<compile_context>
chip_gen: v6e
topology: v6e:2x2x1
jax: 0.10.0
libtpu: 0.0.40
codegen_flags: <defaults>
</compile_context>

<pallas_src>
import functools

import jax
import jax.numpy as jnp
from jax.experimental import pallas as pl
from jax.experimental.pallas import tpu as pltpu


def _round_up(n, m):
    return ((n + m - 1) // m) * m


# ----------------------------- Pallas kernel ------------------------------- #
def _fused_gcn_kernel(*refs, n_layers, n_adj, adj_for_layer):
    # refs = (adj_0[, adj_1], x, w0..w{L-1}, b0..b{L-1}, out)
    adj_refs = refs[:n_adj]
    x_ref = refs[n_adj]
    w_refs = refs[n_adj + 1: n_adj + 1 + n_layers]
    b_refs = refs[n_adj + 1 + n_layers: n_adj + 1 + 2 * n_layers]
    out_ref = refs[n_adj + 1 + 2 * n_layers]

    # Pre-transposed, pre-cast bf16 aggregation matrices (0/1 is exact in bf16).
    adjs = [a[...] for a in adj_refs]             # each (Np, Np) bf16

    # Activations stay VMEM-resident across all layers (never round-trip HBM).
    h = x_ref[...].astype(jnp.float32)
    for i in range(n_layers):
        w = w_refs[i][...]                        # bf16 (Fin_p, Fout_p)
        b = b_refs[i][...]                        # f32  (1, Fout_p)
        agg = adjs[adj_for_layer[i]]
        h_bf = h.astype(jnp.bfloat16)
        fin, fout = w.shape
        if fin <= fout:
            # Aggregate first: the N^2 matmul contracts through the smaller Fin
            # (same association DGL GraphConv picks when in_feats <= out_feats).
            ah = jnp.dot(agg, h_bf, preferred_element_type=jnp.float32)
            h = jnp.dot(ah.astype(jnp.bfloat16), w, preferred_element_type=jnp.float32)
        else:
            # Project first: the N^2 matmul contracts through the smaller Fout.
            hw = jnp.dot(h_bf, w, preferred_element_type=jnp.float32)
            h = jnp.dot(agg, hw.astype(jnp.bfloat16), preferred_element_type=jnp.float32)
        # NOTE: padded node rows pick up bias (and ReLU(bias)) values here.
        # This is safe because padded adjacency rows/cols are zero (garbage
        # never mixes into real rows) and the wrapper slices out [:N, :Fout].
        h = h + b
        if i < n_layers - 1:                      # last GraphConv has no activation
            h = jnp.maximum(h, 0.0)
    out_ref[...] = h.astype(out_ref.dtype)


# ------------------------------ Wrapper ------------------------------------ #
def make_gcn_forward(adj, params):
    """One-time prep (pad / transpose / cast outside the hot path) + jitted forward.

    Returns forward(x) -> (N, future_queue_steps) implementing
        for i, (W, b) in enumerate(params):
            g_i = g.reverse() if i % 4 == 3 else g          # matches the PyTorch Model
            h = act_i(Agg(g_i, h) @ W + b)                  # copy_u / sum, norm='none'
    as a single fused pallas_call.
    """
    n_layers = len(params)
    rev_flags = tuple((i % 4) == 3 for i in range(n_layers))

    N = adj.shape[0]
    Fin0 = params[0][0].shape[0]
    Fout = params[-1][0].shape[1]

    # Pad node count only to the bf16 sublane granule (16), not 128: the dominant
    # h @ W matmuls then carry only the rows that exist.  Feature dims pad to
    # multiples of 128 for lane-dense MXU tiles and unmasked stores.
    Np = _round_up(max(N, 16), 16)
    Fin0p = _round_up(Fin0, 128)
    Fout_p = _round_up(Fout, 128)

    # ---- one-time graph prep: pad, transpose on host, cast to bf16 ---------
    adj_p = jnp.pad(adj.astype(jnp.float32), ((0, Np - N), (0, Np - N)))
    need_fwd = not all(rev_flags)
    need_rev = any(rev_flags)
    adj_inputs, adj_idx = [], {}
    if need_fwd:                                   # Agg on g           -> A^T @ h
        adj_idx[False] = len(adj_inputs)
        adj_inputs.append(adj_p.T.astype(jnp.bfloat16))
    if need_rev:                                   # Agg on g.reverse() -> A   @ h
        adj_idx[True] = len(adj_inputs)
        adj_inputs.append(adj_p.astype(jnp.bfloat16))
    adj_for_layer = tuple(adj_idx[f] for f in rev_flags)
    n_adj = len(adj_inputs)

    # ---- one-time parameter prep: zero-pad + cast to bf16 ------------------
    # Padded weight rows/cols are zero, so padded feature columns contribute
    # nothing: exact semantics.
    w_ps, b_ps = [], []
    fin_p = Fin0p
    for (w, b) in params:
        fin, fout = w.shape
        fout_pad = _round_up(fout, 128)
        w_ps.append(jnp.pad(w, ((0, fin_p - fin), (0, fout_pad - fout))).astype(jnp.bfloat16))
        b_ps.append(jnp.pad(b.astype(jnp.float32).reshape(1, fout),
                            ((0, 0), (0, fout_pad - fout))))
        fin_p = fout_pad

    kernel = functools.partial(_fused_gcn_kernel, n_layers=n_layers,
                               n_adj=n_adj, adj_for_layer=adj_for_layer)

    in_specs = (
        [pl.BlockSpec((Np, Np), lambda i: (0, 0)) for _ in range(n_adj)]       # adjacency (bf16)
        + [pl.BlockSpec((Np, Fin0p), lambda i: (0, 0))]                        # node features (bf16)
        + [pl.BlockSpec(w.shape, lambda i: (0, 0)) for w in w_ps]              # weights (bf16)
        + [pl.BlockSpec(b.shape, lambda i: (0, 0)) for b in b_ps]              # biases (f32)
    )

    # TODO(synk): at large N / middle_layer_dim, add a "parallel" row-grid axis
    # (both v7x TensorCores) and stream weights via pl.ANY + make_async_copy.
    call = pl.pallas_call(
        kernel,
        out_shape=jax.ShapeDtypeStruct((Np, Fout_p), jnp.float32),
        grid=(1,),
        in_specs=in_specs,
        out_specs=pl.BlockSpec((Np, Fout_p), lambda i: (0, 0)),
        compiler_params=pltpu.CompilerParams(
            dimension_semantics=("arbitrary",),
            # Actual footprint ~10 MiB at these sizes; 48 MiB keeps headroom
            # under v7x's 64 MiB VMEM and is far below v5e/v6e's 128 MiB.
            vmem_limit_bytes=48 << 20,
        ),
    )

    prepped = (tuple(adj_inputs), tuple(w_ps), tuple(b_ps))

    @jax.jit
    def _forward(x, adj_in, w_in, b_in):
        # Only per-call prep left in the hot path: tiny pad + cast of x.
        x_p = jnp.pad(x, ((0, Np - x.shape[0]), (0, Fin0p - x.shape[1]))).astype(jnp.bfloat16)
        out_p = call(*adj_in, x_p, *w_in, *b_in)
        return out_p[:N, :Fout]

    def forward(x):
        return _forward(x, *prepped)

    return forward


# ------------------------------ Model glue --------------------------------- #
def init_params(key, past_queue_steps, future_queue_steps, conv_layers,
                middle_layer_dim=1000):
    """Deterministic xavier-like init of the GraphConv weights/biases."""
    assert conv_layers >= 2
    first_layer_dim = 2 + past_queue_steps
    dims = [first_layer_dim] + [middle_layer_dim] * (conv_layers - 1) + [future_queue_steps]
    params = []
    for i in range(conv_layers):
        fin, fout = dims[i], dims[i + 1]
        key, wk = jax.random.split(key)
        std = (2.0 / (fin + fout)) ** 0.5
        w = std * jax.random.normal(wk, (fin, fout), dtype=jnp.float32)
        b = jnp.zeros((1, fout), dtype=jnp.float32)
        params.append((w, b))
    return params


def model_reference(adj, x, params):
    """Pure-JAX reference with the same bf16-operand / f32-accumulation strategy."""
    a_rev = adj.astype(jnp.bfloat16)
    a_fwd = adj.T.astype(jnp.bfloat16)
    n_layers = len(params)
    h = x.astype(jnp.float32)
    for i, (w, b) in enumerate(params):
        a = a_rev if (i % 4) == 3 else a_fwd
        w_bf = w.astype(jnp.bfloat16)
        h_bf = h.astype(jnp.bfloat16)
        fin, fout = w.shape
        if fin <= fout:
            ah = jnp.dot(a, h_bf, preferred_element_type=jnp.float32)
            h = jnp.dot(ah.astype(jnp.bfloat16), w_bf, preferred_element_type=jnp.float32)
        else:
            hw = jnp.dot(h_bf, w_bf, preferred_element_type=jnp.float32)
            h = jnp.dot(a, hw.astype(jnp.bfloat16), preferred_element_type=jnp.float32)
        h = h + b
        if i < n_layers - 1:
            h = jnp.maximum(h, 0.0)
    return h


# --------------------------------- Main ------------------------------------ #
if __name__ == "__main__":
    past_queue_steps = 6     # -> first_layer_dim = 2 + 6 = 8
    future_queue_steps = 4
    conv_layers = 4          # includes one layer (i == 3) on the reversed graph
    num_nodes = 16

    key = jax.random.PRNGKey(0)
    key, k_adj, k_x, k_p = jax.random.split(key, 4)

    # Random directed graph as a dense adjacency matrix.
    adj = jax.random.bernoulli(k_adj, p=0.3, shape=(num_nodes, num_nodes)).astype(jnp.float32)

    # Input node features: (num_nodes, 2 + past_queue_steps)
    x = jax.random.normal(k_x, (num_nodes, 2 + past_queue_steps), dtype=jnp.float32)

    params = init_params(k_p, past_queue_steps, future_queue_steps, conv_layers)

    forward = make_gcn_forward(adj, params)      # one-time pad/cast/transpose prep
    out = jax.block_until_ready(forward(x))

    ref = model_reference(adj, x, params)
    assert out.shape == (num_nodes, future_queue_steps)
    assert jnp.allclose(out, ref, rtol=5e-2, atol=5e-2), "mismatch vs. reference"

    print("KERNEL_OK")
</pallas_src>

<mosaic_0001>
module attributes {stable_mosaic.version = 11 : i64} {
  func.func @_fused_gcn_kernel(%arg0: i32, %arg1: memref<16x16xbf16, #tpu.memory_space<vmem>>, %arg2: memref<16x16xbf16, #tpu.memory_space<vmem>>, %arg3: memref<16x128xbf16, #tpu.memory_space<vmem>>, %arg4: memref<128x1024xbf16, #tpu.memory_space<vmem>>, %arg5: memref<1024x1024xbf16, #tpu.memory_space<vmem>>, %arg6: memref<1024x1024xbf16, #tpu.memory_space<vmem>>, %arg7: memref<1024x128xbf16, #tpu.memory_space<vmem>>, %arg8: memref<1x1024xf32, #tpu.memory_space<vmem>>, %arg9: memref<1x1024xf32, #tpu.memory_space<vmem>>, %arg10: memref<1x1024xf32, #tpu.memory_space<vmem>>, %arg11: memref<1x128xf32, #tpu.memory_space<vmem>>, %arg12: memref<16x128xf32, #tpu.memory_space<vmem>>) attributes {dimension_semantics = [#tpu.dimension_semantics<arbitrary>], iteration_bounds = array<i64: 1>, scalar_prefetch = 0 : i64, scratch_operands = 0 : i64, tpu.core_type = #tpu.core_type<tc>, window_params = [{pipeline_mode = #tpu.pipeline_mode<synchronous>, transform_indices = @transform_0, window_bounds = array<i64: 16, 16>}, {pipeline_mode = #tpu.pipeline_mode<synchronous>, transform_indices = @transform_1, window_bounds = array<i64: 16, 16>}, {pipeline_mode = #tpu.pipeline_mode<synchronous>, transform_indices = @transform_2, window_bounds = array<i64: 16, 128>}, {pipeline_mode = #tpu.pipeline_mode<synchronous>, transform_indices = @transform_3, window_bounds = array<i64: 128, 1024>}, {pipeline_mode = #tpu.pipeline_mode<synchronous>, transform_indices = @transform_4, window_bounds = array<i64: 1024, 1024>}, {pipeline_mode = #tpu.pipeline_mode<synchronous>, transform_indices = @transform_5, window_bounds = array<i64: 1024, 1024>}, {pipeline_mode = #tpu.pipeline_mode<synchronous>, transform_indices = @transform_6, window_bounds = array<i64: 1024, 128>}, {pipeline_mode = #tpu.pipeline_mode<synchronous>, transform_indices = @transform_7, window_bounds = array<i64: 1, 1024>}, {pipeline_mode = #tpu.pipeline_mode<synchronous>, transform_indices = @transform_8, window_bounds = array<i64: 1, 1024>}, {pipeline_mode = #tpu.pipeline_mode<synchronous>, transform_indices = @transform_9, window_bounds = array<i64: 1, 1024>}, {pipeline_mode = #tpu.pipeline_mode<synchronous>, transform_indices = @transform_10, window_bounds = array<i64: 1, 128>}, {pipeline_mode = #tpu.pipeline_mode<synchronous>, transform_indices = @transform_11, window_bounds = array<i64: 16, 128>}]} {
    %c0 = arith.constant 0 : index
    %c0_0 = arith.constant 0 : index
    %0 = vector.load %arg1[%c0, %c0_0] : memref<16x16xbf16, #tpu.memory_space<vmem>>, vector<16x16xbf16>
    %c0_1 = arith.constant 0 : index
    %c0_2 = arith.constant 0 : index
    %1 = vector.load %arg2[%c0_1, %c0_2] : memref<16x16xbf16, #tpu.memory_space<vmem>>, vector<16x16xbf16>
    %c0_3 = arith.constant 0 : index
    %c0_4 = arith.constant 0 : index
    %2 = vector.load %arg3[%c0_3, %c0_4] : memref<16x128xbf16, #tpu.memory_space<vmem>>, vector<16x128xbf16>
    %3 = arith.extf %2 : vector<16x128xbf16> to vector<16x128xf32>
    %c0_5 = arith.constant 0 : index
    %c0_6 = arith.constant 0 : index
    %4 = vector.load %arg4[%c0_5, %c0_6] : memref<128x1024xbf16, #tpu.memory_space<vmem>>, vector<128x1024xbf16>
    %c0_7 = arith.constant 0 : index
    %c0_8 = arith.constant 0 : index
    %5 = vector.load %arg8[%c0_7, %c0_8] : memref<1x1024xf32, #tpu.memory_space<vmem>>, vector<1x1024xf32>
    %6 = arith.truncf %3 : vector<16x128xf32> to vector<16x128xbf16>
    %cst = arith.constant dense<0.000000e+00> : vector<16x128xf32>
    %7 = tpu.matmul %0, %6, %cst {dimension_numbers = #tpu.dot_dimension_numbers<[1], [0], [0], [1], [0, 0, 1, 1], [], []>} : vector<16x16xbf16>, vector<16x128xbf16>, vector<16x128xf32> -> vector<16x128xf32>
    %8 = arith.truncf %7 : vector<16x128xf32> to vector<16x128xbf16>
    %cst_9 = arith.constant dense<0.000000e+00> : vector<16x1024xf32>
    %9 = tpu.matmul %8, %4, %cst_9 {dimension_numbers = #tpu.dot_dimension_numbers<[1], [0], [0], [1], [0, 0, 1, 1], [], []>} : vector<16x128xbf16>, vector<128x1024xbf16>, vector<16x1024xf32> -> vector<16x1024xf32>
    %10 = vector.broadcast %5 : vector<1x1024xf32> to vector<16x1024xf32>
    %11 = arith.addf %9, %10 : vector<16x1024xf32>
    %cst_10 = arith.constant 0.000000e+00 : f32
    %12 = vector.broadcast %cst_10 : f32 to vector<16x1024xf32>
    %13 = arith.maximumf %11, %12 : vector<16x1024xf32>
    %c0_11 = arith.constant 0 : index
    %c0_12 = arith.constant 0 : index
    %14 = vector.load %arg5[%c0_11, %c0_12] : memref<1024x1024xbf16, #tpu.memory_space<vmem>>, vector<1024x1024xbf16>
    %c0_13 = arith.constant 0 : index
    %c0_14 = arith.constant 0 : index
    %15 = vector.load %arg9[%c0_13, %c0_14] : memref<1x1024xf32, #tpu.memory_space<vmem>>, vector<1x1024xf32>
    %16 = arith.truncf %13 : vector<16x1024xf32> to vector<16x1024xbf16>
    %cst_15 = arith.constant dense<0.000000e+00> : vector<16x1024xf32>
    %17 = tpu.matmul %0, %16, %cst_15 {dimension_numbers = #tpu.dot_dimension_numbers<[1], [0], [0], [1], [0, 0, 1, 1], [], []>} : vector<16x16xbf16>, vector<16x1024xbf16>, vector<16x1024xf32> -> vector<16x1024xf32>
    %18 = arith.truncf %17 : vector<16x1024xf32> to vector<16x1024xbf16>
    %cst_16 = arith.constant dense<0.000000e+00> : vector<16x1024xf32>
    %19 = tpu.matmul %18, %14, %cst_16 {dimension_numbers = #tpu.dot_dimension_numbers<[1], [0], [0], [1], [0, 0, 1, 1], [], []>} : vector<16x1024xbf16>, vector<1024x1024xbf16>, vector<16x1024xf32> -> vector<16x1024xf32>
    %20 = vector.broadcast %15 : vector<1x1024xf32> to vector<16x1024xf32>
    %21 = arith.addf %19, %20 : vector<16x1024xf32>
    %cst_17 = arith.constant 0.000000e+00 : f32
    %22 = vector.broadcast %cst_17 : f32 to vector<16x1024xf32>
    %23 = arith.maximumf %21, %22 : vector<16x1024xf32>
    %c0_18 = arith.constant 0 : index
    %c0_19 = arith.constant 0 : index
    %24 = vector.load %arg6[%c0_18, %c0_19] : memref<1024x1024xbf16, #tpu.memory_space<vmem>>, vector<1024x1024xbf16>
    %c0_20 = arith.constant 0 : index
    %c0_21 = arith.constant 0 : index
    %25 = vector.load %arg10[%c0_20, %c0_21] : memref<1x1024xf32, #tpu.memory_space<vmem>>, vector<1x1024xf32>
    %26 = arith.truncf %23 : vector<16x1024xf32> to vector<16x1024xbf16>
    %cst_22 = arith.constant dense<0.000000e+00> : vector<16x1024xf32>
    %27 = tpu.matmul %0, %26, %cst_22 {dimension_numbers = #tpu.dot_dimension_numbers<[1], [0], [0], [1], [0, 0, 1, 1], [], []>} : vector<16x16xbf16>, vector<16x1024xbf16>, vector<16x1024xf32> -> vector<16x1024xf32>
    %28 = arith.truncf %27 : vector<16x1024xf32> to vector<16x1024xbf16>
    %cst_23 = arith.constant dense<0.000000e+00> : vector<16x1024xf32>
    %29 = tpu.matmul %28, %24, %cst_23 {dimension_numbers = #tpu.dot_dimension_numbers<[1], [0], [0], [1], [0, 0, 1, 1], [], []>} : vector<16x1024xbf16>, vector<1024x1024xbf16>, vector<16x1024xf32> -> vector<16x1024xf32>
    %30 = vector.broadcast %25 : vector<1x1024xf32> to vector<16x1024xf32>
    %31 = arith.addf %29, %30 : vector<16x1024xf32>
    %cst_24 = arith.constant 0.000000e+00 : f32
    %32 = vector.broadcast %cst_24 : f32 to vector<16x1024xf32>
    %33 = arith.maximumf %31, %32 : vector<16x1024xf32>
    %c0_25 = arith.constant 0 : index
    %c0_26 = arith.constant 0 : index
    %34 = vector.load %arg7[%c0_25, %c0_26] : memref<1024x128xbf16, #tpu.memory_space<vmem>>, vector<1024x128xbf16>
    %c0_27 = arith.constant 0 : index
    %c0_28 = arith.constant 0 : index
    %35 = vector.load %arg11[%c0_27, %c0_28] : memref<1x128xf32, #tpu.memory_space<vmem>>, vector<1x128xf32>
    %36 = arith.truncf %33 : vector<16x1024xf32> to vector<16x1024xbf16>
    %cst_29 = arith.constant dense<0.000000e+00> : vector<16x128xf32>
    %37 = tpu.matmul %36, %34, %cst_29 {dimension_numbers = #tpu.dot_dimension_numbers<[1], [0], [0], [1], [0, 0, 1, 1], [], []>} : vector<16x1024xbf16>, vector<1024x128xbf16>, vector<16x128xf32> -> vector<16x128xf32>
    %38 = arith.truncf %37 : vector<16x128xf32> to vector<16x128xbf16>
    %cst_30 = arith.constant dense<0.000000e+00> : vector<16x128xf32>
    %39 = tpu.matmul %1, %38, %cst_30 {dimension_numbers = #tpu.dot_dimension_numbers<[1], [0], [0], [1], [0, 0, 1, 1], [], []>} : vector<16x16xbf16>, vector<16x128xbf16>, vector<16x128xf32> -> vector<16x128xf32>
    %40 = vector.broadcast %35 : vector<1x128xf32> to vector<16x128xf32>
    %41 = arith.addf %39, %40 : vector<16x128xf32>
    %c0_31 = arith.constant 0 : index
    %c0_32 = arith.constant 0 : index
    %42 = vector.load %arg12[%c0_31, %c0_32] : memref<16x128xf32, #tpu.memory_space<vmem>>, vector<16x128xf32>
    tpu.vector_store %arg12[%c0_31, %c0_32], %41 {strides = array<i32>} : memref<16x128xf32, #tpu.memory_space<vmem>>, vector<16x128xf32>,
    return
  }
  func.func @transform_0(%arg0: i32) -> (i32, i32) {
    %c0_i32 = arith.constant 0 : i32
    %c0_i32_0 = arith.constant 0 : i32
    %c0_i32_1 = arith.constant 0 : i32
    return %c0_i32, %c0_i32_0 : i32, i32
  }
  func.func @transform_1(%arg0: i32) -> (i32, i32) {
    %c0_i32 = arith.constant 0 : i32
    %c0_i32_0 = arith.constant 0 : i32
    %c0_i32_1 = arith.constant 0 : i32
    return %c0_i32, %c0_i32_0 : i32, i32
  }
  func.func @transform_2(%arg0: i32) -> (i32, i32) {
    %c0_i32 = arith.constant 0 : i32
    %c0_i32_0 = arith.constant 0 : i32
    %c0_i32_1 = arith.constant 0 : i32
    return %c0_i32, %c0_i32_0 : i32, i32
  }
  func.func @transform_3(%arg0: i32) -> (i32, i32) {
    %c0_i32 = arith.constant 0 : i32
    %c0_i32_0 = arith.constant 0 : i32
    %c0_i32_1 = arith.constant 0 : i32
    return %c0_i32, %c0_i32_0 : i32, i32
  }
  func.func @transform_4(%arg0: i32) -> (i32, i32) {
    %c0_i32 = arith.constant 0 : i32
    %c0_i32_0 = arith.constant 0 : i32
    %c0_i32_1 = arith.constant 0 : i32
    return %c0_i32, %c0_i32_0 : i32, i32
  }
  func.func @transform_5(%arg0: i32) -> (i32, i32) {
    %c0_i32 = arith.constant 0 : i32
    %c0_i32_0 = arith.constant 0 : i32
    %c0_i32_1 = arith.constant 0 : i32
    return %c0_i32, %c0_i32_0 : i32, i32
  }
  func.func @transform_6(%arg0: i32) -> (i32, i32) {
    %c0_i32 = arith.constant 0 : i32
    %c0_i32_0 = arith.constant 0 : i32
    %c0_i32_1 = arith.constant 0 : i32
    return %c0_i32, %c0_i32_0 : i32, i32
  }
  func.func @transform_7(%arg0: i32) -> (i32, i32) {
    %c0_i32 = arith.constant 0 : i32
    %c0_i32_0 = arith.constant 0 : i32
    %c0_i32_1 = arith.constant 0 : i32
    return %c0_i32, %c0_i32_0 : i32, i32
  }
  func.func @transform_8(%arg0: i32) -> (i32, i32) {
    %c0_i32 = arith.constant 0 : i32
    %c0_i32_0 = arith.constant 0 : i32
    %c0_i32_1 = arith.constant 0 : i32
    return %c0_i32, %c0_i32_0 : i32, i32
  }
  func.func @transform_9(%arg0: i32) -> (i32, i32) {
    %c0_i32 = arith.constant 0 : i32
    %c0_i32_0 = arith.constant 0 : i32
    %c0_i32_1 = arith.constant 0 : i32
    return %c0_i32, %c0_i32_0 : i32, i32
  }
  func.func @transform_10(%arg0: i32) -> (i32, i32) {
    %c0_i32 = arith.constant 0 : i32
    %c0_i32_0 = arith.constant 0 : i32
    %c0_i32_1 = arith.constant 0 : i32
    return %c0_i32, %c0_i32_0 : i32, i32
  }
  func.func @transform_11(%arg0: i32) -> (i32, i32) {
    %c0_i32 = arith.constant 0 : i32
    %c0_i32_0 = arith.constant 0 : i32
    %c0_i32_1 = arith.constant 0 : i32
    return %c0_i32, %c0_i32_0 : i32, i32
  }
}

</mosaic_0001>

<llo_original>
// kernel: _forward.1
$region0: #{_forward.1}
  #allocation0 [shape = 'u32[]', space=smem, size = 0x4, offset = 0x4, fixed_abs, tag = 'smem constant byte address 0x4 - core index']
  #allocation1 [shape = 'u32[144,128]{1,0:T(1,128)}', space=vmem, size = 0x12000, scoped, tag = 'internal scratch']
  %s0 = inlined_call_operand.hbm [shape: bf16[16,16], index: 0, kind: input, shape index: {}]
  %s1 = inlined_call_operand.hbm [shape: bf16[16,16], index: 1, kind: input, shape index: {}]
  %s2 = inlined_call_operand.vmem [shape: bf16[16,128], index: 2, kind: input, shape index: {}]
  %s3 = inlined_call_operand.hbm [shape: bf16[128,1024], index: 3, kind: input, shape index: {}]
  %s4 = inlined_call_operand.hbm [shape: bf16[1024,1024], index: 4, kind: input, shape index: {}]
  %s5 = inlined_call_operand.hbm [shape: bf16[1024,1024], index: 5, kind: input, shape index: {}]
  %s6 = inlined_call_operand.hbm [shape: bf16[1024,128], index: 6, kind: input, shape index: {}]
  %s7 = inlined_call_operand.hbm [shape: f32[1,1024], index: 7, kind: input, shape index: {}]
  %s8 = inlined_call_operand.hbm [shape: f32[1,1024], index: 8, kind: input, shape index: {}]
  %s9 = inlined_call_operand.hbm [shape: f32[1,1024], index: 9, kind: input, shape index: {}]
  %s10 = inlined_call_operand.hbm [shape: f32[1,128], index: 10, kind: input, shape index: {}]
  %s11 = inlined_call_operand.vmem [shape: f32[16,128], index: 11, kind: output, shape index: {}]
  %s12 = sld [smem:[#allocation0]]
  $region94: #{_forward.1} parent=0
    _
  %s14 = ssub.s32 1, %s12
  %s15 = scalar_select 0, %s14, %s12
  $region1: #{_forward.1} parent=0
    #allocation2 [shape = 'u8[4096]{0}', space=vmem, size = 0x1000, scoped, tag = 'input window, operand 0, single buffered']
    #allocation3 [shape = 's32[1]{0}', space=sflag, size = 0x4, scoped, tag = 'scoped memory for _forward.1']
    #allocation4 [shape = 'u8[4096]{0}', space=vmem, size = 0x1000, scoped, tag = 'input window, operand 1, single buffered']
    #allocation5 [shape = 's32[1]{0}', space=sflag, size = 0x4, scoped, tag = 'scoped memory for _forward.1']
    #allocation6 [shape = 'u8[262144]{0}', space=vmem, size = 0x40000, scoped, tag = 'input window, operand 3, single buffered']
    #allocation7 [shape = 'u8[2097152]{0}', space=vmem, size = 0x200000, scoped, tag = 'input window, operand 4, single buffered']
    #allocation8 [shape = 's32[1]{0}', space=sflag, size = 0x4, scoped, tag = 'scoped memory for _forward.1']
    #allocation9 [shape = 'u8[2097152]{0}', space=vmem, size = 0x200000, scoped, tag = 'input window, operand 5, single buffered']
    #allocation10 [shape = 'u8[262144]{0}', space=vmem, size = 0x40000, scoped, tag = 'input window, operand 6, single buffered']
    #allocation11 [shape = 's32[1]{0}', space=sflag, size = 0x4, scoped, tag = 'scoped memory for _forward.1']
    #allocation12 [shape = 'u8[4096]{0}', space=vmem, size = 0x1000, scoped, tag = 'input window, operand 7, single buffered']
    #allocation13 [shape = 'u8[4096]{0}', space=vmem, size = 0x1000, scoped, tag = 'input window, operand 8, single buffered']
    #allocation14 [shape = 's32[1]{0}', space=sflag, size = 0x4, scoped, tag = 'scoped memory for _forward.1']
    #allocation15 [shape = 'u8[4096]{0}', space=vmem, size = 0x1000, scoped, tag = 'input window, operand 9, single buffered']
    #allocation16 [shape = 'u8[512]{0}', space=vmem, size = 0x400, scoped, tag = 'input window, operand 10, single buffered']
    #allocation17 [shape = 's32[1]{0}', space=sflag, size = 0x4, scoped, tag = 'scoped memory for _forward.1']
    %16 = vsyncpa [#allocation3], 0
    %17 = vsyncpa [#allocation5], 0
    %18 = vsyncpa [#allocation8], 0
    %19 = vsyncpa [#allocation11], 0
    %20 = vsyncpa [#allocation14], 0
    %21 = vsyncpa [#allocation17], 0
    // Predicated region
    $region2: #{_forward.1} parent=1 // pred_check
      _
    $region3: #{_forward.1} parent=1 // pred_check_branch
      %23 = sbr.rel (0) target = $region5
    $region4: #{_forward.1} parent=1 // pred_region
      %s25 = ssub.s32 128, 128
      %26 = vsyncadd [#allocation3], %s25
      %s27 = sshll.u32 [#allocation2], 4
      %s28 = int_to_ptr.vmem [resolvable:$true] %s27
      %33 = dma.hbm_to_vmem [thread:$0]  %s0, 128, %s28, [#allocation3], 64, 64, 4
    $region5: #{_forward.1} parent=1 // pred_fallthru
      _
    // Predicated region
    $region6: #{_forward.1} parent=1 // pred_check
      _
    $region7: #{_forward.1} parent=1 // pred_check_branch
      %35 = sbr.rel (0) target = $region9
    $region8: #{_forward.1} parent=1 // pred_region
      %s37 = ssub.s32 128, 128
      %38 = vsyncadd [#allocation5], %s37
      %s39 = sshll.u32 [#allocation4], 4
      %s40 = int_to_ptr.vmem [resolvable:$true] %s39
      %45 = dma.hbm_to_vmem [thread:$0]  %s1, 128, %s40, [#allocation5], 64, 64, 4
    $region9: #{_forward.1} parent=1 // pred_fallthru
      _
    // Predicated region
    $region10: #{_forward.1} parent=1 // pred_check
      _
    $region11: #{_forward.1} parent=1 // pred_check_branch
      %47 = sbr.rel (0) target = $region13
    $region12: #{_forward.1} parent=1 // pred_region
      _
    $region13: #{_forward.1} parent=1 // pred_fallthru
      _
    // Predicated region
    $region14: #{_forward.1} parent=1 // pred_check
      _
    $region15: #{_forward.1} parent=1 // pred_check_branch
      %49 = sbr.rel (0) target = $region17
    $region16: #{_forward.1} parent=1 // pred_region
      %s51 = ssub.s32 8192, 8192
      %52 = vsyncadd [#allocation5], %s51
      %s53 = sshll.u32 [#allocation6], 4
      %s54 = int_to_ptr.vmem [resolvable:$true] %s53
      %59 = dma.hbm_to_vmem [thread:$0]  %s3, 8192, %s54, [#allocation5], 512, 512, 32
    $region17: #{_forward.1} parent=1 // pred_fallthru
      _
    // Predicated region
    $region18: #{_forward.1} parent=1 // pred_check
      _
    $region19: #{_forward.1} parent=1 // pred_check_branch
      %61 = sbr.rel (0) target = $region21
    $region20: #{_forward.1} parent=1 // pred_region
      %s63 = ssub.s32 65536, 65536
      %64 = vsyncadd [#allocation8], %s63
      %s65 = sshll.u32 [#allocation7], 4
      %s66 = int_to_ptr.vmem [resolvable:$true] %s65
      %71 = dma.hbm_to_vmem [thread:$0]  %s4, 65536, %s66, [#allocation8], 512, 512, 32
    $region21: #{_forward.1} parent=1 // pred_fallthru
      _
    // Predicated region
    $region22: #{_forward.1} parent=1 // pred_check
      _
    $region23: #{_forward.1} parent=1 // pred_check_branch
      %73 = sbr.rel (0) target = $region25
    $region24: #{_forward.1} parent=1 // pred_region
      %s75 = ssub.s32 65536, 65536
      %76 = vsyncadd [#allocation8], %s75
      %s77 = sshll.u32 [#allocation9], 4
      %s78 = int_to_ptr.vmem [resolvable:$true] %s77
      %83 = dma.hbm_to_vmem [thread:$0]  %s5, 65536, %s78, [#allocation8], 512, 512, 32
    $region25: #{_forward.1} parent=1 // pred_fallthru
      _
    // Predicated region
    $region26: #{_forward.1} parent=1 // pred_check
      _
    $region27: #{_forward.1} parent=1 // pred_check_branch
      %85 = sbr.rel (0) target = $region29
    $region28: #{_forward.1} parent=1 // pred_region
      %s87 = ssub.s32 8192, 8192
      %88 = vsyncadd [#allocation11], %s87
      %s89 = sshll.u32 [#allocation10], 4
      %s90 = int_to_ptr.vmem [resolvable:$true] %s89
      %95 = dma.hbm_to_vmem [thread:$0]  %s6, 8192, %s90, [#allocation11], 64, 64, 4
    $region29: #{_forward.1} parent=1 // pred_fallthru
      _
    // Predicated region
    $region30: #{_forward.1} parent=1 // pred_check
      _
    $region31: #{_forward.1} parent=1 // pred_check_branch
      %97 = sbr.rel (0) target = $region33
    $region32: #{_forward.1} parent=1 // pred_region
      %s99 = ssub.s32 128, 128
      %100 = vsyncadd [#allocation11], %s99
      %s102 = sshll.u32 [#allocation12], 4
      %s103 = int_to_ptr.vmem [resolvable:$true] %s102
      %105 = dma.hbm_to_vmem [thread:$0]  %s7, 128, %s103, [#allocation11]
    $region33: #{_forward.1} parent=1 // pred_fallthru
      _
    // Predicated region
    $region34: #{_forward.1} parent=1 // pred_check
      _
    $region35: #{_forward.1} parent=1 // pred_check_branch
      %107 = sbr.rel (0) target = $region37
    $region36: #{_forward.1} parent=1 // pred_region
      %s109 = ssub.s32 128, 128
      %110 = vsyncadd [#allocation14], %s109
      %s112 = sshll.u32 [#allocation13], 4
      %s113 = int_to_ptr.vmem [resolvable:$true] %s112
      %115 = dma.hbm_to_vmem [thread:$0]  %s8, 128, %s113, [#allocation14]
    $region37: #{_forward.1} parent=1 // pred_fallthru
      _
    // Predicated region
    $region38: #{_forward.1} parent=1 // pred_check
      _
    $region39: #{_forward.1} parent=1 // pred_check_branch
      %117 = sbr.rel (0) target = $region41
    $region40: #{_forward.1} parent=1 // pred_region
      %s119 = ssub.s32 128, 128
      %120 = vsyncadd [#allocation14], %s119
      %s122 = sshll.u32 [#allocation15], 4
      %s123 = int_to_ptr.vmem [resolvable:$true] %s122
      %125 = dma.hbm_to_vmem [thread:$0]  %s9, 128, %s123, [#allocation14]
    $region41: #{_forward.1} parent=1 // pred_fallthru
      _
    // Predicated region
    $region42: #{_forward.1} parent=1 // pred_check
      _
    $region43: #{_forward.1} parent=1 // pred_check_branch
      %127 = sbr.rel (0) target = $region45
    $region44: #{_forward.1} parent=1 // pred_region
      %s129 = ssub.s32 16, 16
      %130 = vsyncadd [#allocation17], %s129
      %s132 = sshll.u32 [#allocation16], 4
      %s133 = int_to_ptr.vmem [resolvable:$true] %s132
      %135 = dma.hbm_to_vmem [thread:$0]  %s10, 16, %s133, [#allocation17]
    $region45: #{_forward.1} parent=1 // pred_fallthru
      _
    // Predicated region
    $region46: #{_forward.1} parent=1 // pred_check
      _
    $region47: #{_forward.1} parent=1 // pred_check_branch
      %137 = sbr.rel (0) target = $region49
    $region48: #{_forward.1} parent=1 // pred_region
      %138 = dma.done [#allocation3], 128
    $region49: #{_forward.1} parent=1 // pred_fallthru
      _
    // Predicated region
    $region50: #{_forward.1} parent=1 // pred_check
      _
    $region51: #{_forward.1} parent=1 // pred_check_branch
      %140 = sbr.rel (0) target = $region53
    $region52: #{_forward.1} parent=1 // pred_region
      %141 = dma.done [#allocation5], 128
    $region53: #{_forward.1} parent=1 // pred_fallthru
      _
    // Predicated region
    $region54: #{_forward.1} parent=1 // pred_check
      _
    $region55: #{_forward.1} parent=1 // pred_check_branch
      %143 = sbr.rel (0) target = $region57
    $region56: #{_forward.1} parent=1 // pred_region
      %144 = dma.done [#allocation5], 8192
    $region57: #{_forward.1} parent=1 // pred_fallthru
      _
    // Predicated region
    $region58: #{_forward.1} parent=1 // pred_check
      _
    $region59: #{_forward.1} parent=1 // pred_check_branch
      %146 = sbr.rel (0) target = $region61
    $region60: #{_forward.1} parent=1 // pred_region
      %147 = dma.done [#allocation8], 65536
    $region61: #{_forward.1} parent=1 // pred_fallthru
      _
    // Predicated region
    $region62: #{_forward.1} parent=1 // pred_check
      _
    $region63: #{_forward.1} parent=1 // pred_check_branch
      %149 = sbr.rel (0) target = $region65
    $region64: #{_forward.1} parent=1 // pred_region
      %150 = dma.done [#allocation8], 65536
    $region65: #{_forward.1} parent=1 // pred_fallthru
      _
    // Predicated region
    $region66: #{_forward.1} parent=1 // pred_check
      _
    $region67: #{_forward.1} parent=1 // pred_check_branch
      %152 = sbr.rel (0) target = $region69
    $region68: #{_forward.1} parent=1 // pred_region
      %153 = dma.done [#allocation11], 8192
    $region69: #{_forward.1} parent=1 // pred_fallthru
      _
    // Predicated region
    $region70: #{_forward.1} parent=1 // pred_check
      _
    $region71: #{_forward.1} parent=1 // pred_check_branch
      %155 = sbr.rel (0) target = $region73
    $region72: #{_forward.1} parent=1 // pred_region
      %156 = dma.done [#allocation11], 128
    $region73: #{_forward.1} parent=1 // pred_fallthru
      _
    // Predicated region
    $region74: #{_forward.1} parent=1 // pred_check
      _
    $region75: #{_forward.1} parent=1 // pred_check_branch
      %158 = sbr.rel (0) target = $region77
    $region76: #{_forward.1} parent=1 // pred_region
      %159 = dma.done [#allocation14], 128
    $region77: #{_forward.1} parent=1 // pred_fallthru
      _
    // Predicated region
    $region78: #{_forward.1} parent=1 // pred_check
      _
    $region79: #{_forward.1} parent=1 // pred_check_branch
      %161 = sbr.rel (0) target = $region81
    $region80: #{_forward.1} parent=1 // pred_region
      %162 = dma.done [#allocation14], 128
    $region81: #{_forward.1} parent=1 // pred_fallthru
      _
    // Predicated region
    $region82: #{_forward.1} parent=1 // pred_check
      _
    $region83: #{_forward.1} parent=1 // pred_check_branch
      %164 = sbr.rel (0) target = $region85
    $region84: #{_forward.1} parent=1 // pred_region
      %165 = dma.done [#allocation17], 16
    $region85: #{_forward.1} parent=1 // pred_fallthru
      _
    %v167 = vld [vmem:[#allocation2] sm:$0xf]
    %v168 = vld [vmem:[#allocation2 + $0x4] sm:$0xf]
    %v169 = vld [vmem:[#allocation4] sm:$0xf]
    %v170 = vld [vmem:[#allocation4 + $0x4] sm:$0xf]
    %v171 = vld [vmem:[%s2] sm:$0xf]
    %v172 = vld [vmem:[%s2 + $0x4] sm:$0xf]
    %v173 = vld [vmem:[#allocation6] sm:$0xff]
    %v174 = vld [vmem:[#allocation6 + $0x8] sm:$0xff]
    %v175 = vld [vmem:[#allocation6 + $0x10] sm:$0xff]
    %v176 = vld [vmem:[#allocation6 + $0x18] sm:$0xff]
    %v177 = vld [vmem:[#allocation6 + $0x20] sm:$0xff]
    %v178 = vld [vmem:[#allocation6 + $0x28] sm:$0xff]
    %v179 = vld [vmem:[#allocation6 + $0x30] sm:$0xff]
    %v180 = vld [vmem:[#allocation6 + $0x38] sm:$0xff]
    %v181 = vld [vmem:[#allocation6 + $0x40] sm:$0xff]
    %v182 = vld [vmem:[#allocation6 + $0x48] sm:$0xff]
    %v183 = vld [vmem:[#allocation6 + $0x50] sm:$0xff]
    %v184 = vld [vmem:[#allocation6 + $0x58] sm:$0xff]
    %v185 = vld [vmem:[#allocation6 + $0x60] sm:$0xff]
    %v186 = vld [vmem:[#allocation6 + $0x68] sm:$0xff]
    %v187 = vld [vmem:[#allocation6 + $0x70] sm:$0xff]
    %v188 = vld [vmem:[#allocation6 + $0x78] sm:$0xff]
    %v189 = vld [vmem:[#allocation6 + $0x80] sm:$0xff]
    %v190 = vld [vmem:[#allocation6 + $0x88] sm:$0xff]
    %v191 = vld [vmem:[#allocation6 + $0x90] sm:$0xff]
    %v192 = vld [vmem:[#allocation6 + $0x98] sm:$0xff]
    %v193 = vld [vmem:[#allocation6 + $0xa0] sm:$0xff]
    %v194 = vld [vmem:[#allocation6 + $0xa8] sm:$0xff]
    %v195 = vld [vmem:[#allocation6 + $0xb0] sm:$0xff]
    %v196 = vld [vmem:[#allocation6 + $0xb8] sm:$0xff]
    %v197 = vld [vmem:[#allocation6 + $0xc0] sm:$0xff]
    %v198 = vld [vmem:[#allocation6 + $0xc8] sm:$0xff]
    %v199 = vld [vmem:[#allocation6 + $0xd0] sm:$0xff]
    %v200 = vld [vmem:[#allocation6 + $0xd8] sm:$0xff]
    %v201 = vld [vmem:[#allocation6 + $0xe0] sm:$0xff]
    %v202 = vld [vmem:[#allocation6 + $0xe8] sm:$0xff]
    %v203 = vld [vmem:[#allocation6 + $0xf0] sm:$0xff]
    %v204 = vld [vmem:[#allocation6 + $0xf8] sm:$0xff]
    %v205 = vld [vmem:[#allocation6 + $0x100] sm:$0xff]
    %v206 = vld [vmem:[#allocation6 + $0x108] sm:$0xff]
    %v207 = vld [vmem:[#allocation6 + $0x110] sm:$0xff]
    %v208 = vld [vmem:[#allocation6 + $0x118] sm:$0xff]
    %v209 = vld [vmem:[#allocation6 + $0x120] sm:$0xff]
    %v210 = vld [vmem:[#allocation6 + $0x128] sm:$0xff]
    %v211 = vld [vmem:[#allocation6 + $0x130] sm:$0xff]
    %v212 = vld [vmem:[#allocation6 + $0x138] sm:$0xff]
    %v213 = vld [vmem:[#allocation6 + $0x140] sm:$0xff]
    %v214 = vld [vmem:[#allocation6 + $0x148] sm:$0xff]
    %v215 = vld [vmem:[#allocation6 + $0x150] sm:$0xff]
    %v216 = vld [vmem:[#allocation6 + $0x158] sm:$0xff]
    %v217 = vld [vmem:[#allocation6 + $0x160] sm:$0xff]
    %v218 = vld [vmem:[#allocation6 + $0x168] sm:$0xff]
    %v219 = vld [vmem:[#allocation6 + $0x170] sm:$0xff]
    %v220 = vld [vmem:[#allocation6 + $0x178] sm:$0xff]
    %v221 = vld [vmem:[#allocation6 + $0x180] sm:$0xff]
    %v222 = vld [vmem:[#allocation6 + $0x188] sm:$0xff]
    %v223 = vld [vmem:[#allocation6 + $0x190] sm:$0xff]
    %v224 = vld [vmem:[#allocation6 + $0x198] sm:$0xff]
    %v225 = vld [vmem:[#allocation6 + $0x1a0] sm:$0xff]
    %v226 = vld [vmem:[#allocation6 + $0x1a8] sm:$0xff]
    %v227 = vld [vmem:[#allocation6 + $0x1b0] sm:$0xff]
    %v228 = vld [vmem:[#allocation6 + $0x1b8] sm:$0xff]
    %v229 = vld [vmem:[#allocation6 + $0x1c0] sm:$0xff]
    %v230 = vld [vmem:[#allocation6 + $0x1c8] sm:$0xff]
    %v231 = vld [vmem:[#allocation6 + $0x1d0] sm:$0xff]
    %v232 = vld [vmem:[#allocation6 + $0x1d8] sm:$0xff]
    %v233 = vld [vmem:[#allocation6 + $0x1e0] sm:$0xff]
    %v234 = vld [vmem:[#allocation6 + $0x1e8] sm:$0xff]
    %v235 = vld [vmem:[#allocation6 + $0x1f0] sm:$0xff]
    %v236 = vld [vmem:[#allocation6 + $0x1f8] sm:$0xff]
    %v237 = vld [vmem:[#allocation12] sm:$0xff]
    %v240 = vunpack.c.l.b16 %v167
    %v241 = vunpack.c.l.b16 %v168
    %v242 = vpack.c.b16 %v241, %v240
    %v245 = vunpack.c.l.b16 %v171
    %v246 = vunpack.c.l.b16 %v172
    %v247 = vpack.c.b16 %v246, %v245
    %vm249 = vcmask 130048
    %v251 = vsel %vm249, %v242, 0
    %253 = vmatprep.subr.bf16.mxu0 0
    %254 = vmatpush1.bf16.msra.mxu0 0
    %255 = vmatprep.subr.bf16.mxu0 0
    %256 = vmatpush1.bf16.msra.mxu0 0
    %257 = vmatprep.subr.bf16.mxu0 0
    %258 = vmatpush1.bf16.msra.mxu0 0
    %259 = vmatprep.subr.bf16.mxu0 0
    %260 = vmatpush1.bf16.msra.mxu0 0
    %261 = vmatprep.subr.bf16.mxu0 0
    %262 = vmatpush1.bf16.msra.mxu0 0
    %263 = vmatprep.subr.bf16.mxu0 0
    %264 = vmatpush1.bf16.msra.mxu0 0
    %265 = vmatprep.subr.bf16.mxu0 0
    %266 = vmatpush1.bf16.msra.mxu0 0
    %267 = vmatprep.subr.bf16.mxu0 0
    %268 = vmatpush1.bf16.msra.mxu0 %v247
    %269 = vmatprep.subr.bf16.mxu0 0
    %270 = vmatpush2.bf16.msra.mxu0 0
    %271 = vmatprep.subr.bf16.mxu0 0
    %272 = vmatpush2.bf16.msra.mxu0 0
    %273 = vmatprep.subr.bf16.mxu0 0
    %274 = vmatpush2.bf16.msra.mxu0 0
    %275 = vmatprep.subr.bf16.mxu0 0
    %276 = vmatpush2.bf16.msra.mxu0 0
    %277 = vmatprep.subr.bf16.mxu0 0
    %278 = vmatpush2.bf16.msra.mxu0 0
    %279 = vmatprep.subr.bf16.mxu0 0
    %280 = vmatpush2.bf16.msra.mxu0 0
    %281 = vmatprep.subr.bf16.mxu0 0
    %282 = vmatpush2.bf16.msra.mxu0 0
    %283 = vmatprep.subr.bf16.mxu0 0
    %284 = vmatpush2.bf16.msra.mxu0 0
    %285 = vmatprep.mubr.bf16.mxu0 0
    %286 = vmatmul.mubr.bf16.gmra.mxu0 %v251
    %v287 = vpop.f32.mrf.mxu0
    %v288 = vadd.f32 0.0, %v287
    %v289 = vpop.f32.mrf.mxu0
    %v290 = vpop.f32.mrf.mxu0
    %v291 = vadd.f32 0.0, %v290
    %v292 = vpop.f32.mrf.mxu0
    %293 = vdwg.mxu0
    %v294 = vpack.c.bf16 %v291, %v288
    %v296 = vlaneseq
    %v297 = vshrl.u32 %v296, 7
    %v298 = vsub.s32 0, %v297
    %v299 = vrot.slane %v237, %v298
    %v300 = vlaneseq
    %v301 = vshrl.u32 %v300, 7
    %v302 = vsub.s32 1, %v301
    %v303 = vrot.slane %v237, %v302
    %v304 = vlaneseq
    %v305 = vshrl.u32 %v304, 7
    %v306 = vsub.s32 2, %v305
    %v307 = vrot.slane %v237, %v306
    %v308 = vlaneseq
    %v309 = vshrl.u32 %v308, 7
    %v310 = vsub.s32 3, %v309
    %v311 = vrot.slane %v237, %v310
    %v312 = vlaneseq
    %v313 = vshrl.u32 %v312, 7
    %v314 = vsub.s32 4, %v313
    %v315 = vrot.slane %v237, %v314
    %v316 = vlaneseq
    %v317 = vshrl.u32 %v316, 7
    %v318 = vsub.s32 5, %v317
    %v319 = vrot.slane %v237, %v318
    %v320 = vlaneseq
    %v321 = vshrl.u32 %v320, 7
    %v322 = vsub.s32 6, %v321
    %v323 = vrot.slane %v237, %v322
    %v324 = vlaneseq
    %v325 = vshrl.u32 %v324, 7
    %v326 = vsub.s32 7, %v325
    %v327 = vrot.slane %v237, %v326
    %v400 = vunpack.c.l.b16 %v173
    %v401 = vunpack.c.h.b16 %v173
    %v402 = vunpack.c.l.b16 %v174
    %v403 = vunpack.c.h.b16 %v174
    %v404 = vunpack.c.l.b16 %v175
    %v405 = vunpack.c.h.b16 %v175
    %v406 = vunpack.c.l.b16 %v176
    %v407 = vunpack.c.h.b16 %v176
    %v408 = vunpack.c.l.b16 %v177
    %v409 = vunpack.c.h.b16 %v177
    %v410 = vunpack.c.l.b16 %v178
    %v411 = vunpack.c.h.b16 %v178
    %v412 = vunpack.c.l.b16 %v179
    %v413 = vunpack.c.h.b16 %v179
    %v414 = vunpack.c.l.b16 %v180
    %v415 = vunpack.c.h.b16 %v180
    %v416 = vunpack.c.l.b16 %v181
    %v417 = vunpack.c.h.b16 %v181
    %v418 = vunpack.c.l.b16 %v182
    %v419 = vunpack.c.h.b16 %v182
    %v420 = vunpack.c.l.b16 %v183
    %v421 = vunpack.c.h.b16 %v183
    %v422 = vunpack.c.l.b16 %v184
    %v423 = vunpack.c.h.b16 %v184
    %v424 = vunpack.c.l.b16 %v185
    %v425 = vunpack.c.h.b16 %v185
    %v426 = vunpack.c.l.b16 %v186
    %v427 = vunpack.c.h.b16 %v186
    %v428 = vunpack.c.l.b16 %v187
    %v429 = vunpack.c.h.b16 %v187
    %v430 = vunpack.c.l.b16 %v188
    %v431 = vunpack.c.h.b16 %v188
    %v432 = vunpack.c.l.b16 %v189
    %v433 = vunpack.c.h.b16 %v189
    %v434 = vunpack.c.l.b16 %v190
    %v435 = vunpack.c.h.b16 %v190
    %v436 = vunpack.c.l.b16 %v191
    %v437 = vunpack.c.h.b16 %v191
    %v438 = vunpack.c.l.b16 %v192
    %v439 = vunpack.c.h.b16 %v192
    %v440 = vunpack.c.l.b16 %v193
    %v441 = vunpack.c.h.b16 %v193
    %v442 = vunpack.c.l.b16 %v194
    %v443 = vunpack.c.h.b16 %v194
    %v444 = vunpack.c.l.b16 %v195
    %v445 = vunpack.c.h.b16 %v195
    %v446 = vunpack.c.l.b16 %v196
    %v447 = vunpack.c.h.b16 %v196
    %v448 = vunpack.c.l.b16 %v197
    %v449 = vunpack.c.h.b16 %v197
    %v450 = vunpack.c.l.b16 %v198
    %v451 = vunpack.c.h.b16 %v198
    %v452 = vunpack.c.l.b16 %v199
    %v453 = vunpack.c.h.b16 %v199
    %v454 = vunpack.c.l.b16 %v200
    %v455 = vunpack.c.h.b16 %v200
    %v456 = vunpack.c.l.b16 %v201
    %v457 = vunpack.c.h.b16 %v201
    %v458 = vunpack.c.l.b16 %v202
    %v459 = vunpack.c.h.b16 %v202
    %v460 = vunpack.c.l.b16 %v203
    %v461 = vunpack.c.h.b16 %v203
    %v462 = vunpack.c.l.b16 %v204
    %v463 = vunpack.c.h.b16 %v204
    %v464 = vunpack.c.l.b16 %v205
    %v465 = vunpack.c.h.b16 %v205
    %v466 = vunpack.c.l.b16 %v206
    %v467 = vunpack.c.h.b16 %v206
    %v468 = vunpack.c.l.b16 %v207
    %v469 = vunpack.c.h.b16 %v207
    %v470 = vunpack.c.l.b16 %v208
    %v471 = vunpack.c.h.b16 %v208
    %v472 = vunpack.c.l.b16 %v209
    %v473 = vunpack.c.h.b16 %v209
    %v474 = vunpack.c.l.b16 %v210
    %v475 = vunpack.c.h.b16 %v210
    %v476 = vunpack.c.l.b16 %v211
    %v477 = vunpack.c.h.b16 %v211
    %v478 = vunpack.c.l.b16 %v212
    %v479 = vunpack.c.h.b16 %v212
    %v480 = vunpack.c.l.b16 %v213
    %v481 = vunpack.c.h.b16 %v213
    %v482 = vunpack.c.l.b16 %v214
    %v483 = vunpack.c.h.b16 %v214
    %v484 = vunpack.c.l.b16 %v215
    %v485 = vunpack.c.h.b16 %v215
    %v486 = vunpack.c.l.b16 %v216
    %v487 = vunpack.c.h.b16 %v216
    %v488 = vunpack.c.l.b16 %v217
    %v489 = vunpack.c.h.b16 %v217
    %v490 = vunpack.c.l.b16 %v218
    %v491 = vunpack.c.h.b16 %v218
    %v492 = vunpack.c.l.b16 %v219
    %v493 = vunpack.c.h.b16 %v219
    %v494 = vunpack.c.l.b16 %v220
    %v495 = vunpack.c.h.b16 %v220
    %v496 = vunpack.c.l.b16 %v221
    %v497 = vunpack.c.h.b16 %v221
    %v498 = vunpack.c.l.b16 %v222
    %v499 = vunpack.c.h.b16 %v222
    %v500 = vunpack.c.l.b16 %v223
    %v501 = vunpack.c.h.b16 %v223
    %v502 = vunpack.c.l.b16 %v224
    %v503 = vunpack.c.h.b16 %v224
    %v504 = vunpack.c.l.b16 %v225
    %v505 = vunpack.c.h.b16 %v225
    %v506 = vunpack.c.l.b16 %v226
    %v507 = vunpack.c.h.b16 %v226
    %v508 = vunpack.c.l.b16 %v227
    %v509 = vunpack.c.h.b16 %v227
    %v510 = vunpack.c.l.b16 %v228
    %v511 = vunpack.c.h.b16 %v228
    %v512 = vunpack.c.l.b16 %v229
    %v513 = vunpack.c.h.b16 %v229
    %v514 = vunpack.c.l.b16 %v230
    %v515 = vunpack.c.h.b16 %v230
    %v516 = vunpack.c.l.b16 %v231
    %v517 = vunpack.c.h.b16 %v231
    %v518 = vunpack.c.l.b16 %v232
    %v519 = vunpack.c.h.b16 %v232
    %v520 = vunpack.c.l.b16 %v233
    %v521 = vunpack.c.h.b16 %v233
    %v522 = vunpack.c.l.b16 %v234
    %v523 = vunpack.c.h.b16 %v234
    %v524 = vunpack.c.l.b16 %v235
    %v525 = vunpack.c.h.b16 %v235
    %v526 = vunpack.c.l.b16 %v236
    %v527 = vunpack.c.h.b16 %v236
    %v528 = vpack.c.b16 %v408, %v400
    %v529 = vpack.c.b16 %v409, %v401
    %v530 = vpack.c.b16 %v410, %v402
    %v531 = vpack.c.b16 %v411, %v403
    %v532 = vpack.c.b16 %v412, %v404
    %v533 = vpack.c.b16 %v413, %v405
    %v534 = vpack.c.b16 %v414, %v406
    %v535 = vpack.c.b16 %v415, %v407
    %v536 = vpack.c.b16 %v424, %v416
    %v537 = vpack.c.b16 %v425, %v417
    %v538 = vpack.c.b16 %v426, %v418
    %v539 = vpack.c.b16 %v427, %v419
    %v540 = vpack.c.b16 %v428, %v420
    %v541 = vpack.c.b16 %v429, %v421
    %v542 = vpack.c.b16 %v430, %v422
    %v543 = vpack.c.b16 %v431, %v423
    %v544 = vpack.c.b16 %v440, %v432
    %v545 = vpack.c.b16 %v441, %v433
    %v546 = vpack.c.b16 %v442, %v434
    %v547 = vpack.c.b16 %v443, %v435
    %v548 = vpack.c.b16 %v444, %v436
    %v549 = vpack.c.b16 %v445, %v437
    %v550 = vpack.c.b16 %v446, %v438
    %v551 = vpack.c.b16 %v447, %v439
    %v552 = vpack.c.b16 %v456, %v448
    %v553 = vpack.c.b16 %v457, %v449
    %v554 = vpack.c.b16 %v458, %v450
    %v555 = vpack.c.b16 %v459, %v451
    %v556 = vpack.c.b16 %v460, %v452
    %v557 = vpack.c.b16 %v461, %v453
    %v558 = vpack.c.b16 %v462, %v454
    %v559 = vpack.c.b16 %v463, %v455
    %v560 = vpack.c.b16 %v472, %v464
    %v561 = vpack.c.b16 %v473, %v465
    %v562 = vpack.c.b16 %v474, %v466
    %v563 = vpack.c.b16 %v475, %v467
    %v564 = vpack.c.b16 %v476, %v468
    %v565 = vpack.c.b16 %v477, %v469
    %v566 = vpack.c.b16 %v478, %v470
    %v567 = vpack.c.b16 %v479, %v471
    %v568 = vpack.c.b16 %v488, %v480
    %v569 = vpack.c.b16 %v489, %v481
    %v570 = vpack.c.b16 %v490, %v482
    %v571 = vpack.c.b16 %v491, %v483
    %v572 = vpack.c.b16 %v492, %v484
    %v573 = vpack.c.b16 %v493, %v485
    %v574 = vpack.c.b16 %v494, %v486
    %v575 = vpack.c.b16 %v495, %v487
    %v576 = vpack.c.b16 %v504, %v496
    %v577 = vpack.c.b16 %v505, %v497
    %v578 = vpack.c.b16 %v506, %v498
    %v579 = vpack.c.b16 %v507, %v499
    %v580 = vpack.c.b16 %v508, %v500
    %v581 = vpack.c.b16 %v509, %v501
    %v582 = vpack.c.b16 %v510, %v502
    %v583 = vpack.c.b16 %v511, %v503
    %v584 = vpack.c.b16 %v520, %v512
    %v585 = vpack.c.b16 %v521, %v513
    %v586 = vpack.c.b16 %v522, %v514
    %v587 = vpack.c.b16 %v523, %v515
    %v588 = vpack.c.b16 %v524, %v516
    %v589 = vpack.c.b16 %v525, %v517
    %v590 = vpack.c.b16 %v526, %v518
    %v591 = vpack.c.b16 %v527, %v519
    %656 = vmatprep.subr.bf16.mxu0 %v585
    %657 = vmatpush1.bf16.msra.mxu0 %v584
    %658 = vmatprep.subr.bf16.mxu0 %v577
    %659 = vmatpush1.bf16.msra.mxu0 %v576
    %660 = vmatprep.subr.bf16.mxu0 %v569
    %661 = vmatpush1.bf16.msra.mxu0 %v568
    %662 = vmatprep.subr.bf16.mxu0 %v561
    %663 = vmatpush1.bf16.msra.mxu0 %v560
    %664 = vmatprep.subr.bf16.mxu0 %v553
    %665 = vmatpush1.bf16.msra.mxu0 %v552
    %666 = vmatprep.subr.bf16.mxu0 %v545
    %667 = vmatpush1.bf16.msra.mxu0 %v544
    %668 = vmatprep.subr.bf16.mxu0 %v537
    %669 = vmatpush1.bf16.msra.mxu0 %v536
    %670 = vmatprep.subr.bf16.mxu0 %v529
    %671 = vmatpush1.bf16.msra.mxu0 %v528
    %672 = vmatprep.subr.bf16.mxu0 0
    %673 = vmatpush2.bf16.msra.mxu0 0
    %674 = vmatprep.subr.bf16.mxu0 0
    %675 = vmatpush2.bf16.msra.mxu0 0
    %676 = vmatprep.subr.bf16.mxu0 0
    %677 = vmatpush2.bf16.msra.mxu0 0
    %678 = vmatprep.subr.bf16.mxu0 0
    %679 = vmatpush2.bf16.msra.mxu0 0
    %680 = vmatprep.subr.bf16.mxu0 0
    %681 = vmatpush2.bf16.msra.mxu0 0
    %682 = vmatprep.subr.bf16.mxu0 0
    %683 = vmatpush2.bf16.msra.mxu0 0
    %684 = vmatprep.subr.bf16.mxu0 0
    %685 = vmatpush2.bf16.msra.mxu0 0
    %686 = vmatprep.subr.bf16.mxu0 0
    %687 = vmatpush2.bf16.msra.mxu0 0
    %688 = vmatprep.mubr.bf16.mxu0 0
    %689 = vmatmul.mubr.bf16.gmra.mxu0 %v294
    %v690 = vpop.f32.mrf.mxu0
    %v691 = vadd.f32 %v299, %v690
    %v692 = vpop.f32.mrf.mxu0
    %v693 = vadd.f32 %v303, %v692
    %v694 = vpop.f32.mrf.mxu0
    %v695 = vadd.f32 %v299, %v694
    %v696 = vpop.f32.mrf.mxu0
    %v697 = vadd.f32 %v303, %v696
    %698 = vdwg.mxu0
    %699 = vmatprep.subr.bf16.mxu0 %v587
    %700 = vmatpush1.bf16.msra.mxu0 %v586
    %701 = vmatprep.subr.bf16.mxu0 %v579
    %702 = vmatpush1.bf16.msra.mxu0 %v578
    %703 = vmatprep.subr.bf16.mxu0 %v571
    %704 = vmatpush1.bf16.msra.mxu0 %v570
    %705 = vmatprep.subr.bf16.mxu0 %v563
    %706 = vmatpush1.bf16.msra.mxu0 %v562
    %707 = vmatprep.subr.bf16.mxu0 %v555
    %708 = vmatpush1.bf16.msra.mxu0 %v554
    %709 = vmatprep.subr.bf16.mxu0 %v547
    %710 = vmatpush1.bf16.msra.mxu0 %v546
    %711 = vmatprep.subr.bf16.mxu0 %v539
    %712 = vmatpush1.bf16.msra.mxu0 %v538
    %713 = vmatprep.subr.bf16.mxu0 %v531
    %714 = vmatpush1.bf16.msra.mxu0 %v530
    %715 = vmatprep.subr.bf16.mxu0 0
    %716 = vmatpush2.bf16.msra.mxu0 0
    %717 = vmatprep.subr.bf16.mxu0 0
    %718 = vmatpush2.bf16.msra.mxu0 0
    %719 = vmatprep.subr.bf16.mxu0 0
    %720 = vmatpush2.bf16.msra.mxu0 0
    %721 = vmatprep.subr.bf16.mxu0 0
    %722 = vmatpush2.bf16.msra.mxu0 0
    %723 = vmatprep.subr.bf16.mxu0 0
    %724 = vmatpush2.bf16.msra.mxu0 0
    %725 = vmatprep.subr.bf16.mxu0 0
    %726 = vmatpush2.bf16.msra.mxu0 0
    %727 = vmatprep.subr.bf16.mxu0 0
    %728 = vmatpush2.bf16.msra.mxu0 0
    %729 = vmatprep.subr.bf16.mxu0 0
    %730 = vmatpush2.bf16.msra.mxu0 0
    %731 = vmatprep.mubr.bf16.mxu0 0
    %732 = vmatmul.mubr.bf16.gmra.mxu0 %v294
    %v733 = vpop.f32.mrf.mxu0
    %v734 = vadd.f32 %v307, %v733
    %v735 = vpop.f32.mrf.mxu0
    %v736 = vadd.f32 %v311, %v735
    %v737 = vpop.f32.mrf.mxu0
    %v738 = vadd.f32 %v307, %v737
    %v739 = vpop.f32.mrf.mxu0
    %v740 = vadd.f32 %v311, %v739
    %741 = vdwg.mxu0
    %742 = vmatprep.subr.bf16.mxu0 %v589
    %743 = vmatpush1.bf16.msra.mxu0 %v588
    %744 = vmatprep.subr.bf16.mxu0 %v581
    %745 = vmatpush1.bf16.msra.mxu0 %v580
    %746 = vmatprep.subr.bf16.mxu0 %v573
    %747 = vmatpush1.bf16.msra.mxu0 %v572
    %748 = vmatprep.subr.bf16.mxu0 %v565
    %749 = vmatpush1.bf16.msra.mxu0 %v564
    %750 = vmatprep.subr.bf16.mxu0 %v557
    %751 = vmatpush1.bf16.msra.mxu0 %v556
    %752 = vmatprep.subr.bf16.mxu0 %v549
    %753 = vmatpush1.bf16.msra.mxu0 %v548
    %754 = vmatprep.subr.bf16.mxu0 %v541
    %755 = vmatpush1.bf16.msra.mxu0 %v540
    %756 = vmatprep.subr.bf16.mxu0 %v533
    %757 = vmatpush1.bf16.msra.mxu0 %v532
    %758 = vmatprep.subr.bf16.mxu0 0
    %759 = vmatpush2.bf16.msra.mxu0 0
    %760 = vmatprep.subr.bf16.mxu0 0
    %761 = vmatpush2.bf16.msra.mxu0 0
    %762 = vmatprep.subr.bf16.mxu0 0
    %763 = vmatpush2.bf16.msra.mxu0 0
    %764 = vmatprep.subr.bf16.mxu0 0
    %765 = vmatpush2.bf16.msra.mxu0 0
    %766 = vmatprep.subr.bf16.mxu0 0
    %767 = vmatpush2.bf16.msra.mxu0 0
    %768 = vmatprep.subr.bf16.mxu0 0
    %769 = vmatpush2.bf16.msra.mxu0 0
    %770 = vmatprep.subr.bf16.mxu0 0
    %771 = vmatpush2.bf16.msra.mxu0 0
    %772 = vmatprep.subr.bf16.mxu0 0
    %773 = vmatpush2.bf16.msra.mxu0 0
    %774 = vmatprep.mubr.bf16.mxu0 0
    %775 = vmatmul.mubr.bf16.gmra.mxu0 %v294
    %v776 = vpop.f32.mrf.mxu0
    %v777 = vadd.f32 %v315, %v776
    %v778 = vpop.f32.mrf.mxu0
    %v779 = vadd.f32 %v319, %v778
    %v780 = vpop.f32.mrf.mxu0
    %v781 = vadd.f32 %v315, %v780
    %v782 = vpop.f32.mrf.mxu0
    %v783 = vadd.f32 %v319, %v782
    %784 = vdwg.mxu0
    %785 = vmatprep.subr.bf16.mxu0 %v591
    %786 = vmatpush1.bf16.msra.mxu0 %v590
    %787 = vmatprep.subr.bf16.mxu0 %v583
    %788 = vmatpush1.bf16.msra.mxu0 %v582
    %789 = vmatprep.subr.bf16.mxu0 %v575
    %790 = vmatpush1.bf16.msra.mxu0 %v574
    %791 = vmatprep.subr.bf16.mxu0 %v567
    %792 = vmatpush1.bf16.msra.mxu0 %v566
    %793 = vmatprep.subr.bf16.mxu0 %v559
    %794 = vmatpush1.bf16.msra.mxu0 %v558
    %795 = vmatprep.subr.bf16.mxu0 %v551
    %796 = vmatpush1.bf16.msra.mxu0 %v550
    %797 = vmatprep.subr.bf16.mxu0 %v543
    %798 = vmatpush1.bf16.msra.mxu0 %v542
    %799 = vmatprep.subr.bf16.mxu0 %v535
    %800 = vmatpush1.bf16.msra.mxu0 %v534
    %801 = vmatprep.subr.bf16.mxu0 0
    %802 = vmatpush2.bf16.msra.mxu0 0
    %803 = vmatprep.subr.bf16.mxu0 0
    %804 = vmatpush2.bf16.msra.mxu0 0
    %805 = vmatprep.subr.bf16.mxu0 0
    %806 = vmatpush2.bf16.msra.mxu0 0
    %807 = vmatprep.subr.bf16.mxu0 0
    %808 = vmatpush2.bf16.msra.mxu0 0
    %809 = vmatprep.subr.bf16.mxu0 0
    %810 = vmatpush2.bf16.msra.mxu0 0
    %811 = vmatprep.subr.bf16.mxu0 0
    %812 = vmatpush2.bf16.msra.mxu0 0
    %813 = vmatprep.subr.bf16.mxu0 0
    %814 = vmatpush2.bf16.msra.mxu0 0
    %815 = vmatprep.subr.bf16.mxu0 0
    %816 = vmatpush2.bf16.msra.mxu0 0
    %817 = vmatprep.mubr.bf16.mxu0 0
    %818 = vmatmul.mubr.bf16.gmra.mxu0 %v294
    %v819 = vpop.f32.mrf.mxu0
    %v820 = vadd.f32 %v323, %v819
    %v821 = vpop.f32.mrf.mxu0
    %v822 = vadd.f32 %v327, %v821
    %v823 = vpop.f32.mrf.mxu0
    %v824 = vadd.f32 %v323, %v823
    %v825 = vpop.f32.mrf.mxu0
    %v826 = vadd.f32 %v327, %v825
    %827 = vdwg.mxu0
    %v828 = vmax.f32 %v691, 0.0
    %v829 = vmax.f32 %v693, 0.0
    %v830 = vmax.f32 %v734, 0.0
    %v831 = vmax.f32 %v736, 0.0
    %v832 = vmax.f32 %v777, 0.0
    %v833 = vmax.f32 %v779, 0.0
    %v834 = vmax.f32 %v820, 0.0
    %v835 = vmax.f32 %v822, 0.0
    %v836 = vmax.f32 %v695, 0.0
    %v837 = vmax.f32 %v697, 0.0
    %v838 = vmax.f32 %v738, 0.0
    %v839 = vmax.f32 %v740, 0.0
    %v840 = vmax.f32 %v781, 0.0
    %v841 = vmax.f32 %v783, 0.0
    %v842 = vmax.f32 %v824, 0.0
    %v843 = vmax.f32 %v826, 0.0
    %v844 = vld [vmem:[#allocation7] sm:$0xff]
    %v845 = vld [vmem:[#allocation7 + $0x8] sm:$0xff]
    %v846 = vld [vmem:[#allocation7 + $0x10] sm:$0xff]
    %v847 = vld [vmem:[#allocation7 + $0x18] sm:$0xff]
    %v848 = vld [vmem:[#allocation7 + $0x20] sm:$0xff]
    %v849 = vld [vmem:[#allocation7 + $0x28] sm:$0xff]
    %v850 = vld [vmem:[#allocation7 + $0x30] sm:$0xff]
    %v851 = vld [vmem:[#allocation7 + $0x38] sm:$0xff]
    %v852 = vld [vmem:[#allocation7 + $0x40] sm:$0xff]
    %v853 = vld [vmem:[#allocation7 + $0x48] sm:$0xff]
    %v854 = vld [vmem:[#allocation7 + $0x50] sm:$0xff]
    %v855 = vld [vmem:[#allocation7 + $0x58] sm:$0xff]
    %v856 = vld [vmem:[#allocation7 + $0x60] sm:$0xff]
    %v857 = vld [vmem:[#allocation7 + $0x68] sm:$0xff]
    %v858 = vld [vmem:[#allocation7 + $0x70] sm:$0xff]
    %v859 = vld [vmem:[#allocation7 + $0x78] sm:$0xff]
    %v860 = vld [vmem:[#allocation7 + $0x80] sm:$0xff]
    %v861 = vld [vmem:[#allocation7 + $0x88] sm:$0xff]
    %v862 = vld [vmem:[#allocation7 + $0x90] sm:$0xff]
    %v863 = vld [vmem:[#allocation7 + $0x98] sm:$0xff]
    %v864 = vld [vmem:[#allocation7 + $0xa0] sm:$0xff]
    %v865 = vld [vmem:[#allocation7 + $0xa8] sm:$0xff]
    %v866 = vld [vmem:[#allocation7 + $0xb0] sm:$0xff]
    %v867 = vld [vmem:[#allocation7 + $0xb8] sm:$0xff]
    %v868 = vld [vmem:[#allocation7 + $0xc0] sm:$0xff]
    %v869 = vld [vmem:[#allocation7 + $0xc8] sm:$0xff]
    %v870 = vld [vmem:[#allocation7 + $0xd0] sm:$0xff]
    %v871 = vld [vmem:[#allocation7 + $0xd8] sm:$0xff]
    %v872 = vld [vmem:[#allocation7 + $0xe0] sm:$0xff]
    %v873 = vld [vmem:[#allocation7 + $0xe8] sm:$0xff]
    %v874 = vld [vmem:[#allocation7 + $0xf0] sm:$0xff]
    %v875 = vld [vmem:[#allocation7 + $0xf8] sm:$0xff]
    %v876 = vld [vmem:[#allocation7 + $0x100] sm:$0xff]
    %v877 = vld [vmem:[#allocation7 + $0x108] sm:$0xff]
    %v878 = vld [vmem:[#allocation7 + $0x110] sm:$0xff]
    %v879 = vld [vmem:[#allocation7 + $0x118] sm:$0xff]
    %v880 = vld [vmem:[#allocation7 + $0x120] sm:$0xff]
    %v881 = vld [vmem:[#allocation7 + $0x128] sm:$0xff]
    %v882 = vld [vmem:[#allocation7 + $0x130] sm:$0xff]
    %v883 = vld [vmem:[#allocation7 + $0x138] sm:$0xff]
    %v884 = vld [vmem:[#allocation7 + $0x140] sm:$0xff]
    %v885 = vld [vmem:[#allocation7 + $0x148] sm:$0xff]
    %v886 = vld [vmem:[#allocation7 + $0x150] sm:$0xff]
    %v887 = vld [vmem:[#allocation7 + $0x158] sm:$0xff]
    %v888 = vld [vmem:[#allocation7 + $0x160] sm:$0xff]
    %v889 = vld [vmem:[#allocation7 + $0x168] sm:$0xff]
    %v890 = vld [vmem:[#allocation7 + $0x170] sm:$0xff]
    %v891 = vld [vmem:[#allocation7 + $0x178] sm:$0xff]
    %v892 = vld [vmem:[#allocation7 + $0x180] sm:$0xff]
    %v893 = vld [vmem:[#allocation7 + $0x188] sm:$0xff]
    %v894 = vld [vmem:[#allocation7 + $0x190] sm:$0xff]
    %v895 = vld [vmem:[#allocation7 + $0x198] sm:$0xff]
    %v896 = vld [vmem:[#allocation7 + $0x1a0] sm:$0xff]
    %v897 = vld [vmem:[#allocation7 + $0x1a8] sm:$0xff]
    %v898 = vld [vmem:[#allocation7 + $0x1b0] sm:$0xff]
    %v899 = vld [vmem:[#allocation7 + $0x1b8] sm:$0xff]
    %v900 = vld [vmem:[#allocation7 + $0x1c0] sm:$0xff]
    %v901 = vld [vmem:[#allocation7 + $0x1c8] sm:$0xff]
    %v902 = vld [vmem:[#allocation7 + $0x1d0] sm:$0xff]
    %v903 = vld [vmem:[#allocation7 + $0x1d8] sm:$0xff]
    %v904 = vld [vmem:[#allocation7 + $0x1e0] sm:$0xff]
    %v905 = vld [vmem:[#allocation7 + $0x1e8] sm:$0xff]
    %v906 = vld [vmem:[#allocation7 + $0x1f0] sm:$0xff]
    %v907 = vld [vmem:[#allocation7 + $0x1f8] sm:$0xff]
    %v908 = vld [vmem:[#allocation7 + $0x200] sm:$0xff]
    %v909 = vld [vmem:[#allocation7 + $0x208] sm:$0xff]
    %v910 = vld [vmem:[#allocation7 + $0x210] sm:$0xff]
    %v911 = vld [vmem:[#allocation7 + $0x218] sm:$0xff]
    %v912 = vld [vmem:[#allocation7 + $0x220] sm:$0xff]
    %v913 = vld [vmem:[#allocation7 + $0x228] sm:$0xff]
    %v914 = vld [vmem:[#allocation7 + $0x230] sm:$0xff]
    %v915 = vld [vmem:[#allocation7 + $0x238] sm:$0xff]
    %v916 = vld [vmem:[#allocation7 + $0x240] sm:$0xff]
    %v917 = vld [vmem:[#allocation7 + $0x248] sm:$0xff]
    %v918 = vld [vmem:[#allocation7 + $0x250] sm:$0xff]
    %v919 = vld [vmem:[#allocation7 + $0x258] sm:$0xff]
    %v920 = vld [vmem:[#allocation7 + $0x260] sm:$0xff]
    %v921 = vld [vmem:[#allocation7 + $0x268] sm:$0xff]
    %v922 = vld [vmem:[#allocation7 + $0x270] sm:$0xff]
    %v923 = vld [vmem:[#allocation7 + $0x278] sm:$0xff]
    %v924 = vld [vmem:[#allocation7 + $0x280] sm:$0xff]
    %v925 = vld [vmem:[#allocation7 + $0x288] sm:$0xff]
    %v926 = vld [vmem:[#allocation7 + $0x290] sm:$0xff]
    %v927 = vld [vmem:[#allocation7 + $0x298] sm:$0xff]
    %v928 = vld [vmem:[#allocation7 + $0x2a0] sm:$0xff]
    %v929 = vld [vmem:[#allocation7 + $0x2a8] sm:$0xff]
    %v930 = vld [vmem:[#allocation7 + $0x2b0] sm:$0xff]
    %v931 = vld [vmem:[#allocation7 + $0x2b8] sm:$0xff]
    %v932 = vld [vmem:[#allocation7 + $0x2c0] sm:$0xff]
    %v933 = vld [vmem:[#allocation7 + $0x2c8] sm:$0xff]
    %v934 = vld [vmem:[#allocation7 + $0x2d0] sm:$0xff]
    %v935 = vld [vmem:[#allocation7 + $0x2d8] sm:$0xff]
    %v936 = vld [vmem:[#allocation7 + $0x2e0] sm:$0xff]
    %v937 = vld [vmem:[#allocation7 + $0x2e8] sm:$0xff]
    %v938 = vld [vmem:[#allocation7 + $0x2f0] sm:$0xff]
    %v939 = vld [vmem:[#allocation7 + $0x2f8] sm:$0xff]
    %v940 = vld [vmem:[#allocation7 + $0x300] sm:$0xff]
    %v941 = vld [vmem:[#allocation7 + $0x308] sm:$0xff]
    %v942 = vld [vmem:[#allocation7 + $0x310] sm:$0xff]
    %v943 = vld [vmem:[#allocation7 + $0x318] sm:$0xff]
    %v944 = vld [vmem:[#allocation7 + $0x320] sm:$0xff]
    %v945 = vld [vmem:[#allocation7 + $0x328] sm:$0xff]
    %v946 = vld [vmem:[#allocation7 + $0x330] sm:$0xff]
    %v947 = vld [vmem:[#allocation7 + $0x338] sm:$0xff]
    %v948 = vld [vmem:[#allocation7 + $0x340] sm:$0xff]
    %v949 = vld [vmem:[#allocation7 + $0x348] sm:$0xff]
    %v950 = vld [vmem:[#allocation7 + $0x350] sm:$0xff]
    %v951 = vld [vmem:[#allocation7 + $0x358] sm:$0xff]
    %v952 = vld [vmem:[#allocation7 + $0x360] sm:$0xff]
    %v953 = vld [vmem:[#allocation7 + $0x368] sm:$0xff]
    %v954 = vld [vmem:[#allocation7 + $0x370] sm:$0xff]
    %v955 = vld [vmem:[#allocation7 + $0x378] sm:$0xff]
    %v956 = vld [vmem:[#allocation7 + $0x380] sm:$0xff]
    %v957 = vld [vmem:[#allocation7 + $0x388] sm:$0xff]
    %v958 = vld [vmem:[#allocation7 + $0x390] sm:$0xff]
    %v959 = vld [vmem:[#allocation7 + $0x398] sm:$0xff]
    %v960 = vld [vmem:[#allocation7 + $0x3a0] sm:$0xff]
    %v961 = vld [vmem:[#allocation7 + $0x3a8] sm:$0xff]
    %v962 = vld [vmem:[#allocation7 + $0x3b0] sm:$0xff]
    %v963 = vld [vmem:[#allocation7 + $0x3b8] sm:$0xff]
    %v964 = vld [vmem:[#allocation7 + $0x3c0] sm:$0xff]
    %v965 = vld [vmem:[#allocation7 + $0x3c8] sm:$0xff]
    %v966 = vld [vmem:[#allocation7 + $0x3d0] sm:$0xff]
    %v967 = vld [vmem:[#allocation7 + $0x3d8] sm:$0xff]
    %v968 = vld [vmem:[#allocation7 + $0x3e0] sm:$0xff]
    %v969 = vld [vmem:[#allocation7 + $0x3e8] sm:$0xff]
    %v970 = vld [vmem:[#allocation7 + $0x3f0] sm:$0xff]
    %v971 = vld [vmem:[#allocation7 + $0x3f8] sm:$0xff]
    %v972 = vld [vmem:[#allocation7 + $0x400] sm:$0xff]
    %v973 = vld [vmem:[#allocation7 + $0x408] sm:$0xff]
    %v974 = vld [vmem:[#allocation7 + $0x410] sm:$0xff]
    %v975 = vld [vmem:[#allocation7 + $0x418] sm:$0xff]
    %v976 = vld [vmem:[#allocation7 + $0x420] sm:$0xff]
    %v977 = vld [vmem:[#allocation7 + $0x428] sm:$0xff]
    %v978 = vld [vmem:[#allocation7 + $0x430] sm:$0xff]
    %v979 = vld [vmem:[#allocation7 + $0x438] sm:$0xff]
    %v980 = vld [vmem:[#allocation7 + $0x440] sm:$0xff]
    %v981 = vld [vmem:[#allocation7 + $0x448] sm:$0xff]
    %v982 = vld [vmem:[#allocation7 + $0x450] sm:$0xff]
    %v983 = vld [vmem:[#allocation7 + $0x458] sm:$0xff]
    %v984 = vld [vmem:[#allocation7 + $0x460] sm:$0xff]
    %v985 = vld [vmem:[#allocation7 + $0x468] sm:$0xff]
    %v986 = vld [vmem:[#allocation7 + $0x470] sm:$0xff]
    %v987 = vld [vmem:[#allocation7 + $0x478] sm:$0xff]
    %v988 = vld [vmem:[#allocation7 + $0x480] sm:$0xff]
    %v989 = vld [vmem:[#allocation7 + $0x488] sm:$0xff]
    %v990 = vld [vmem:[#allocation7 + $0x490] sm:$0xff]
    %v991 = vld [vmem:[#allocation7 + $0x498] sm:$0xff]
    %v992 = vld [vmem:[#allocation7 + $0x4a0] sm:$0xff]
    %v993 = vld [vmem:[#allocation7 + $0x4a8] sm:$0xff]
    %v994 = vld [vmem:[#allocation7 + $0x4b0] sm:$0xff]
    %v995 = vld [vmem:[#allocation7 + $0x4b8] sm:$0xff]
    %v996 = vld [vmem:[#allocation7 + $0x4c0] sm:$0xff]
    %v997 = vld [vmem:[#allocation7 + $0x4c8] sm:$0xff]
    %v998 = vld [vmem:[#allocation7 + $0x4d0] sm:$0xff]
    %v999 = vld [vmem:[#allocation7 + $0x4d8] sm:$0xff]
    %v1000 = vld [vmem:[#allocation7 + $0x4e0] sm:$0xff]
    %v1001 = vld [vmem:[#allocation7 + $0x4e8] sm:$0xff]
    %v1002 = vld [vmem:[#allocation7 + $0x4f0] sm:$0xff]
    %v1003 = vld [vmem:[#allocation7 + $0x4f8] sm:$0xff]
    %v1004 = vld [vmem:[#allocation7 + $0x500] sm:$0xff]
    %v1005 = vld [vmem:[#allocation7 + $0x508] sm:$0xff]
    %v1006 = vld [vmem:[#allocation7 + $0x510] sm:$0xff]
    %v1007 = vld [vmem:[#allocation7 + $0x518] sm:$0xff]
    %v1008 = vld [vmem:[#allocation7 + $0x520] sm:$0xff]
    %v1009 = vld [vmem:[#allocation7 + $0x528] sm:$0xff]
    %v1010 = vld [vmem:[#allocation7 + $0x530] sm:$0xff]
    %v1011 = vld [vmem:[#allocation7 + $0x538] sm:$0xff]
    %v1012 = vld [vmem:[#allocation7 + $0x540] sm:$0xff]
    %v1013 = vld [vmem:[#allocation7 + $0x548] sm:$0xff]
    %v1014 = vld [vmem:[#allocation7 + $0x550] sm:$0xff]
    %v1015 = vld [vmem:[#allocation7 + $0x558] sm:$0xff]
    %v1016 = vld [vmem:[#allocation7 + $0x560] sm:$0xff]
    %v1017 = vld [vmem:[#allocation7 + $0x568] sm:$0xff]
    %v1018 = vld [vmem:[#allocation7 + $0x570] sm:$0xff]
    %v1019 = vld [vmem:[#allocation7 + $0x578] sm:$0xff]
    %v1020 = vld [vmem:[#allocation7 + $0x580] sm:$0xff]
    %v1021 = vld [vmem:[#allocation7 + $0x588] sm:$0xff]
    %v1022 = vld [vmem:[#allocation7 + $0x590] sm:$0xff]
    %v1023 = vld [vmem:[#allocation7 + $0x598] sm:$0xff]
    %v1024 = vld [vmem:[#allocation7 + $0x5a0] sm:$0xff]
    %v1025 = vld [vmem:[#allocation7 + $0x5a8] sm:$0xff]
    %v1026 = vld [vmem:[#allocation7 + $0x5b0] sm:$0xff]
    %v1027 = vld [vmem:[#allocation7 + $0x5b8] sm:$0xff]
    %v1028 = vld [vmem:[#allocation7 + $0x5c0] sm:$0xff]
    %v1029 = vld [vmem:[#allocation7 + $0x5c8] sm:$0xff]
    %v1030 = vld [vmem:[#allocation7 + $0x5d0] sm:$0xff]
    %v1031 = vld [vmem:[#allocation7 + $0x5d8] sm:$0xff]
    %v1032 = vld [vmem:[#allocation7 + $0x5e0] sm:$0xff]
    %v1033 = vld [vmem:[#allocation7 + $0x5e8] sm:$0xff]
    %v1034 = vld [vmem:[#allocation7 + $0x5f0] sm:$0xff]
    %v1035 = vld [vmem:[#allocation7 + $0x5f8] sm:$0xff]
    %v1036 = vld [vmem:[#allocation7 + $0x600] sm:$0xff]
    %v1037 = vld [vmem:[#allocation7 + $0x608] sm:$0xff]
    %v1038 = vld [vmem:[#allocation7 + $0x610] sm:$0xff]
    %v1039 = vld [vmem:[#allocation7 + $0x618] sm:$0xff]
    %v1040 = vld [vmem:[#allocation7 + $0x620] sm:$0xff]
    %v1041 = vld [vmem:[#allocation7 + $0x628] sm:$0xff]
    %v1042 = vld [vmem:[#allocation7 + $0x630] sm:$0xff]
    %v1043 = vld [vmem:[#allocation7 + $0x638] sm:$0xff]
    %v1044 = vld [vmem:[#allocation7 + $0x640] sm:$0xff]
    %v1045 = vld [vmem:[#allocation7 + $0x648] sm:$0xff]
    %v1046 = vld [vmem:[#allocation7 + $0x650] sm:$0xff]
    %v1047 = vld [vmem:[#allocation7 + $0x658] sm:$0xff]
    %v1048 = vld [vmem:[#allocation7 + $0x660] sm:$0xff]
    %v1049 = vld [vmem:[#allocation7 + $0x668] sm:$0xff]
    %v1050 = vld [vmem:[#allocation7 + $0x670] sm:$0xff]
    %v1051 = vld [vmem:[#allocation7 + $0x678] sm:$0xff]
    %v1052 = vld [vmem:[#allocation7 + $0x680] sm:$0xff]
    %v1053 = vld [vmem:[#allocation7 + $0x688] sm:$0xff]
    %v1054 = vld [vmem:[#allocation7 + $0x690] sm:$0xff]
    %v1055 = vld [vmem:[#allocation7 + $0x698] sm:$0xff]
    %v1056 = vld [vmem:[#allocation7 + $0x6a0] sm:$0xff]
    %v1057 = vld [vmem:[#allocation7 + $0x6a8] sm:$0xff]
    %v1058 = vld [vmem:[#allocation7 + $0x6b0] sm:$0xff]
    %v1059 = vld [vmem:[#allocation7 + $0x6b8] sm:$0xff]
    %v1060 = vld [vmem:[#allocation7 + $0x6c0] sm:$0xff]
    %v1061 = vld [vmem:[#allocation7 + $0x6c8] sm:$0xff]
    %v1062 = vld [vmem:[#allocation7 + $0x6d0] sm:$0xff]
    %v1063 = vld [vmem:[#allocation7 + $0x6d8] sm:$0xff]
    %v1064 = vld [vmem:[#allocation7 + $0x6e0] sm:$0xff]
    %v1065 = vld [vmem:[#allocation7 + $0x6e8] sm:$0xff]
    %v1066 = vld [vmem:[#allocation7 + $0x6f0] sm:$0xff]
    %v1067 = vld [vmem:[#allocation7 + $0x6f8] sm:$0xff]
    %v1068 = vld [vmem:[#allocation7 + $0x700] sm:$0xff]
    %v1069 = vld [vmem:[#allocation7 + $0x708] sm:$0xff]
    %v1070 = vld [vmem:[#allocation7 + $0x710] sm:$0xff]
    %v1071 = vld [vmem:[#allocation7 + $0x718] sm:$0xff]
    %v1072 = vld [vmem:[#allocation7 + $0x720] sm:$0xff]
    %v1073 = vld [vmem:[#allocation7 + $0x728] sm:$0xff]
    %v1074 = vld [vmem:[#allocation7 + $0x730] sm:$0xff]
    %v1075 = vld [vmem:[#allocation7 + $0x738] sm:$0xff]
    %v1076 = vld [vmem:[#allocation7 + $0x740] sm:$0xff]
    %v1077 = vld [vmem:[#allocation7 + $0x748] sm:$0xff]
    %v1078 = vld [vmem:[#allocation7 + $0x750] sm:$0xff]
    %v1079 = vld [vmem:[#allocation7 + $0x758] sm:$0xff]
    %v1080 = vld [vmem:[#allocation7 + $0x760] sm:$0xff]
    %v1081 = vld [vmem:[#allocation7 + $0x768] sm:$0xff]
    %v1082 = vld [vmem:[#allocation7 + $0x770] sm:$0xff]
    %v1083 = vld [vmem:[#allocation7 + $0x778] sm:$0xff]
    %v1084 = vld [vmem:[#allocation7 + $0x780] sm:$0xff]
    %v1085 = vld [vmem:[#allocation7 + $0x788] sm:$0xff]
    %v1086 = vld [vmem:[#allocation7 + $0x790] sm:$0xff]
    %v1087 = vld [vmem:[#allocation7 + $0x798] sm:$0xff]
    %v1088 = vld [vmem:[#allocation7 + $0x7a0] sm:$0xff]
    %v1089 = vld [vmem:[#allocation7 + $0x7a8] sm:$0xff]
    %v1090 = vld [vmem:[#allocation7 + $0x7b0] sm:$0xff]
    %v1091 = vld [vmem:[#allocation7 + $0x7b8] sm:$0xff]
    %v1092 = vld [vmem:[#allocation7 + $0x7c0] sm:$0xff]
    %v1093 = vld [vmem:[#allocation7 + $0x7c8] sm:$0xff]
    %v1094 = vld [vmem:[#allocation7 + $0x7d0] sm:$0xff]
    %v1095 = vld [vmem:[#allocation7 + $0x7d8] sm:$0xff]
    %v1096 = vld [vmem:[#allocation7 + $0x7e0] sm:$0xff]
    %v1097 = vld [vmem:[#allocation7 + $0x7e8] sm:$0xff]
    %v1098 = vld [vmem:[#allocation7 + $0x7f0] sm:$0xff]
    %v1099 = vld [vmem:[#allocation7 + $0x7f8] sm:$0xff]
    %v1100 = vld [vmem:[#allocation7 + $0x800] sm:$0xff]
    %v1101 = vld [vmem:[#allocation7 + $0x808] sm:$0xff]
    %v1102 = vld [vmem:[#allocation7 + $0x810] sm:$0xff]
    %v1103 = vld [vmem:[#allocation7 + $0x818] sm:$0xff]
    %v1104 = vld [vmem:[#allocation7 + $0x820] sm:$0xff]
    %v1105 = vld [vmem:[#allocation7 + $0x828] sm:$0xff]
    %v1106 = vld [vmem:[#allocation7 + $0x830] sm:$0xff]
    %v1107 = vld [vmem:[#allocation7 + $0x838] sm:$0xff]
    %v1108 = vld [vmem:[#allocation7 + $0x840] sm:$0xff]
    %v1109 = vld [vmem:[#allocation7 + $0x848] sm:$0xff]
    %v1110 = vld [vmem:[#allocation7 + $0x850] sm:$0xff]
    %v1111 = vld [vmem:[#allocation7 + $0x858] sm:$0xff]
    %v1112 = vld [vmem:[#allocation7 + $0x860] sm:$0xff]
    %v1113 = vld [vmem:[#allocation7 + $0x868] sm:$0xff]
    %v1114 = vld [vmem:[#allocation7 + $0x870] sm:$0xff]
    %v1115 = vld [vmem:[#allocation7 + $0x878] sm:$0xff]
    %v1116 = vld [vmem:[#allocation7 + $0x880] sm:$0xff]
    %v1117 = vld [vmem:[#allocation7 + $0x888] sm:$0xff]
    %v1118 = vld [vmem:[#allocation7 + $0x890] sm:$0xff]
    %v1119 = vld [vmem:[#allocation7 + $0x898] sm:$0xff]
    %v1120 = vld [vmem:[#allocation7 + $0x8a0] sm:$0xff]
    %v1121 = vld [vmem:[#allocation7 + $0x8a8] sm:$0xff]
    %v1122 = vld [vmem:[#allocation7 + $0x8b0] sm:$0xff]
    %v1123 = vld [vmem:[#allocation7 + $0x8b8] sm:$0xff]
    %v1124 = vld [vmem:[#allocation7 + $0x8c0] sm:$0xff]
    %v1125 = vld [vmem:[#allocation7 + $0x8c8] sm:$0xff]
    %v1126 = vld [vmem:[#allocation7 + $0x8d0] sm:$0xff]
    %v1127 = vld [vmem:[#allocation7 + $0x8d8] sm:$0xff]
    %v1128 = vld [vmem:[#allocation7 + $0x8e0] sm:$0xff]
    %v1129 = vld [vmem:[#allocation7 + $0x8e8] sm:$0xff]
    %v1130 = vld [vmem:[#allocation7 + $0x8f0] sm:$0xff]
    %v1131 = vld [vmem:[#allocation7 + $0x8f8] sm:$0xff]
    %v1132 = vld [vmem:[#allocation7 + $0x900] sm:$0xff]
    %v1133 = vld [vmem:[#allocation7 + $0x908] sm:$0xff]
    %v1134 = vld [vmem:[#allocation7 + $0x910] sm:$0xff]
    %v1135 = vld [vmem:[#allocation7 + $0x918] sm:$0xff]
    %v1136 = vld [vmem:[#allocation7 + $0x920] sm:$0xff]
    %v1137 = vld [vmem:[#allocation7 + $0x928] sm:$0xff]
    %v1138 = vld [vmem:[#allocation7 + $0x930] sm:$0xff]
    %v1139 = vld [vmem:[#allocation7 + $0x938] sm:$0xff]
    %v1140 = vld [vmem:[#allocation7 + $0x940] sm:$0xff]
    %v1141 = vld [vmem:[#allocation7 + $0x948] sm:$0xff]
    %v1142 = vld [vmem:[#allocation7 + $0x950] sm:$0xff]
    %v1143 = vld [vmem:[#allocation7 + $0x958] sm:$0xff]
    %v1144 = vld [vmem:[#allocation7 + $0x960] sm:$0xff]
    %v1145 = vld [vmem:[#allocation7 + $0x968] sm:$0xff]
    %v1146 = vld [vmem:[#allocation7 + $0x970] sm:$0xff]
    %v1147 = vld [vmem:[#allocation7 + $0x978] sm:$0xff]
    %v1148 = vld [vmem:[#allocation7 + $0x980] sm:$0xff]
    %v1149 = vld [vmem:[#allocation7 + $0x988] sm:$0xff]
    %v1150 = vld [vmem:[#allocation7 + $0x990] sm:$0xff]
    %v1151 = vld [vmem:[#allocation7 + $0x998] sm:$0xff]
    %v1152 = vld [vmem:[#allocation7 + $0x9a0] sm:$0xff]
    %v1153 = vld [vmem:[#allocation7 + $0x9a8] sm:$0xff]
    %v1154 = vld [vmem:[#allocation7 + $0x9b0] sm:$0xff]
    %v1155 = vld [vmem:[#allocation7 + $0x9b8] sm:$0xff]
    %v1156 = vld [vmem:[#allocation7 + $0x9c0] sm:$0xff]
    %v1157 = vld [vmem:[#allocation7 + $0x9c8] sm:$0xff]
    %v1158 = vld [vmem:[#allocation7 + $0x9d0] sm:$0xff]
    %v1159 = vld [vmem:[#allocation7 + $0x9d8] sm:$0xff]
    %v1160 = vld [vmem:[#allocation7 + $0x9e0] sm:$0xff]
    %v1161 = vld [vmem:[#allocation7 + $0x9e8] sm:$0xff]
    %v1162 = vld [vmem:[#allocation7 + $0x9f0] sm:$0xff]
    %v1163 = vld [vmem:[#allocation7 + $0x9f8] sm:$0xff]
    %v1164 = vld [vmem:[#allocation7 + $0xa00] sm:$0xff]
    %v1165 = vld [vmem:[#allocation7 + $0xa08] sm:$0xff]
    %v1166 = vld [vmem:[#allocation7 + $0xa10] sm:$0xff]
    %v1167 = vld [vmem:[#allocation7 + $0xa18] sm:$0xff]
    %v1168 = vld [vmem:[#allocation7 + $0xa20] sm:$0xff]
    %v1169 = vld [vmem:[#allocation7 + $0xa28] sm:$0xff]
    %v1170 = vld [vmem:[#allocation7 + $0xa30] sm:$0xff]
    %v1171 = vld [vmem:[#allocation7 + $0xa38] sm:$0xff]
    %v1172 = vld [vmem:[#allocation7 + $0xa40] sm:$0xff]
    %v1173 = vld [vmem:[#allocation7 + $0xa48] sm:$0xff]
    %v1174 = vld [vmem:[#allocation7 + $0xa50] sm:$0xff]
    %v1175 = vld [vmem:[#allocation7 + $0xa58] sm:$0xff]
    %v1176 = vld [vmem:[#allocation7 + $0xa60] sm:$0xff]
    %v1177 = vld [vmem:[#allocation7 + $0xa68] sm:$0xff]
    %v1178 = vld [vmem:[#allocation7 + $0xa70] sm:$0xff]
    %v1179 = vld [vmem:[#allocation7 + $0xa78] sm:$0xff]
    %v1180 = vld [vmem:[#allocation7 + $0xa80] sm:$0xff]
    %v1181 = vld [vmem:[#allocation7 + $0xa88] sm:$0xff]
    %v1182 = vld [vmem:[#allocation7 + $0xa90] sm:$0xff]
    %v1183 = vld [vmem:[#allocation7 + $0xa98] sm:$0xff]
    %v1184 = vld [vmem:[#allocation7 + $0xaa0] sm:$0xff]
    %v1185 = vld [vmem:[#allocation7 + $0xaa8] sm:$0xff]
    %v1186 = vld [vmem:[#allocation7 + $0xab0] sm:$0xff]
    %v1187 = vld [vmem:[#allocation7 + $0xab8] sm:$0xff]
    %v1188 = vld [vmem:[#allocation7 + $0xac0] sm:$0xff]
    %v1189 = vld [vmem:[#allocation7 + $0xac8] sm:$0xff]
    %v1190 = vld [vmem:[#allocation7 + $0xad0] sm:$0xff]
    %v1191 = vld [vmem:[#allocation7 + $0xad8] sm:$0xff]
    %v1192 = vld [vmem:[#allocation7 + $0xae0] sm:$0xff]
    %v1193 = vld [vmem:[#allocation7 + $0xae8] sm:$0xff]
    %v1194 = vld [vmem:[#allocation7 + $0xaf0] sm:$0xff]
    %v1195 = vld [vmem:[#allocation7 + $0xaf8] sm:$0xff]
    %v1196 = vld [vmem:[#allocation7 + $0xb00] sm:$0xff]
    %v1197 = vld [vmem:[#allocation7 + $0xb08] sm:$0xff]
    %v1198 = vld [vmem:[#allocation7 + $0xb10] sm:$0xff]
    %v1199 = vld [vmem:[#allocation7 + $0xb18] sm:$0xff]
    %v1200 = vld [vmem:[#allocation7 + $0xb20] sm:$0xff]
    %v1201 = vld [vmem:[#allocation7 + $0xb28] sm:$0xff]
    %v1202 = vld [vmem:[#allocation7 + $0xb30] sm:$0xff]
    %v1203 = vld [vmem:[#allocation7 + $0xb38] sm:$0xff]
    %v1204 = vld [vmem:[#allocation7 + $0xb40] sm:$0xff]
    %v1205 = vld [vmem:[#allocation7 + $0xb48] sm:$0xff]
    %v1206 = vld [vmem:[#allocation7 + $0xb50] sm:$0xff]
    %v1207 = vld [vmem:[#allocation7 + $0xb58] sm:$0xff]
    %v1208 = vld [vmem:[#allocation7 + $0xb60] sm:$0xff]
    %v1209 = vld [vmem:[#allocation7 + $0xb68] sm:$0xff]
    %v1210 = vld [vmem:[#allocation7 + $0xb70] sm:$0xff]
    %v1211 = vld [vmem:[#allocation7 + $0xb78] sm:$0xff]
    %v1212 = vld [vmem:[#allocation7 + $0xb80] sm:$0xff]
    %v1213 = vld [vmem:[#allocation7 + $0xb88] sm:$0xff]
    %v1214 = vld [vmem:[#allocation7 + $0xb90] sm:$0xff]
    %v1215 = vld [vmem:[#allocation7 + $0xb98] sm:$0xff]
    %v1216 = vld [vmem:[#allocation7 + $0xba0] sm:$0xff]
    %v1217 = vld [vmem:[#allocation7 + $0xba8] sm:$0xff]
    %v1218 = vld [vmem:[#allocation7 + $0xbb0] sm:$0xff]
    %v1219 = vld [vmem:[#allocation7 + $0xbb8] sm:$0xff]
    %v1220 = vld [vmem:[#allocation7 + $0xbc0] sm:$0xff]
    %v1221 = vld [vmem:[#allocation7 + $0xbc8] sm:$0xff]
    %v1222 = vld [vmem:[#allocation7 + $0xbd0] sm:$0xff]
    %v1223 = vld [vmem:[#allocation7 + $0xbd8] sm:$0xff]
    %v1224 = vld [vmem:[#allocation7 + $0xbe0] sm:$0xff]
    %v1225 = vld [vmem:[#allocation7 + $0xbe8] sm:$0xff]
    %v1226 = vld [vmem:[#allocation7 + $0xbf0] sm:$0xff]
    %v1227 = vld [vmem:[#allocation7 + $0xbf8] sm:$0xff]
    %v1228 = vld [vmem:[#allocation7 + $0xc00] sm:$0xff]
    %v1229 = vld [vmem:[#allocation7 + $0xc08] sm:$0xff]
    %v1230 = vld [vmem:[#allocation7 + $0xc10] sm:$0xff]
    %v1231 = vld [vmem:[#allocation7 + $0xc18] sm:$0xff]
    %v1232 = vld [vmem:[#allocation7 + $0xc20] sm:$0xff]
    %v1233 = vld [vmem:[#allocation7 + $0xc28] sm:$0xff]
    %v1234 = vld [vmem:[#allocation7 + $0xc30] sm:$0xff]
    %v1235 = vld [vmem:[#allocation7 + $0xc38] sm:$0xff]
    %v1236 = vld [vmem:[#allocation7 + $0xc40] sm:$0xff]
    %v1237 = vld [vmem:[#allocation7 + $0xc48] sm:$0xff]
    %v1238 = vld [vmem:[#allocation7 + $0xc50] sm:$0xff]
    %v1239 = vld [vmem:[#allocation7 + $0xc58] sm:$0xff]
    %v1240 = vld [vmem:[#allocation7 + $0xc60] sm:$0xff]
    %v1241 = vld [vmem:[#allocation7 + $0xc68] sm:$0xff]
    %v1242 = vld [vmem:[#allocation7 + $0xc70] sm:$0xff]
    %v1243 = vld [vmem:[#allocation7 + $0xc78] sm:$0xff]
    %v1244 = vld [vmem:[#allocation7 + $0xc80] sm:$0xff]
    %v1245 = vld [vmem:[#allocation7 + $0xc88] sm:$0xff]
    %v1246 = vld [vmem:[#allocation7 + $0xc90] sm:$0xff]
    %v1247 = vld [vmem:[#allocation7 + $0xc98] sm:$0xff]
    %v1248 = vld [vmem:[#allocation7 + $0xca0] sm:$0xff]
    %v1249 = vld [vmem:[#allocation7 + $0xca8] sm:$0xff]
    %v1250 = vld [vmem:[#allocation7 + $0xcb0] sm:$0xff]
    %v1251 = vld [vmem:[#allocation7 + $0xcb8] sm:$0xff]
    %v1252 = vld [vmem:[#allocation7 + $0xcc0] sm:$0xff]
    %v1253 = vld [vmem:[#allocation7 + $0xcc8] sm:$0xff]
    %v1254 = vld [vmem:[#allocation7 + $0xcd0] sm:$0xff]
    %v1255 = vld [vmem:[#allocation7 + $0xcd8] sm:$0xff]
    %v1256 = vld [vmem:[#allocation7 + $0xce0] sm:$0xff]
    %v1257 = vld [vmem:[#allocation7 + $0xce8] sm:$0xff]
    %v1258 = vld [vmem:[#allocation7 + $0xcf0] sm:$0xff]
    %v1259 = vld [vmem:[#allocation7 + $0xcf8] sm:$0xff]
    %v1260 = vld [vmem:[#allocation7 + $0xd00] sm:$0xff]
    %v1261 = vld [vmem:[#allocation7 + $0xd08] sm:$0xff]
    %v1262 = vld [vmem:[#allocation7 + $0xd10] sm:$0xff]
    %v1263 = vld [vmem:[#allocation7 + $0xd18] sm:$0xff]
    %v1264 = vld [vmem:[#allocation7 + $0xd20] sm:$0xff]
    %v1265 = vld [vmem:[#allocation7 + $0xd28] sm:$0xff]
    %v1266 = vld [vmem:[#allocation7 + $0xd30] sm:$0xff]
    %v1267 = vld [vmem:[#allocation7 + $0xd38] sm:$0xff]
    %v1268 = vld [vmem:[#allocation7 + $0xd40] sm:$0xff]
    %v1269 = vld [vmem:[#allocation7 + $0xd48] sm:$0xff]
    %v1270 = vld [vmem:[#allocation7 + $0xd50] sm:$0xff]
    %v1271 = vld [vmem:[#allocation7 + $0xd58] sm:$0xff]
    %v1272 = vld [vmem:[#allocation7 + $0xd60] sm:$0xff]
    %v1273 = vld [vmem:[#allocation7 + $0xd68] sm:$0xff]
    %v1274 = vld [vmem:[#allocation7 + $0xd70] sm:$0xff]
    %v1275 = vld [vmem:[#allocation7 + $0xd78] sm:$0xff]
    %v1276 = vld [vmem:[#allocation7 + $0xd80] sm:$0xff]
    %v1277 = vld [vmem:[#allocation7 + $0xd88] sm:$0xff]
    %v1278 = vld [vmem:[#allocation7 + $0xd90] sm:$0xff]
    %v1279 = vld [vmem:[#allocation7 + $0xd98] sm:$0xff]
    %v1280 = vld [vmem:[#allocation7 + $0xda0] sm:$0xff]
    %v1281 = vld [vmem:[#allocation7 + $0xda8] sm:$0xff]
    %v1282 = vld [vmem:[#allocation7 + $0xdb0] sm:$0xff]
    %v1283 = vld [vmem:[#allocation7 + $0xdb8] sm:$0xff]
    %v1284 = vld [vmem:[#allocation7 + $0xdc0] sm:$0xff]
    %v1285 = vld [vmem:[#allocation7 + $0xdc8] sm:$0xff]
    %v1286 = vld [vmem:[#allocation7 + $0xdd0] sm:$0xff]
    %v1287 = vld [vmem:[#allocation7 + $0xdd8] sm:$0xff]
    %v1288 = vld [vmem:[#allocation7 + $0xde0] sm:$0xff]
    %v1289 = vld [vmem:[#allocation7 + $0xde8] sm:$0xff]
    %v1290 = vld [vmem:[#allocation7 + $0xdf0] sm:$0xff]
    %v1291 = vld [vmem:[#allocation7 + $0xdf8] sm:$0xff]
    %v1292 = vld [vmem:[#allocation7 + $0xe00] sm:$0xff]
    %v1293 = vld [vmem:[#allocation7 + $0xe08] sm:$0xff]
    %v1294 = vld [vmem:[#allocation7 + $0xe10] sm:$0xff]
    %v1295 = vld [vmem:[#allocation7 + $0xe18] sm:$0xff]
    %v1296 = vld [vmem:[#allocation7 + $0xe20] sm:$0xff]
    %v1297 = vld [vmem:[#allocation7 + $0xe28] sm:$0xff]
    %v1298 = vld [vmem:[#allocation7 + $0xe30] sm:$0xff]
    %v1299 = vld [vmem:[#allocation7 + $0xe38] sm:$0xff]
    %v1300 = vld [vmem:[#allocation7 + $0xe40] sm:$0xff]
    %v1301 = vld [vmem:[#allocation7 + $0xe48] sm:$0xff]
    %v1302 = vld [vmem:[#allocation7 + $0xe50] sm:$0xff]
    %v1303 = vld [vmem:[#allocation7 + $0xe58] sm:$0xff]
    %v1304 = vld [vmem:[#allocation7 + $0xe60] sm:$0xff]
    %v1305 = vld [vmem:[#allocation7 + $0xe68] sm:$0xff]
    %v1306 = vld [vmem:[#allocation7 + $0xe70] sm:$0xff]
    %v1307 = vld [vmem:[#allocation7 + $0xe78] sm:$0xff]
    %v1308 = vld [vmem:[#allocation7 + $0xe80] sm:$0xff]
    %v1309 = vld [vmem:[#allocation7 + $0xe88] sm:$0xff]
    %v1310 = vld [vmem:[#allocation7 + $0xe90] sm:$0xff]
    %v1311 = vld [vmem:[#allocation7 + $0xe98] sm:$0xff]
    %v1312 = vld [vmem:[#allocation7 + $0xea0] sm:$0xff]
    %v1313 = vld [vmem:[#allocation7 + $0xea8] sm:$0xff]
    %v1314 = vld [vmem:[#allocation7 + $0xeb0] sm:$0xff]
    %v1315 = vld [vmem:[#allocation7 + $0xeb8] sm:$0xff]
    %v1316 = vld [vmem:[#allocation7 + $0xec0] sm:$0xff]
    %v1317 = vld [vmem:[#allocation7 + $0xec8] sm:$0xff]
    %v1318 = vld [vmem:[#allocation7 + $0xed0] sm:$0xff]
    %v1319 = vld [vmem:[#allocation7 + $0xed8] sm:$0xff]
    %v1320 = vld [vmem:[#allocation7 + $0xee0] sm:$0xff]
    %v1321 = vld [vmem:[#allocation7 + $0xee8] sm:$0xff]
    %v1322 = vld [vmem:[#allocation7 + $0xef0] sm:$0xff]
    %v1323 = vld [vmem:[#allocation7 + $0xef8] sm:$0xff]
    %v1324 = vld [vmem:[#allocation7 + $0xf00] sm:$0xff]
    %v1325 = vld [vmem:[#allocation7 + $0xf08] sm:$0xff]
    %v1326 = vld [vmem:[#allocation7 + $0xf10] sm:$0xff]
    %v1327 = vld [vmem:[#allocation7 + $0xf18] sm:$0xff]
    %v1328 = vld [vmem:[#allocation7 + $0xf20] sm:$0xff]
    %v1329 = vld [vmem:[#allocation7 + $0xf28] sm:$0xff]
    %v1330 = vld [vmem:[#allocation7 + $0xf30] sm:$0xff]
    %v1331 = vld [vmem:[#allocation7 + $0xf38] sm:$0xff]
    %v1332 = vld [vmem:[#allocation7 + $0xf40] sm:$0xff]
    %v1333 = vld [vmem:[#allocation7 + $0xf48] sm:$0xff]
    %v1334 = vld [vmem:[#allocation7 + $0xf50] sm:$0xff]
    %v1335 = vld [vmem:[#allocation7 + $0xf58] sm:$0xff]
    %v1336 = vld [vmem:[#allocation7 + $0xf60] sm:$0xff]
    %v1337 = vld [vmem:[#allocation7 + $0xf68] sm:$0xff]
    %v1338 = vld [vmem:[#allocation7 + $0xf70] sm:$0xff]
    %v1339 = vld [vmem:[#allocation7 + $0xf78] sm:$0xff]
    %v1340 = vld [vmem:[#allocation7 + $0xf80] sm:$0xff]
    %v1341 = vld [vmem:[#allocation7 + $0xf88] sm:$0xff]
    %v1342 = vld [vmem:[#allocation7 + $0xf90] sm:$0xff]
    %v1343 = vld [vmem:[#allocation7 + $0xf98] sm:$0xff]
    %v1344 = vld [vmem:[#allocation7 + $0xfa0] sm:$0xff]
    %v1345 = vld [vmem:[#allocation7 + $0xfa8] sm:$0xff]
    %v1346 = vld [vmem:[#allocation7 + $0xfb0] sm:$0xff]
    %v1347 = vld [vmem:[#allocation7 + $0xfb8] sm:$0xff]
    %v1348 = vld [vmem:[#allocation7 + $0xfc0] sm:$0xff]
    %v1349 = vld [vmem:[#allocation7 + $0xfc8] sm:$0xff]
    %v1350 = vld [vmem:[#allocation7 + $0xfd0] sm:$0xff]
    %v1351 = vld [vmem:[#allocation7 + $0xfd8] sm:$0xff]
    %v1352 = vld [vmem:[#allocation7 + $0xfe0] sm:$0xff]
    %v1353 = vld [vmem:[#allocation7 + $0xfe8] sm:$0xff]
    %v1354 = vld [vmem:[#allocation7 + $0xff0] sm:$0xff]
    %v1355 = vld [vmem:[#allocation7 + $0xff8] sm:$0xff]
    %v1356 = vld [vmem:[#allocation13] sm:$0xff]
    %v1357 = vpack.c.bf16 %v836, %v828
    %v1358 = vpack.c.bf16 %v837, %v829
    %v1359 = vpack.c.bf16 %v838, %v830
    %v1360 = vpack.c.bf16 %v839, %v831
    %v1361 = vpack.c.bf16 %v840, %v832
    %v1362 = vpack.c.bf16 %v841, %v833
    %v1363 = vpack.c.bf16 %v842, %v834
    %v1364 = vpack.c.bf16 %v843, %v835
    %1365 = vmatprep.subr.bf16.mxu0 0
    %1366 = vmatpush1.bf16.msra.mxu0 0
    %1367 = vmatprep.subr.bf16.mxu0 0
    %1368 = vmatpush1.bf16.msra.mxu0 0
    %1369 = vmatprep.subr.bf16.mxu0 0
    %1370 = vmatpush1.bf16.msra.mxu0 0
    %1371 = vmatprep.subr.bf16.mxu0 0
    %1372 = vmatpush1.bf16.msra.mxu0 0
    %1373 = vmatprep.subr.bf16.mxu0 0
    %1374 = vmatpush1.bf16.msra.mxu0 0
    %1375 = vmatprep.subr.bf16.mxu0 0
    %1376 = vmatpush1.bf16.msra.mxu0 0
    %1377 = vmatprep.subr.bf16.mxu0 0
    %1378 = vmatpush1.bf16.msra.mxu0 0
    %1379 = vmatprep.subr.bf16.mxu0 %v1358
    %1380 = vmatpush1.bf16.msra.mxu0 %v1357
    %1381 = vmatprep.subr.bf16.mxu0 0
    %1382 = vmatpush2.bf16.msra.mxu0 0
    %1383 = vmatprep.subr.bf16.mxu0 0
    %1384 = vmatpush2.bf16.msra.mxu0 0
    %1385 = vmatprep.subr.bf16.mxu0 0
    %1386 = vmatpush2.bf16.msra.mxu0 0
    %1387 = vmatprep.subr.bf16.mxu0 0
    %1388 = vmatpush2.bf16.msra.mxu0 0
    %1389 = vmatprep.subr.bf16.mxu0 0
    %1390 = vmatpush2.bf16.msra.mxu0 0
    %1391 = vmatprep.subr.bf16.mxu0 0
    %1392 = vmatpush2.bf16.msra.mxu0 0
    %1393 = vmatprep.subr.bf16.mxu0 0
    %1394 = vmatpush2.bf16.msra.mxu0 0
    %1395 = vmatprep.subr.bf16.mxu0 0
    %1396 = vmatpush2.bf16.msra.mxu0 0
    %1397 = vmatprep.mubr.bf16.mxu0 0
    %1398 = vmatmul.mubr.bf16.gmra.mxu0 %v251
    %v1399 = vpop.f32.mrf.mxu0
    %v1400 = vadd.f32 0.0, %v1399
    %v1401 = vpop.f32.mrf.mxu0
    %v1402 = vadd.f32 0.0, %v1401
    %v1403 = vpop.f32.mrf.mxu0
    %v1404 = vadd.f32 0.0, %v1403
    %v1405 = vpop.f32.mrf.mxu0
    %v1406 = vadd.f32 0.0, %v1405
    %1407 = vdwg.mxu0
    %1408 = vmatprep.subr.bf16.mxu0 0
    %1409 = vmatpush1.bf16.msra.mxu0 0
    %1410 = vmatprep.subr.bf16.mxu0 0
    %1411 = vmatpush1.bf16.msra.mxu0 0
    %1412 = vmatprep.subr.bf16.mxu0 0
    %1413 = vmatpush1.bf16.msra.mxu0 0
    %1414 = vmatprep.subr.bf16.mxu0 0
    %1415 = vmatpush1.bf16.msra.mxu0 0
    %1416 = vmatprep.subr.bf16.mxu0 0
    %1417 = vmatpush1.bf16.msra.mxu0 0
    %1418 = vmatprep.subr.bf16.mxu0 0
    %1419 = vmatpush1.bf16.msra.mxu0 0
    %1420 = vmatprep.subr.bf16.mxu0 0
    %1421 = vmatpush1.bf16.msra.mxu0 0
    %1422 = vmatprep.subr.bf16.mxu0 %v1360
    %1423 = vmatpush1.bf16.msra.mxu0 %v1359
    %1424 = vmatprep.subr.bf16.mxu0 0
    %1425 = vmatpush2.bf16.msra.mxu0 0
    %1426 = vmatprep.subr.bf16.mxu0 0
    %1427 = vmatpush2.bf16.msra.mxu0 0
    %1428 = vmatprep.subr.bf16.mxu0 0
    %1429 = vmatpush2.bf16.msra.mxu0 0
    %1430 = vmatprep.subr.bf16.mxu0 0
    %1431 = vmatpush2.bf16.msra.mxu0 0
    %1432 = vmatprep.subr.bf16.mxu0 0
    %1433 = vmatpush2.bf16.msra.mxu0 0
    %1434 = vmatprep.subr.bf16.mxu0 0
    %1435 = vmatpush2.bf16.msra.mxu0 0
    %1436 = vmatprep.subr.bf16.mxu0 0
    %1437 = vmatpush2.bf16.msra.mxu0 0
    %1438 = vmatprep.subr.bf16.mxu0 0
    %1439 = vmatpush2.bf16.msra.mxu0 0
    %1440 = vmatprep.mubr.bf16.mxu0 0
    %1441 = vmatmul.mubr.bf16.gmra.mxu0 %v251
    %v1442 = vpop.f32.mrf.mxu0
    %v1443 = vadd.f32 0.0, %v1442
    %v1444 = vpop.f32.mrf.mxu0
    %v1445 = vadd.f32 0.0, %v1444
    %v1446 = vpop.f32.mrf.mxu0
    %v1447 = vadd.f32 0.0, %v1446
    %v1448 = vpop.f32.mrf.mxu0
    %v1449 = vadd.f32 0.0, %v1448
    %1450 = vdwg.mxu0
    %1451 = vmatprep.subr.bf16.mxu0 0
    %1452 = vmatpush1.bf16.msra.mxu0 0
    %1453 = vmatprep.subr.bf16.mxu0 0
    %1454 = vmatpush1.bf16.msra.mxu0 0
    %1455 = vmatprep.subr.bf16.mxu0 0
    %1456 = vmatpush1.bf16.msra.mxu0 0
    %1457 = vmatprep.subr.bf16.mxu0 0
    %1458 = vmatpush1.bf16.msra.mxu0 0
    %1459 = vmatprep.subr.bf16.mxu0 0
    %1460 = vmatpush1.bf16.msra.mxu0 0
    %1461 = vmatprep.subr.bf16.mxu0 0
    %1462 = vmatpush1.bf16.msra.mxu0 0
    %1463 = vmatprep.subr.bf16.mxu0 0
    %1464 = vmatpush1.bf16.msra.mxu0 0
    %1465 = vmatprep.subr.bf16.mxu0 %v1362
    %1466 = vmatpush1.bf16.msra.mxu0 %v1361
    %1467 = vmatprep.subr.bf16.mxu0 0
    %1468 = vmatpush2.bf16.msra.mxu0 0
    %1469 = vmatprep.subr.bf16.mxu0 0
    %1470 = vmatpush2.bf16.msra.mxu0 0
    %1471 = vmatprep.subr.bf16.mxu0 0
    %1472 = vmatpush2.bf16.msra.mxu0 0
    %1473 = vmatprep.subr.bf16.mxu0 0
    %1474 = vmatpush2.bf16.msra.mxu0 0
    %1475 = vmatprep.subr.bf16.mxu0 0
    %1476 = vmatpush2.bf16.msra.mxu0 0
    %1477 = vmatprep.subr.bf16.mxu0 0
    %1478 = vmatpush2.bf16.msra.mxu0 0
    %1479 = vmatprep.subr.bf16.mxu0 0
    %1480 = vmatpush2.bf16.msra.mxu0 0
    %1481 = vmatprep.subr.bf16.mxu0 0
    %1482 = vmatpush2.bf16.msra.mxu0 0
    %1483 = vmatprep.mubr.bf16.mxu0 0
    %1484 = vmatmul.mubr.bf16.gmra.mxu0 %v251
    %v1485 = vpop.f32.mrf.mxu0
    %v1486 = vadd.f32 0.0, %v1485
    %v1487 = vpop.f32.mrf.mxu0
    %v1488 = vadd.f32 0.0, %v1487
    %v1489 = vpop.f32.mrf.mxu0
    %v1490 = vadd.f32 0.0, %v1489
    %v1491 = vpop.f32.mrf.mxu0
    %v1492 = vadd.f32 0.0, %v1491
    %1493 = vdwg.mxu0
    %1494 = vmatprep.subr.bf16.mxu0 0
    %1495 = vmatpush1.bf16.msra.mxu0 0
    %1496 = vmatprep.subr.bf16.mxu0 0
    %1497 = vmatpush1.bf16.msra.mxu0 0
    %1498 = vmatprep.subr.bf16.mxu0 0
    %1499 = vmatpush1.bf16.msra.mxu0 0
    %1500 = vmatprep.subr.bf16.mxu0 0
    %1501 = vmatpush1.bf16.msra.mxu0 0
    %1502 = vmatprep.subr.bf16.mxu0 0
    %1503 = vmatpush1.bf16.msra.mxu0 0
    %1504 = vmatprep.subr.bf16.mxu0 0
    %1505 = vmatpush1.bf16.msra.mxu0 0
    %1506 = vmatprep.subr.bf16.mxu0 0
    %1507 = vmatpush1.bf16.msra.mxu0 0
    %1508 = vmatprep.subr.bf16.mxu0 %v1364
    %1509 = vmatpush1.bf16.msra.mxu0 %v1363
    %1510 = vmatprep.subr.bf16.mxu0 0
    %1511 = vmatpush2.bf16.msra.mxu0 0
    %1512 = vmatprep.subr.bf16.mxu0 0
    %1513 = vmatpush2.bf16.msra.mxu0 0
    %1514 = vmatprep.subr.bf16.mxu0 0
    %1515 = vmatpush2.bf16.msra.mxu0 0
    %1516 = vmatprep.subr.bf16.mxu0 0
    %1517 = vmatpush2.bf16.msra.mxu0 0
    %1518 = vmatprep.subr.bf16.mxu0 0
    %1519 = vmatpush2.bf16.msra.mxu0 0
    %1520 = vmatprep.subr.bf16.mxu0 0
    %1521 = vmatpush2.bf16.msra.mxu0 0
    %1522 = vmatprep.subr.bf16.mxu0 0
    %1523 = vmatpush2.bf16.msra.mxu0 0
    %1524 = vmatprep.subr.bf16.mxu0 0
    %1525 = vmatpush2.bf16.msra.mxu0 0
    %1526 = vmatprep.mubr.bf16.mxu0 0
    %1527 = vmatmul.mubr.bf16.gmra.mxu0 %v251
    %v1528 = vpop.f32.mrf.mxu0
    %v1529 = vadd.f32 0.0, %v1528
    %v1530 = vpop.f32.mrf.mxu0
    %v1531 = vadd.f32 0.0, %v1530
    %v1532 = vpop.f32.mrf.mxu0
    %v1533 = vadd.f32 0.0, %v1532
    %v1534 = vpop.f32.mrf.mxu0
    %v1535 = vadd.f32 0.0, %v1534
    %1536 = vdwg.mxu0
    %v1537 = vpack.c.bf16 %v1404, %v1400
    %v1538 = vpack.c.bf16 %v1406, %v1402
    %v1539 = vpack.c.bf16 %v1447, %v1443
    %v1540 = vpack.c.bf16 %v1449, %v1445
    %v1541 = vpack.c.bf16 %v1490, %v1486
    %v1542 = vpack.c.bf16 %v1492, %v1488
    %v1543 = vpack.c.bf16 %v1533, %v1529
    %v1544 = vpack.c.bf16 %v1535, %v1531
    %v1546 = vlaneseq
    %v1547 = vshrl.u32 %v1546, 7
    %v1548 = vsub.s32 0, %v1547
    %v1549 = vrot.slane %v1356, %v1548
    %v1550 = vlaneseq
    %v1551 = vshrl.u32 %v1550, 7
    %v1552 = vsub.s32 1, %v1551
    %v1553 = vrot.slane %v1356, %v1552
    %v1554 = vlaneseq
    %v1555 = vshrl.u32 %v1554, 7
    %v1556 = vsub.s32 2, %v1555
    %v1557 = vrot.slane %v1356, %v1556
    %v1558 = vlaneseq
    %v1559 = vshrl.u32 %v1558, 7
    %v1560 = vsub.s32 3, %v1559
    %v1561 = vrot.slane %v1356, %v1560
    %v1562 = vlaneseq
    %v1563 = vshrl.u32 %v1562, 7
    %v1564 = vsub.s32 4, %v1563
    %v1565 = vrot.slane %v1356, %v1564
    %v1566 = vlaneseq
    %v1567 = vshrl.u32 %v1566, 7
    %v1568 = vsub.s32 5, %v1567
    %v1569 = vrot.slane %v1356, %v1568
    %v1570 = vlaneseq
    %v1571 = vshrl.u32 %v1570, 7
    %v1572 = vsub.s32 6, %v1571
    %v1573 = vrot.slane %v1356, %v1572
    %v1574 = vlaneseq
    %v1575 = vshrl.u32 %v1574, 7
    %v1576 = vsub.s32 7, %v1575
    %v1577 = vrot.slane %v1356, %v1576
    %v2098 = vunpack.c.l.b16 %v844
    %v2099 = vunpack.c.h.b16 %v844
    %v2100 = vunpack.c.l.b16 %v845
    %v2101 = vunpack.c.h.b16 %v845
    %v2102 = vunpack.c.l.b16 %v846
    %v2103 = vunpack.c.h.b16 %v846
    %v2104 = vunpack.c.l.b16 %v847
    %v2105 = vunpack.c.h.b16 %v847
    %v2106 = vunpack.c.l.b16 %v848
    %v2107 = vunpack.c.h.b16 %v848
    %v2108 = vunpack.c.l.b16 %v849
    %v2109 = vunpack.c.h.b16 %v849
    %v2110 = vunpack.c.l.b16 %v850
    %v2111 = vunpack.c.h.b16 %v850
    %v2112 = vunpack.c.l.b16 %v851
    %v2113 = vunpack.c.h.b16 %v851
    %v2114 = vunpack.c.l.b16 %v852
    %v2115 = vunpack.c.h.b16 %v852
    %v2116 = vunpack.c.l.b16 %v853
    %v2117 = vunpack.c.h.b16 %v853
    %v2118 = vunpack.c.l.b16 %v854
    %v2119 = vunpack.c.h.b16 %v854
    %v2120 = vunpack.c.l.b16 %v855
    %v2121 = vunpack.c.h.b16 %v855
    %v2122 = vunpack.c.l.b16 %v856
    %v2123 = vunpack.c.h.b16 %v856
    %v2124 = vunpack.c.l.b16 %v857
    %v2125 = vunpack.c.h.b16 %v857
    %v2126 = vunpack.c.l.b16 %v858
    %v2127 = vunpack.c.h.b16 %v858
    %v2128 = vunpack.c.l.b16 %v859
    %v2129 = vunpack.c.h.b16 %v859
    %v2130 = vunpack.c.l.b16 %v860
    %v2131 = vunpack.c.h.b16 %v860
    %v2132 = vunpack.c.l.b16 %v861
    %v2133 = vunpack.c.h.b16 %v861
    %v2134 = vunpack.c.l.b16 %v862
    %v2135 = vunpack.c.h.b16 %v862
    %v2136 = vunpack.c.l.b16 %v863
    %v2137 = vunpack.c.h.b16 %v863
    %v2138 = vunpack.c.l.b16 %v864
    %v2139 = vunpack.c.h.b16 %v864
    %v2140 = vunpack.c.l.b16 %v865
    %v2141 = vunpack.c.h.b16 %v865
    %v2142 = vunpack.c.l.b16 %v866
    %v2143 = vunpack.c.h.b16 %v866
    %v2144 = vunpack.c.l.b16 %v867
    %v2145 = vunpack.c.h.b16 %v867
    %v2146 = vunpack.c.l.b16 %v868
    %v2147 = vunpack.c.h.b16 %v868
    %v2148 = vunpack.c.l.b16 %v869
    %v2149 = vunpack.c.h.b16 %v869
    %v2150 = vunpack.c.l.b16 %v870
    %v2151 = vunpack.c.h.b16 %v870
    %v2152 = vunpack.c.l.b16 %v871
    %v2153 = vunpack.c.h.b16 %v871
    %v2154 = vunpack.c.l.b16 %v872
    %v2155 = vunpack.c.h.b16 %v872
    %v2156 = vunpack.c.l.b16 %v873
    %v2157 = vunpack.c.h.b16 %v873
    %v2158 = vunpack.c.l.b16 %v874
    %v2159 = vunpack.c.h.b16 %v874
    %v2160 = vunpack.c.l.b16 %v875
    %v2161 = vunpack.c.h.b16 %v875
    %v2162 = vunpack.c.l.b16 %v876
    %v2163 = vunpack.c.h.b16 %v876
    %v2164 = vunpack.c.l.b16 %v877
    %v2165 = vunpack.c.h.b16 %v877
    %v2166 = vunpack.c.l.b16 %v878
    %v2167 = vunpack.c.h.b16 %v878
    %v2168 = vunpack.c.l.b16 %v879
    %v2169 = vunpack.c.h.b16 %v879
    %v2170 = vunpack.c.l.b16 %v880
    %v2171 = vunpack.c.h.b16 %v880
    %v2172 = vunpack.c.l.b16 %v881
    %v2173 = vunpack.c.h.b16 %v881
    %v2174 = vunpack.c.l.b16 %v882
    %v2175 = vunpack.c.h.b16 %v882
    %v2176 = vunpack.c.l.b16 %v883
    %v2177 = vunpack.c.h.b16 %v883
    %v2178 = vunpack.c.l.b16 %v884
    %v2179 = vunpack.c.h.b16 %v884
    %v2180 = vunpack.c.l.b16 %v885
    %v2181 = vunpack.c.h.b16 %v885
    %v2182 = vunpack.c.l.b16 %v886
    %v2183 = vunpack.c.h.b16 %v886
    %v2184 = vunpack.c.l.b16 %v887
    %v2185 = vunpack.c.h.b16 %v887
    %v2186 = vunpack.c.l.b16 %v888
    %v2187 = vunpack.c.h.b16 %v888
    %v2188 = vunpack.c.l.b16 %v889
    %v2189 = vunpack.c.h.b16 %v889
    %v2190 = vunpack.c.l.b16 %v890
    %v2191 = vunpack.c.h.b16 %v890
    %v2192 = vunpack.c.l.b16 %v891
    %v2193 = vunpack.c.h.b16 %v891
    %v2194 = vunpack.c.l.b16 %v892
    %v2195 = vunpack.c.h.b16 %v892
    %v2196 = vunpack.c.l.b16 %v893
    %v2197 = vunpack.c.h.b16 %v893
    %v2198 = vunpack.c.l.b16 %v894
    %v2199 = vunpack.c.h.b16 %v894
    %v2200 = vunpack.c.l.b16 %v895
    %v2201 = vunpack.c.h.b16 %v895
    %v2202 = vunpack.c.l.b16 %v896
    %v2203 = vunpack.c.h.b16 %v896
    %v2204 = vunpack.c.l.b16 %v897
    %v2205 = vunpack.c.h.b16 %v897
    %v2206 = vunpack.c.l.b16 %v898
    %v2207 = vunpack.c.h.b16 %v898
    %v2208 = vunpack.c.l.b16 %v899
    %v2209 = vunpack.c.h.b16 %v899
    %v2210 = vunpack.c.l.b16 %v900
    %v2211 = vunpack.c.h.b16 %v900
    %v2212 = vunpack.c.l.b16 %v901
    %v2213 = vunpack.c.h.b16 %v901
    %v2214 = vunpack.c.l.b16 %v902
    %v2215 = vunpack.c.h.b16 %v902
    %v2216 = vunpack.c.l.b16 %v903
    %v2217 = vunpack.c.h.b16 %v903
    %v2218 = vunpack.c.l.b16 %v904
    %v2219 = vunpack.c.h.b16 %v904
    %v2220 = vunpack.c.l.b16 %v905
    %v2221 = vunpack.c.h.b16 %v905
    %v2222 = vunpack.c.l.b16 %v906
    %v2223 = vunpack.c.h.b16 %v906
    %v2224 = vunpack.c.l.b16 %v907
    %v2225 = vunpack.c.h.b16 %v907
    %v2226 = vunpack.c.l.b16 %v908
    %v2227 = vunpack.c.h.b16 %v908
    %v2228 = vunpack.c.l.b16 %v909
    %v2229 = vunpack.c.h.b16 %v909
    %v2230 = vunpack.c.l.b16 %v910
    %v2231 = vunpack.c.h.b16 %v910
    %v2232 = vunpack.c.l.b16 %v911
    %v2233 = vunpack.c.h.b16 %v911
    %v2234 = vunpack.c.l.b16 %v912
    %v2235 = vunpack.c.h.b16 %v912
    %v2236 = vunpack.c.l.b16 %v913
    %v2237 = vunpack.c.h.b16 %v913
    %v2238 = vunpack.c.l.b16 %v914
    %v2239 = vunpack.c.h.b16 %v914
    %v2240 = vunpack.c.l.b16 %v915
    %v2241 = vunpack.c.h.b16 %v915
    %v2242 = vunpack.c.l.b16 %v916
    %v2243 = vunpack.c.h.b16 %v916
    %v2244 = vunpack.c.l.b16 %v917
    %v2245 = vunpack.c.h.b16 %v917
    %v2246 = vunpack.c.l.b16 %v918
    %v2247 = vunpack.c.h.b16 %v918
    %v2248 = vunpack.c.l.b16 %v919
    %v2249 = vunpack.c.h.b16 %v919
    %v2250 = vunpack.c.l.b16 %v920
    %v2251 = vunpack.c.h.b16 %v920
    %v2252 = vunpack.c.l.b16 %v921
    %v2253 = vunpack.c.h.b16 %v921
    %v2254 = vunpack.c.l.b16 %v922
    %v2255 = vunpack.c.h.b16 %v922
    %v2256 = vunpack.c.l.b16 %v923
    %v2257 = vunpack.c.h.b16 %v923
    %v2258 = vunpack.c.l.b16 %v924
    %v2259 = vunpack.c.h.b16 %v924
    %v2260 = vunpack.c.l.b16 %v925
    %v2261 = vunpack.c.h.b16 %v925
    %v2262 = vunpack.c.l.b16 %v926
    %v2263 = vunpack.c.h.b16 %v926
    %v2264 = vunpack.c.l.b16 %v927
    %v2265 = vunpack.c.h.b16 %v927
    %v2266 = vunpack.c.l.b16 %v928
    %v2267 = vunpack.c.h.b16 %v928
    %v2268 = vunpack.c.l.b16 %v929
    %v2269 = vunpack.c.h.b16 %v929
    %v2270 = vunpack.c.l.b16 %v930
    %v2271 = vunpack.c.h.b16 %v930
    %v2272 = vunpack.c.l.b16 %v931
    %v2273 = vunpack.c.h.b16 %v931
    %v2274 = vunpack.c.l.b16 %v932
    %v2275 = vunpack.c.h.b16 %v932
    %v2276 = vunpack.c.l.b16 %v933
    %v2277 = vunpack.c.h.b16 %v933
    %v2278 = vunpack.c.l.b16 %v934
    %v2279 = vunpack.c.h.b16 %v934
    %v2280 = vunpack.c.l.b16 %v935
    %v2281 = vunpack.c.h.b16 %v935
    %v2282 = vunpack.c.l.b16 %v936
    %v2283 = vunpack.c.h.b16 %v936
    %v2284 = vunpack.c.l.b16 %v937
    %v2285 = vunpack.c.h.b16 %v937
    %v2286 = vunpack.c.l.b16 %v938
    %v2287 = vunpack.c.h.b16 %v938
    %v2288 = vunpack.c.l.b16 %v939
    %v2289 = vunpack.c.h.b16 %v939
    %v2290 = vunpack.c.l.b16 %v940
    %v2291 = vunpack.c.h.b16 %v940
    %v2292 = vunpack.c.l.b16 %v941
    %v2293 = vunpack.c.h.b16 %v941
    %v2294 = vunpack.c.l.b16 %v942
    %v2295 = vunpack.c.h.b16 %v942
    %v2296 = vunpack.c.l.b16 %v943
    %v2297 = vunpack.c.h.b16 %v943
    %v2298 = vunpack.c.l.b16 %v944
    %v2299 = vunpack.c.h.b16 %v944
    %v2300 = vunpack.c.l.b16 %v945
    %v2301 = vunpack.c.h.b16 %v945
    %v2302 = vunpack.c.l.b16 %v946
    %v2303 = vunpack.c.h.b16 %v946
    %v2304 = vunpack.c.l.b16 %v947
    %v2305 = vunpack.c.h.b16 %v947
    %v2306 = vunpack.c.l.b16 %v948
    %v2307 = vunpack.c.h.b16 %v948
    %v2308 = vunpack.c.l.b16 %v949
    %v2309 = vunpack.c.h.b16 %v949
    %v2310 = vunpack.c.l.b16 %v950
    %v2311 = vunpack.c.h.b16 %v950
    %v2312 = vunpack.c.l.b16 %v951
    %v2313 = vunpack.c.h.b16 %v951
    %v2314 = vunpack.c.l.b16 %v952
    %v2315 = vunpack.c.h.b16 %v952
    %v2316 = vunpack.c.l.b16 %v953
    %v2317 = vunpack.c.h.b16 %v953
    %v2318 = vunpack.c.l.b16 %v954
    %v2319 = vunpack.c.h.b16 %v954
    %v2320 = vunpack.c.l.b16 %v955
    %v2321 = vunpack.c.h.b16 %v955
    %v2322 = vunpack.c.l.b16 %v956
    %v2323 = vunpack.c.h.b16 %v956
    %v2324 = vunpack.c.l.b16 %v957
    %v2325 = vunpack.c.h.b16 %v957
    %v2326 = vunpack.c.l.b16 %v958
    %v2327 = vunpack.c.h.b16 %v958
    %v2328 = vunpack.c.l.b16 %v959
    %v2329 = vunpack.c.h.b16 %v959
    %v2330 = vunpack.c.l.b16 %v960
    %v2331 = vunpack.c.h.b16 %v960
    %v2332 = vunpack.c.l.b16 %v961
    %v2333 = vunpack.c.h.b16 %v961
    %v2334 = vunpack.c.l.b16 %v962
    %v2335 = vunpack.c.h.b16 %v962
    %v2336 = vunpack.c.l.b16 %v963
    %v2337 = vunpack.c.h.b16 %v963
    %v2338 = vunpack.c.l.b16 %v964
    %v2339 = vunpack.c.h.b16 %v964
    %v2340 = vunpack.c.l.b16 %v965
    %v2341 = vunpack.c.h.b16 %v965
    %v2342 = vunpack.c.l.b16 %v966
    %v2343 = vunpack.c.h.b16 %v966
    %v2344 = vunpack.c.l.b16 %v967
    %v2345 = vunpack.c.h.b16 %v967
    %v2346 = vunpack.c.l.b16 %v968
    %v2347 = vunpack.c.h.b16 %v968
    %v2348 = vunpack.c.l.b16 %v969
    %v2349 = vunpack.c.h.b16 %v969
    %v2350 = vunpack.c.l.b16 %v970
    %v2351 = vunpack.c.h.b16 %v970
    %v2352 = vunpack.c.l.b16 %v971
    %v2353 = vunpack.c.h.b16 %v971
    %v2354 = vunpack.c.l.b16 %v972
    %v2355 = vunpack.c.h.b16 %v972
    %v2356 = vunpack.c.l.b16 %v973
    %v2357 = vunpack.c.h.b16 %v973
    %v2358 = vunpack.c.l.b16 %v974
    %v2359 = vunpack.c.h.b16 %v974
    %v2360 = vunpack.c.l.b16 %v975
    %v2361 = vunpack.c.h.b16 %v975
    %v2362 = vunpack.c.l.b16 %v976
    %v2363 = vunpack.c.h.b16 %v976
    %v2364 = vunpack.c.l.b16 %v977
    %v2365 = vunpack.c.h.b16 %v977
    %v2366 = vunpack.c.l.b16 %v978
    %v2367 = vunpack.c.h.b16 %v978
    %v2368 = vunpack.c.l.b16 %v979
    %v2369 = vunpack.c.h.b16 %v979
    %v2370 = vunpack.c.l.b16 %v980
    %v2371 = vunpack.c.h.b16 %v980
    %v2372 = vunpack.c.l.b16 %v981
    %v2373 = vunpack.c.h.b16 %v981
    %v2374 = vunpack.c.l.b16 %v982
    %v2375 = vunpack.c.h.b16 %v982
    %v2376 = vunpack.c.l.b16 %v983
    %v2377 = vunpack.c.h.b16 %v983
    %v2378 = vunpack.c.l.b16 %v984
    %v2379 = vunpack.c.h.b16 %v984
    %v2380 = vunpack.c.l.b16 %v985
    %v2381 = vunpack.c.h.b16 %v985
    %v2382 = vunpack.c.l.b16 %v986
    %v2383 = vunpack.c.h.b16 %v986
    %v2384 = vunpack.c.l.b16 %v987
    %v2385 = vunpack.c.h.b16 %v987
    %v2386 = vunpack.c.l.b16 %v988
    %v2387 = vunpack.c.h.b16 %v988
    %v2388 = vunpack.c.l.b16 %v989
    %v2389 = vunpack.c.h.b16 %v989
    %v2390 = vunpack.c.l.b16 %v990
    %v2391 = vunpack.c.h.b16 %v990
    %v2392 = vunpack.c.l.b16 %v991
    %v2393 = vunpack.c.h.b16 %v991
    %v2394 = vunpack.c.l.b16 %v992
    %v2395 = vunpack.c.h.b16 %v992
    %v2396 = vunpack.c.l.b16 %v993
    %v2397 = vunpack.c.h.b16 %v993
    %v2398 = vunpack.c.l.b16 %v994
    %v2399 = vunpack.c.h.b16 %v994
    %v2400 = vunpack.c.l.b16 %v995
    %v2401 = vunpack.c.h.b16 %v995
    %v2402 = vunpack.c.l.b16 %v996
    %v2403 = vunpack.c.h.b16 %v996
    %v2404 = vunpack.c.l.b16 %v997
    %v2405 = vunpack.c.h.b16 %v997
    %v2406 = vunpack.c.l.b16 %v998
    %v2407 = vunpack.c.h.b16 %v998
    %v2408 = vunpack.c.l.b16 %v999
    %v2409 = vunpack.c.h.b16 %v999
    %v2410 = vunpack.c.l.b16 %v1000
    %v2411 = vunpack.c.h.b16 %v1000
    %v2412 = vunpack.c.l.b16 %v1001
    %v2413 = vunpack.c.h.b16 %v1001
    %v2414 = vunpack.c.l.b16 %v1002
    %v2415 = vunpack.c.h.b16 %v1002
    %v2416 = vunpack.c.l.b16 %v1003
    %v2417 = vunpack.c.h.b16 %v1003
    %v2418 = vunpack.c.l.b16 %v1004
    %v2419 = vunpack.c.h.b16 %v1004
    %v2420 = vunpack.c.l.b16 %v1005
    %v2421 = vunpack.c.h.b16 %v1005
    %v2422 = vunpack.c.l.b16 %v1006
    %v2423 = vunpack.c.h.b16 %v1006
    %v2424 = vunpack.c.l.b16 %v1007
    %v2425 = vunpack.c.h.b16 %v1007
    %v2426 = vunpack.c.l.b16 %v1008
    %v2427 = vunpack.c.h.b16 %v1008
    %v2428 = vunpack.c.l.b16 %v1009
    %v2429 = vunpack.c.h.b16 %v1009
    %v2430 = vunpack.c.l.b16 %v1010
    %v2431 = vunpack.c.h.b16 %v1010
    %v2432 = vunpack.c.l.b16 %v1011
    %v2433 = vunpack.c.h.b16 %v1011
    %v2434 = vunpack.c.l.b16 %v1012
    %v2435 = vunpack.c.h.b16 %v1012
    %v2436 = vunpack.c.l.b16 %v1013
    %v2437 = vunpack.c.h.b16 %v1013
    %v2438 = vunpack.c.l.b16 %v1014
    %v2439 = vunpack.c.h.b16 %v1014
    %v2440 = vunpack.c.l.b16 %v1015
    %v2441 = vunpack.c.h.b16 %v1015
    %v2442 = vunpack.c.l.b16 %v1016
    %v2443 = vunpack.c.h.b16 %v1016
    %v2444 = vunpack.c.l.b16 %v1017
    %v2445 = vunpack.c.h.b16 %v1017
    %v2446 = vunpack.c.l.b16 %v1018
    %v2447 = vunpack.c.h.b16 %v1018
    %v2448 = vunpack.c.l.b16 %v1019
    %v2449 = vunpack.c.h.b16 %v1019
    %v2450 = vunpack.c.l.b16 %v1020
    %v2451 = vunpack.c.h.b16 %v1020
    %v2452 = vunpack.c.l.b16 %v1021
    %v2453 = vunpack.c.h.b16 %v1021
    %v2454 = vunpack.c.l.b16 %v1022
    %v2455 = vunpack.c.h.b16 %v1022
    %v2456 = vunpack.c.l.b16 %v1023
    %v2457 = vunpack.c.h.b16 %v1023
    %v2458 = vunpack.c.l.b16 %v1024
    %v2459 = vunpack.c.h.b16 %v1024
    %v2460 = vunpack.c.l.b16 %v1025
    %v2461 = vunpack.c.h.b16 %v1025
    %v2462 = vunpack.c.l.b16 %v1026
    %v2463 = vunpack.c.h.b16 %v1026
    %v2464 = vunpack.c.l.b16 %v1027
    %v2465 = vunpack.c.h.b16 %v1027
    %v2466 = vunpack.c.l.b16 %v1028
    %v2467 = vunpack.c.h.b16 %v1028
    %v2468 = vunpack.c.l.b16 %v1029
    %v2469 = vunpack.c.h.b16 %v1029
    %v2470 = vunpack.c.l.b16 %v1030
    %v2471 = vunpack.c.h.b16 %v1030
    %v2472 = vunpack.c.l.b16 %v1031
    %v2473 = vunpack.c.h.b16 %v1031
    %v2474 = vunpack.c.l.b16 %v1032
    %v2475 = vunpack.c.h.b16 %v1032
    %v2476 = vunpack.c.l.b16 %v1033
    %v2477 = vunpack.c.h.b16 %v1033
    %v2478 = vunpack.c.l.b16 %v1034
    %v2479 = vunpack.c.h.b16 %v1034
    %v2480 = vunpack.c.l.b16 %v1035
    %v2481 = vunpack.c.h.b16 %v1035
    %v2482 = vunpack.c.l.b16 %v1036
    %v2483 = vunpack.c.h.b16 %v1036
    %v2484 = vunpack.c.l.b16 %v1037
    %v2485 = vunpack.c.h.b16 %v1037
    %v2486 = vunpack.c.l.b16 %v1038
    %v2487 = vunpack.c.h.b16 %v1038
    %v2488 = vunpack.c.l.b16 %v1039
    %v2489 = vunpack.c.h.b16 %v1039
    %v2490 = vunpack.c.l.b16 %v1040
    %v2491 = vunpack.c.h.b16 %v1040
    %v2492 = vunpack.c.l.b16 %v1041
    %v2493 = vunpack.c.h.b16 %v1041
    %v2494 = vunpack.c.l.b16 %v1042
    %v2495 = vunpack.c.h.b16 %v1042
    %v2496 = vunpack.c.l.b16 %v1043
    %v2497 = vunpack.c.h.b16 %v1043
    %v2498 = vunpack.c.l.b16 %v1044
    %v2499 = vunpack.c.h.b16 %v1044
    %v2500 = vunpack.c.l.b16 %v1045
    %v2501 = vunpack.c.h.b16 %v1045
    %v2502 = vunpack.c.l.b16 %v1046
    %v2503 = vunpack.c.h.b16 %v1046
    %v2504 = vunpack.c.l.b16 %v1047
    %v2505 = vunpack.c.h.b16 %v1047
    %v2506 = vunpack.c.l.b16 %v1048
    %v2507 = vunpack.c.h.b16 %v1048
    %v2508 = vunpack.c.l.b16 %v1049
    %v2509 = vunpack.c.h.b16 %v1049
    %v2510 = vunpack.c.l.b16 %v1050
    %v2511 = vunpack.c.h.b16 %v1050
    %v2512 = vunpack.c.l.b16 %v1051
    %v2513 = vunpack.c.h.b16 %v1051
    %v2514 = vunpack.c.l.b16 %v1052
    %v2515 = vunpack.c.h.b16 %v1052
    %v2516 = vunpack.c.l.b16 %v1053
    %v2517 = vunpack.c.h.b16 %v1053
    %v2518 = vunpack.c.l.b16 %v1054
    %v2519 = vunpack.c.h.b16 %v1054
    %v2520 = vunpack.c.l.b16 %v1055
    %v2521 = vunpack.c.h.b16 %v1055
    %v2522 = vunpack.c.l.b16 %v1056
    %v2523 = vunpack.c.h.b16 %v1056
    %v2524 = vunpack.c.l.b16 %v1057
    %v2525 = vunpack.c.h.b16 %v1057
    %v2526 = vunpack.c.l.b16 %v1058
    %v2527 = vunpack.c.h.b16 %v1058
    %v2528 = vunpack.c.l.b16 %v1059
    %v2529 = vunpack.c.h.b16 %v1059
    %v2530 = vunpack.c.l.b16 %v1060
    %v2531 = vunpack.c.h.b16 %v1060
    %v2532 = vunpack.c.l.b16 %v1061
    %v2533 = vunpack.c.h.b16 %v1061
    %v2534 = vunpack.c.l.b16 %v1062
    %v2535 = vunpack.c.h.b16 %v1062
    %v2536 = vunpack.c.l.b16 %v1063
    %v2537 = vunpack.c.h.b16 %v1063
    %v2538 = vunpack.c.l.b16 %v1064
    %v2539 = vunpack.c.h.b16 %v1064
    %v2540 = vunpack.c.l.b16 %v1065
    %v2541 = vunpack.c.h.b16 %v1065
    %v2542 = vunpack.c.l.b16 %v1066
    %v2543 = vunpack.c.h.b16 %v1066
    %v2544 = vunpack.c.l.b16 %v1067
    %v2545 = vunpack.c.h.b16 %v1067
    %v2546 = vunpack.c.l.b16 %v1068
    %v2547 = vunpack.c.h.b16 %v1068
    %v2548 = vunpack.c.l.b16 %v1069
    %v2549 = vunpack.c.h.b16 %v1069
    %v2550 = vunpack.c.l.b16 %v1070
    %v2551 = vunpack.c.h.b16 %v1070
    %v2552 = vunpack.c.l.b16 %v1071
    %v2553 = vunpack.c.h.b16 %v1071
    %v2554 = vunpack.c.l.b16 %v1072
    %v2555 = vunpack.c.h.b16 %v1072
    %v2556 = vunpack.c.l.b16 %v1073
    %v2557 = vunpack.c.h.b16 %v1073
    %v2558 = vunpack.c.l.b16 %v1074
    %v2559 = vunpack.c.h.b16 %v1074
    %v2560 = vunpack.c.l.b16 %v1075
    %v2561 = vunpack.c.h.b16 %v1075
    %v2562 = vunpack.c.l.b16 %v1076
    %v2563 = vunpack.c.h.b16 %v1076
    %v2564 = vunpack.c.l.b16 %v1077
    %v2565 = vunpack.c.h.b16 %v1077
    %v2566 = vunpack.c.l.b16 %v1078
    %v2567 = vunpack.c.h.b16 %v1078
    %v2568 = vunpack.c.l.b16 %v1079
    %v2569 = vunpack.c.h.b16 %v1079
    %v2570 = vunpack.c.l.b16 %v1080
    %v2571 = vunpack.c.h.b16 %v1080
    %v2572 = vunpack.c.l.b16 %v1081
    %v2573 = vunpack.c.h.b16 %v1081
    %v2574 = vunpack.c.l.b16 %v1082
    %v2575 = vunpack.c.h.b16 %v1082
    %v2576 = vunpack.c.l.b16 %v1083
    %v2577 = vunpack.c.h.b16 %v1083
    %v2578 = vunpack.c.l.b16 %v1084
    %v2579 = vunpack.c.h.b16 %v1084
    %v2580 = vunpack.c.l.b16 %v1085
    %v2581 = vunpack.c.h.b16 %v1085
    %v2582 = vunpack.c.l.b16 %v1086
    %v2583 = vunpack.c.h.b16 %v1086
    %v2584 = vunpack.c.l.b16 %v1087
    %v2585 = vunpack.c.h.b16 %v1087
    %v2586 = vunpack.c.l.b16 %v1088
    %v2587 = vunpack.c.h.b16 %v1088
    %v2588 = vunpack.c.l.b16 %v1089
    %v2589 = vunpack.c.h.b16 %v1089
    %v2590 = vunpack.c.l.b16 %v1090
    %v2591 = vunpack.c.h.b16 %v1090
    %v2592 = vunpack.c.l.b16 %v1091
    %v2593 = vunpack.c.h.b16 %v1091
    %v2594 = vunpack.c.l.b16 %v1092
    %v2595 = vunpack.c.h.b16 %v1092
    %v2596 = vunpack.c.l.b16 %v1093
    %v2597 = vunpack.c.h.b16 %v1093
    %v2598 = vunpack.c.l.b16 %v1094
    %v2599 = vunpack.c.h.b16 %v1094
    %v2600 = vunpack.c.l.b16 %v1095
    %v2601 = vunpack.c.h.b16 %v1095
    %v2602 = vunpack.c.l.b16 %v1096
    %v2603 = vunpack.c.h.b16 %v1096
    %v2604 = vunpack.c.l.b16 %v1097
    %v2605 = vunpack.c.h.b16 %v1097
    %v2606 = vunpack.c.l.b16 %v1098
    %v2607 = vunpack.c.h.b16 %v1098
    %v2608 = vunpack.c.l.b16 %v1099
    %v2609 = vunpack.c.h.b16 %v1099
    %v2610 = vunpack.c.l.b16 %v1100
    %v2611 = vunpack.c.h.b16 %v1100
    %v2612 = vunpack.c.l.b16 %v1101
    %v2613 = vunpack.c.h.b16 %v1101
    %v2614 = vunpack.c.l.b16 %v1102
    %v2615 = vunpack.c.h.b16 %v1102
    %v2616 = vunpack.c.l.b16 %v1103
    %v2617 = vunpack.c.h.b16 %v1103
    %v2618 = vunpack.c.l.b16 %v1104
    %v2619 = vunpack.c.h.b16 %v1104
    %v2620 = vunpack.c.l.b16 %v1105
    %v2621 = vunpack.c.h.b16 %v1105
    %v2622 = vunpack.c.l.b16 %v1106
    %v2623 = vunpack.c.h.b16 %v1106
    %v2624 = vunpack.c.l.b16 %v1107
    %v2625 = vunpack.c.h.b16 %v1107
    %v2626 = vunpack.c.l.b16 %v1108
    %v2627 = vunpack.c.h.b16 %v1108
    %v2628 = vunpack.c.l.b16 %v1109
    %v2629 = vunpack.c.h.b16 %v1109
    %v2630 = vunpack.c.l.b16 %v1110
    %v2631 = vunpack.c.h.b16 %v1110
    %v2632 = vunpack.c.l.b16 %v1111
    %v2633 = vunpack.c.h.b16 %v1111
    %v2634 = vunpack.c.l.b16 %v1112
    %v2635 = vunpack.c.h.b16 %v1112
    %v2636 = vunpack.c.l.b16 %v1113
    %v2637 = vunpack.c.h.b16 %v1113
    %v2638 = vunpack.c.l.b16 %v1114
    %v2639 = vunpack.c.h.b16 %v1114
    %v2640 = vunpack.c.l.b16 %v1115
    %v2641 = vunpack.c.h.b16 %v1115
    %v2642 = vunpack.c.l.b16 %v1116
    %v2643 = vunpack.c.h.b16 %v1116
    %v2644 = vunpack.c.l.b16 %v1117
    %v2645 = vunpack.c.h.b16 %v1117
    %v2646 = vunpack.c.l.b16 %v1118
    %v2647 = vunpack.c.h.b16 %v1118
    %v2648 = vunpack.c.l.b16 %v1119
    %v2649 = vunpack.c.h.b16 %v1119
    %v2650 = vunpack.c.l.b16 %v1120
    %v2651 = vunpack.c.h.b16 %v1120
    %v2652 = vunpack.c.l.b16 %v1121
    %v2653 = vunpack.c.h.b16 %v1121
    %v2654 = vunpack.c.l.b16 %v1122
    %v2655 = vunpack.c.h.b16 %v1122
    %v2656 = vunpack.c.l.b16 %v1123
    %v2657 = vunpack.c.h.b16 %v1123
    %v2658 = vunpack.c.l.b16 %v1124
    %v2659 = vunpack.c.h.b16 %v1124
    %v2660 = vunpack.c.l.b16 %v1125
    %v2661 = vunpack.c.h.b16 %v1125
    %v2662 = vunpack.c.l.b16 %v1126
    %v2663 = vunpack.c.h.b16 %v1126
    %v2664 = vunpack.c.l.b16 %v1127
    %v2665 = vunpack.c.h.b16 %v1127
    %v2666 = vunpack.c.l.b16 %v1128
    %v2667 = vunpack.c.h.b16 %v1128
    %v2668 = vunpack.c.l.b16 %v1129
    %v2669 = vunpack.c.h.b16 %v1129
    %v2670 = vunpack.c.l.b16 %v1130
    %v2671 = vunpack.c.h.b16 %v1130
    %v2672 = vunpack.c.l.b16 %v1131
    %v2673 = vunpack.c.h.b16 %v1131
    %v2674 = vunpack.c.l.b16 %v1132
    %v2675 = vunpack.c.h.b16 %v1132
    %v2676 = vunpack.c.l.b16 %v1133
    %v2677 = vunpack.c.h.b16 %v1133
    %v2678 = vunpack.c.l.b16 %v1134
    %v2679 = vunpack.c.h.b16 %v1134
    %v2680 = vunpack.c.l.b16 %v1135
    %v2681 = vunpack.c.h.b16 %v1135
    %v2682 = vunpack.c.l.b16 %v1136
    %v2683 = vunpack.c.h.b16 %v1136
    %v2684 = vunpack.c.l.b16 %v1137
    %v2685 = vunpack.c.h.b16 %v1137
    %v2686 = vunpack.c.l.b16 %v1138
    %v2687 = vunpack.c.h.b16 %v1138
    %v2688 = vunpack.c.l.b16 %v1139
    %v2689 = vunpack.c.h.b16 %v1139
    %v2690 = vunpack.c.l.b16 %v1140
    %v2691 = vunpack.c.h.b16 %v1140
    %v2692 = vunpack.c.l.b16 %v1141
    %v2693 = vunpack.c.h.b16 %v1141
    %v2694 = vunpack.c.l.b16 %v1142
    %v2695 = vunpack.c.h.b16 %v1142
    %v2696 = vunpack.c.l.b16 %v1143
    %v2697 = vunpack.c.h.b16 %v1143
    %v2698 = vunpack.c.l.b16 %v1144
    %v2699 = vunpack.c.h.b16 %v1144
    %v2700 = vunpack.c.l.b16 %v1145
    %v2701 = vunpack.c.h.b16 %v1145
    %v2702 = vunpack.c.l.b16 %v1146
    %v2703 = vunpack.c.h.b16 %v1146
    %v2704 = vunpack.c.l.b16 %v1147
    %v2705 = vunpack.c.h.b16 %v1147
    %v2706 = vunpack.c.l.b16 %v1148
    %v2707 = vunpack.c.h.b16 %v1148
    %v2708 = vunpack.c.l.b16 %v1149
    %v2709 = vunpack.c.h.b16 %v1149
    %v2710 = vunpack.c.l.b16 %v1150
    %v2711 = vunpack.c.h.b16 %v1150
    %v2712 = vunpack.c.l.b16 %v1151
    %v2713 = vunpack.c.h.b16 %v1151
    %v2714 = vunpack.c.l.b16 %v1152
    %v2715 = vunpack.c.h.b16 %v1152
    %v2716 = vunpack.c.l.b16 %v1153
    %v2717 = vunpack.c.h.b16 %v1153
    %v2718 = vunpack.c.l.b16 %v1154
    %v2719 = vunpack.c.h.b16 %v1154
    %v2720 = vunpack.c.l.b16 %v1155
    %v2721 = vunpack.c.h.b16 %v1155
    %v2722 = vunpack.c.l.b16 %v1156
    %v2723 = vunpack.c.h.b16 %v1156
    %v2724 = vunpack.c.l.b16 %v1157
    %v2725 = vunpack.c.h.b16 %v1157
    %v2726 = vunpack.c.l.b16 %v1158
    %v2727 = vunpack.c.h.b16 %v1158
    %v2728 = vunpack.c.l.b16 %v1159
    %v2729 = vunpack.c.h.b16 %v1159
    %v2730 = vunpack.c.l.b16 %v1160
    %v2731 = vunpack.c.h.b16 %v1160
    %v2732 = vunpack.c.l.b16 %v1161
    %v2733 = vunpack.c.h.b16 %v1161
    %v2734 = vunpack.c.l.b16 %v1162
    %v2735 = vunpack.c.h.b16 %v1162
    %v2736 = vunpack.c.l.b16 %v1163
    %v2737 = vunpack.c.h.b16 %v1163
    %v2738 = vunpack.c.l.b16 %v1164
    %v2739 = vunpack.c.h.b16 %v1164
    %v2740 = vunpack.c.l.b16 %v1165
    %v2741 = vunpack.c.h.b16 %v1165
    %v2742 = vunpack.c.l.b16 %v1166
    %v2743 = vunpack.c.h.b16 %v1166
    %v2744 = vunpack.c.l.b16 %v1167
    %v2745 = vunpack.c.h.b16 %v1167
    %v2746 = vunpack.c.l.b16 %v1168
    %v2747 = vunpack.c.h.b16 %v1168
    %v2748 = vunpack.c.l.b16 %v1169
    %v2749 = vunpack.c.h.b16 %v1169
    %v2750 = vunpack.c.l.b16 %v1170
    %v2751 = vunpack.c.h.b16 %v1170
    %v2752 = vunpack.c.l.b16 %v1171
    %v2753 = vunpack.c.h.b16 %v1171
    %v2754 = vunpack.c.l.b16 %v1172
    %v2755 = vunpack.c.h.b16 %v1172
    %v2756 = vunpack.c.l.b16 %v1173
    %v2757 = vunpack.c.h.b16 %v1173
    %v2758 = vunpack.c.l.b16 %v1174
    %v2759 = vunpack.c.h.b16 %v1174
    %v2760 = vunpack.c.l.b16 %v1175
    %v2761 = vunpack.c.h.b16 %v1175
    %v2762 = vunpack.c.l.b16 %v1176
    %v2763 = vunpack.c.h.b16 %v1176
    %v2764 = vunpack.c.l.b16 %v1177
    %v2765 = vunpack.c.h.b16 %v1177
    %v2766 = vunpack.c.l.b16 %v1178
    %v2767 = vunpack.c.h.b16 %v1178
    %v2768 = vunpack.c.l.b16 %v1179
    %v2769 = vunpack.c.h.b16 %v1179
    %v2770 = vunpack.c.l.b16 %v1180
    %v2771 = vunpack.c.h.b16 %v1180
    %v2772 = vunpack.c.l.b16 %v1181
    %v2773 = vunpack.c.h.b16 %v1181
    %v2774 = vunpack.c.l.b16 %v1182
    %v2775 = vunpack.c.h.b16 %v1182
    %v2776 = vunpack.c.l.b16 %v1183
    %v2777 = vunpack.c.h.b16 %v1183
    %v2778 = vunpack.c.l.b16 %v1184
    %v2779 = vunpack.c.h.b16 %v1184
    %v2780 = vunpack.c.l.b16 %v1185
    %v2781 = vunpack.c.h.b16 %v1185
    %v2782 = vunpack.c.l.b16 %v1186
    %v2783 = vunpack.c.h.b16 %v1186
    %v2784 = vunpack.c.l.b16 %v1187
    %v2785 = vunpack.c.h.b16 %v1187
    %v2786 = vunpack.c.l.b16 %v1188
    %v2787 = vunpack.c.h.b16 %v1188
    %v2788 = vunpack.c.l.b16 %v1189
    %v2789 = vunpack.c.h.b16 %v1189
    %v2790 = vunpack.c.l.b16 %v1190
    %v2791 = vunpack.c.h.b16 %v1190
    %v2792 = vunpack.c.l.b16 %v1191
    %v2793 = vunpack.c.h.b16 %v1191
    %v2794 = vunpack.c.l.b16 %v1192
    %v2795 = vunpack.c.h.b16 %v1192
    %v2796 = vunpack.c.l.b16 %v1193
    %v2797 = vunpack.c.h.b16 %v1193
    %v2798 = vunpack.c.l.b16 %v1194
    %v2799 = vunpack.c.h.b16 %v1194
    %v2800 = vunpack.c.l.b16 %v1195
    %v2801 = vunpack.c.h.b16 %v1195
    %v2802 = vunpack.c.l.b16 %v1196
    %v2803 = vunpack.c.h.b16 %v1196
    %v2804 = vunpack.c.l.b16 %v1197
    %v2805 = vunpack.c.h.b16 %v1197
    %v2806 = vunpack.c.l.b16 %v1198
    %v2807 = vunpack.c.h.b16 %v1198
    %v2808 = vunpack.c.l.b16 %v1199
    %v2809 = vunpack.c.h.b16 %v1199
    %v2810 = vunpack.c.l.b16 %v1200
    %v2811 = vunpack.c.h.b16 %v1200
    %v2812 = vunpack.c.l.b16 %v1201
    %v2813 = vunpack.c.h.b16 %v1201
    %v2814 = vunpack.c.l.b16 %v1202
    %v2815 = vunpack.c.h.b16 %v1202
    %v2816 = vunpack.c.l.b16 %v1203
    %v2817 = vunpack.c.h.b16 %v1203
    %v2818 = vunpack.c.l.b16 %v1204
    %v2819 = vunpack.c.h.b16 %v1204
    %v2820 = vunpack.c.l.b16 %v1205
    %v2821 = vunpack.c.h.b16 %v1205
    %v2822 = vunpack.c.l.b16 %v1206
    %v2823 = vunpack.c.h.b16 %v1206
    %v2824 = vunpack.c.l.b16 %v1207
    %v2825 = vunpack.c.h.b16 %v1207
    %v2826 = vunpack.c.l.b16 %v1208
    %v2827 = vunpack.c.h.b16 %v1208
    %v2828 = vunpack.c.l.b16 %v1209
    %v2829 = vunpack.c.h.b16 %v1209
    %v2830 = vunpack.c.l.b16 %v1210
    %v2831 = vunpack.c.h.b16 %v1210
    %v2832 = vunpack.c.l.b16 %v1211
    %v2833 = vunpack.c.h.b16 %v1211
    %v2834 = vunpack.c.l.b16 %v1212
    %v2835 = vunpack.c.h.b16 %v1212
    %v2836 = vunpack.c.l.b16 %v1213
    %v2837 = vunpack.c.h.b16 %v1213
    %v2838 = vunpack.c.l.b16 %v1214
    %v2839 = vunpack.c.h.b16 %v1214
    %v2840 = vunpack.c.l.b16 %v1215
    %v2841 = vunpack.c.h.b16 %v1215
    %v2842 = vunpack.c.l.b16 %v1216
    %v2843 = vunpack.c.h.b16 %v1216
    %v2844 = vunpack.c.l.b16 %v1217
    %v2845 = vunpack.c.h.b16 %v1217
    %v2846 = vunpack.c.l.b16 %v1218
    %v2847 = vunpack.c.h.b16 %v1218
    %v2848 = vunpack.c.l.b16 %v1219
    %v2849 = vunpack.c.h.b16 %v1219
    %v2850 = vunpack.c.l.b16 %v1220
    %v2851 = vunpack.c.h.b16 %v1220
    %v2852 = vunpack.c.l.b16 %v1221
    %v2853 = vunpack.c.h.b16 %v1221
    %v2854 = vunpack.c.l.b16 %v1222
    %v2855 = vunpack.c.h.b16 %v1222
    %v2856 = vunpack.c.l.b16 %v1223
    %v2857 = vunpack.c.h.b16 %v1223
    %v2858 = vunpack.c.l.b16 %v1224
    %v2859 = vunpack.c.h.b16 %v1224
    %v2860 = vunpack.c.l.b16 %v1225
    %v2861 = vunpack.c.h.b16 %v1225
    %v2862 = vunpack.c.l.b16 %v1226
    %v2863 = vunpack.c.h.b16 %v1226
    %v2864 = vunpack.c.l.b16 %v1227
    %v2865 = vunpack.c.h.b16 %v1227
    %v2866 = vunpack.c.l.b16 %v1228
    %v2867 = vunpack.c.h.b16 %v1228
    %v2868 = vunpack.c.l.b16 %v1229
    %v2869 = vunpack.c.h.b16 %v1229
    %v2870 = vunpack.c.l.b16 %v1230
    %v2871 = vunpack.c.h.b16 %v1230
    %v2872 = vunpack.c.l.b16 %v1231
    %v2873 = vunpack.c.h.b16 %v1231
    %v2874 = vunpack.c.l.b16 %v1232
    %v2875 = vunpack.c.h.b16 %v1232
    %v2876 = vunpack.c.l.b16 %v1233
    %v2877 = vunpack.c.h.b16 %v1233
    %v2878 = vunpack.c.l.b16 %v1234
    %v2879 = vunpack.c.h.b16 %v1234
    %v2880 = vunpack.c.l.b16 %v1235
    %v2881 = vunpack.c.h.b16 %v1235
    %v2882 = vunpack.c.l.b16 %v1236
    %v2883 = vunpack.c.h.b16 %v1236
    %v2884 = vunpack.c.l.b16 %v1237
    %v2885 = vunpack.c.h.b16 %v1237
    %v2886 = vunpack.c.l.b16 %v1238
    %v2887 = vunpack.c.h.b16 %v1238
    %v2888 = vunpack.c.l.b16 %v1239
    %v2889 = vunpack.c.h.b16 %v1239
    %v2890 = vunpack.c.l.b16 %v1240
    %v2891 = vunpack.c.h.b16 %v1240
    %v2892 = vunpack.c.l.b16 %v1241
    %v2893 = vunpack.c.h.b16 %v1241
    %v2894 = vunpack.c.l.b16 %v1242
    %v2895 = vunpack.c.h.b16 %v1242
    %v2896 = vunpack.c.l.b16 %v1243
    %v2897 = vunpack.c.h.b16 %v1243
    %v2898 = vunpack.c.l.b16 %v1244
    %v2899 = vunpack.c.h.b16 %v1244
    %v2900 = vunpack.c.l.b16 %v1245
    %v2901 = vunpack.c.h.b16 %v1245
    %v2902 = vunpack.c.l.b16 %v1246
    %v2903 = vunpack.c.h.b16 %v1246
    %v2904 = vunpack.c.l.b16 %v1247
    %v2905 = vunpack.c.h.b16 %v1247
    %v2906 = vunpack.c.l.b16 %v1248
    %v2907 = vunpack.c.h.b16 %v1248
    %v2908 = vunpack.c.l.b16 %v1249
    %v2909 = vunpack.c.h.b16 %v1249
    %v2910 = vunpack.c.l.b16 %v1250
    %v2911 = vunpack.c.h.b16 %v1250
    %v2912 = vunpack.c.l.b16 %v1251
    %v2913 = vunpack.c.h.b16 %v1251
    %v2914 = vunpack.c.l.b16 %v1252
    %v2915 = vunpack.c.h.b16 %v1252
    %v2916 = vunpack.c.l.b16 %v1253
    %v2917 = vunpack.c.h.b16 %v1253
    %v2918 = vunpack.c.l.b16 %v1254
    %v2919 = vunpack.c.h.b16 %v1254
    %v2920 = vunpack.c.l.b16 %v1255
    %v2921 = vunpack.c.h.b16 %v1255
    %v2922 = vunpack.c.l.b16 %v1256
    %v2923 = vunpack.c.h.b16 %v1256
    %v2924 = vunpack.c.l.b16 %v1257
    %v2925 = vunpack.c.h.b16 %v1257
    %v2926 = vunpack.c.l.b16 %v1258
    %v2927 = vunpack.c.h.b16 %v1258
    %v2928 = vunpack.c.l.b16 %v1259
    %v2929 = vunpack.c.h.b16 %v1259
    %v2930 = vunpack.c.l.b16 %v1260
    %v2931 = vunpack.c.h.b16 %v1260
    %v2932 = vunpack.c.l.b16 %v1261
    %v2933 = vunpack.c.h.b16 %v1261
    %v2934 = vunpack.c.l.b16 %v1262
    %v2935 = vunpack.c.h.b16 %v1262
    %v2936 = vunpack.c.l.b16 %v1263
    %v2937 = vunpack.c.h.b16 %v1263
    %v2938 = vunpack.c.l.b16 %v1264
    %v2939 = vunpack.c.h.b16 %v1264
    %v2940 = vunpack.c.l.b16 %v1265
    %v2941 = vunpack.c.h.b16 %v1265
    %v2942 = vunpack.c.l.b16 %v1266
    %v2943 = vunpack.c.h.b16 %v1266
    %v2944 = vunpack.c.l.b16 %v1267
    %v2945 = vunpack.c.h.b16 %v1267
    %v2946 = vunpack.c.l.b16 %v1268
    %v2947 = vunpack.c.h.b16 %v1268
    %v2948 = vunpack.c.l.b16 %v1269
    %v2949 = vunpack.c.h.b16 %v1269
    %v2950 = vunpack.c.l.b16 %v1270
    %v2951 = vunpack.c.h.b16 %v1270
    %v2952 = vunpack.c.l.b16 %v1271
    %v2953 = vunpack.c.h.b16 %v1271
    %v2954 = vunpack.c.l.b16 %v1272
    %v2955 = vunpack.c.h.b16 %v1272
    %v2956 = vunpack.c.l.b16 %v1273
    %v2957 = vunpack.c.h.b16 %v1273
    %v2958 = vunpack.c.l.b16 %v1274
    %v2959 = vunpack.c.h.b16 %v1274
    %v2960 = vunpack.c.l.b16 %v1275
    %v2961 = vunpack.c.h.b16 %v1275
    %v2962 = vunpack.c.l.b16 %v1276
    %v2963 = vunpack.c.h.b16 %v1276
    %v2964 = vunpack.c.l.b16 %v1277
    %v2965 = vunpack.c.h.b16 %v1277
    %v2966 = vunpack.c.l.b16 %v1278
    %v2967 = vunpack.c.h.b16 %v1278
    %v2968 = vunpack.c.l.b16 %v1279
    %v2969 = vunpack.c.h.b16 %v1279
    %v2970 = vunpack.c.l.b16 %v1280
    %v2971 = vunpack.c.h.b16 %v1280
    %v2972 = vunpack.c.l.b16 %v1281
    %v2973 = vunpack.c.h.b16 %v1281
    %v2974 = vunpack.c.l.b16 %v1282
    %v2975 = vunpack.c.h.b16 %v1282
    %v2976 = vunpack.c.l.b16 %v1283
    %v2977 = vunpack.c.h.b16 %v1283
    %v2978 = vunpack.c.l.b16 %v1284
    %v2979 = vunpack.c.h.b16 %v1284
    %v2980 = vunpack.c.l.b16 %v1285
    %v2981 = vunpack.c.h.b16 %v1285
    %v2982 = vunpack.c.l.b16 %v1286
    %v2983 = vunpack.c.h.b16 %v1286
    %v2984 = vunpack.c.l.b16 %v1287
    %v2985 = vunpack.c.h.b16 %v1287
    %v2986 = vunpack.c.l.b16 %v1288
    %v2987 = vunpack.c.h.b16 %v1288
    %v2988 = vunpack.c.l.b16 %v1289
    %v2989 = vunpack.c.h.b16 %v1289
    %v2990 = vunpack.c.l.b16 %v1290
    %v2991 = vunpack.c.h.b16 %v1290
    %v2992 = vunpack.c.l.b16 %v1291
    %v2993 = vunpack.c.h.b16 %v1291
    %v2994 = vunpack.c.l.b16 %v1292
    %v2995 = vunpack.c.h.b16 %v1292
    %v2996 = vunpack.c.l.b16 %v1293
    %v2997 = vunpack.c.h.b16 %v1293
    %v2998 = vunpack.c.l.b16 %v1294
    %v2999 = vunpack.c.h.b16 %v1294
    %v3000 = vunpack.c.l.b16 %v1295
    %v3001 = vunpack.c.h.b16 %v1295
    %v3002 = vunpack.c.l.b16 %v1296
    %v3003 = vunpack.c.h.b16 %v1296
    %v3004 = vunpack.c.l.b16 %v1297
    %v3005 = vunpack.c.h.b16 %v1297
    %v3006 = vunpack.c.l.b16 %v1298
    %v3007 = vunpack.c.h.b16 %v1298
    %v3008 = vunpack.c.l.b16 %v1299
    %v3009 = vunpack.c.h.b16 %v1299
    %v3010 = vunpack.c.l.b16 %v1300
    %v3011 = vunpack.c.h.b16 %v1300
    %v3012 = vunpack.c.l.b16 %v1301
    %v3013 = vunpack.c.h.b16 %v1301
    %v3014 = vunpack.c.l.b16 %v1302
    %v3015 = vunpack.c.h.b16 %v1302
    %v3016 = vunpack.c.l.b16 %v1303
    %v3017 = vunpack.c.h.b16 %v1303
    %v3018 = vunpack.c.l.b16 %v1304
    %v3019 = vunpack.c.h.b16 %v1304
    %v3020 = vunpack.c.l.b16 %v1305
    %v3021 = vunpack.c.h.b16 %v1305
    %v3022 = vunpack.c.l.b16 %v1306
    %v3023 = vunpack.c.h.b16 %v1306
    %v3024 = vunpack.c.l.b16 %v1307
    %v3025 = vunpack.c.h.b16 %v1307
    %v3026 = vunpack.c.l.b16 %v1308
    %v3027 = vunpack.c.h.b16 %v1308
    %v3028 = vunpack.c.l.b16 %v1309
    %v3029 = vunpack.c.h.b16 %v1309
    %v3030 = vunpack.c.l.b16 %v1310
    %v3031 = vunpack.c.h.b16 %v1310
    %v3032 = vunpack.c.l.b16 %v1311
    %v3033 = vunpack.c.h.b16 %v1311
    %v3034 = vunpack.c.l.b16 %v1312
    %v3035 = vunpack.c.h.b16 %v1312
    %v3036 = vunpack.c.l.b16 %v1313
    %v3037 = vunpack.c.h.b16 %v1313
    %v3038 = vunpack.c.l.b16 %v1314
    %v3039 = vunpack.c.h.b16 %v1314
    %v3040 = vunpack.c.l.b16 %v1315
    %v3041 = vunpack.c.h.b16 %v1315
    %v3042 = vunpack.c.l.b16 %v1316
    %v3043 = vunpack.c.h.b16 %v1316
    %v3044 = vunpack.c.l.b16 %v1317
    %v3045 = vunpack.c.h.b16 %v1317
    %v3046 = vunpack.c.l.b16 %v1318
    %v3047 = vunpack.c.h.b16 %v1318
    %v3048 = vunpack.c.l.b16 %v1319
    %v3049 = vunpack.c.h.b16 %v1319
    %v3050 = vunpack.c.l.b16 %v1320
    %v3051 = vunpack.c.h.b16 %v1320
    %v3052 = vunpack.c.l.b16 %v1321
    %v3053 = vunpack.c.h.b16 %v1321
    %v3054 = vunpack.c.l.b16 %v1322
    %v3055 = vunpack.c.h.b16 %v1322
    %v3056 = vunpack.c.l.b16 %v1323
    %v3057 = vunpack.c.h.b16 %v1323
    %v3058 = vunpack.c.l.b16 %v1324
    %v3059 = vunpack.c.h.b16 %v1324
    %v3060 = vunpack.c.l.b16 %v1325
    %v3061 = vunpack.c.h.b16 %v1325
    %v3062 = vunpack.c.l.b16 %v1326
    %v3063 = vunpack.c.h.b16 %v1326
    %v3064 = vunpack.c.l.b16 %v1327
    %v3065 = vunpack.c.h.b16 %v1327
    %v3066 = vunpack.c.l.b16 %v1328
    %v3067 = vunpack.c.h.b16 %v1328
    %v3068 = vunpack.c.l.b16 %v1329
    %v3069 = vunpack.c.h.b16 %v1329
    %v3070 = vunpack.c.l.b16 %v1330
    %v3071 = vunpack.c.h.b16 %v1330
    %v3072 = vunpack.c.l.b16 %v1331
    %v3073 = vunpack.c.h.b16 %v1331
    %v3074 = vunpack.c.l.b16 %v1332
    %v3075 = vunpack.c.h.b16 %v1332
    %v3076 = vunpack.c.l.b16 %v1333
    %v3077 = vunpack.c.h.b16 %v1333
    %v3078 = vunpack.c.l.b16 %v1334
    %v3079 = vunpack.c.h.b16 %v1334
    %v3080 = vunpack.c.l.b16 %v1335
    %v3081 = vunpack.c.h.b16 %v1335
    %v3082 = vunpack.c.l.b16 %v1336
    %v3083 = vunpack.c.h.b16 %v1336
    %v3084 = vunpack.c.l.b16 %v1337
    %v3085 = vunpack.c.h.b16 %v1337
    %v3086 = vunpack.c.l.b16 %v1338
    %v3087 = vunpack.c.h.b16 %v1338
    %v3088 = vunpack.c.l.b16 %v1339
    %v3089 = vunpack.c.h.b16 %v1339
    %v3090 = vunpack.c.l.b16 %v1340
    %v3091 = vunpack.c.h.b16 %v1340
    %v3092 = vunpack.c.l.b16 %v1341
    %v3093 = vunpack.c.h.b16 %v1341
    %v3094 = vunpack.c.l.b16 %v1342
    %v3095 = vunpack.c.h.b16 %v1342
    %v3096 = vunpack.c.l.b16 %v1343
    %v3097 = vunpack.c.h.b16 %v1343
    %v3098 = vunpack.c.l.b16 %v1344
    %v3099 = vunpack.c.h.b16 %v1344
    %v3100 = vunpack.c.l.b16 %v1345
    %v3101 = vunpack.c.h.b16 %v1345
    %v3102 = vunpack.c.l.b16 %v1346
    %v3103 = vunpack.c.h.b16 %v1346
    %v3104 = vunpack.c.l.b16 %v1347
    %v3105 = vunpack.c.h.b16 %v1347
    %v3106 = vunpack.c.l.b16 %v1348
    %v3107 = vunpack.c.h.b16 %v1348
    %v3108 = vunpack.c.l.b16 %v1349
    %v3109 = vunpack.c.h.b16 %v1349
    %v3110 = vunpack.c.l.b16 %v1350
    %v3111 = vunpack.c.h.b16 %v1350
    %v3112 = vunpack.c.l.b16 %v1351
    %v3113 = vunpack.c.h.b16 %v1351
    %v3114 = vunpack.c.l.b16 %v1352
    %v3115 = vunpack.c.h.b16 %v1352
    %v3116 = vunpack.c.l.b16 %v1353
    %v3117 = vunpack.c.h.b16 %v1353
    %v3118 = vunpack.c.l.b16 %v1354
    %v3119 = vunpack.c.h.b16 %v1354
    %v3120 = vunpack.c.l.b16 %v1355
    %v3121 = vunpack.c.h.b16 %v1355
    %v3122 = vpack.c.b16 %v2106, %v2098
    %v3123 = vpack.c.b16 %v2107, %v2099
    %v3124 = vpack.c.b16 %v2108, %v2100
    %v3125 = vpack.c.b16 %v2109, %v2101
    %v3126 = vpack.c.b16 %v2110, %v2102
    %v3127 = vpack.c.b16 %v2111, %v2103
    %v3128 = vpack.c.b16 %v2112, %v2104
    %v3129 = vpack.c.b16 %v2113, %v2105
    %v3130 = vpack.c.b16 %v2122, %v2114
    %v3131 = vpack.c.b16 %v2123, %v2115
    %v3132 = vpack.c.b16 %v2124, %v2116
    %v3133 = vpack.c.b16 %v2125, %v2117
    %v3134 = vpack.c.b16 %v2126, %v2118
    %v3135 = vpack.c.b16 %v2127, %v2119
    %v3136 = vpack.c.b16 %v2128, %v2120
    %v3137 = vpack.c.b16 %v2129, %v2121
    %v3138 = vpack.c.b16 %v2138, %v2130
    %v3139 = vpack.c.b16 %v2139, %v2131
    %v3140 = vpack.c.b16 %v2140, %v2132
    %v3141 = vpack.c.b16 %v2141, %v2133
    %v3142 = vpack.c.b16 %v2142, %v2134
    %v3143 = vpack.c.b16 %v2143, %v2135
    %v3144 = vpack.c.b16 %v2144, %v2136
    %v3145 = vpack.c.b16 %v2145, %v2137
    %v3146 = vpack.c.b16 %v2154, %v2146
    %v3147 = vpack.c.b16 %v2155, %v2147
    %v3148 = vpack.c.b16 %v2156, %v2148
    %v3149 = vpack.c.b16 %v2157, %v2149
    %v3150 = vpack.c.b16 %v2158, %v2150
    %v3151 = vpack.c.b16 %v2159, %v2151
    %v3152 = vpack.c.b16 %v2160, %v2152
    %v3153 = vpack.c.b16 %v2161, %v2153
    %v3154 = vpack.c.b16 %v2170, %v2162
    %v3155 = vpack.c.b16 %v2171, %v2163
    %v3156 = vpack.c.b16 %v2172, %v2164
    %v3157 = vpack.c.b16 %v2173, %v2165
    %v3158 = vpack.c.b16 %v2174, %v2166
    %v3159 = vpack.c.b16 %v2175, %v2167
    %v3160 = vpack.c.b16 %v2176, %v2168
    %v3161 = vpack.c.b16 %v2177, %v2169
    %v3162 = vpack.c.b16 %v2186, %v2178
    %v3163 = vpack.c.b16 %v2187, %v2179
    %v3164 = vpack.c.b16 %v2188, %v2180
    %v3165 = vpack.c.b16 %v2189, %v2181
    %v3166 = vpack.c.b16 %v2190, %v2182
    %v3167 = vpack.c.b16 %v2191, %v2183
    %v3168 = vpack.c.b16 %v2192, %v2184
    %v3169 = vpack.c.b16 %v2193, %v2185
    %v3170 = vpack.c.b16 %v2202, %v2194
    %v3171 = vpack.c.b16 %v2203, %v2195
    %v3172 = vpack.c.b16 %v2204, %v2196
    %v3173 = vpack.c.b16 %v2205, %v2197
    %v3174 = vpack.c.b16 %v2206, %v2198
    %v3175 = vpack.c.b16 %v2207, %v2199
    %v3176 = vpack.c.b16 %v2208, %v2200
    %v3177 = vpack.c.b16 %v2209, %v2201
    %v3178 = vpack.c.b16 %v2218, %v2210
    %v3179 = vpack.c.b16 %v2219, %v2211
    %v3180 = vpack.c.b16 %v2220, %v2212
    %v3181 = vpack.c.b16 %v2221, %v2213
    %v3182 = vpack.c.b16 %v2222, %v2214
    %v3183 = vpack.c.b16 %v2223, %v2215
    %v3184 = vpack.c.b16 %v2224, %v2216
    %v3185 = vpack.c.b16 %v2225, %v2217
    %v3186 = vpack.c.b16 %v2234, %v2226
    %v3187 = vpack.c.b16 %v2235, %v2227
    %v3188 = vpack.c.b16 %v2236, %v2228
    %v3189 = vpack.c.b16 %v2237, %v2229
    %v3190 = vpack.c.b16 %v2238, %v2230
    %v3191 = vpack.c.b16 %v2239, %v2231
    %v3192 = vpack.c.b16 %v2240, %v2232
    %v3193 = vpack.c.b16 %v2241, %v2233
    %v3194 = vpack.c.b16 %v2250, %v2242
    %v3195 = vpack.c.b16 %v2251, %v2243
    %v3196 = vpack.c.b16 %v2252, %v2244
    %v3197 = vpack.c.b16 %v2253, %v2245
    %v3198 = vpack.c.b16 %v2254, %v2246
    %v3199 = vpack.c.b16 %v2255, %v2247
    %v3200 = vpack.c.b16 %v2256, %v2248
    %v3201 = vpack.c.b16 %v2257, %v2249
    %v3202 = vpack.c.b16 %v2266, %v2258
    %v3203 = vpack.c.b16 %v2267, %v2259
    %v3204 = vpack.c.b16 %v2268, %v2260
    %v3205 = vpack.c.b16 %v2269, %v2261
    %v3206 = vpack.c.b16 %v2270, %v2262
    %v3207 = vpack.c.b16 %v2271, %v2263
    %v3208 = vpack.c.b16 %v2272, %v2264
    %v3209 = vpack.c.b16 %v2273, %v2265
    %v3210 = vpack.c.b16 %v2282, %v2274
    %v3211 = vpack.c.b16 %v2283, %v2275
    %v3212 = vpack.c.b16 %v2284, %v2276
    %v3213 = vpack.c.b16 %v2285, %v2277
    %v3214 = vpack.c.b16 %v2286, %v2278
    %v3215 = vpack.c.b16 %v2287, %v2279
    %v3216 = vpack.c.b16 %v2288, %v2280
    %v3217 = vpack.c.b16 %v2289, %v2281
    %v3218 = vpack.c.b16 %v2298, %v2290
    %v3219 = vpack.c.b16 %v2299, %v2291
    %v3220 = vpack.c.b16 %v2300, %v2292
    %v3221 = vpack.c.b16 %v2301, %v2293
    %v3222 = vpack.c.b16 %v2302, %v2294
    %v3223 = vpack.c.b16 %v2303, %v2295
    %v3224 = vpack.c.b16 %v2304, %v2296
    %v3225 = vpack.c.b16 %v2305, %v2297
    %v3226 = vpack.c.b16 %v2314, %v2306
    %v3227 = vpack.c.b16 %v2315, %v2307
    %v3228 = vpack.c.b16 %v2316, %v2308
    %v3229 = vpack.c.b16 %v2317, %v2309
    %v3230 = vpack.c.b16 %v2318, %v2310
    %v3231 = vpack.c.b16 %v2319, %v2311
    %v3232 = vpack.c.b16 %v2320, %v2312
    %v3233 = vpack.c.b16 %v2321, %v2313
    %v3234 = vpack.c.b16 %v2330, %v2322
    %v3235 = vpack.c.b16 %v2331, %v2323
    %v3236 = vpack.c.b16 %v2332, %v2324
    %v3237 = vpack.c.b16 %v2333, %v2325
    %v3238 = vpack.c.b16 %v2334, %v2326
    %v3239 = vpack.c.b16 %v2335, %v2327
    %v3240 = vpack.c.b16 %v2336, %v2328
    %v3241 = vpack.c.b16 %v2337, %v2329
    %v3242 = vpack.c.b16 %v2346, %v2338
    %v3243 = vpack.c.b16 %v2347, %v2339
    %v3244 = vpack.c.b16 %v2348, %v2340
    %v3245 = vpack.c.b16 %v2349, %v2341
    %v3246 = vpack.c.b16 %v2350, %v2342
    %v3247 = vpack.c.b16 %v2351, %v2343
    %v3248 = vpack.c.b16 %v2352, %v2344
    %v3249 = vpack.c.b16 %v2353, %v2345
    %v3250 = vpack.c.b16 %v2362, %v2354
    %v3251 = vpack.c.b16 %v2363, %v2355
    %v3252 = vpack.c.b16 %v2364, %v2356
    %v3253 = vpack.c.b16 %v2365, %v2357
    %v3254 = vpack.c.b16 %v2366, %v2358
    %v3255 = vpack.c.b16 %v2367, %v2359
    %v3256 = vpack.c.b16 %v2368, %v2360
    %v3257 = vpack.c.b16 %v2369, %v2361
    %v3258 = vpack.c.b16 %v2378, %v2370
    %v3259 = vpack.c.b16 %v2379, %v2371
    %v3260 = vpack.c.b16 %v2380, %v2372
    %v3261 = vpack.c.b16 %v2381, %v2373
    %v3262 = vpack.c.b16 %v2382, %v2374
    %v3263 = vpack.c.b16 %v2383, %v2375
    %v3264 = vpack.c.b16 %v2384, %v2376
    %v3265 = vpack.c.b16 %v2385, %v2377
    %v3266 = vpack.c.b16 %v2394, %v2386
    %v3267 = vpack.c.b16 %v2395, %v2387
    %v3268 = vpack.c.b16 %v2396, %v2388
    %v3269 = vpack.c.b16 %v2397, %v2389
    %v3270 = vpack.c.b16 %v2398, %v2390
    %v3271 = vpack.c.b16 %v2399, %v2391
    %v3272 = vpack.c.b16 %v2400, %v2392
    %v3273 = vpack.c.b16 %v2401, %v2393
    %v3274 = vpack.c.b16 %v2410, %v2402
    %v3275 = vpack.c.b16 %v2411, %v2403
    %v3276 = vpack.c.b16 %v2412, %v2404
    %v3277 = vpack.c.b16 %v2413, %v2405
    %v3278 = vpack.c.b16 %v2414, %v2406
    %v3279 = vpack.c.b16 %v2415, %v2407
    %v3280 = vpack.c.b16 %v2416, %v2408
    %v3281 = vpack.c.b16 %v2417, %v2409
    %v3282 = vpack.c.b16 %v2426, %v2418
    %v3283 = vpack.c.b16 %v2427, %v2419
    %v3284 = vpack.c.b16 %v2428, %v2420
    %v3285 = vpack.c.b16 %v2429, %v2421
    %v3286 = vpack.c.b16 %v2430, %v2422
    %v3287 = vpack.c.b16 %v2431, %v2423
    %v3288 = vpack.c.b16 %v2432, %v2424
    %v3289 = vpack.c.b16 %v2433, %v2425
    %v3290 = vpack.c.b16 %v2442, %v2434
    %v3291 = vpack.c.b16 %v2443, %v2435
    %v3292 = vpack.c.b16 %v2444, %v2436
    %v3293 = vpack.c.b16 %v2445, %v2437
    %v3294 = vpack.c.b16 %v2446, %v2438
    %v3295 = vpack.c.b16 %v2447, %v2439
    %v3296 = vpack.c.b16 %v2448, %v2440
    %v3297 = vpack.c.b16 %v2449, %v2441
    %v3298 = vpack.c.b16 %v2458, %v2450
    %v3299 = vpack.c.b16 %v2459, %v2451
    %v3300 = vpack.c.b16 %v2460, %v2452
    %v3301 = vpack.c.b16 %v2461, %v2453
    %v3302 = vpack.c.b16 %v2462, %v2454
    %v3303 = vpack.c.b16 %v2463, %v2455
    %v3304 = vpack.c.b16 %v2464, %v2456
    %v3305 = vpack.c.b16 %v2465, %v2457
    %v3306 = vpack.c.b16 %v2474, %v2466
    %v3307 = vpack.c.b16 %v2475, %v2467
    %v3308 = vpack.c.b16 %v2476, %v2468
    %v3309 = vpack.c.b16 %v2477, %v2469
    %v3310 = vpack.c.b16 %v2478, %v2470
    %v3311 = vpack.c.b16 %v2479, %v2471
    %v3312 = vpack.c.b16 %v2480, %v2472
    %v3313 = vpack.c.b16 %v2481, %v2473
    %v3314 = vpack.c.b16 %v2490, %v2482
    %v3315 = vpack.c.b16 %v2491, %v2483
    %v3316 = vpack.c.b16 %v2492, %v2484
    %v3317 = vpack.c.b16 %v2493, %v2485
    %v3318 = vpack.c.b16 %v2494, %v2486
    %v3319 = vpack.c.b16 %v2495, %v2487
    %v3320 = vpack.c.b16 %v2496, %v2488
    %v3321 = vpack.c.b16 %v2497, %v2489
    %v3322 = vpack.c.b16 %v2506, %v2498
    %v3323 = vpack.c.b16 %v2507, %v2499
    %v3324 = vpack.c.b16 %v2508, %v2500
    %v3325 = vpack.c.b16 %v2509, %v2501
    %v3326 = vpack.c.b16 %v2510, %v2502
    %v3327 = vpack.c.b16 %v2511, %v2503
    %v3328 = vpack.c.b16 %v2512, %v2504
    %v3329 = vpack.c.b16 %v2513, %v2505
    %v3330 = vpack.c.b16 %v2522, %v2514
    %v3331 = vpack.c.b16 %v2523, %v2515
    %v3332 = vpack.c.b16 %v2524, %v2516
    %v3333 = vpack.c.b16 %v2525, %v2517
    %v3334 = vpack.c.b16 %v2526, %v2518
    %v3335 = vpack.c.b16 %v2527, %v2519
    %v3336 = vpack.c.b16 %v2528, %v2520
    %v3337 = vpack.c.b16 %v2529, %v2521
    %v3338 = vpack.c.b16 %v2538, %v2530
    %v3339 = vpack.c.b16 %v2539, %v2531
    %v3340 = vpack.c.b16 %v2540, %v2532
    %v3341 = vpack.c.b16 %v2541, %v2533
    %v3342 = vpack.c.b16 %v2542, %v2534
    %v3343 = vpack.c.b16 %v2543, %v2535
    %v3344 = vpack.c.b16 %v2544, %v2536
    %v3345 = vpack.c.b16 %v2545, %v2537
    %v3346 = vpack.c.b16 %v2554, %v2546
    %v3347 = vpack.c.b16 %v2555, %v2547
    %v3348 = vpack.c.b16 %v2556, %v2548
    %v3349 = vpack.c.b16 %v2557, %v2549
    %v3350 = vpack.c.b16 %v2558, %v2550
    %v3351 = vpack.c.b16 %v2559, %v2551
    %v3352 = vpack.c.b16 %v2560, %v2552
    %v3353 = vpack.c.b16 %v2561, %v2553
    %v3354 = vpack.c.b16 %v2570, %v2562
    %v3355 = vpack.c.b16 %v2571, %v2563
    %v3356 = vpack.c.b16 %v2572, %v2564
    %v3357 = vpack.c.b16 %v2573, %v2565
    %v3358 = vpack.c.b16 %v2574, %v2566
    %v3359 = vpack.c.b16 %v2575, %v2567
    %v3360 = vpack.c.b16 %v2576, %v2568
    %v3361 = vpack.c.b16 %v2577, %v2569
    %v3362 = vpack.c.b16 %v2586, %v2578
    %v3363 = vpack.c.b16 %v2587, %v2579
    %v3364 = vpack.c.b16 %v2588, %v2580
    %v3365 = vpack.c.b16 %v2589, %v2581
    %v3366 = vpack.c.b16 %v2590, %v2582
    %v3367 = vpack.c.b16 %v2591, %v2583
    %v3368 = vpack.c.b16 %v2592, %v2584
    %v3369 = vpack.c.b16 %v2593, %v2585
    %v3370 = vpack.c.b16 %v2602, %v2594
    %v3371 = vpack.c.b16 %v2603, %v2595
    %v3372 = vpack.c.b16 %v2604, %v2596
    %v3373 = vpack.c.b16 %v2605, %v2597
    %v3374 = vpack.c.b16 %v2606, %v2598
    %v3375 = vpack.c.b16 %v2607, %v2599
    %v3376 = vpack.c.b16 %v2608, %v2600
    %v3377 = vpack.c.b16 %v2609, %v2601
    %v3378 = vpack.c.b16 %v2618, %v2610
    %v3379 = vpack.c.b16 %v2619, %v2611
    %v3380 = vpack.c.b16 %v2620, %v2612
    %v3381 = vpack.c.b16 %v2621, %v2613
    %v3382 = vpack.c.b16 %v2622, %v2614
    %v3383 = vpack.c.b16 %v2623, %v2615
    %v3384 = vpack.c.b16 %v2624, %v2616
    %v3385 = vpack.c.b16 %v2625, %v2617
    %v3386 = vpack.c.b16 %v2634, %v2626
    %v3387 = vpack.c.b16 %v2635, %v2627
    %v3388 = vpack.c.b16 %v2636, %v2628
    %v3389 = vpack.c.b16 %v2637, %v2629
    %v3390 = vpack.c.b16 %v2638, %v2630
    %v3391 = vpack.c.b16 %v2639, %v2631
    %v3392 = vpack.c.b16 %v2640, %v2632
    %v3393 = vpack.c.b16 %v2641, %v2633
    %v3394 = vpack.c.b16 %v2650, %v2642
    %v3395 = vpack.c.b16 %v2651, %v2643
    %v3396 = vpack.c.b16 %v2652, %v2644
    %v3397 = vpack.c.b16 %v2653, %v2645
    %v3398 = vpack.c.b16 %v2654, %v2646
    %v3399 = vpack.c.b16 %v2655, %v2647
    %v3400 = vpack.c.b16 %v2656, %v2648
    %v3401 = vpack.c.b16 %v2657, %v2649
    %v3402 = vpack.c.b16 %v2666, %v2658
    %v3403 = vpack.c.b16 %v2667, %v2659
    %v3404 = vpack.c.b16 %v2668, %v2660
    %v3405 = vpack.c.b16 %v2669, %v2661
    %v3406 = vpack.c.b16 %v2670, %v2662
    %v3407 = vpack.c.b16 %v2671, %v2663
    %v3408 = vpack.c.b16 %v2672, %v2664
    %v3409 = vpack.c.b16 %v2673, %v2665
    %v3410 = vpack.c.b16 %v2682, %v2674
    %v3411 = vpack.c.b16 %v2683, %v2675
    %v3412 = vpack.c.b16 %v2684, %v2676
    %v3413 = vpack.c.b16 %v2685, %v2677
    %v3414 = vpack.c.b16 %v2686, %v2678
    %v3415 = vpack.c.b16 %v2687, %v2679
    %v3416 = vpack.c.b16 %v2688, %v2680
    %v3417 = vpack.c.b16 %v2689, %v2681
    %v3418 = vpack.c.b16 %v2698, %v2690
    %v3419 = vpack.c.b16 %v2699, %v2691
    %v3420 = vpack.c.b16 %v2700, %v2692
    %v3421 = vpack.c.b16 %v2701, %v2693
    %v3422 = vpack.c.b16 %v2702, %v2694
    %v3423 = vpack.c.b16 %v2703, %v2695
    %v3424 = vpack.c.b16 %v2704, %v2696
    %v3425 = vpack.c.b16 %v2705, %v2697
    %v3426 = vpack.c.b16 %v2714, %v2706
    %v3427 = vpack.c.b16 %v2715, %v2707
    %v3428 = vpack.c.b16 %v2716, %v2708
    %v3429 = vpack.c.b16 %v2717, %v2709
    %v3430 = vpack.c.b16 %v2718, %v2710
    %v3431 = vpack.c.b16 %v2719, %v2711
    %v3432 = vpack.c.b16 %v2720, %v2712
    %v3433 = vpack.c.b16 %v2721, %v2713
    %v3434 = vpack.c.b16 %v2730, %v2722
    %v3435 = vpack.c.b16 %v2731, %v2723
    %v3436 = vpack.c.b16 %v2732, %v2724
    %v3437 = vpack.c.b16 %v2733, %v2725
    %v3438 = vpack.c.b16 %v2734, %v2726
    %v3439 = vpack.c.b16 %v2735, %v2727
    %v3440 = vpack.c.b16 %v2736, %v2728
    %v3441 = vpack.c.b16 %v2737, %v2729
    %v3442 = vpack.c.b16 %v2746, %v2738
    %v3443 = vpack.c.b16 %v2747, %v2739
    %v3444 = vpack.c.b16 %v2748, %v2740
    %v3445 = vpack.c.b16 %v2749, %v2741
    %v3446 = vpack.c.b16 %v2750, %v2742
    %v3447 = vpack.c.b16 %v2751, %v2743
    %v3448 = vpack.c.b16 %v2752, %v2744
    %v3449 = vpack.c.b16 %v2753, %v2745
    %v3450 = vpack.c.b16 %v2762, %v2754
    %v3451 = vpack.c.b16 %v2763, %v2755
    %v3452 = vpack.c.b16 %v2764, %v2756
    %v3453 = vpack.c.b16 %v2765, %v2757
    %v3454 = vpack.c.b16 %v2766, %v2758
    %v3455 = vpack.c.b16 %v2767, %v2759
    %v3456 = vpack.c.b16 %v2768, %v2760
    %v3457 = vpack.c.b16 %v2769, %v2761
    %v3458 = vpack.c.b16 %v2778, %v2770
    %v3459 = vpack.c.b16 %v2779, %v2771
    %v3460 = vpack.c.b16 %v2780, %v2772
    %v3461 = vpack.c.b16 %v2781, %v2773
    %v3462 = vpack.c.b16 %v2782, %v2774
    %v3463 = vpack.c.b16 %v2783, %v2775
    %v3464 = vpack.c.b16 %v2784, %v2776
    %v3465 = vpack.c.b16 %v2785, %v2777
    %v3466 = vpack.c.b16 %v2794, %v2786
    %v3467 = vpack.c.b16 %v2795, %v2787
    %v3468 = vpack.c.b16 %v2796, %v2788
    %v3469 = vpack.c.b16 %v2797, %v2789
    %v3470 = vpack.c.b16 %v2798, %v2790
    %v3471 = vpack.c.b16 %v2799, %v2791
    %v3472 = vpack.c.b16 %v2800, %v2792
    %v3473 = vpack.c.b16 %v2801, %v2793
    %v3474 = vpack.c.b16 %v2810, %v2802
    %v3475 = vpack.c.b16 %v2811, %v2803
    %v3476 = vpack.c.b16 %v2812, %v2804
    %v3477 = vpack.c.b16 %v2813, %v2805
    %v3478 = vpack.c.b16 %v2814, %v2806
    %v3479 = vpack.c.b16 %v2815, %v2807
    %v3480 = vpack.c.b16 %v2816, %v2808
    %v3481 = vpack.c.b16 %v2817, %v2809
    %v3482 = vpack.c.b16 %v2826, %v2818
    %v3483 = vpack.c.b16 %v2827, %v2819
    %v3484 = vpack.c.b16 %v2828, %v2820
    %v3485 = vpack.c.b16 %v2829, %v2821
    %v3486 = vpack.c.b16 %v2830, %v2822
    %v3487 = vpack.c.b16 %v2831, %v2823
    %v3488 = vpack.c.b16 %v2832, %v2824
    %v3489 = vpack.c.b16 %v2833, %v2825
    %v3490 = vpack.c.b16 %v2842, %v2834
    %v3491 = vpack.c.b16 %v2843, %v2835
    %v3492 = vpack.c.b16 %v2844, %v2836
    %v3493 = vpack.c.b16 %v2845, %v2837
    %v3494 = vpack.c.b16 %v2846, %v2838
    %v3495 = vpack.c.b16 %v2847, %v2839
    %v3496 = vpack.c.b16 %v2848, %v2840
    %v3497 = vpack.c.b16 %v2849, %v2841
    %v3498 = vpack.c.b16 %v2858, %v2850
    %v3499 = vpack.c.b16 %v2859, %v2851
    %v3500 = vpack.c.b16 %v2860, %v2852
    %v3501 = vpack.c.b16 %v2861, %v2853
    %v3502 = vpack.c.b16 %v2862, %v2854
    %v3503 = vpack.c.b16 %v2863, %v2855
    %v3504 = vpack.c.b16 %v2864, %v2856
    %v3505 = vpack.c.b16 %v2865, %v2857
    %v3506 = vpack.c.b16 %v2874, %v2866
    %v3507 = vpack.c.b16 %v2875, %v2867
    %v3508 = vpack.c.b16 %v2876, %v2868
    %v3509 = vpack.c.b16 %v2877, %v2869
    %v3510 = vpack.c.b16 %v2878, %v2870
    %v3511 = vpack.c.b16 %v2879, %v2871
    %v3512 = vpack.c.b16 %v2880, %v2872
    %v3513 = vpack.c.b16 %v2881, %v2873
    %v3514 = vpack.c.b16 %v2890, %v2882
    %v3515 = vpack.c.b16 %v2891, %v2883
    %v3516 = vpack.c.b16 %v2892, %v2884
    %v3517 = vpack.c.b16 %v2893, %v2885
    %v3518 = vpack.c.b16 %v2894, %v2886
    %v3519 = vpack.c.b16 %v2895, %v2887
    %v3520 = vpack.c.b16 %v2896, %v2888
    %v3521 = vpack.c.b16 %v2897, %v2889
    %v3522 = vpack.c.b16 %v2906, %v2898
    %v3523 = vpack.c.b16 %v2907, %v2899
    %v3524 = vpack.c.b16 %v2908, %v2900
    %v3525 = vpack.c.b16 %v2909, %v2901
    %v3526 = vpack.c.b16 %v2910, %v2902
    %v3527 = vpack.c.b16 %v2911, %v2903
    %v3528 = vpack.c.b16 %v2912, %v2904
    %v3529 = vpack.c.b16 %v2913, %v2905
    %v3530 = vpack.c.b16 %v2922, %v2914
    %v3531 = vpack.c.b16 %v2923, %v2915
    %v3532 = vpack.c.b16 %v2924, %v2916
    %v3533 = vpack.c.b16 %v2925, %v2917
    %v3534 = vpack.c.b16 %v2926, %v2918
    %v3535 = vpack.c.b16 %v2927, %v2919
    %v3536 = vpack.c.b16 %v2928, %v2920
    %v3537 = vpack.c.b16 %v2929, %v2921
    %v3538 = vpack.c.b16 %v2938, %v2930
    %v3539 = vpack.c.b16 %v2939, %v2931
    %v3540 = vpack.c.b16 %v2940, %v2932
    %v3541 = vpack.c.b16 %v2941, %v2933
    %v3542 = vpack.c.b16 %v2942, %v2934
    %v3543 = vpack.c.b16 %v2943, %v2935
    %v3544 = vpack.c.b16 %v2944, %v2936
    %v3545 = vpack.c.b16 %v2945, %v2937
    %v3546 = vpack.c.b16 %v2954, %v2946
    %v3547 = vpack.c.b16 %v2955, %v2947
    %v3548 = vpack.c.b16 %v2956, %v2948
    %v3549 = vpack.c.b16 %v2957, %v2949
    %v3550 = vpack.c.b16 %v2958, %v2950
    %v3551 = vpack.c.b16 %v2959, %v2951
    %v3552 = vpack.c.b16 %v2960, %v2952
    %v3553 = vpack.c.b16 %v2961, %v2953
    %v3554 = vpack.c.b16 %v2970, %v2962
    %v3555 = vpack.c.b16 %v2971, %v2963
    %v3556 = vpack.c.b16 %v2972, %v2964
    %v3557 = vpack.c.b16 %v2973, %v2965
    %v3558 = vpack.c.b16 %v2974, %v2966
    %v3559 = vpack.c.b16 %v2975, %v2967
    %v3560 = vpack.c.b16 %v2976, %v2968
    %v3561 = vpack.c.b16 %v2977, %v2969
    %v3562 = vpack.c.b16 %v2986, %v2978
    %v3563 = vpack.c.b16 %v2987, %v2979
    %v3564 = vpack.c.b16 %v2988, %v2980
    %v3565 = vpack.c.b16 %v2989, %v2981
    %v3566 = vpack.c.b16 %v2990, %v2982
    %v3567 = vpack.c.b16 %v2991, %v2983
    %v3568 = vpack.c.b16 %v2992, %v2984
    %v3569 = vpack.c.b16 %v2993, %v2985
    %v3570 = vpack.c.b16 %v3002, %v2994
    %v3571 = vpack.c.b16 %v3003, %v2995
    %v3572 = vpack.c.b16 %v3004, %v2996
    %v3573 = vpack.c.b16 %v3005, %v2997
    %v3574 = vpack.c.b16 %v3006, %v2998
    %v3575 = vpack.c.b16 %v3007, %v2999
    %v3576 = vpack.c.b16 %v3008, %v3000
    %v3577 = vpack.c.b16 %v3009, %v3001
    %v3578 = vpack.c.b16 %v3018, %v3010
    %v3579 = vpack.c.b16 %v3019, %v3011
    %v3580 = vpack.c.b16 %v3020, %v3012
    %v3581 = vpack.c.b16 %v3021, %v3013
    %v3582 = vpack.c.b16 %v3022, %v3014
    %v3583 = vpack.c.b16 %v3023, %v3015
    %v3584 = vpack.c.b16 %v3024, %v3016
    %v3585 = vpack.c.b16 %v3025, %v3017
    %v3586 = vpack.c.b16 %v3034, %v3026
    %v3587 = vpack.c.b16 %v3035, %v3027
    %v3588 = vpack.c.b16 %v3036, %v3028
    %v3589 = vpack.c.b16 %v3037, %v3029
    %v3590 = vpack.c.b16 %v3038, %v3030
    %v3591 = vpack.c.b16 %v3039, %v3031
    %v3592 = vpack.c.b16 %v3040, %v3032
    %v3593 = vpack.c.b16 %v3041, %v3033
    %v3594 = vpack.c.b16 %v3050, %v3042
    %v3595 = vpack.c.b16 %v3051, %v3043
    %v3596 = vpack.c.b16 %v3052, %v3044
    %v3597 = vpack.c.b16 %v3053, %v3045
    %v3598 = vpack.c.b16 %v3054, %v3046
    %v3599 = vpack.c.b16 %v3055, %v3047
    %v3600 = vpack.c.b16 %v3056, %v3048
    %v3601 = vpack.c.b16 %v3057, %v3049
    %v3602 = vpack.c.b16 %v3066, %v3058
    %v3603 = vpack.c.b16 %v3067, %v3059
    %v3604 = vpack.c.b16 %v3068, %v3060
    %v3605 = vpack.c.b16 %v3069, %v3061
    %v3606 = vpack.c.b16 %v3070, %v3062
    %v3607 = vpack.c.b16 %v3071, %v3063
    %v3608 = vpack.c.b16 %v3072, %v3064
    %v3609 = vpack.c.b16 %v3073, %v3065
    %v3610 = vpack.c.b16 %v3082, %v3074
    %v3611 = vpack.c.b16 %v3083, %v3075
    %v3612 = vpack.c.b16 %v3084, %v3076
    %v3613 = vpack.c.b16 %v3085, %v3077
    %v3614 = vpack.c.b16 %v3086, %v3078
    %v3615 = vpack.c.b16 %v3087, %v3079
    %v3616 = vpack.c.b16 %v3088, %v3080
    %v3617 = vpack.c.b16 %v3089, %v3081
    %v3618 = vpack.c.b16 %v3098, %v3090
    %v3619 = vpack.c.b16 %v3099, %v3091
    %v3620 = vpack.c.b16 %v3100, %v3092
    %v3621 = vpack.c.b16 %v3101, %v3093
    %v3622 = vpack.c.b16 %v3102, %v3094
    %v3623 = vpack.c.b16 %v3103, %v3095
    %v3624 = vpack.c.b16 %v3104, %v3096
    %v3625 = vpack.c.b16 %v3105, %v3097
    %v3626 = vpack.c.b16 %v3114, %v3106
    %v3627 = vpack.c.b16 %v3115, %v3107
    %v3628 = vpack.c.b16 %v3116, %v3108
    %v3629 = vpack.c.b16 %v3117, %v3109
    %v3630 = vpack.c.b16 %v3118, %v3110
    %v3631 = vpack.c.b16 %v3119, %v3111
    %v3632 = vpack.c.b16 %v3120, %v3112
    %v3633 = vpack.c.b16 %v3121, %v3113
    %4146 = vmatprep.subr.bf16.mxu0 %v3179
    %4147 = vmatpush1.bf16.msra.mxu0 %v3178
    %4148 = vmatprep.subr.bf16.mxu0 %v3171
    %4149 = vmatpush1.bf16.msra.mxu0 %v3170
    %4150 = vmatprep.subr.bf16.mxu0 %v3163
    %4151 = vmatpush1.bf16.msra.mxu0 %v3162
    %4152 = vmatprep.subr.bf16.mxu0 %v3155
    %4153 = vmatpush1.bf16.msra.mxu0 %v3154
    %4154 = vmatprep.subr.bf16.mxu0 %v3147
    %4155 = vmatpush1.bf16.msra.mxu0 %v3146
    %4156 = vmatprep.subr.bf16.mxu0 %v3139
    %4157 = vmatpush1.bf16.msra.mxu0 %v3138
    %4158 = vmatprep.subr.bf16.mxu0 %v3131
    %4159 = vmatpush1.bf16.msra.mxu0 %v3130
    %4160 = vmatprep.subr.bf16.mxu0 %v3123
    %4161 = vmatpush1.bf16.msra.mxu0 %v3122
    %4162 = vmatprep.subr.bf16.mxu0 %v3243
    %4163 = vmatpush2.bf16.msra.mxu0 %v3242
    %4164 = vmatprep.subr.bf16.mxu0 %v3235
    %4165 = vmatpush2.bf16.msra.mxu0 %v3234
    %4166 = vmatprep.subr.bf16.mxu0 %v3227
    %4167 = vmatpush2.bf16.msra.mxu0 %v3226
    %4168 = vmatprep.subr.bf16.mxu0 %v3219
    %4169 = vmatpush2.bf16.msra.mxu0 %v3218
    %4170 = vmatprep.subr.bf16.mxu0 %v3211
    %4171 = vmatpush2.bf16.msra.mxu0 %v3210
    %4172 = vmatprep.subr.bf16.mxu0 %v3203
    %4173 = vmatpush2.bf16.msra.mxu0 %v3202
    %4174 = vmatprep.subr.bf16.mxu0 %v3195
    %4175 = vmatpush2.bf16.msra.mxu0 %v3194
    %4176 = vmatprep.subr.bf16.mxu0 %v3187
    %4177 = vmatpush2.bf16.msra.mxu0 %v3186
    %4178 = vmatprep.mubr.bf16.mxu0 %v1538
    %4179 = vmatmul.mubr.bf16.gmra.mxu0 %v1537
    %v4180 = vpop.f32.mrf.mxu0
    %v4181 = vadd.f32 %v1549, %v4180
    %v4182 = vpop.f32.mrf.mxu0
    %v4183 = vadd.f32 %v1553, %v4182
    %v4184 = vpop.f32.mrf.mxu0
    %v4185 = vadd.f32 %v1549, %v4184
    %v4186 = vpop.f32.mrf.mxu0
    %v4187 = vadd.f32 %v1553, %v4186
    %4188 = vdwg.mxu0
    %4189 = vmatprep.subr.bf16.mxu0 %v3307
    %4190 = vmatpush1.bf16.msra.mxu0 %v3306
    %4191 = vmatprep.subr.bf16.mxu0 %v3299
    %4192 = vmatpush1.bf16.msra.mxu0 %v3298
    %4193 = vmatprep.subr.bf16.mxu0 %v3291
    %4194 = vmatpush1.bf16.msra.mxu0 %v3290
    %4195 = vmatprep.subr.bf16.mxu0 %v3283
    %4196 = vmatpush1.bf16.msra.mxu0 %v3282
    %4197 = vmatprep.subr.bf16.mxu0 %v3275
    %4198 = vmatpush1.bf16.msra.mxu0 %v3274
    %4199 = vmatprep.subr.bf16.mxu0 %v3267
    %4200 = vmatpush1.bf16.msra.mxu0 %v3266
    %4201 = vmatprep.subr.bf16.mxu0 %v3259
    %4202 = vmatpush1.bf16.msra.mxu0 %v3258
    %4203 = vmatprep.subr.bf16.mxu0 %v3251
    %4204 = vmatpush1.bf16.msra.mxu0 %v3250
    %4205 = vmatprep.subr.bf16.mxu0 %v3371
    %4206 = vmatpush2.bf16.msra.mxu0 %v3370
    %4207 = vmatprep.subr.bf16.mxu0 %v3363
    %4208 = vmatpush2.bf16.msra.mxu0 %v3362
    %4209 = vmatprep.subr.bf16.mxu0 %v3355
    %4210 = vmatpush2.bf16.msra.mxu0 %v3354
    %4211 = vmatprep.subr.bf16.mxu0 %v3347
    %4212 = vmatpush2.bf16.msra.mxu0 %v3346
    %4213 = vmatprep.subr.bf16.mxu0 %v3339
    %4214 = vmatpush2.bf16.msra.mxu0 %v3338
    %4215 = vmatprep.subr.bf16.mxu0 %v3331
    %4216 = vmatpush2.bf16.msra.mxu0 %v3330
    %4217 = vmatprep.subr.bf16.mxu0 %v3323
    %4218 = vmatpush2.bf16.msra.mxu0 %v3322
    %4219 = vmatprep.subr.bf16.mxu0 %v3315
    %4220 = vmatpush2.bf16.msra.mxu0 %v3314
    %4221 = vmatprep.mubr.bf16.mxu0 %v1540
    %4222 = vmatmul.mubr.bf16.gmra.mxu0 %v1539
    %v4223 = vpop.f32.mrf.mxu0
    %v4224 = vadd.f32 %v4181, %v4223
    %v4225 = vpop.f32.mrf.mxu0
    %v4226 = vadd.f32 %v4183, %v4225
    %v4227 = vpop.f32.mrf.mxu0
    %v4228 = vadd.f32 %v4185, %v4227
    %v4229 = vpop.f32.mrf.mxu0
    %v4230 = vadd.f32 %v4187, %v4229
    %4231 = vdwg.mxu0
    %4232 = vmatprep.subr.bf16.mxu0 %v3435
    %4233 = vmatpush1.bf16.msra.mxu0 %v3434
    %4234 = vmatprep.subr.bf16.mxu0 %v3427
    %4235 = vmatpush1.bf16.msra.mxu0 %v3426
    %4236 = vmatprep.subr.bf16.mxu0 %v3419
    %4237 = vmatpush1.bf16.msra.mxu0 %v3418
    %4238 = vmatprep.subr.bf16.mxu0 %v3411
    %4239 = vmatpush1.bf16.msra.mxu0 %v3410
    %4240 = vmatprep.subr.bf16.mxu0 %v3403
    %4241 = vmatpush1.bf16.msra.mxu0 %v3402
    %4242 = vmatprep.subr.bf16.mxu0 %v3395
    %4243 = vmatpush1.bf16.msra.mxu0 %v3394
    %4244 = vmatprep.subr.bf16.mxu0 %v3387
    %4245 = vmatpush1.bf16.msra.mxu0 %v3386
    %4246 = vmatprep.subr.bf16.mxu0 %v3379
    %4247 = vmatpush1.bf16.msra.mxu0 %v3378
    %4248 = vmatprep.subr.bf16.mxu0 %v3499
    %4249 = vmatpush2.bf16.msra.mxu0 %v3498
    %4250 = vmatprep.subr.bf16.mxu0 %v3491
    %4251 = vmatpush2.bf16.msra.mxu0 %v3490
    %4252 = vmatprep.subr.bf16.mxu0 %v3483
    %4253 = vmatpush2.bf16.msra.mxu0 %v3482
    %4254 = vmatprep.subr.bf16.mxu0 %v3475
    %4255 = vmatpush2.bf16.msra.mxu0 %v3474
    %4256 = vmatprep.subr.bf16.mxu0 %v3467
    %4257 = vmatpush2.bf16.msra.mxu0 %v3466
    %4258 = vmatprep.subr.bf16.mxu0 %v3459
    %4259 = vmatpush2.bf16.msra.mxu0 %v3458
    %4260 = vmatprep.subr.bf16.mxu0 %v3451
    %4261 = vmatpush2.bf16.msra.mxu0 %v3450
    %4262 = vmatprep.subr.bf16.mxu0 %v3443
    %4263 = vmatpush2.bf16.msra.mxu0 %v3442
    %4264 = vmatprep.mubr.bf16.mxu0 %v1542
    %4265 = vmatmul.mubr.bf16.gmra.mxu0 %v1541
    %v4266 = vpop.f32.mrf.mxu0
    %v4267 = vadd.f32 %v4224, %v4266
    %v4268 = vpop.f32.mrf.mxu0
    %v4269 = vadd.f32 %v4226, %v4268
    %v4270 = vpop.f32.mrf.mxu0
    %v4271 = vadd.f32 %v4228, %v4270
    %v4272 = vpop.f32.mrf.mxu0
    %v4273 = vadd.f32 %v4230, %v4272
    %4274 = vdwg.mxu0
    %4275 = vmatprep.subr.bf16.mxu0 %v3563
    %4276 = vmatpush1.bf16.msra.mxu0 %v3562
    %4277 = vmatprep.subr.bf16.mxu0 %v3555
    %4278 = vmatpush1.bf16.msra.mxu0 %v3554
    %4279 = vmatprep.subr.bf16.mxu0 %v3547
    %4280 = vmatpush1.bf16.msra.mxu0 %v3546
    %4281 = vmatprep.subr.bf16.mxu0 %v3539
    %4282 = vmatpush1.bf16.msra.mxu0 %v3538
    %4283 = vmatprep.subr.bf16.mxu0 %v3531
    %4284 = vmatpush1.bf16.msra.mxu0 %v3530
    %4285 = vmatprep.subr.bf16.mxu0 %v3523
    %4286 = vmatpush1.bf16.msra.mxu0 %v3522
    %4287 = vmatprep.subr.bf16.mxu0 %v3515
    %4288 = vmatpush1.bf16.msra.mxu0 %v3514
    %4289 = vmatprep.subr.bf16.mxu0 %v3507
    %4290 = vmatpush1.bf16.msra.mxu0 %v3506
    %4291 = vmatprep.subr.bf16.mxu0 %v3627
    %4292 = vmatpush2.bf16.msra.mxu0 %v3626
    %4293 = vmatprep.subr.bf16.mxu0 %v3619
    %4294 = vmatpush2.bf16.msra.mxu0 %v3618
    %4295 = vmatprep.subr.bf16.mxu0 %v3611
    %4296 = vmatpush2.bf16.msra.mxu0 %v3610
    %4297 = vmatprep.subr.bf16.mxu0 %v3603
    %4298 = vmatpush2.bf16.msra.mxu0 %v3602
    %4299 = vmatprep.subr.bf16.mxu0 %v3595
    %4300 = vmatpush2.bf16.msra.mxu0 %v3594
    %4301 = vmatprep.subr.bf16.mxu0 %v3587
    %4302 = vmatpush2.bf16.msra.mxu0 %v3586
    %4303 = vmatprep.subr.bf16.mxu0 %v3579
    %4304 = vmatpush2.bf16.msra.mxu0 %v3578
    %4305 = vmatprep.subr.bf16.mxu0 %v3571
    %4306 = vmatpush2.bf16.msra.mxu0 %v3570
    %4307 = vmatprep.mubr.bf16.mxu0 %v1544
    %4308 = vmatmul.mubr.bf16.gmra.mxu0 %v1543
    %v4309 = vpop.f32.mrf.mxu0
    %v4310 = vadd.f32 %v4267, %v4309
    %v4311 = vpop.f32.mrf.mxu0
    %v4312 = vadd.f32 %v4269, %v4311
    %v4313 = vpop.f32.mrf.mxu0
    %v4314 = vadd.f32 %v4271, %v4313
    %v4315 = vpop.f32.mrf.mxu0
    %v4316 = vadd.f32 %v4273, %v4315
    %4317 = vdwg.mxu0
    %4318 = vmatprep.subr.bf16.mxu0 %v3181
    %4319 = vmatpush1.bf16.msra.mxu0 %v3180
    %4320 = vmatprep.subr.bf16.mxu0 %v3173
    %4321 = vmatpush1.bf16.msra.mxu0 %v3172
    %4322 = vmatprep.subr.bf16.mxu0 %v3165
    %4323 = vmatpush1.bf16.msra.mxu0 %v3164
    %4324 = vmatprep.subr.bf16.mxu0 %v3157
    %4325 = vmatpush1.bf16.msra.mxu0 %v3156
    %4326 = vmatprep.subr.bf16.mxu0 %v3149
    %4327 = vmatpush1.bf16.msra.mxu0 %v3148
    %4328 = vmatprep.subr.bf16.mxu0 %v3141
    %4329 = vmatpush1.bf16.msra.mxu0 %v3140
    %4330 = vmatprep.subr.bf16.mxu0 %v3133
    %4331 = vmatpush1.bf16.msra.mxu0 %v3132
    %4332 = vmatprep.subr.bf16.mxu0 %v3125
    %4333 = vmatpush1.bf16.msra.mxu0 %v3124
    %4334 = vmatprep.subr.bf16.mxu0 %v3245
    %4335 = vmatpush2.bf16.msra.mxu0 %v3244
    %4336 = vmatprep.subr.bf16.mxu0 %v3237
    %4337 = vmatpush2.bf16.msra.mxu0 %v3236
    %4338 = vmatprep.subr.bf16.mxu0 %v3229
    %4339 = vmatpush2.bf16.msra.mxu0 %v3228
    %4340 = vmatprep.subr.bf16.mxu0 %v3221
    %4341 = vmatpush2.bf16.msra.mxu0 %v3220
    %4342 = vmatprep.subr.bf16.mxu0 %v3213
    %4343 = vmatpush2.bf16.msra.mxu0 %v3212
    %4344 = vmatprep.subr.bf16.mxu0 %v3205
    %4345 = vmatpush2.bf16.msra.mxu0 %v3204
    %4346 = vmatprep.subr.bf16.mxu0 %v3197
    %4347 = vmatpush2.bf16.msra.mxu0 %v3196
    %4348 = vmatprep.subr.bf16.mxu0 %v3189
    %4349 = vmatpush2.bf16.msra.mxu0 %v3188
    %4350 = vmatprep.mubr.bf16.mxu0 %v1538
    %4351 = vmatmul.mubr.bf16.gmra.mxu0 %v1537
    %v4352 = vpop.f32.mrf.mxu0
    %v4353 = vadd.f32 %v1557, %v4352
    %v4354 = vpop.f32.mrf.mxu0
    %v4355 = vadd.f32 %v1561, %v4354
    %v4356 = vpop.f32.mrf.mxu0
    %v4357 = vadd.f32 %v1557, %v4356
    %v4358 = vpop.f32.mrf.mxu0
    %v4359 = vadd.f32 %v1561, %v4358
    %4360 = vdwg.mxu0
    %4361 = vmatprep.subr.bf16.mxu0 %v3309
    %4362 = vmatpush1.bf16.msra.mxu0 %v3308
    %4363 = vmatprep.subr.bf16.mxu0 %v3301
    %4364 = vmatpush1.bf16.msra.mxu0 %v3300
    %4365 = vmatprep.subr.bf16.mxu0 %v3293
    %4366 = vmatpush1.bf16.msra.mxu0 %v3292
    %4367 = vmatprep.subr.bf16.mxu0 %v3285
    %4368 = vmatpush1.bf16.msra.mxu0 %v3284
    %4369 = vmatprep.subr.bf16.mxu0 %v3277
    %4370 = vmatpush1.bf16.msra.mxu0 %v3276
    %4371 = vmatprep.subr.bf16.mxu0 %v3269
    %4372 = vmatpush1.bf16.msra.mxu0 %v3268
    %4373 = vmatprep.subr.bf16.mxu0 %v3261
    %4374 = vmatpush1.bf16.msra.mxu0 %v3260
    %4375 = vmatprep.subr.bf16.mxu0 %v3253
    %4376 = vmatpush1.bf16.msra.mxu0 %v3252
    %4377 = vmatprep.subr.bf16.mxu0 %v3373
    %4378 = vmatpush2.bf16.msra.mxu0 %v3372
    %4379 = vmatprep.subr.bf16.mxu0 %v3365
    %4380 = vmatpush2.bf16.msra.mxu0 %v3364
    %4381 = vmatprep.subr.bf16.mxu0 %v3357
    %4382 = vmatpush2.bf16.msra.mxu0 %v3356
    %4383 = vmatprep.subr.bf16.mxu0 %v3349
    %4384 = vmatpush2.bf16.msra.mxu0 %v3348
    %4385 = vmatprep.subr.bf16.mxu0 %v3341
    %4386 = vmatpush2.bf16.msra.mxu0 %v3340
    %4387 = vmatprep.subr.bf16.mxu0 %v3333
    %4388 = vmatpush2.bf16.msra.mxu0 %v3332
    %4389 = vmatprep.subr.bf16.mxu0 %v3325
    %4390 = vmatpush2.bf16.msra.mxu0 %v3324
    %4391 = vmatprep.subr.bf16.mxu0 %v3317
    %4392 = vmatpush2.bf16.msra.mxu0 %v3316
    %4393 = vmatprep.mubr.bf16.mxu0 %v1540
    %4394 = vmatmul.mubr.bf16.gmra.mxu0 %v1539
    %v4395 = vpop.f32.mrf.mxu0
    %v4396 = vadd.f32 %v4353, %v4395
    %v4397 = vpop.f32.mrf.mxu0
    %v4398 = vadd.f32 %v4355, %v4397
    %v4399 = vpop.f32.mrf.mxu0
    %v4400 = vadd.f32 %v4357, %v4399
    %v4401 = vpop.f32.mrf.mxu0
    %v4402 = vadd.f32 %v4359, %v4401
    %4403 = vdwg.mxu0
    %4404 = vmatprep.subr.bf16.mxu0 %v3437
    %4405 = vmatpush1.bf16.msra.mxu0 %v3436
    %4406 = vmatprep.subr.bf16.mxu0 %v3429
    %4407 = vmatpush1.bf16.msra.mxu0 %v3428
    %4408 = vmatprep.subr.bf16.mxu0 %v3421
    %4409 = vmatpush1.bf16.msra.mxu0 %v3420
    %4410 = vmatprep.subr.bf16.mxu0 %v3413
    %4411 = vmatpush1.bf16.msra.mxu0 %v3412
    %4412 = vmatprep.subr.bf16.mxu0 %v3405
    %4413 = vmatpush1.bf16.msra.mxu0 %v3404
    %4414 = vmatprep.subr.bf16.mxu0 %v3397
    %4415 = vmatpush1.bf16.msra.mxu0 %v3396
    %4416 = vmatprep.subr.bf16.mxu0 %v3389
    %4417 = vmatpush1.bf16.msra.mxu0 %v3388
    %4418 = vmatprep.subr.bf16.mxu0 %v3381
    %4419 = vmatpush1.bf16.msra.mxu0 %v3380
    %4420 = vmatprep.subr.bf16.mxu0 %v3501
    %4421 = vmatpush2.bf16.msra.mxu0 %v3500
    %4422 = vmatprep.subr.bf16.mxu0 %v3493
    %4423 = vmatpush2.bf16.msra.mxu0 %v3492
    %4424 = vmatprep.subr.bf16.mxu0 %v3485
    %4425 = vmatpush2.bf16.msra.mxu0 %v3484
    %4426 = vmatprep.subr.bf16.mxu0 %v3477
    %4427 = vmatpush2.bf16.msra.mxu0 %v3476
    %4428 = vmatprep.subr.bf16.mxu0 %v3469
    %4429 = vmatpush2.bf16.msra.mxu0 %v3468
    %4430 = vmatprep.subr.bf16.mxu0 %v3461
    %4431 = vmatpush2.bf16.msra.mxu0 %v3460
    %4432 = vmatprep.subr.bf16.mxu0 %v3453
    %4433 = vmatpush2.bf16.msra.mxu0 %v3452
    %4434 = vmatprep.subr.bf16.mxu0 %v3445
    %4435 = vmatpush2.bf16.msra.mxu0 %v3444
    %4436 = vmatprep.mubr.bf16.mxu0 %v1542
    %4437 = vmatmul.mubr.bf16.gmra.mxu0 %v1541
    %v4438 = vpop.f32.mrf.mxu0
    %v4439 = vadd.f32 %v4396, %v4438
    %v4440 = vpop.f32.mrf.mxu0
    %v4441 = vadd.f32 %v4398, %v4440
    %v4442 = vpop.f32.mrf.mxu0
    %v4443 = vadd.f32 %v4400, %v4442
    %v4444 = vpop.f32.mrf.mxu0
    %v4445 = vadd.f32 %v4402, %v4444
    %4446 = vdwg.mxu0
    %4447 = vmatprep.subr.bf16.mxu0 %v3565
    %4448 = vmatpush1.bf16.msra.mxu0 %v3564
    %4449 = vmatprep.subr.bf16.mxu0 %v3557
    %4450 = vmatpush1.bf16.msra.mxu0 %v3556
    %4451 = vmatprep.subr.bf16.mxu0 %v3549
    %4452 = vmatpush1.bf16.msra.mxu0 %v3548
    %4453 = vmatprep.subr.bf16.mxu0 %v3541
    %4454 = vmatpush1.bf16.msra.mxu0 %v3540
    %4455 = vmatprep.subr.bf16.mxu0 %v3533
    %4456 = vmatpush1.bf16.msra.mxu0 %v3532
    %4457 = vmatprep.subr.bf16.mxu0 %v3525
    %4458 = vmatpush1.bf16.msra.mxu0 %v3524
    %4459 = vmatprep.subr.bf16.mxu0 %v3517
    %4460 = vmatpush1.bf16.msra.mxu0 %v3516
    %4461 = vmatprep.subr.bf16.mxu0 %v3509
    %4462 = vmatpush1.bf16.msra.mxu0 %v3508
    %4463 = vmatprep.subr.bf16.mxu0 %v3629
    %4464 = vmatpush2.bf16.msra.mxu0 %v3628
    %4465 = vmatprep.subr.bf16.mxu0 %v3621
    %4466 = vmatpush2.bf16.msra.mxu0 %v3620
    %4467 = vmatprep.subr.bf16.mxu0 %v3613
    %4468 = vmatpush2.bf16.msra.mxu0 %v3612
    %4469 = vmatprep.subr.bf16.mxu0 %v3605
    %4470 = vmatpush2.bf16.msra.mxu0 %v3604
    %4471 = vmatprep.subr.bf16.mxu0 %v3597
    %4472 = vmatpush2.bf16.msra.mxu0 %v3596
    %4473 = vmatprep.subr.bf16.mxu0 %v3589
    %4474 = vmatpush2.bf16.msra.mxu0 %v3588
    %4475 = vmatprep.subr.bf16.mxu0 %v3581
    %4476 = vmatpush2.bf16.msra.mxu0 %v3580
    %4477 = vmatprep.subr.bf16.mxu0 %v3573
    %4478 = vmatpush2.bf16.msra.mxu0 %v3572
    %4479 = vmatprep.mubr.bf16.mxu0 %v1544
    %4480 = vmatmul.mubr.bf16.gmra.mxu0 %v1543
    %v4481 = vpop.f32.mrf.mxu0
    %v4482 = vadd.f32 %v4439, %v4481
    %v4483 = vpop.f32.mrf.mxu0
    %v4484 = vadd.f32 %v4441, %v4483
    %v4485 = vpop.f32.mrf.mxu0
    %v4486 = vadd.f32 %v4443, %v4485
    %v4487 = vpop.f32.mrf.mxu0
    %v4488 = vadd.f32 %v4445, %v4487
    %4489 = vdwg.mxu0
    %4490 = vmatprep.subr.bf16.mxu0 %v3183
    %4491 = vmatpush1.bf16.msra.mxu0 %v3182
    %4492 = vmatprep.subr.bf16.mxu0 %v3175
    %4493 = vmatpush1.bf16.msra.mxu0 %v3174
    %4494 = vmatprep.subr.bf16.mxu0 %v3167
    %4495 = vmatpush1.bf16.msra.mxu0 %v3166
    %4496 = vmatprep.subr.bf16.mxu0 %v3159
    %4497 = vmatpush1.bf16.msra.mxu0 %v3158
    %4498 = vmatprep.subr.bf16.mxu0 %v3151
    %4499 = vmatpush1.bf16.msra.mxu0 %v3150
    %4500 = vmatprep.subr.bf16.mxu0 %v3143
    %4501 = vmatpush1.bf16.msra.mxu0 %v3142
    %4502 = vmatprep.subr.bf16.mxu0 %v3135
    %4503 = vmatpush1.bf16.msra.mxu0 %v3134
    %4504 = vmatprep.subr.bf16.mxu0 %v3127
    %4505 = vmatpush1.bf16.msra.mxu0 %v3126
    %4506 = vmatprep.subr.bf16.mxu0 %v3247
    %4507 = vmatpush2.bf16.msra.mxu0 %v3246
    %4508 = vmatprep.subr.bf16.mxu0 %v3239
    %4509 = vmatpush2.bf16.msra.mxu0 %v3238
    %4510 = vmatprep.subr.bf16.mxu0 %v3231
    %4511 = vmatpush2.bf16.msra.mxu0 %v3230
    %4512 = vmatprep.subr.bf16.mxu0 %v3223
    %4513 = vmatpush2.bf16.msra.mxu0 %v3222
    %4514 = vmatprep.subr.bf16.mxu0 %v3215
    %4515 = vmatpush2.bf16.msra.mxu0 %v3214
    %4516 = vmatprep.subr.bf16.mxu0 %v3207
    %4517 = vmatpush2.bf16.msra.mxu0 %v3206
    %4518 = vmatprep.subr.bf16.mxu0 %v3199
    %4519 = vmatpush2.bf16.msra.mxu0 %v3198
    %4520 = vmatprep.subr.bf16.mxu0 %v3191
    %4521 = vmatpush2.bf16.msra.mxu0 %v3190
    %4522 = vmatprep.mubr.bf16.mxu0 %v1538
    %4523 = vmatmul.mubr.bf16.gmra.mxu0 %v1537
    %v4524 = vpop.f32.mrf.mxu0
    %v4525 = vadd.f32 %v1565, %v4524
    %v4526 = vpop.f32.mrf.mxu0
    %v4527 = vadd.f32 %v1569, %v4526
    %v4528 = vpop.f32.mrf.mxu0
    %v4529 = vadd.f32 %v1565, %v4528
    %v4530 = vpop.f32.mrf.mxu0
    %v4531 = vadd.f32 %v1569, %v4530
    %4532 = vdwg.mxu0
    %4533 = vmatprep.subr.bf16.mxu0 %v3311
    %4534 = vmatpush1.bf16.msra.mxu0 %v3310
    %4535 = vmatprep.subr.bf16.mxu0 %v3303
    %4536 = vmatpush1.bf16.msra.mxu0 %v3302
    %4537 = vmatprep.subr.bf16.mxu0 %v3295
    %4538 = vmatpush1.bf16.msra.mxu0 %v3294
    %4539 = vmatprep.subr.bf16.mxu0 %v3287
    %4540 = vmatpush1.bf16.msra.mxu0 %v3286
    %4541 = vmatprep.subr.bf16.mxu0 %v3279
    %4542 = vmatpush1.bf16.msra.mxu0 %v3278
    %4543 = vmatprep.subr.bf16.mxu0 %v3271
    %4544 = vmatpush1.bf16.msra.mxu0 %v3270
    %4545 = vmatprep.subr.bf16.mxu0 %v3263
    %4546 = vmatpush1.bf16.msra.mxu0 %v3262
    %4547 = vmatprep.subr.bf16.mxu0 %v3255
    %4548 = vmatpush1.bf16.msra.mxu0 %v3254
    %4549 = vmatprep.subr.bf16.mxu0 %v3375
    %4550 = vmatpush2.bf16.msra.mxu0 %v3374
    %4551 = vmatprep.subr.bf16.mxu0 %v3367
    %4552 = vmatpush2.bf16.msra.mxu0 %v3366
    %4553 = vmatprep.subr.bf16.mxu0 %v3359
    %4554 = vmatpush2.bf16.msra.mxu0 %v3358
    %4555 = vmatprep.subr.bf16.mxu0 %v3351
    %4556 = vmatpush2.bf16.msra.mxu0 %v3350
    %4557 = vmatprep.subr.bf16.mxu0 %v3343
    %4558 = vmatpush2.bf16.msra.mxu0 %v3342
    %4559 = vmatprep.subr.bf16.mxu0 %v3335
    %4560 = vmatpush2.bf16.msra.mxu0 %v3334
    %4561 = vmatprep.subr.bf16.mxu0 %v3327
    %4562 = vmatpush2.bf16.msra.mxu0 %v3326
    %4563 = vmatprep.subr.bf16.mxu0 %v3319
    %4564 = vmatpush2.bf16.msra.mxu0 %v3318
    %4565 = vmatprep.mubr.bf16.mxu0 %v1540
    %4566 = vmatmul.mubr.bf16.gmra.mxu0 %v1539
    %v4567 = vpop.f32.mrf.mxu0
    %v4568 = vadd.f32 %v4525, %v4567
    %v4569 = vpop.f32.mrf.mxu0
    %v4570 = vadd.f32 %v4527, %v4569
    %v4571 = vpop.f32.mrf.mxu0
    %v4572 = vadd.f32 %v4529, %v4571
    %v4573 = vpop.f32.mrf.mxu0
    %v4574 = vadd.f32 %v4531, %v4573
    %4575 = vdwg.mxu0
    %4576 = vmatprep.subr.bf16.mxu0 %v3439
    %4577 = vmatpush1.bf16.msra.mxu0 %v3438
    %4578 = vmatprep.subr.bf16.mxu0 %v3431
    %4579 = vmatpush1.bf16.msra.mxu0 %v3430
    %4580 = vmatprep.subr.bf16.mxu0 %v3423
    %4581 = vmatpush1.bf16.msra.mxu0 %v3422
    %4582 = vmatprep.subr.bf16.mxu0 %v3415
    %4583 = vmatpush1.bf16.msra.mxu0 %v3414
    %4584 = vmatprep.subr.bf16.mxu0 %v3407
    %4585 = vmatpush1.bf16.msra.mxu0 %v3406
    %4586 = vmatprep.subr.bf16.mxu0 %v3399
    %4587 = vmatpush1.bf16.msra.mxu0 %v3398
    %4588 = vmatprep.subr.bf16.mxu0 %v3391
    %4589 = vmatpush1.bf16.msra.mxu0 %v3390
    %4590 = vmatprep.subr.bf16.mxu0 %v3383
    %4591 = vmatpush1.bf16.msra.mxu0 %v3382
    %4592 = vmatprep.subr.bf16.mxu0 %v3503
    %4593 = vmatpush2.bf16.msra.mxu0 %v3502
    %4594 = vmatprep.subr.bf16.mxu0 %v3495
    %4595 = vmatpush2.bf16.msra.mxu0 %v3494
    %4596 = vmatprep.subr.bf16.mxu0 %v3487
    %4597 = vmatpush2.bf16.msra.mxu0 %v3486
    %4598 = vmatprep.subr.bf16.mxu0 %v3479
    %4599 = vmatpush2.bf16.msra.mxu0 %v3478
    %4600 = vmatprep.subr.bf16.mxu0 %v3471
    %4601 = vmatpush2.bf16.msra.mxu0 %v3470
    %4602 = vmatprep.subr.bf16.mxu0 %v3463
    %4603 = vmatpush2.bf16.msra.mxu0 %v3462
    %4604 = vmatprep.subr.bf16.mxu0 %v3455
    %4605 = vmatpush2.bf16.msra.mxu0 %v3454
    %4606 = vmatprep.subr.bf16.mxu0 %v3447
    %4607 = vmatpush2.bf16.msra.mxu0 %v3446
    %4608 = vmatprep.mubr.bf16.mxu0 %v1542
    %4609 = vmatmul.mubr.bf16.gmra.mxu0 %v1541
    %v4610 = vpop.f32.mrf.mxu0
    %v4611 = vadd.f32 %v4568, %v4610
    %v4612 = vpop.f32.mrf.mxu0
    %v4613 = vadd.f32 %v4570, %v4612
    %v4614 = vpop.f32.mrf.mxu0
    %v4615 = vadd.f32 %v4572, %v4614
    %v4616 = vpop.f32.mrf.mxu0
    %v4617 = vadd.f32 %v4574, %v4616
    %4618 = vdwg.mxu0
    %4619 = vmatprep.subr.bf16.mxu0 %v3567
    %4620 = vmatpush1.bf16.msra.mxu0 %v3566
    %4621 = vmatprep.subr.bf16.mxu0 %v3559
    %4622 = vmatpush1.bf16.msra.mxu0 %v3558
    %4623 = vmatprep.subr.bf16.mxu0 %v3551
    %4624 = vmatpush1.bf16.msra.mxu0 %v3550
    %4625 = vmatprep.subr.bf16.mxu0 %v3543
    %4626 = vmatpush1.bf16.msra.mxu0 %v3542
    %4627 = vmatprep.subr.bf16.mxu0 %v3535
    %4628 = vmatpush1.bf16.msra.mxu0 %v3534
    %4629 = vmatprep.subr.bf16.mxu0 %v3527
    %4630 = vmatpush1.bf16.msra.mxu0 %v3526
    %4631 = vmatprep.subr.bf16.mxu0 %v3519
    %4632 = vmatpush1.bf16.msra.mxu0 %v3518
    %4633 = vmatprep.subr.bf16.mxu0 %v3511
    %4634 = vmatpush1.bf16.msra.mxu0 %v3510
    %4635 = vmatprep.subr.bf16.mxu0 %v3631
    %4636 = vmatpush2.bf16.msra.mxu0 %v3630
    %4637 = vmatprep.subr.bf16.mxu0 %v3623
    %4638 = vmatpush2.bf16.msra.mxu0 %v3622
    %4639 = vmatprep.subr.bf16.mxu0 %v3615
    %4640 = vmatpush2.bf16.msra.mxu0 %v3614
    %4641 = vmatprep.subr.bf16.mxu0 %v3607
    %4642 = vmatpush2.bf16.msra.mxu0 %v3606
    %4643 = vmatprep.subr.bf16.mxu0 %v3599
    %4644 = vmatpush2.bf16.msra.mxu0 %v3598
    %4645 = vmatprep.subr.bf16.mxu0 %v3591
    %4646 = vmatpush2.bf16.msra.mxu0 %v3590
    %4647 = vmatprep.subr.bf16.mxu0 %v3583
    %4648 = vmatpush2.bf16.msra.mxu0 %v3582
    %4649 = vmatprep.subr.bf16.mxu0 %v3575
    %4650 = vmatpush2.bf16.msra.mxu0 %v3574
    %4651 = vmatprep.mubr.bf16.mxu0 %v1544
    %4652 = vmatmul.mubr.bf16.gmra.mxu0 %v1543
    %v4653 = vpop.f32.mrf.mxu0
    %v4654 = vadd.f32 %v4611, %v4653
    %v4655 = vpop.f32.mrf.mxu0
    %v4656 = vadd.f32 %v4613, %v4655
    %v4657 = vpop.f32.mrf.mxu0
    %v4658 = vadd.f32 %v4615, %v4657
    %v4659 = vpop.f32.mrf.mxu0
    %v4660 = vadd.f32 %v4617, %v4659
    %4661 = vdwg.mxu0
    %4662 = vmatprep.subr.bf16.mxu0 %v3185
    %4663 = vmatpush1.bf16.msra.mxu0 %v3184
    %4664 = vmatprep.subr.bf16.mxu0 %v3177
    %4665 = vmatpush1.bf16.msra.mxu0 %v3176
    %4666 = vmatprep.subr.bf16.mxu0 %v3169
    %4667 = vmatpush1.bf16.msra.mxu0 %v3168
    %4668 = vmatprep.subr.bf16.mxu0 %v3161
    %4669 = vmatpush1.bf16.msra.mxu0 %v3160
    %4670 = vmatprep.subr.bf16.mxu0 %v3153
    %4671 = vmatpush1.bf16.msra.mxu0 %v3152
    %4672 = vmatprep.subr.bf16.mxu0 %v3145
    %4673 = vmatpush1.bf16.msra.mxu0 %v3144
    %4674 = vmatprep.subr.bf16.mxu0 %v3137
    %4675 = vmatpush1.bf16.msra.mxu0 %v3136
    %4676 = vmatprep.subr.bf16.mxu0 %v3129
    %4677 = vmatpush1.bf16.msra.mxu0 %v3128
    %4678 = vmatprep.subr.bf16.mxu0 %v3249
    %4679 = vmatpush2.bf16.msra.mxu0 %v3248
    %4680 = vmatprep.subr.bf16.mxu0 %v3241
    %4681 = vmatpush2.bf16.msra.mxu0 %v3240
    %4682 = vmatprep.subr.bf16.mxu0 %v3233
    %4683 = vmatpush2.bf16.msra.mxu0 %v3232
    %4684 = vmatprep.subr.bf16.mxu0 %v3225
    %4685 = vmatpush2.bf16.msra.mxu0 %v3224
    %4686 = vmatprep.subr.bf16.mxu0 %v3217
    %4687 = vmatpush2.bf16.msra.mxu0 %v3216
    %4688 = vmatprep.subr.bf16.mxu0 %v3209
    %4689 = vmatpush2.bf16.msra.mxu0 %v3208
    %4690 = vmatprep.subr.bf16.mxu0 %v3201
    %4691 = vmatpush2.bf16.msra.mxu0 %v3200
    %4692 = vmatprep.subr.bf16.mxu0 %v3193
    %4693 = vmatpush2.bf16.msra.mxu0 %v3192
    %4694 = vmatprep.mubr.bf16.mxu0 %v1538
    %4695 = vmatmul.mubr.bf16.gmra.mxu0 %v1537
    %v4696 = vpop.f32.mrf.mxu0
    %v4697 = vadd.f32 %v1573, %v4696
    %v4698 = vpop.f32.mrf.mxu0
    %v4699 = vadd.f32 %v1577, %v4698
    %v4700 = vpop.f32.mrf.mxu0
    %v4701 = vadd.f32 %v1573, %v4700
    %v4702 = vpop.f32.mrf.mxu0
    %v4703 = vadd.f32 %v1577, %v4702
    %4704 = vdwg.mxu0
    %4705 = vmatprep.subr.bf16.mxu0 %v3313
    %4706 = vmatpush1.bf16.msra.mxu0 %v3312
    %4707 = vmatprep.subr.bf16.mxu0 %v3305
    %4708 = vmatpush1.bf16.msra.mxu0 %v3304
    %4709 = vmatprep.subr.bf16.mxu0 %v3297
    %4710 = vmatpush1.bf16.msra.mxu0 %v3296
    %4711 = vmatprep.subr.bf16.mxu0 %v3289
    %4712 = vmatpush1.bf16.msra.mxu0 %v3288
    %4713 = vmatprep.subr.bf16.mxu0 %v3281
    %4714 = vmatpush1.bf16.msra.mxu0 %v3280
    %4715 = vmatprep.subr.bf16.mxu0 %v3273
    %4716 = vmatpush1.bf16.msra.mxu0 %v3272
    %4717 = vmatprep.subr.bf16.mxu0 %v3265
    %4718 = vmatpush1.bf16.msra.mxu0 %v3264
    %4719 = vmatprep.subr.bf16.mxu0 %v3257
    %4720 = vmatpush1.bf16.msra.mxu0 %v3256
    %4721 = vmatprep.subr.bf16.mxu0 %v3377
    %4722 = vmatpush2.bf16.msra.mxu0 %v3376
    %4723 = vmatprep.subr.bf16.mxu0 %v3369
    %4724 = vmatpush2.bf16.msra.mxu0 %v3368
    %4725 = vmatprep.subr.bf16.mxu0 %v3361
    %4726 = vmatpush2.bf16.msra.mxu0 %v3360
    %4727 = vmatprep.subr.bf16.mxu0 %v3353
    %4728 = vmatpush2.bf16.msra.mxu0 %v3352
    %4729 = vmatprep.subr.bf16.mxu0 %v3345
    %4730 = vmatpush2.bf16.msra.mxu0 %v3344
    %4731 = vmatprep.subr.bf16.mxu0 %v3337
    %4732 = vmatpush2.bf16.msra.mxu0 %v3336
    %4733 = vmatprep.subr.bf16.mxu0 %v3329
    %4734 = vmatpush2.bf16.msra.mxu0 %v3328
    %4735 = vmatprep.subr.bf16.mxu0 %v3321
    %4736 = vmatpush2.bf16.msra.mxu0 %v3320
    %4737 = vmatprep.mubr.bf16.mxu0 %v1540
    %4738 = vmatmul.mubr.bf16.gmra.mxu0 %v1539
    %v4739 = vpop.f32.mrf.mxu0
    %v4740 = vadd.f32 %v4697, %v4739
    %v4741 = vpop.f32.mrf.mxu0
    %v4742 = vadd.f32 %v4699, %v4741
    %v4743 = vpop.f32.mrf.mxu0
    %v4744 = vadd.f32 %v4701, %v4743
    %v4745 = vpop.f32.mrf.mxu0
    %v4746 = vadd.f32 %v4703, %v4745
    %4747 = vdwg.mxu0
    %4748 = vmatprep.subr.bf16.mxu0 %v3441
    %4749 = vmatpush1.bf16.msra.mxu0 %v3440
    %4750 = vmatprep.subr.bf16.mxu0 %v3433
    %4751 = vmatpush1.bf16.msra.mxu0 %v3432
    %4752 = vmatprep.subr.bf16.mxu0 %v3425
    %4753 = vmatpush1.bf16.msra.mxu0 %v3424
    %4754 = vmatprep.subr.bf16.mxu0 %v3417
    %4755 = vmatpush1.bf16.msra.mxu0 %v3416
    %4756 = vmatprep.subr.bf16.mxu0 %v3409
    %4757 = vmatpush1.bf16.msra.mxu0 %v3408
    %4758 = vmatprep.subr.bf16.mxu0 %v3401
    %4759 = vmatpush1.bf16.msra.mxu0 %v3400
    %4760 = vmatprep.subr.bf16.mxu0 %v3393
    %4761 = vmatpush1.bf16.msra.mxu0 %v3392
    %4762 = vmatprep.subr.bf16.mxu0 %v3385
    %4763 = vmatpush1.bf16.msra.mxu0 %v3384
    %4764 = vmatprep.subr.bf16.mxu0 %v3505
    %4765 = vmatpush2.bf16.msra.mxu0 %v3504
    %4766 = vmatprep.subr.bf16.mxu0 %v3497
    %4767 = vmatpush2.bf16.msra.mxu0 %v3496
    %4768 = vmatprep.subr.bf16.mxu0 %v3489
    %4769 = vmatpush2.bf16.msra.mxu0 %v3488
    %4770 = vmatprep.subr.bf16.mxu0 %v3481
    %4771 = vmatpush2.bf16.msra.mxu0 %v3480
    %4772 = vmatprep.subr.bf16.mxu0 %v3473
    %4773 = vmatpush2.bf16.msra.mxu0 %v3472
    %4774 = vmatprep.subr.bf16.mxu0 %v3465
    %4775 = vmatpush2.bf16.msra.mxu0 %v3464
    %4776 = vmatprep.subr.bf16.mxu0 %v3457
    %4777 = vmatpush2.bf16.msra.mxu0 %v3456
    %4778 = vmatprep.subr.bf16.mxu0 %v3449
    %4779 = vmatpush2.bf16.msra.mxu0 %v3448
    %4780 = vmatprep.mubr.bf16.mxu0 %v1542
    %4781 = vmatmul.mubr.bf16.gmra.mxu0 %v1541
    %v4782 = vpop.f32.mrf.mxu0
    %v4783 = vadd.f32 %v4740, %v4782
    %v4784 = vpop.f32.mrf.mxu0
    %v4785 = vadd.f32 %v4742, %v4784
    %v4786 = vpop.f32.mrf.mxu0
    %v4787 = vadd.f32 %v4744, %v4786
    %v4788 = vpop.f32.mrf.mxu0
    %v4789 = vadd.f32 %v4746, %v4788
    %4790 = vdwg.mxu0
    %4791 = vmatprep.subr.bf16.mxu0 %v3569
    %4792 = vmatpush1.bf16.msra.mxu0 %v3568
    %4793 = vmatprep.subr.bf16.mxu0 %v3561
    %4794 = vmatpush1.bf16.msra.mxu0 %v3560
    %4795 = vmatprep.subr.bf16.mxu0 %v3553
    %4796 = vmatpush1.bf16.msra.mxu0 %v3552
    %4797 = vmatprep.subr.bf16.mxu0 %v3545
    %4798 = vmatpush1.bf16.msra.mxu0 %v3544
    %4799 = vmatprep.subr.bf16.mxu0 %v3537
    %4800 = vmatpush1.bf16.msra.mxu0 %v3536
    %4801 = vmatprep.subr.bf16.mxu0 %v3529
    %4802 = vmatpush1.bf16.msra.mxu0 %v3528
    %4803 = vmatprep.subr.bf16.mxu0 %v3521
    %4804 = vmatpush1.bf16.msra.mxu0 %v3520
    %4805 = vmatprep.subr.bf16.mxu0 %v3513
    %4806 = vmatpush1.bf16.msra.mxu0 %v3512
    %4807 = vmatprep.subr.bf16.mxu0 %v3633
    %4808 = vmatpush2.bf16.msra.mxu0 %v3632
    %4809 = vmatprep.subr.bf16.mxu0 %v3625
    %4810 = vmatpush2.bf16.msra.mxu0 %v3624
    %4811 = vmatprep.subr.bf16.mxu0 %v3617
    %4812 = vmatpush2.bf16.msra.mxu0 %v3616
    %4813 = vmatprep.subr.bf16.mxu0 %v3609
    %4814 = vmatpush2.bf16.msra.mxu0 %v3608
    %4815 = vmatprep.subr.bf16.mxu0 %v3601
    %4816 = vmatpush2.bf16.msra.mxu0 %v3600
    %4817 = vmatprep.subr.bf16.mxu0 %v3593
    %4818 = vmatpush2.bf16.msra.mxu0 %v3592
    %4819 = vmatprep.subr.bf16.mxu0 %v3585
    %4820 = vmatpush2.bf16.msra.mxu0 %v3584
    %4821 = vmatprep.subr.bf16.mxu0 %v3577
    %4822 = vmatpush2.bf16.msra.mxu0 %v3576
    %4823 = vmatprep.mubr.bf16.mxu0 %v1544
    %4824 = vmatmul.mubr.bf16.gmra.mxu0 %v1543
    %v4825 = vpop.f32.mrf.mxu0
    %v4826 = vadd.f32 %v4783, %v4825
    %v4827 = vpop.f32.mrf.mxu0
    %v4828 = vadd.f32 %v4785, %v4827
    %v4829 = vpop.f32.mrf.mxu0
    %v4830 = vadd.f32 %v4787, %v4829
    %v4831 = vpop.f32.mrf.mxu0
    %v4832 = vadd.f32 %v4789, %v4831
    %4833 = vdwg.mxu0
    %v4834 = vmax.f32 %v4310, 0.0
    %v4835 = vmax.f32 %v4312, 0.0
    %v4836 = vmax.f32 %v4482, 0.0
    %v4837 = vmax.f32 %v4484, 0.0
    %v4838 = vmax.f32 %v4654, 0.0
    %v4839 = vmax.f32 %v4656, 0.0
    %v4840 = vmax.f32 %v4826, 0.0
    %v4841 = vmax.f32 %v4828, 0.0
    %v4842 = vmax.f32 %v4314, 0.0
    %v4843 = vmax.f32 %v4316, 0.0
    %v4844 = vmax.f32 %v4486, 0.0
    %v4845 = vmax.f32 %v4488, 0.0
    %v4846 = vmax.f32 %v4658, 0.0
    %v4847 = vmax.f32 %v4660, 0.0
    %v4848 = vmax.f32 %v4830, 0.0
    %v4849 = vmax.f32 %v4832, 0.0
    %v4850 = vld [vmem:[#allocation9] sm:$0xff]
    %v4851 = vld [vmem:[#allocation9 + $0x8] sm:$0xff]
    %v4852 = vld [vmem:[#allocation9 + $0x10] sm:$0xff]
    %v4853 = vld [vmem:[#allocation9 + $0x18] sm:$0xff]
    %v4854 = vld [vmem:[#allocation9 + $0x20] sm:$0xff]
    %v4855 = vld [vmem:[#allocation9 + $0x28] sm:$0xff]
    %v4856 = vld [vmem:[#allocation9 + $0x30] sm:$0xff]
    %v4857 = vld [vmem:[#allocation9 + $0x38] sm:$0xff]
    %v4858 = vld [vmem:[#allocation9 + $0x40] sm:$0xff]
    %v4859 = vld [vmem:[#allocation9 + $0x48] sm:$0xff]
    %v4860 = vld [vmem:[#allocation9 + $0x50] sm:$0xff]
    %v4861 = vld [vmem:[#allocation9 + $0x58] sm:$0xff]
    %v4862 = vld [vmem:[#allocation9 + $0x60] sm:$0xff]
    %v4863 = vld [vmem:[#allocation9 + $0x68] sm:$0xff]
    %v4864 = vld [vmem:[#allocation9 + $0x70] sm:$0xff]
    %v4865 = vld [vmem:[#allocation9 + $0x78] sm:$0xff]
    %v4866 = vld [vmem:[#allocation9 + $0x80] sm:$0xff]
    %v4867 = vld [vmem:[#allocation9 + $0x88] sm:$0xff]
    %v4868 = vld [vmem:[#allocation9 + $0x90] sm:$0xff]
    %v4869 = vld [vmem:[#allocation9 + $0x98] sm:$0xff]
    %v4870 = vld [vmem:[#allocation9 + $0xa0] sm:$0xff]
    %v4871 = vld [vmem:[#allocation9 + $0xa8] sm:$0xff]
    %v4872 = vld [vmem:[#allocation9 + $0xb0] sm:$0xff]
    %v4873 = vld [vmem:[#allocation9 + $0xb8] sm:$0xff]
    %v4874 = vld [vmem:[#allocation9 + $0xc0] sm:$0xff]
    %v4875 = vld [vmem:[#allocation9 + $0xc8] sm:$0xff]
    %v4876 = vld [vmem:[#allocation9 + $0xd0] sm:$0xff]
    %v4877 = vld [vmem:[#allocation9 + $0xd8] sm:$0xff]
    %v4878 = vld [vmem:[#allocation9 + $0xe0] sm:$0xff]
    %v4879 = vld [vmem:[#allocation9 + $0xe8] sm:$0xff]
    %v4880 = vld [vmem:[#allocation9 + $0xf0] sm:$0xff]
    %v4881 = vld [vmem:[#allocation9 + $0xf8] sm:$0xff]
    %v4882 = vld [vmem:[#allocation9 + $0x100] sm:$0xff]
    %v4883 = vld [vmem:[#allocation9 + $0x108] sm:$0xff]
    %v4884 = vld [vmem:[#allocation9 + $0x110] sm:$0xff]
    %v4885 = vld [vmem:[#allocation9 + $0x118] sm:$0xff]
    %v4886 = vld [vmem:[#allocation9 + $0x120] sm:$0xff]
    %v4887 = vld [vmem:[#allocation9 + $0x128] sm:$0xff]
    %v4888 = vld [vmem:[#allocation9 + $0x130] sm:$0xff]
    %v4889 = vld [vmem:[#allocation9 + $0x138] sm:$0xff]
    %v4890 = vld [vmem:[#allocation9 + $0x140] sm:$0xff]
    %v4891 = vld [vmem:[#allocation9 + $0x148] sm:$0xff]
    %v4892 = vld [vmem:[#allocation9 + $0x150] sm:$0xff]
    %v4893 = vld [vmem:[#allocation9 + $0x158] sm:$0xff]
    %v4894 = vld [vmem:[#allocation9 + $0x160] sm:$0xff]
    %v4895 = vld [vmem:[#allocation9 + $0x168] sm:$0xff]
    %v4896 = vld [vmem:[#allocation9 + $0x170] sm:$0xff]
    %v4897 = vld [vmem:[#allocation9 + $0x178] sm:$0xff]
    %v4898 = vld [vmem:[#allocation9 + $0x180] sm:$0xff]
    %v4899 = vld [vmem:[#allocation9 + $0x188] sm:$0xff]
    %v4900 = vld [vmem:[#allocation9 + $0x190] sm:$0xff]
    %v4901 = vld [vmem:[#allocation9 + $0x198] sm:$0xff]
    %v4902 = vld [vmem:[#allocation9 + $0x1a0] sm:$0xff]
    %v4903 = vld [vmem:[#allocation9 + $0x1a8] sm:$0xff]
    %v4904 = vld [vmem:[#allocation9 + $0x1b0] sm:$0xff]
    %v4905 = vld [vmem:[#allocation9 + $0x1b8] sm:$0xff]
    %v4906 = vld [vmem:[#allocation9 + $0x1c0] sm:$0xff]
    %v4907 = vld [vmem:[#allocation9 + $0x1c8] sm:$0xff]
    %v4908 = vld [vmem:[#allocation9 + $0x1d0] sm:$0xff]
    %v4909 = vld [vmem:[#allocation9 + $0x1d8] sm:$0xff]
    %v4910 = vld [vmem:[#allocation9 + $0x1e0] sm:$0xff]
    %v4911 = vld [vmem:[#allocation9 + $0x1e8] sm:$0xff]
    %v4912 = vld [vmem:[#allocation9 + $0x1f0] sm:$0xff]
    %v4913 = vld [vmem:[#allocation9 + $0x1f8] sm:$0xff]
    %v4914 = vld [vmem:[#allocation9 + $0x200] sm:$0xff]
    %v4915 = vld [vmem:[#allocation9 + $0x208] sm:$0xff]
    %v4916 = vld [vmem:[#allocation9 + $0x210] sm:$0xff]
    %v4917 = vld [vmem:[#allocation9 + $0x218] sm:$0xff]
    %v4918 = vld [vmem:[#allocation9 + $0x220] sm:$0xff]
    %v4919 = vld [vmem:[#allocation9 + $0x228] sm:$0xff]
    %v4920 = vld [vmem:[#allocation9 + $0x230] sm:$0xff]
    %v4921 = vld [vmem:[#allocation9 + $0x238] sm:$0xff]
    %v4922 = vld [vmem:[#allocation9 + $0x240] sm:$0xff]
    %v4923 = vld [vmem:[#allocation9 + $0x248] sm:$0xff]
    %v4924 = vld [vmem:[#allocation9 + $0x250] sm:$0xff]
    %v4925 = vld [vmem:[#allocation9 + $0x258] sm:$0xff]
    %v4926 = vld [vmem:[#allocation9 + $0x260] sm:$0xff]
    %v4927 = vld [vmem:[#allocation9 + $0x268] sm:$0xff]
    %v4928 = vld [vmem:[#allocation9 + $0x270] sm:$0xff]
    %v4929 = vld [vmem:[#allocation9 + $0x278] sm:$0xff]
    %v4930 = vld [vmem:[#allocation9 + $0x280] sm:$0xff]
    %v4931 = vld [vmem:[#allocation9 + $0x288] sm:$0xff]
    %v4932 = vld [vmem:[#allocation9 + $0x290] sm:$0xff]
    %v4933 = vld [vmem:[#allocation9 + $0x298] sm:$0xff]
    %v4934 = vld [vmem:[#allocation9 + $0x2a0] sm:$0xff]
    %v4935 = vld [vmem:[#allocation9 + $0x2a8] sm:$0xff]
    %v4936 = vld [vmem:[#allocation9 + $0x2b0] sm:$0xff]
    %v4937 = vld [vmem:[#allocation9 + $0x2b8] sm:$0xff]
    %v4938 = vld [vmem:[#allocation9 + $0x2c0] sm:$0xff]
    %v4939 = vld [vmem:[#allocation9 + $0x2c8] sm:$0xff]
    %v4940 = vld [vmem:[#allocation9 + $0x2d0] sm:$0xff]
    %v4941 = vld [vmem:[#allocation9 + $0x2d8] sm:$0xff]
    %v4942 = vld [vmem:[#allocation9 + $0x2e0] sm:$0xff]
    %v4943 = vld [vmem:[#allocation9 + $0x2e8] sm:$0xff]
    %v4944 = vld [vmem:[#allocation9 + $0x2f0] sm:$0xff]
    %v4945 = vld [vmem:[#allocation9 + $0x2f8] sm:$0xff]
    %v4946 = vld [vmem:[#allocation9 + $0x300] sm:$0xff]
    %v4947 = vld [vmem:[#allocation9 + $0x308] sm:$0xff]
    %v4948 = vld [vmem:[#allocation9 + $0x310] sm:$0xff]
    %v4949 = vld [vmem:[#allocation9 + $0x318] sm:$0xff]
    %v4950 = vld [vmem:[#allocation9 + $0x320] sm:$0xff]
    %v4951 = vld [vmem:[#allocation9 + $0x328] sm:$0xff]
    %v4952 = vld [vmem:[#allocation9 + $0x330] sm:$0xff]
    %v4953 = vld [vmem:[#allocation9 + $0x338] sm:$0xff]
    %v4954 = vld [vmem:[#allocation9 + $0x340] sm:$0xff]
    %v4955 = vld [vmem:[#allocation9 + $0x348] sm:$0xff]
    %v4956 = vld [vmem:[#allocation9 + $0x350] sm:$0xff]
    %v4957 = vld [vmem:[#allocation9 + $0x358] sm:$0xff]
    %v4958 = vld [vmem:[#allocation9 + $0x360] sm:$0xff]
    %v4959 = vld [vmem:[#allocation9 + $0x368] sm:$0xff]
    %v4960 = vld [vmem:[#allocation9 + $0x370] sm:$0xff]
    %v4961 = vld [vmem:[#allocation9 + $0x378] sm:$0xff]
    %v4962 = vld [vmem:[#allocation9 + $0x380] sm:$0xff]
    %v4963 = vld [vmem:[#allocation9 + $0x388] sm:$0xff]
    %v4964 = vld [vmem:[#allocation9 + $0x390] sm:$0xff]
    %v4965 = vld [vmem:[#allocation9 + $0x398] sm:$0xff]
    %v4966 = vld [vmem:[#allocation9 + $0x3a0] sm:$0xff]
    %v4967 = vld [vmem:[#allocation9 + $0x3a8] sm:$0xff]
    %v4968 = vld [vmem:[#allocation9 + $0x3b0] sm:$0xff]
    %v4969 = vld [vmem:[#allocation9 + $0x3b8] sm:$0xff]
    %v4970 = vld [vmem:[#allocation9 + $0x3c0] sm:$0xff]
    %v4971 = vld [vmem:[#allocation9 + $0x3c8] sm:$0xff]
    %v4972 = vld [vmem:[#allocation9 + $0x3d0] sm:$0xff]
    %v4973 = vld [vmem:[#allocation9 + $0x3d8] sm:$0xff]
    %v4974 = vld [vmem:[#allocation9 + $0x3e0] sm:$0xff]
    %v4975 = vld [vmem:[#allocation9 + $0x3e8] sm:$0xff]
    %v4976 = vld [vmem:[#allocation9 + $0x3f0] sm:$0xff]
    %v4977 = vld [vmem:[#allocation9 + $0x3f8] sm:$0xff]
    %v4978 = vld [vmem:[#allocation9 + $0x400] sm:$0xff]
    %v4979 = vld [vmem:[#allocation9 + $0x408] sm:$0xff]
    %v4980 = vld [vmem:[#allocation9 + $0x410] sm:$0xff]
    %v4981 = vld [vmem:[#allocation9 + $0x418] sm:$0xff]
    %v4982 = vld [vmem:[#allocation9 + $0x420] sm:$0xff]
    %v4983 = vld [vmem:[#allocation9 + $0x428] sm:$0xff]
    %v4984 = vld [vmem:[#allocation9 + $0x430] sm:$0xff]
    %v4985 = vld [vmem:[#allocation9 + $0x438] sm:$0xff]
    %v4986 = vld [vmem:[#allocation9 + $0x440] sm:$0xff]
    %v4987 = vld [vmem:[#allocation9 + $0x448] sm:$0xff]
    %v4988 = vld [vmem:[#allocation9 + $0x450] sm:$0xff]
    %v4989 = vld [vmem:[#allocation9 + $0x458] sm:$0xff]
    %v4990 = vld [vmem:[#allocation9 + $0x460] sm:$0xff]
    %v4991 = vld [vmem:[#allocation9 + $0x468] sm:$0xff]
    %v4992 = vld [vmem:[#allocation9 + $0x470] sm:$0xff]
    %v4993 = vld [vmem:[#allocation9 + $0x478] sm:$0xff]
    %v4994 = vld [vmem:[#allocation9 + $0x480] sm:$0xff]
    %v4995 = vld [vmem:[#allocation9 + $0x488] sm:$0xff]
    %v4996 = vld [vmem:[#allocation9 + $0x490] sm:$0xff]
    %v4997 = vld [vmem:[#allocation9 + $0x498] sm:$0xff]
    %v4998 = vld [vmem:[#allocation9 + $0x4a0] sm:$0xff]
    %v4999 = vld [vmem:[#allocation9 + $0x4a8] sm:$0xff]
    %v5000 = vld [vmem:[#allocation9 + $0x4b0] sm:$0xff]
    %v5001 = vld [vmem:[#allocation9 + $0x4b8] sm:$0xff]
    %v5002 = vld [vmem:[#allocation9 + $0x4c0] sm:$0xff]
    %v5003 = vld [vmem:[#allocation9 + $0x4c8] sm:$0xff]
    %v5004 = vld [vmem:[#allocation9 + $0x4d0] sm:$0xff]
    %v5005 = vld [vmem:[#allocation9 + $0x4d8] sm:$0xff]
    %v5006 = vld [vmem:[#allocation9 + $0x4e0] sm:$0xff]
    %v5007 = vld [vmem:[#allocation9 + $0x4e8] sm:$0xff]
    %v5008 = vld [vmem:[#allocation9 + $0x4f0] sm:$0xff]
    %v5009 = vld [vmem:[#allocation9 + $0x4f8] sm:$0xff]
    %v5010 = vld [vmem:[#allocation9 + $0x500] sm:$0xff]
    %v5011 = vld [vmem:[#allocation9 + $0x508] sm:$0xff]
    %v5012 = vld [vmem:[#allocation9 + $0x510] sm:$0xff]
    %v5013 = vld [vmem:[#allocation9 + $0x518] sm:$0xff]
    %v5014 = vld [vmem:[#allocation9 + $0x520] sm:$0xff]
    %v5015 = vld [vmem:[#allocation9 + $0x528] sm:$0xff]
    %v5016 = vld [vmem:[#allocation9 + $0x530] sm:$0xff]
    %v5017 = vld [vmem:[#allocation9 + $0x538] sm:$0xff]
    %v5018 = vld [vmem:[#allocation9 + $0x540] sm:$0xff]
    %v5019 = vld [vmem:[#allocation9 + $0x548] sm:$0xff]
    %v5020 = vld [vmem:[#allocation9 + $0x550] sm:$0xff]
    %v5021 = vld [vmem:[#allocation9 + $0x558] sm:$0xff]
    %v5022 = vld [vmem:[#allocation9 + $0x560] sm:$0xff]
    %v5023 = vld [vmem:[#allocation9 + $0x568] sm:$0xff]
    %v5024 = vld [vmem:[#allocation9 + $0x570] sm:$0xff]
    %v5025 = vld [vmem:[#allocation9 + $0x578] sm:$0xff]
    %v5026 = vld [vmem:[#allocation9 + $0x580] sm:$0xff]
    %v5027 = vld [vmem:[#allocation9 + $0x588] sm:$0xff]
    %v5028 = vld [vmem:[#allocation9 + $0x590] sm:$0xff]
    %v5029 = vld [vmem:[#allocation9 + $0x598] sm:$0xff]
    %v5030 = vld [vmem:[#allocation9 + $0x5a0] sm:$0xff]
    %v5031 = vld [vmem:[#allocation9 + $0x5a8] sm:$0xff]
    %v5032 = vld [vmem:[#allocation9 + $0x5b0] sm:$0xff]
    %v5033 = vld [vmem:[#allocation9 + $0x5b8] sm:$0xff]
    %v5034 = vld [vmem:[#allocation9 + $0x5c0] sm:$0xff]
    %v5035 = vld [vmem:[#allocation9 + $0x5c8] sm:$0xff]
    %v5036 = vld [vmem:[#allocation9 + $0x5d0] sm:$0xff]
    %v5037 = vld [vmem:[#allocation9 + $0x5d8] sm:$0xff]
    %v5038 = vld [vmem:[#allocation9 + $0x5e0] sm:$0xff]
    %v5039 = vld [vmem:[#allocation9 + $0x5e8] sm:$0xff]
    %v5040 = vld [vmem:[#allocation9 + $0x5f0] sm:$0xff]
    %v5041 = vld [vmem:[#allocation9 + $0x5f8] sm:$0xff]
    %v5042 = vld [vmem:[#allocation9 + $0x600] sm:$0xff]
    %v5043 = vld [vmem:[#allocation9 + $0x608] sm:$0xff]
    %v5044 = vld [vmem:[#allocation9 + $0x610] sm:$0xff]
    %v5045 = vld [vmem:[#allocation9 + $0x618] sm:$0xff]
    %v5046 = vld [vmem:[#allocation9 + $0x620] sm:$0xff]
    %v5047 = vld [vmem:[#allocation9 + $0x628] sm:$0xff]
    %v5048 = vld [vmem:[#allocation9 + $0x630] sm:$0xff]
    %v5049 = vld [vmem:[#allocation9 + $0x638] sm:$0xff]
    %v5050 = vld [vmem:[#allocation9 + $0x640] sm:$0xff]
    %v5051 = vld [vmem:[#allocation9 + $0x648] sm:$0xff]
    %v5052 = vld [vmem:[#allocation9 + $0x650] sm:$0xff]
    %v5053 = vld [vmem:[#allocation9 + $0x658] sm:$0xff]
    %v5054 = vld [vmem:[#allocation9 + $0x660] sm:$0xff]
    %v5055 = vld [vmem:[#allocation9 + $0x668] sm:$0xff]
    %v5056 = vld [vmem:[#allocation9 + $0x670] sm:$0xff]
    %v5057 = vld [vmem:[#allocation9 + $0x678] sm:$0xff]
    %v5058 = vld [vmem:[#allocation9 + $0x680] sm:$0xff]
    %v5059 = vld [vmem:[#allocation9 + $0x688] sm:$0xff]
    %v5060 = vld [vmem:[#allocation9 + $0x690] sm:$0xff]
    %v5061 = vld [vmem:[#allocation9 + $0x698] sm:$0xff]
    %v5062 = vld [vmem:[#allocation9 + $0x6a0] sm:$0xff]
    %v5063 = vld [vmem:[#allocation9 + $0x6a8] sm:$0xff]
    %v5064 = vld [vmem:[#allocation9 + $0x6b0] sm:$0xff]
    %v5065 = vld [vmem:[#allocation9 + $0x6b8] sm:$0xff]
    %v5066 = vld [vmem:[#allocation9 + $0x6c0] sm:$0xff]
    %v5067 = vld [vmem:[#allocation9 + $0x6c8] sm:$0xff]
    %v5068 = vld [vmem:[#allocation9 + $0x6d0] sm:$0xff]
    %v5069 = vld [vmem:[#allocation9 + $0x6d8] sm:$0xff]
    %v5070 = vld [vmem:[#allocation9 + $0x6e0] sm:$0xff]
    %v5071 = vld [vmem:[#allocation9 + $0x6e8] sm:$0xff]
    %v5072 = vld [vmem:[#allocation9 + $0x6f0] sm:$0xff]
    %v5073 = vld [vmem:[#allocation9 + $0x6f8] sm:$0xff]
    %v5074 = vld [vmem:[#allocation9 + $0x700] sm:$0xff]
    %v5075 = vld [vmem:[#allocation9 + $0x708] sm:$0xff]
    %v5076 = vld [vmem:[#allocation9 + $0x710] sm:$0xff]
    %v5077 = vld [vmem:[#allocation9 + $0x718] sm:$0xff]
    %v5078 = vld [vmem:[#allocation9 + $0x720] sm:$0xff]
    %v5079 = vld [vmem:[#allocation9 + $0x728] sm:$0xff]
    %v5080 = vld [vmem:[#allocation9 + $0x730] sm:$0xff]
    %v5081 = vld [vmem:[#allocation9 + $0x738] sm:$0xff]
    %v5082 = vld [vmem:[#allocation9 + $0x740] sm:$0xff]
    %v5083 = vld [vmem:[#allocation9 + $0x748] sm:$0xff]
    %v5084 = vld [vmem:[#allocation9 + $0x750] sm:$0xff]
    %v5085 = vld [vmem:[#allocation9 + $0x758] sm:$0xff]
    %v5086 = vld [vmem:[#allocation9 + $0x760] sm:$0xff]
    %v5087 = vld [vmem:[#allocation9 + $0x768] sm:$0xff]
    %v5088 = vld [vmem:[#allocation9 + $0x770] sm:$0xff]
    %v5089 = vld [vmem:[#allocation9 + $0x778] sm:$0xff]
    %v5090 = vld [vmem:[#allocation9 + $0x780] sm:$0xff]
    %v5091 = vld [vmem:[#allocation9 + $0x788] sm:$0xff]
    %v5092 = vld [vmem:[#allocation9 + $0x790] sm:$0xff]
    %v5093 = vld [vmem:[#allocation9 + $0x798] sm:$0xff]
    %v5094 = vld [vmem:[#allocation9 + $0x7a0] sm:$0xff]
    %v5095 = vld [vmem:[#allocation9 + $0x7a8] sm:$0xff]
    %v5096 = vld [vmem:[#allocation9 + $0x7b0] sm:$0xff]
    %v5097 = vld [vmem:[#allocation9 + $0x7b8] sm:$0xff]
    %v5098 = vld [vmem:[#allocation9 + $0x7c0] sm:$0xff]
    %v5099 = vld [vmem:[#allocation9 + $0x7c8] sm:$0xff]
    %v5100 = vld [vmem:[#allocation9 + $0x7d0] sm:$0xff]
    %v5101 = vld [vmem:[#allocation9 + $0x7d8] sm:$0xff]
    %v5102 = vld [vmem:[#allocation9 + $0x7e0] sm:$0xff]
    %v5103 = vld [vmem:[#allocation9 + $0x7e8] sm:$0xff]
    %v5104 = vld [vmem:[#allocation9 + $0x7f0] sm:$0xff]
    %v5105 = vld [vmem:[#allocation9 + $0x7f8] sm:$0xff]
    %v5106 = vld [vmem:[#allocation9 + $0x800] sm:$0xff]
    %v5107 = vld [vmem:[#allocation9 + $0x808] sm:$0xff]
    %v5108 = vld [vmem:[#allocation9 + $0x810] sm:$0xff]
    %v5109 = vld [vmem:[#allocation9 + $0x818] sm:$0xff]
    %v5110 = vld [vmem:[#allocation9 + $0x820] sm:$0xff]
    %v5111 = vld [vmem:[#allocation9 + $0x828] sm:$0xff]
    %v5112 = vld [vmem:[#allocation9 + $0x830] sm:$0xff]
    %v5113 = vld [vmem:[#allocation9 + $0x838] sm:$0xff]
    %v5114 = vld [vmem:[#allocation9 + $0x840] sm:$0xff]
    %v5115 = vld [vmem:[#allocation9 + $0x848] sm:$0xff]
    %v5116 = vld [vmem:[#allocation9 + $0x850] sm:$0xff]
    %v5117 = vld [vmem:[#allocation9 + $0x858] sm:$0xff]
    %v5118 = vld [vmem:[#allocation9 + $0x860] sm:$0xff]
    %v5119 = vld [vmem:[#allocation9 + $0x868] sm:$0xff]
    %v5120 = vld [vmem:[#allocation9 + $0x870] sm:$0xff]
    %v5121 = vld [vmem:[#allocation9 + $0x878] sm:$0xff]
    %v5122 = vld [vmem:[#allocation9 + $0x880] sm:$0xff]
    %v5123 = vld [vmem:[#allocation9 + $0x888] sm:$0xff]
    %v5124 = vld [vmem:[#allocation9 + $0x890] sm:$0xff]
    %v5125 = vld [vmem:[#allocation9 + $0x898] sm:$0xff]
    %v5126 = vld [vmem:[#allocation9 + $0x8a0] sm:$0xff]
    %v5127 = vld [vmem:[#allocation9 + $0x8a8] sm:$0xff]
    %v5128 = vld [vmem:[#allocation9 + $0x8b0] sm:$0xff]
    %v5129 = vld [vmem:[#allocation9 + $0x8b8] sm:$0xff]
    %v5130 = vld [vmem:[#allocation9 + $0x8c0] sm:$0xff]
    %v5131 = vld [vmem:[#allocation9 + $0x8c8] sm:$0xff]
    %v5132 = vld [vmem:[#allocation9 + $0x8d0] sm:$0xff]
    %v5133 = vld [vmem:[#allocation9 + $0x8d8] sm:$0xff]
    %v5134 = vld [vmem:[#allocation9 + $0x8e0] sm:$0xff]
    %v5135 = vld [vmem:[#allocation9 + $0x8e8] sm:$0xff]
    %v5136 = vld [vmem:[#allocation9 + $0x8f0] sm:$0xff]
    %v5137 = vld [vmem:[#allocation9 + $0x8f8] sm:$0xff]
    %v5138 = vld [vmem:[#allocation9 + $0x900] sm:$0xff]
    %v5139 = vld [vmem:[#allocation9 + $0x908] sm:$0xff]
    %v5140 = vld [vmem:[#allocation9 + $0x910] sm:$0xff]
    %v5141 = vld [vmem:[#allocation9 + $0x918] sm:$0xff]
    %v5142 = vld [vmem:[#allocation9 + $0x920] sm:$0xff]
    %v5143 = vld [vmem:[#allocation9 + $0x928] sm:$0xff]
    %v5144 = vld [vmem:[#allocation9 + $0x930] sm:$0xff]
    %v5145 = vld [vmem:[#allocation9 + $0x938] sm:$0xff]
    %v5146 = vld [vmem:[#allocation9 + $0x940] sm:$0xff]
    %v5147 = vld [vmem:[#allocation9 + $0x948] sm:$0xff]
    %v5148 = vld [vmem:[#allocation9 + $0x950] sm:$0xff]
    %v5149 = vld [vmem:[#allocation9 + $0x958] sm:$0xff]
    %v5150 = vld [vmem:[#allocation9 + $0x960] sm:$0xff]
    %v5151 = vld [vmem:[#allocation9 + $0x968] sm:$0xff]
    %v5152 = vld [vmem:[#allocation9 + $0x970] sm:$0xff]
    %v5153 = vld [vmem:[#allocation9 + $0x978] sm:$0xff]
    %v5154 = vld [vmem:[#allocation9 + $0x980] sm:$0xff]
    %v5155 = vld [vmem:[#allocation9 + $0x988] sm:$0xff]
    %v5156 = vld [vmem:[#allocation9 + $0x990] sm:$0xff]
    %v5157 = vld [vmem:[#allocation9 + $0x998] sm:$0xff]
    %v5158 = vld [vmem:[#allocation9 + $0x9a0] sm:$0xff]
    %v5159 = vld [vmem:[#allocation9 + $0x9a8] sm:$0xff]
    %v5160 = vld [vmem:[#allocation9 + $0x9b0] sm:$0xff]
    %v5161 = vld [vmem:[#allocation9 + $0x9b8] sm:$0xff]
    %v5162 = vld [vmem:[#allocation9 + $0x9c0] sm:$0xff]
    %v5163 = vld [vmem:[#allocation9 + $0x9c8] sm:$0xff]
    %v5164 = vld [vmem:[#allocation9 + $0x9d0] sm:$0xff]
    %v5165 = vld [vmem:[#allocation9 + $0x9d8] sm:$0xff]
    %v5166 = vld [vmem:[#allocation9 + $0x9e0] sm:$0xff]
    %v5167 = vld [vmem:[#allocation9 + $0x9e8] sm:$0xff]
    %v5168 = vld [vmem:[#allocation9 + $0x9f0] sm:$0xff]
    %v5169 = vld [vmem:[#allocation9 + $0x9f8] sm:$0xff]
    %v5170 = vld [vmem:[#allocation9 + $0xa00] sm:$0xff]
    %v5171 = vld [vmem:[#allocation9 + $0xa08] sm:$0xff]
    %v5172 = vld [vmem:[#allocation9 + $0xa10] sm:$0xff]
    %v5173 = vld [vmem:[#allocation9 + $0xa18] sm:$0xff]
    %v5174 = vld [vmem:[#allocation9 + $0xa20] sm:$0xff]
    %v5175 = vld [vmem:[#allocation9 + $0xa28] sm:$0xff]
    %v5176 = vld [vmem:[#allocation9 + $0xa30] sm:$0xff]
    %v5177 = vld [vmem:[#allocation9 + $0xa38] sm:$0xff]
    %v5178 = vld [vmem:[#allocation9 + $0xa40] sm:$0xff]
    %v5179 = vld [vmem:[#allocation9 + $0xa48] sm:$0xff]
    %v5180 = vld [vmem:[#allocation9 + $0xa50] sm:$0xff]
    %v5181 = vld [vmem:[#allocation9 + $0xa58] sm:$0xff]
    %v5182 = vld [vmem:[#allocation9 + $0xa60] sm:$0xff]
    %v5183 = vld [vmem:[#allocation9 + $0xa68] sm:$0xff]
    %v5184 = vld [vmem:[#allocation9 + $0xa70] sm:$0xff]
    %v5185 = vld [vmem:[#allocation9 + $0xa78] sm:$0xff]
    %v5186 = vld [vmem:[#allocation9 + $0xa80] sm:$0xff]
    %v5187 = vld [vmem:[#allocation9 + $0xa88] sm:$0xff]
    %v5188 = vld [vmem:[#allocation9 + $0xa90] sm:$0xff]
    %v5189 = vld [vmem:[#allocation9 + $0xa98] sm:$0xff]
    %v5190 = vld [vmem:[#allocation9 + $0xaa0] sm:$0xff]
    %v5191 = vld [vmem:[#allocation9 + $0xaa8] sm:$0xff]
    %v5192 = vld [vmem:[#allocation9 + $0xab0] sm:$0xff]
    %v5193 = vld [vmem:[#allocation9 + $0xab8] sm:$0xff]
    %v5194 = vld [vmem:[#allocation9 + $0xac0] sm:$0xff]
    %v5195 = vld [vmem:[#allocation9 + $0xac8] sm:$0xff]
    %v5196 = vld [vmem:[#allocation9 + $0xad0] sm:$0xff]
    %v5197 = vld [vmem:[#allocation9 + $0xad8] sm:$0xff]
    %v5198 = vld [vmem:[#allocation9 + $0xae0] sm:$0xff]
    %v5199 = vld [vmem:[#allocation9 + $0xae8] sm:$0xff]
    %v5200 = vld [vmem:[#allocation9 + $0xaf0] sm:$0xff]
    %v5201 = vld [vmem:[#allocation9 + $0xaf8] sm:$0xff]
    %v5202 = vld [vmem:[#allocation9 + $0xb00] sm:$0xff]
    %v5203 = vld [vmem:[#allocation9 + $0xb08] sm:$0xff]
    %v5204 = vld [vmem:[#allocation9 + $0xb10] sm:$0xff]
    %v5205 = vld [vmem:[#allocation9 + $0xb18] sm:$0xff]
    %v5206 = vld [vmem:[#allocation9 + $0xb20] sm:$0xff]
    %v5207 = vld [vmem:[#allocation9 + $0xb28] sm:$0xff]
    %v5208 = vld [vmem:[#allocation9 + $0xb30] sm:$0xff]
    %v5209 = vld [vmem:[#allocation9 + $0xb38] sm:$0xff]
    %v5210 = vld [vmem:[#allocation9 + $0xb40] sm:$0xff]
    %v5211 = vld [vmem:[#allocation9 + $0xb48] sm:$0xff]
    %v5212 = vld [vmem:[#allocation9 + $0xb50] sm:$0xff]
    %v5213 = vld [vmem:[#allocation9 + $0xb58] sm:$0xff]
    %v5214 = vld [vmem:[#allocation9 + $0xb60] sm:$0xff]
    %v5215 = vld [vmem:[#allocation9 + $0xb68] sm:$0xff]
    %v5216 = vld [vmem:[#allocation9 + $0xb70] sm:$0xff]
    %v5217 = vld [vmem:[#allocation9 + $0xb78] sm:$0xff]
    %v5218 = vld [vmem:[#allocation9 + $0xb80] sm:$0xff]
    %v5219 = vld [vmem:[#allocation9 + $0xb88] sm:$0xff]
    %v5220 = vld [vmem:[#allocation9 + $0xb90] sm:$0xff]
    %v5221 = vld [vmem:[#allocation9 + $0xb98] sm:$0xff]
    %v5222 = vld [vmem:[#allocation9 + $0xba0] sm:$0xff]
    %v5223 = vld [vmem:[#allocation9 + $0xba8] sm:$0xff]
    %v5224 = vld [vmem:[#allocation9 + $0xbb0] sm:$0xff]
    %v5225 = vld [vmem:[#allocation9 + $0xbb8] sm:$0xff]
    %v5226 = vld [vmem:[#allocation9 + $0xbc0] sm:$0xff]
    %v5227 = vld [vmem:[#allocation9 + $0xbc8] sm:$0xff]
    %v5228 = vld [vmem:[#allocation9 + $0xbd0] sm:$0xff]
    %v5229 = vld [vmem:[#allocation9 + $0xbd8] sm:$0xff]
    %v5230 = vld [vmem:[#allocation9 + $0xbe0] sm:$0xff]
    %v5231 = vld [vmem:[#allocation9 + $0xbe8] sm:$0xff]
    %v5232 = vld [vmem:[#allocation9 + $0xbf0] sm:$0xff]
    %v5233 = vld [vmem:[#allocation9 + $0xbf8] sm:$0xff]
    %v5234 = vld [vmem:[#allocation9 + $0xc00] sm:$0xff]
    %v5235 = vld [vmem:[#allocation9 + $0xc08] sm:$0xff]
    %v5236 = vld [vmem:[#allocation9 + $0xc10] sm:$0xff]
    %v5237 = vld [vmem:[#allocation9 + $0xc18] sm:$0xff]
    %v5238 = vld [vmem:[#allocation9 + $0xc20] sm:$0xff]
    %v5239 = vld [vmem:[#allocation9 + $0xc28] sm:$0xff]
    %v5240 = vld [vmem:[#allocation9 + $0xc30] sm:$0xff]
    %v5241 = vld [vmem:[#allocation9 + $0xc38] sm:$0xff]
    %v5242 = vld [vmem:[#allocation9 + $0xc40] sm:$0xff]
    %v5243 = vld [vmem:[#allocation9 + $0xc48] sm:$0xff]
    %v5244 = vld [vmem:[#allocation9 + $0xc50] sm:$0xff]
    %v5245 = vld [vmem:[#allocation9 + $0xc58] sm:$0xff]
    %v5246 = vld [vmem:[#allocation9 + $0xc60] sm:$0xff]
    %v5247 = vld [vmem:[#allocation9 + $0xc68] sm:$0xff]
    %v5248 = vld [vmem:[#allocation9 + $0xc70] sm:$0xff]
    %v5249 = vld [vmem:[#allocation9 + $0xc78] sm:$0xff]
    %v5250 = vld [vmem:[#allocation9 + $0xc80] sm:$0xff]
    %v5251 = vld [vmem:[#allocation9 + $0xc88] sm:$0xff]
    %v5252 = vld [vmem:[#allocation9 + $0xc90] sm:$0xff]
    %v5253 = vld [vmem:[#allocation9 + $0xc98] sm:$0xff]
    %v5254 = vld [vmem:[#allocation9 + $0xca0] sm:$0xff]
    %v5255 = vld [vmem:[#allocation9 + $0xca8] sm:$0xff]
    %v5256 = vld [vmem:[#allocation9 + $0xcb0] sm:$0xff]
    %v5257 = vld [vmem:[#allocation9 + $0xcb8] sm:$0xff]
    %v5258 = vld [vmem:[#allocation9 + $0xcc0] sm:$0xff]
    %v5259 = vld [vmem:[#allocation9 + $0xcc8] sm:$0xff]
    %v5260 = vld [vmem:[#allocation9 + $0xcd0] sm:$0xff]
    %v5261 = vld [vmem:[#allocation9 + $0xcd8] sm:$0xff]
    %v5262 = vld [vmem:[#allocation9 + $0xce0] sm:$0xff]
    %v5263 = vld [vmem:[#allocation9 + $0xce8] sm:$0xff]
    %v5264 = vld [vmem:[#allocation9 + $0xcf0] sm:$0xff]
    %v5265 = vld [vmem:[#allocation9 + $0xcf8] sm:$0xff]
    %v5266 = vld [vmem:[#allocation9 + $0xd00] sm:$0xff]
    %v5267 = vld [vmem:[#allocation9 + $0xd08] sm:$0xff]
    %v5268 = vld [vmem:[#allocation9 + $0xd10] sm:$0xff]
    %v5269 = vld [vmem:[#allocation9 + $0xd18] sm:$0xff]
    %v5270 = vld [vmem:[#allocation9 + $0xd20] sm:$0xff]
    %v5271 = vld [vmem:[#allocation9 + $0xd28] sm:$0xff]
    %v5272 = vld [vmem:[#allocation9 + $0xd30] sm:$0xff]
    %v5273 = vld [vmem:[#allocation9 + $0xd38] sm:$0xff]
    %v5274 = vld [vmem:[#allocation9 + $0xd40] sm:$0xff]
    %v5275 = vld [vmem:[#allocation9 + $0xd48] sm:$0xff]
    %v5276 = vld [vmem:[#allocation9 + $0xd50] sm:$0xff]
    %v5277 = vld [vmem:[#allocation9 + $0xd58] sm:$0xff]
    %v5278 = vld [vmem:[#allocation9 + $0xd60] sm:$0xff]
    %v5279 = vld [vmem:[#allocation9 + $0xd68] sm:$0xff]
    %v5280 = vld [vmem:[#allocation9 + $0xd70] sm:$0xff]
    %v5281 = vld [vmem:[#allocation9 + $0xd78] sm:$0xff]
    %v5282 = vld [vmem:[#allocation9 + $0xd80] sm:$0xff]
    %v5283 = vld [vmem:[#allocation9 + $0xd88] sm:$0xff]
    %v5284 = vld [vmem:[#allocation9 + $0xd90] sm:$0xff]
    %v5285 = vld [vmem:[#allocation9 + $0xd98] sm:$0xff]
    %v5286 = vld [vmem:[#allocation9 + $0xda0] sm:$0xff]
    %v5287 = vld [vmem:[#allocation9 + $0xda8] sm:$0xff]
    %v5288 = vld [vmem:[#allocation9 + $0xdb0] sm:$0xff]
    %v5289 = vld [vmem:[#allocation9 + $0xdb8] sm:$0xff]
    %v5290 = vld [vmem:[#allocation9 + $0xdc0] sm:$0xff]
    %v5291 = vld [vmem:[#allocation9 + $0xdc8] sm:$0xff]
    %v5292 = vld [vmem:[#allocation9 + $0xdd0] sm:$0xff]
    %v5293 = vld [vmem:[#allocation9 + $0xdd8] sm:$0xff]
    %v5294 = vld [vmem:[#allocation9 + $0xde0] sm:$0xff]
    %v5295 = vld [vmem:[#allocation9 + $0xde8] sm:$0xff]
    %v5296 = vld [vmem:[#allocation9 + $0xdf0] sm:$0xff]
    %v5297 = vld [vmem:[#allocation9 + $0xdf8] sm:$0xff]
    %v5298 = vld [vmem:[#allocation9 + $0xe00] sm:$0xff]
    %v5299 = vld [vmem:[#allocation9 + $0xe08] sm:$0xff]
    %v5300 = vld [vmem:[#allocation9 + $0xe10] sm:$0xff]
    %v5301 = vld [vmem:[#allocation9 + $0xe18] sm:$0xff]
    %v5302 = vld [vmem:[#allocation9 + $0xe20] sm:$0xff]
    %v5303 = vld [vmem:[#allocation9 + $0xe28] sm:$0xff]
    %v5304 = vld [vmem:[#allocation9 + $0xe30] sm:$0xff]
    %v5305 = vld [vmem:[#allocation9 + $0xe38] sm:$0xff]
    %v5306 = vld [vmem:[#allocation9 + $0xe40] sm:$0xff]
    %v5307 = vld [vmem:[#allocation9 + $0xe48] sm:$0xff]
    %v5308 = vld [vmem:[#allocation9 + $0xe50] sm:$0xff]
    %v5309 = vld [vmem:[#allocation9 + $0xe58] sm:$0xff]
    %v5310 = vld [vmem:[#allocation9 + $0xe60] sm:$0xff]
    %v5311 = vld [vmem:[#allocation9 + $0xe68] sm:$0xff]
    %v5312 = vld [vmem:[#allocation9 + $0xe70] sm:$0xff]
    %v5313 = vld [vmem:[#allocation9 + $0xe78] sm:$0xff]
    %v5314 = vld [vmem:[#allocation9 + $0xe80] sm:$0xff]
    %v5315 = vld [vmem:[#allocation9 + $0xe88] sm:$0xff]
    %v5316 = vld [vmem:[#allocation9 + $0xe90] sm:$0xff]
    %v5317 = vld [vmem:[#allocation9 + $0xe98] sm:$0xff]
    %v5318 = vld [vmem:[#allocation9 + $0xea0] sm:$0xff]
    %v5319 = vld [vmem:[#allocation9 + $0xea8] sm:$0xff]
    %v5320 = vld [vmem:[#allocation9 + $0xeb0] sm:$0xff]
    %v5321 = vld [vmem:[#allocation9 + $0xeb8] sm:$0xff]
    %v5322 = vld [vmem:[#allocation9 + $0xec0] sm:$0xff]
    %v5323 = vld [vmem:[#allocation9 + $0xec8] sm:$0xff]
    %v5324 = vld [vmem:[#allocation9 + $0xed0] sm:$0xff]
    %v5325 = vld [vmem:[#allocation9 + $0xed8] sm:$0xff]
    %v5326 = vld [vmem:[#allocation9 + $0xee0] sm:$0xff]
    %v5327 = vld [vmem:[#allocation9 + $0xee8] sm:$0xff]
    %v5328 = vld [vmem:[#allocation9 + $0xef0] sm:$0xff]
    %v5329 = vld [vmem:[#allocation9 + $0xef8] sm:$0xff]
    %v5330 = vld [vmem:[#allocation9 + $0xf00] sm:$0xff]
    %v5331 = vld [vmem:[#allocation9 + $0xf08] sm:$0xff]
    %v5332 = vld [vmem:[#allocation9 + $0xf10] sm:$0xff]
    %v5333 = vld [vmem:[#allocation9 + $0xf18] sm:$0xff]
    %v5334 = vld [vmem:[#allocation9 + $0xf20] sm:$0xff]
    %v5335 = vld [vmem:[#allocation9 + $0xf28] sm:$0xff]
    %v5336 = vld [vmem:[#allocation9 + $0xf30] sm:$0xff]
    %v5337 = vld [vmem:[#allocation9 + $0xf38] sm:$0xff]
    %v5338 = vld [vmem:[#allocation9 + $0xf40] sm:$0xff]
    %v5339 = vld [vmem:[#allocation9 + $0xf48] sm:$0xff]
    %v5340 = vld [vmem:[#allocation9 + $0xf50] sm:$0xff]
    %v5341 = vld [vmem:[#allocation9 + $0xf58] sm:$0xff]
    %v5342 = vld [vmem:[#allocation9 + $0xf60] sm:$0xff]
    %v5343 = vld [vmem:[#allocation9 + $0xf68] sm:$0xff]
    %v5344 = vld [vmem:[#allocation9 + $0xf70] sm:$0xff]
    %v5345 = vld [vmem:[#allocation9 + $0xf78] sm:$0xff]
    %v5346 = vld [vmem:[#allocation9 + $0xf80] sm:$0xff]
    %v5347 = vld [vmem:[#allocation9 + $0xf88] sm:$0xff]
    %v5348 = vld [vmem:[#allocation9 + $0xf90] sm:$0xff]
    %v5349 = vld [vmem:[#allocation9 + $0xf98] sm:$0xff]
    %v5350 = vld [vmem:[#allocation9 + $0xfa0] sm:$0xff]
    %v5351 = vld [vmem:[#allocation9 + $0xfa8] sm:$0xff]
    %v5352 = vld [vmem:[#allocation9 + $0xfb0] sm:$0xff]
    %v5353 = vld [vmem:[#allocation9 + $0xfb8] sm:$0xff]
    %v5354 = vld [vmem:[#allocation9 + $0xfc0] sm:$0xff]
    %v5355 = vld [vmem:[#allocation9 + $0xfc8] sm:$0xff]
    %v5356 = vld [vmem:[#allocation9 + $0xfd0] sm:$0xff]
    %v5357 = vld [vmem:[#allocation9 + $0xfd8] sm:$0xff]
    %v5358 = vld [vmem:[#allocation9 + $0xfe0] sm:$0xff]
    %v5359 = vld [vmem:[#allocation9 + $0xfe8] sm:$0xff]
    %v5360 = vld [vmem:[#allocation9 + $0xff0] sm:$0xff]
    %v5361 = vld [vmem:[#allocation9 + $0xff8] sm:$0xff]
    %v5362 = vld [vmem:[#allocation15] sm:$0xff]
    %v5363 = vpack.c.bf16 %v4842, %v4834
    %v5364 = vpack.c.bf16 %v4843, %v4835
    %v5365 = vpack.c.bf16 %v4844, %v4836
    %v5366 = vpack.c.bf16 %v4845, %v4837
    %v5367 = vpack.c.bf16 %v4846, %v4838
    %v5368 = vpack.c.bf16 %v4847, %v4839
    %v5369 = vpack.c.bf16 %v4848, %v4840
    %v5370 = vpack.c.bf16 %v4849, %v4841
    %5371 = vmatprep.subr.bf16.mxu0 0
    %5372 = vmatpush1.bf16.msra.mxu0 0
    %5373 = vmatprep.subr.bf16.mxu0 0
    %5374 = vmatpush1.bf16.msra.mxu0 0
    %5375 = vmatprep.subr.bf16.mxu0 0
    %5376 = vmatpush1.bf16.msra.mxu0 0
    %5377 = vmatprep.subr.bf16.mxu0 0
    %5378 = vmatpush1.bf16.msra.mxu0 0
    %5379 = vmatprep.subr.bf16.mxu0 0
    %5380 = vmatpush1.bf16.msra.mxu0 0
    %5381 = vmatprep.subr.bf16.mxu0 0
    %5382 = vmatpush1.bf16.msra.mxu0 0
    %5383 = vmatprep.subr.bf16.mxu0 0
    %5384 = vmatpush1.bf16.msra.mxu0 0
    %5385 = vmatprep.subr.bf16.mxu0 %v5364
    %5386 = vmatpush1.bf16.msra.mxu0 %v5363
    %5387 = vmatprep.subr.bf16.mxu0 0
    %5388 = vmatpush2.bf16.msra.mxu0 0
    %5389 = vmatprep.subr.bf16.mxu0 0
    %5390 = vmatpush2.bf16.msra.mxu0 0
    %5391 = vmatprep.subr.bf16.mxu0 0
    %5392 = vmatpush2.bf16.msra.mxu0 0
    %5393 = vmatprep.subr.bf16.mxu0 0
    %5394 = vmatpush2.bf16.msra.mxu0 0
    %5395 = vmatprep.subr.bf16.mxu0 0
    %5396 = vmatpush2.bf16.msra.mxu0 0
    %5397 = vmatprep.subr.bf16.mxu0 0
    %5398 = vmatpush2.bf16.msra.mxu0 0
    %5399 = vmatprep.subr.bf16.mxu0 0
    %5400 = vmatpush2.bf16.msra.mxu0 0
    %5401 = vmatprep.subr.bf16.mxu0 0
    %5402 = vmatpush2.bf16.msra.mxu0 0
    %5403 = vmatprep.mubr.bf16.mxu0 0
    %5404 = vmatmul.mubr.bf16.gmra.mxu0 %v251
    %v5405 = vpop.f32.mrf.mxu0
    %v5406 = vadd.f32 0.0, %v5405
    %v5407 = vpop.f32.mrf.mxu0
    %v5408 = vadd.f32 0.0, %v5407
    %v5409 = vpop.f32.mrf.mxu0
    %v5410 = vadd.f32 0.0, %v5409
    %v5411 = vpop.f32.mrf.mxu0
    %v5412 = vadd.f32 0.0, %v5411
    %5413 = vdwg.mxu0
    %5414 = vmatprep.subr.bf16.mxu0 0
    %5415 = vmatpush1.bf16.msra.mxu0 0
    %5416 = vmatprep.subr.bf16.mxu0 0
    %5417 = vmatpush1.bf16.msra.mxu0 0
    %5418 = vmatprep.subr.bf16.mxu0 0
    %5419 = vmatpush1.bf16.msra.mxu0 0
    %5420 = vmatprep.subr.bf16.mxu0 0
    %5421 = vmatpush1.bf16.msra.mxu0 0
    %5422 = vmatprep.subr.bf16.mxu0 0
    %5423 = vmatpush1.bf16.msra.mxu0 0
    %5424 = vmatprep.subr.bf16.mxu0 0
    %5425 = vmatpush1.bf16.msra.mxu0 0
    %5426 = vmatprep.subr.bf16.mxu0 0
    %5427 = vmatpush1.bf16.msra.mxu0 0
    %5428 = vmatprep.subr.bf16.mxu0 %v5366
    %5429 = vmatpush1.bf16.msra.mxu0 %v5365
    %5430 = vmatprep.subr.bf16.mxu0 0
    %5431 = vmatpush2.bf16.msra.mxu0 0
    %5432 = vmatprep.subr.bf16.mxu0 0
    %5433 = vmatpush2.bf16.msra.mxu0 0
    %5434 = vmatprep.subr.bf16.mxu0 0
    %5435 = vmatpush2.bf16.msra.mxu0 0
    %5436 = vmatprep.subr.bf16.mxu0 0
    %5437 = vmatpush2.bf16.msra.mxu0 0
    %5438 = vmatprep.subr.bf16.mxu0 0
    %5439 = vmatpush2.bf16.msra.mxu0 0
    %5440 = vmatprep.subr.bf16.mxu0 0
    %5441 = vmatpush2.bf16.msra.mxu0 0
    %5442 = vmatprep.subr.bf16.mxu0 0
    %5443 = vmatpush2.bf16.msra.mxu0 0
    %5444 = vmatprep.subr.bf16.mxu0 0
    %5445 = vmatpush2.bf16.msra.mxu0 0
    %5446 = vmatprep.mubr.bf16.mxu0 0
    %5447 = vmatmul.mubr.bf16.gmra.mxu0 %v251
    %v5448 = vpop.f32.mrf.mxu0
    %v5449 = vadd.f32 0.0, %v5448
    %v5450 = vpop.f32.mrf.mxu0
    %v5451 = vadd.f32 0.0, %v5450
    %v5452 = vpop.f32.mrf.mxu0
    %v5453 = vadd.f32 0.0, %v5452
    %v5454 = vpop.f32.mrf.mxu0
    %v5455 = vadd.f32 0.0, %v5454
    %5456 = vdwg.mxu0
    %5457 = vmatprep.subr.bf16.mxu0 0
    %5458 = vmatpush1.bf16.msra.mxu0 0
    %5459 = vmatprep.subr.bf16.mxu0 0
    %5460 = vmatpush1.bf16.msra.mxu0 0
    %5461 = vmatprep.subr.bf16.mxu0 0
    %5462 = vmatpush1.bf16.msra.mxu0 0
    %5463 = vmatprep.subr.bf16.mxu0 0
    %5464 = vmatpush1.bf16.msra.mxu0 0
    %5465 = vmatprep.subr.bf16.mxu0 0
    %5466 = vmatpush1.bf16.msra.mxu0 0
    %5467 = vmatprep.subr.bf16.mxu0 0
    %5468 = vmatpush1.bf16.msra.mxu0 0
    %5469 = vmatprep.subr.bf16.mxu0 0
    %5470 = vmatpush1.bf16.msra.mxu0 0
    %5471 = vmatprep.subr.bf16.mxu0 %v5368
    %5472 = vmatpush1.bf16.msra.mxu0 %v5367
    %5473 = vmatprep.subr.bf16.mxu0 0
    %5474 = vmatpush2.bf16.msra.mxu0 0
    %5475 = vmatprep.subr.bf16.mxu0 0
    %5476 = vmatpush2.bf16.msra.mxu0 0
    %5477 = vmatprep.subr.bf16.mxu0 0
    %5478 = vmatpush2.bf16.msra.mxu0 0
    %5479 = vmatprep.subr.bf16.mxu0 0
    %5480 = vmatpush2.bf16.msra.mxu0 0
    %5481 = vmatprep.subr.bf16.mxu0 0
    %5482 = vmatpush2.bf16.msra.mxu0 0
    %5483 = vmatprep.subr.bf16.mxu0 0
    %5484 = vmatpush2.bf16.msra.mxu0 0
    %5485 = vmatprep.subr.bf16.mxu0 0
    %5486 = vmatpush2.bf16.msra.mxu0 0
    %5487 = vmatprep.subr.bf16.mxu0 0
    %5488 = vmatpush2.bf16.msra.mxu0 0
    %5489 = vmatprep.mubr.bf16.mxu0 0
    %5490 = vmatmul.mubr.bf16.gmra.mxu0 %v251
    %v5491 = vpop.f32.mrf.mxu0
    %v5492 = vadd.f32 0.0, %v5491
    %v5493 = vpop.f32.mrf.mxu0
    %v5494 = vadd.f32 0.0, %v5493
    %v5495 = vpop.f32.mrf.mxu0
    %v5496 = vadd.f32 0.0, %v5495
    %v5497 = vpop.f32.mrf.mxu0
    %v5498 = vadd.f32 0.0, %v5497
    %5499 = vdwg.mxu0
    %5500 = vmatprep.subr.bf16.mxu0 0
    %5501 = vmatpush1.bf16.msra.mxu0 0
    %5502 = vmatprep.subr.bf16.mxu0 0
    %5503 = vmatpush1.bf16.msra.mxu0 0
    %5504 = vmatprep.subr.bf16.mxu0 0
    %5505 = vmatpush1.bf16.msra.mxu0 0
    %5506 = vmatprep.subr.bf16.mxu0 0
    %5507 = vmatpush1.bf16.msra.mxu0 0
    %5508 = vmatprep.subr.bf16.mxu0 0
    %5509 = vmatpush1.bf16.msra.mxu0 0
    %5510 = vmatprep.subr.bf16.mxu0 0
    %5511 = vmatpush1.bf16.msra.mxu0 0
    %5512 = vmatprep.subr.bf16.mxu0 0
    %5513 = vmatpush1.bf16.msra.mxu0 0
    %5514 = vmatprep.subr.bf16.mxu0 %v5370
    %5515 = vmatpush1.bf16.msra.mxu0 %v5369
    %5516 = vmatprep.subr.bf16.mxu0 0
    %5517 = vmatpush2.bf16.msra.mxu0 0
    %5518 = vmatprep.subr.bf16.mxu0 0
    %5519 = vmatpush2.bf16.msra.mxu0 0
    %5520 = vmatprep.subr.bf16.mxu0 0
    %5521 = vmatpush2.bf16.msra.mxu0 0
    %5522 = vmatprep.subr.bf16.mxu0 0
    %5523 = vmatpush2.bf16.msra.mxu0 0
    %5524 = vmatprep.subr.bf16.mxu0 0
    %5525 = vmatpush2.bf16.msra.mxu0 0
    %5526 = vmatprep.subr.bf16.mxu0 0
    %5527 = vmatpush2.bf16.msra.mxu0 0
    %5528 = vmatprep.subr.bf16.mxu0 0
    %5529 = vmatpush2.bf16.msra.mxu0 0
    %5530 = vmatprep.subr.bf16.mxu0 0
    %5531 = vmatpush2.bf16.msra.mxu0 0
    %5532 = vmatprep.mubr.bf16.mxu0 0
    %5533 = vmatmul.mubr.bf16.gmra.mxu0 %v251
    %v5534 = vpop.f32.mrf.mxu0
    %v5535 = vadd.f32 0.0, %v5534
    %v5536 = vpop.f32.mrf.mxu0
    %v5537 = vadd.f32 0.0, %v5536
    %v5538 = vpop.f32.mrf.mxu0
    %v5539 = vadd.f32 0.0, %v5538
    %v5540 = vpop.f32.mrf.mxu0
    %v5541 = vadd.f32 0.0, %v5540
    %5542 = vdwg.mxu0
    %v5543 = vpack.c.bf16 %v5410, %v5406
    %v5544 = vpack.c.bf16 %v5412, %v5408
    %v5545 = vpack.c.bf16 %v5453, %v5449
    %v5546 = vpack.c.bf16 %v5455, %v5451
    %v5547 = vpack.c.bf16 %v5496, %v5492
    %v5548 = vpack.c.bf16 %v5498, %v5494
    %v5549 = vpack.c.bf16 %v5539, %v5535
    %v5550 = vpack.c.bf16 %v5541, %v5537
    %v5552 = vlaneseq
    %v5553 = vshrl.u32 %v5552, 7
    %v5554 = vsub.s32 0, %v5553
    %v5555 = vrot.slane %v5362, %v5554
    %v5556 = vlaneseq
    %v5557 = vshrl.u32 %v5556, 7
    %v5558 = vsub.s32 1, %v5557
    %v5559 = vrot.slane %v5362, %v5558
    %v5560 = vlaneseq
    %v5561 = vshrl.u32 %v5560, 7
    %v5562 = vsub.s32 2, %v5561
    %v5563 = vrot.slane %v5362, %v5562
    %v5564 = vlaneseq
    %v5565 = vshrl.u32 %v5564, 7
    %v5566 = vsub.s32 3, %v5565
    %v5567 = vrot.slane %v5362, %v5566
    %v5568 = vlaneseq
    %v5569 = vshrl.u32 %v5568, 7
    %v5570 = vsub.s32 4, %v5569
    %v5571 = vrot.slane %v5362, %v5570
    %v5572 = vlaneseq
    %v5573 = vshrl.u32 %v5572, 7
    %v5574 = vsub.s32 5, %v5573
    %v5575 = vrot.slane %v5362, %v5574
    %v5576 = vlaneseq
    %v5577 = vshrl.u32 %v5576, 7
    %v5578 = vsub.s32 6, %v5577
    %v5579 = vrot.slane %v5362, %v5578
    %v5580 = vlaneseq
    %v5581 = vshrl.u32 %v5580, 7
    %v5582 = vsub.s32 7, %v5581
    %v5583 = vrot.slane %v5362, %v5582
    %v6104 = vunpack.c.l.b16 %v4850
    %v6105 = vunpack.c.h.b16 %v4850
    %v6106 = vunpack.c.l.b16 %v4851
    %v6107 = vunpack.c.h.b16 %v4851
    %v6108 = vunpack.c.l.b16 %v4852
    %v6109 = vunpack.c.h.b16 %v4852
    %v6110 = vunpack.c.l.b16 %v4853
    %v6111 = vunpack.c.h.b16 %v4853
    %v6112 = vunpack.c.l.b16 %v4854
    %v6113 = vunpack.c.h.b16 %v4854
    %v6114 = vunpack.c.l.b16 %v4855
    %v6115 = vunpack.c.h.b16 %v4855
    %v6116 = vunpack.c.l.b16 %v4856
    %v6117 = vunpack.c.h.b16 %v4856
    %v6118 = vunpack.c.l.b16 %v4857
    %v6119 = vunpack.c.h.b16 %v4857
    %v6120 = vunpack.c.l.b16 %v4858
    %v6121 = vunpack.c.h.b16 %v4858
    %v6122 = vunpack.c.l.b16 %v4859
    %v6123 = vunpack.c.h.b16 %v4859
    %v6124 = vunpack.c.l.b16 %v4860
    %v6125 = vunpack.c.h.b16 %v4860
    %v6126 = vunpack.c.l.b16 %v4861
    %v6127 = vunpack.c.h.b16 %v4861
    %v6128 = vunpack.c.l.b16 %v4862
    %v6129 = vunpack.c.h.b16 %v4862
    %v6130 = vunpack.c.l.b16 %v4863
    %v6131 = vunpack.c.h.b16 %v4863
    %v6132 = vunpack.c.l.b16 %v4864
    %v6133 = vunpack.c.h.b16 %v4864
    %v6134 = vunpack.c.l.b16 %v4865
    %v6135 = vunpack.c.h.b16 %v4865
    %v6136 = vunpack.c.l.b16 %v4866
    %v6137 = vunpack.c.h.b16 %v4866
    %v6138 = vunpack.c.l.b16 %v4867
    %v6139 = vunpack.c.h.b16 %v4867
    %v6140 = vunpack.c.l.b16 %v4868
    %v6141 = vunpack.c.h.b16 %v4868
    %v6142 = vunpack.c.l.b16 %v4869
    %v6143 = vunpack.c.h.b16 %v4869
    %v6144 = vunpack.c.l.b16 %v4870
    %v6145 = vunpack.c.h.b16 %v4870
    %v6146 = vunpack.c.l.b16 %v4871
    %v6147 = vunpack.c.h.b16 %v4871
    %v6148 = vunpack.c.l.b16 %v4872
    %v6149 = vunpack.c.h.b16 %v4872
    %v6150 = vunpack.c.l.b16 %v4873
    %v6151 = vunpack.c.h.b16 %v4873
    %v6152 = vunpack.c.l.b16 %v4874
    %v6153 = vunpack.c.h.b16 %v4874
    %v6154 = vunpack.c.l.b16 %v4875
    %v6155 = vunpack.c.h.b16 %v4875
    %v6156 = vunpack.c.l.b16 %v4876
    %v6157 = vunpack.c.h.b16 %v4876
    %v6158 = vunpack.c.l.b16 %v4877
    %v6159 = vunpack.c.h.b16 %v4877
    %v6160 = vunpack.c.l.b16 %v4878
    %v6161 = vunpack.c.h.b16 %v4878
    %v6162 = vunpack.c.l.b16 %v4879
    %v6163 = vunpack.c.h.b16 %v4879
    %v6164 = vunpack.c.l.b16 %v4880
    %v6165 = vunpack.c.h.b16 %v4880
    %v6166 = vunpack.c.l.b16 %v4881
    %v6167 = vunpack.c.h.b16 %v4881
    %v6168 = vunpack.c.l.b16 %v4882
    %v6169 = vunpack.c.h.b16 %v4882
    %v6170 = vunpack.c.l.b16 %v4883
    %v6171 = vunpack.c.h.b16 %v4883
    %v6172 = vunpack.c.l.b16 %v4884
    %v6173 = vunpack.c.h.b16 %v4884
    %v6174 = vunpack.c.l.b16 %v4885
    %v6175 = vunpack.c.h.b16 %v4885
    %v6176 = vunpack.c.l.b16 %v4886
    %v6177 = vunpack.c.h.b16 %v4886
    %v6178 = vunpack.c.l.b16 %v4887
    %v6179 = vunpack.c.h.b16 %v4887
    %v6180 = vunpack.c.l.b16 %v4888
    %v6181 = vunpack.c.h.b16 %v4888
    %v6182 = vunpack.c.l.b16 %v4889
    %v6183 = vunpack.c.h.b16 %v4889
    %v6184 = vunpack.c.l.b16 %v4890
    %v6185 = vunpack.c.h.b16 %v4890
    %v6186 = vunpack.c.l.b16 %v4891
    %v6187 = vunpack.c.h.b16 %v4891
    %v6188 = vunpack.c.l.b16 %v4892
    %v6189 = vunpack.c.h.b16 %v4892
    %v6190 = vunpack.c.l.b16 %v4893
    %v6191 = vunpack.c.h.b16 %v4893
    %v6192 = vunpack.c.l.b16 %v4894
    %v6193 = vunpack.c.h.b16 %v4894
    %v6194 = vunpack.c.l.b16 %v4895
    %v6195 = vunpack.c.h.b16 %v4895
    %v6196 = vunpack.c.l.b16 %v4896
    %v6197 = vunpack.c.h.b16 %v4896
    %v6198 = vunpack.c.l.b16 %v4897
    %v6199 = vunpack.c.h.b16 %v4897
    %v6200 = vunpack.c.l.b16 %v4898
    %v6201 = vunpack.c.h.b16 %v4898
    %v6202 = vunpack.c.l.b16 %v4899
    %v6203 = vunpack.c.h.b16 %v4899
    %v6204 = vunpack.c.l.b16 %v4900
    %v6205 = vunpack.c.h.b16 %v4900
    %v6206 = vunpack.c.l.b16 %v4901
    %v6207 = vunpack.c.h.b16 %v4901
    %v6208 = vunpack.c.l.b16 %v4902
    %v6209 = vunpack.c.h.b16 %v4902
    %v6210 = vunpack.c.l.b16 %v4903
    %v6211 = vunpack.c.h.b16 %v4903
    %v6212 = vunpack.c.l.b16 %v4904
    %v6213 = vunpack.c.h.b16 %v4904
    %v6214 = vunpack.c.l.b16 %v4905
    %v6215 = vunpack.c.h.b16 %v4905
    %v6216 = vunpack.c.l.b16 %v4906
    %v6217 = vunpack.c.h.b16 %v4906
    %v6218 = vunpack.c.l.b16 %v4907
    %v6219 = vunpack.c.h.b16 %v4907
    %v6220 = vunpack.c.l.b16 %v4908
    %v6221 = vunpack.c.h.b16 %v4908
    %v6222 = vunpack.c.l.b16 %v4909
    %v6223 = vunpack.c.h.b16 %v4909
    %v6224 = vunpack.c.l.b16 %v4910
    %v6225 = vunpack.c.h.b16 %v4910
    %v6226 = vunpack.c.l.b16 %v4911
    %v6227 = vunpack.c.h.b16 %v4911
    %v6228 = vunpack.c.l.b16 %v4912
    %v6229 = vunpack.c.h.b16 %v4912
    %v6230 = vunpack.c.l.b16 %v4913
    %v6231 = vunpack.c.h.b16 %v4913
    %v6232 = vunpack.c.l.b16 %v4914
    %v6233 = vunpack.c.h.b16 %v4914
    %v6234 = vunpack.c.l.b16 %v4915
    %v6235 = vunpack.c.h.b16 %v4915
    %v6236 = vunpack.c.l.b16 %v4916
    %v6237 = vunpack.c.h.b16 %v4916
    %v6238 = vunpack.c.l.b16 %v4917
    %v6239 = vunpack.c.h.b16 %v4917
    %v6240 = vunpack.c.l.b16 %v4918
    %v6241 = vunpack.c.h.b16 %v4918
    %v6242 = vunpack.c.l.b16 %v4919
    %v6243 = vunpack.c.h.b16 %v4919
    %v6244 = vunpack.c.l.b16 %v4920
    %v6245 = vunpack.c.h.b16 %v4920
    %v6246 = vunpack.c.l.b16 %v4921
    %v6247 = vunpack.c.h.b16 %v4921
    %v6248 = vunpack.c.l.b16 %v4922
    %v6249 = vunpack.c.h.b16 %v4922
    %v6250 = vunpack.c.l.b16 %v4923
    %v6251 = vunpack.c.h.b16 %v4923
    %v6252 = vunpack.c.l.b16 %v4924
    %v6253 = vunpack.c.h.b16 %v4924
    %v6254 = vunpack.c.l.b16 %v4925
    %v6255 = vunpack.c.h.b16 %v4925
    %v6256 = vunpack.c.l.b16 %v4926
    %v6257 = vunpack.c.h.b16 %v4926
    %v6258 = vunpack.c.l.b16 %v4927
    %v6259 = vunpack.c.h.b16 %v4927
    %v6260 = vunpack.c.l.b16 %v4928
    %v6261 = vunpack.c.h.b16 %v4928
    %v6262 = vunpack.c.l.b16 %v4929
    %v6263 = vunpack.c.h.b16 %v4929
    %v6264 = vunpack.c.l.b16 %v4930
    %v6265 = vunpack.c.h.b16 %v4930
    %v6266 = vunpack.c.l.b16 %v4931
    %v6267 = vunpack.c.h.b16 %v4931
    %v6268 = vunpack.c.l.b16 %v4932
    %v6269 = vunpack.c.h.b16 %v4932
    %v6270 = vunpack.c.l.b16 %v4933
    %v6271 = vunpack.c.h.b16 %v4933
    %v6272 = vunpack.c.l.b16 %v4934
    %v6273 = vunpack.c.h.b16 %v4934
    %v6274 = vunpack.c.l.b16 %v4935
    %v6275 = vunpack.c.h.b16 %v4935
    %v6276 = vunpack.c.l.b16 %v4936
    %v6277 = vunpack.c.h.b16 %v4936
    %v6278 = vunpack.c.l.b16 %v4937
    %v6279 = vunpack.c.h.b16 %v4937
    %v6280 = vunpack.c.l.b16 %v4938
    %v6281 = vunpack.c.h.b16 %v4938
    %v6282 = vunpack.c.l.b16 %v4939
    %v6283 = vunpack.c.h.b16 %v4939
    %v6284 = vunpack.c.l.b16 %v4940
    %v6285 = vunpack.c.h.b16 %v4940
    %v6286 = vunpack.c.l.b16 %v4941
    %v6287 = vunpack.c.h.b16 %v4941
    %v6288 = vunpack.c.l.b16 %v4942
    %v6289 = vunpack.c.h.b16 %v4942
    %v6290 = vunpack.c.l.b16 %v4943
    %v6291 = vunpack.c.h.b16 %v4943
    %v6292 = vunpack.c.l.b16 %v4944
    %v6293 = vunpack.c.h.b16 %v4944
    %v6294 = vunpack.c.l.b16 %v4945
    %v6295 = vunpack.c.h.b16 %v4945
    %v6296 = vunpack.c.l.b16 %v4946
    %v6297 = vunpack.c.h.b16 %v4946
    %v6298 = vunpack.c.l.b16 %v4947
    %v6299 = vunpack.c.h.b16 %v4947
    %v6300 = vunpack.c.l.b16 %v4948
    %v6301 = vunpack.c.h.b16 %v4948
    %v6302 = vunpack.c.l.b16 %v4949
    %v6303 = vunpack.c.h.b16 %v4949
    %v6304 = vunpack.c.l.b16 %v4950
    %v6305 = vunpack.c.h.b16 %v4950
    %v6306 = vunpack.c.l.b16 %v4951
    %v6307 = vunpack.c.h.b16 %v4951
    %v6308 = vunpack.c.l.b16 %v4952
    %v6309 = vunpack.c.h.b16 %v4952
    %v6310 = vunpack.c.l.b16 %v4953
    %v6311 = vunpack.c.h.b16 %v4953
    %v6312 = vunpack.c.l.b16 %v4954
    %v6313 = vunpack.c.h.b16 %v4954
    %v6314 = vunpack.c.l.b16 %v4955
    %v6315 = vunpack.c.h.b16 %v4955
    %v6316 = vunpack.c.l.b16 %v4956
    %v6317 = vunpack.c.h.b16 %v4956
    %v6318 = vunpack.c.l.b16 %v4957
    %v6319 = vunpack.c.h.b16 %v4957
    %v6320 = vunpack.c.l.b16 %v4958
    %v6321 = vunpack.c.h.b16 %v4958
    %v6322 = vunpack.c.l.b16 %v4959
    %v6323 = vunpack.c.h.b16 %v4959
    %v6324 = vunpack.c.l.b16 %v4960
    %v6325 = vunpack.c.h.b16 %v4960
    %v6326 = vunpack.c.l.b16 %v4961
    %v6327 = vunpack.c.h.b16 %v4961
    %v6328 = vunpack.c.l.b16 %v4962
    %v6329 = vunpack.c.h.b16 %v4962
    %v6330 = vunpack.c.l.b16 %v4963
    %v6331 = vunpack.c.h.b16 %v4963
    %v6332 = vunpack.c.l.b16 %v4964
    %v6333 = vunpack.c.h.b16 %v4964
    %v6334 = vunpack.c.l.b16 %v4965
    %v6335 = vunpack.c.h.b16 %v4965
    %v6336 = vunpack.c.l.b16 %v4966
    %v6337 = vunpack.c.h.b16 %v4966
    %v6338 = vunpack.c.l.b16 %v4967
    %v6339 = vunpack.c.h.b16 %v4967
    %v6340 = vunpack.c.l.b16 %v4968
    %v6341 = vunpack.c.h.b16 %v4968
    %v6342 = vunpack.c.l.b16 %v4969
    %v6343 = vunpack.c.h.b16 %v4969
    %v6344 = vunpack.c.l.b16 %v4970
    %v6345 = vunpack.c.h.b16 %v4970
    %v6346 = vunpack.c.l.b16 %v4971
    %v6347 = vunpack.c.h.b16 %v4971
    %v6348 = vunpack.c.l.b16 %v4972
    %v6349 = vunpack.c.h.b16 %v4972
    %v6350 = vunpack.c.l.b16 %v4973
    %v6351 = vunpack.c.h.b16 %v4973
    %v6352 = vunpack.c.l.b16 %v4974
    %v6353 = vunpack.c.h.b16 %v4974
    %v6354 = vunpack.c.l.b16 %v4975
    %v6355 = vunpack.c.h.b16 %v4975
    %v6356 = vunpack.c.l.b16 %v4976
    %v6357 = vunpack.c.h.b16 %v4976
    %v6358 = vunpack.c.l.b16 %v4977
    %v6359 = vunpack.c.h.b16 %v4977
    %v6360 = vunpack.c.l.b16 %v4978
    %v6361 = vunpack.c.h.b16 %v4978
    %v6362 = vunpack.c.l.b16 %v4979
    %v6363 = vunpack.c.h.b16 %v4979
    %v6364 = vunpack.c.l.b16 %v4980
    %v6365 = vunpack.c.h.b16 %v4980
    %v6366 = vunpack.c.l.b16 %v4981
    %v6367 = vunpack.c.h.b16 %v4981
    %v6368 = vunpack.c.l.b16 %v4982
    %v6369 = vunpack.c.h.b16 %v4982
    %v6370 = vunpack.c.l.b16 %v4983
    %v6371 = vunpack.c.h.b16 %v4983
    %v6372 = vunpack.c.l.b16 %v4984
    %v6373 = vunpack.c.h.b16 %v4984
    %v6374 = vunpack.c.l.b16 %v4985
    %v6375 = vunpack.c.h.b16 %v4985
    %v6376 = vunpack.c.l.b16 %v4986
    %v6377 = vunpack.c.h.b16 %v4986
    %v6378 = vunpack.c.l.b16 %v4987
    %v6379 = vunpack.c.h.b16 %v4987
    %v6380 = vunpack.c.l.b16 %v4988
    %v6381 = vunpack.c.h.b16 %v4988
    %v6382 = vunpack.c.l.b16 %v4989
    %v6383 = vunpack.c.h.b16 %v4989
    %v6384 = vunpack.c.l.b16 %v4990
    %v6385 = vunpack.c.h.b16 %v4990
    %v6386 = vunpack.c.l.b16 %v4991
    %v6387 = vunpack.c.h.b16 %v4991
    %v6388 = vunpack.c.l.b16 %v4992
    %v6389 = vunpack.c.h.b16 %v4992
    %v6390 = vunpack.c.l.b16 %v4993
    %v6391 = vunpack.c.h.b16 %v4993
    %v6392 = vunpack.c.l.b16 %v4994
    %v6393 = vunpack.c.h.b16 %v4994
    %v6394 = vunpack.c.l.b16 %v4995
    %v6395 = vunpack.c.h.b16 %v4995
    %v6396 = vunpack.c.l.b16 %v4996
    %v6397 = vunpack.c.h.b16 %v4996
    %v6398 = vunpack.c.l.b16 %v4997
    %v6399 = vunpack.c.h.b16 %v4997
    %v6400 = vunpack.c.l.b16 %v4998
    %v6401 = vunpack.c.h.b16 %v4998
    %v6402 = vunpack.c.l.b16 %v4999
    %v6403 = vunpack.c.h.b16 %v4999
    %v6404 = vunpack.c.l.b16 %v5000
    %v6405 = vunpack.c.h.b16 %v5000
    %v6406 = vunpack.c.l.b16 %v5001
    %v6407 = vunpack.c.h.b16 %v5001
    %v6408 = vunpack.c.l.b16 %v5002
    %v6409 = vunpack.c.h.b16 %v5002
    %v6410 = vunpack.c.l.b16 %v5003
    %v6411 = vunpack.c.h.b16 %v5003
    %v6412 = vunpack.c.l.b16 %v5004
    %v6413 = vunpack.c.h.b16 %v5004
    %v6414 = vunpack.c.l.b16 %v5005
    %v6415 = vunpack.c.h.b16 %v5005
    %v6416 = vunpack.c.l.b16 %v5006
    %v6417 = vunpack.c.h.b16 %v5006
    %v6418 = vunpack.c.l.b16 %v5007
    %v6419 = vunpack.c.h.b16 %v5007
    %v6420 = vunpack.c.l.b16 %v5008
    %v6421 = vunpack.c.h.b16 %v5008
    %v6422 = vunpack.c.l.b16 %v5009
    %v6423 = vunpack.c.h.b16 %v5009
    %v6424 = vunpack.c.l.b16 %v5010
    %v6425 = vunpack.c.h.b16 %v5010
    %v6426 = vunpack.c.l.b16 %v5011
    %v6427 = vunpack.c.h.b16 %v5011
    %v6428 = vunpack.c.l.b16 %v5012
    %v6429 = vunpack.c.h.b16 %v5012
    %v6430 = vunpack.c.l.b16 %v5013
    %v6431 = vunpack.c.h.b16 %v5013
    %v6432 = vunpack.c.l.b16 %v5014
    %v6433 = vunpack.c.h.b16 %v5014
    %v6434 = vunpack.c.l.b16 %v5015
    %v6435 = vunpack.c.h.b16 %v5015
    %v6436 = vunpack.c.l.b16 %v5016
    %v6437 = vunpack.c.h.b16 %v5016
    %v6438 = vunpack.c.l.b16 %v5017
    %v6439 = vunpack.c.h.b16 %v5017
    %v6440 = vunpack.c.l.b16 %v5018
    %v6441 = vunpack.c.h.b16 %v5018
    %v6442 = vunpack.c.l.b16 %v5019
    %v6443 = vunpack.c.h.b16 %v5019
    %v6444 = vunpack.c.l.b16 %v5020
    %v6445 = vunpack.c.h.b16 %v5020
    %v6446 = vunpack.c.l.b16 %v5021
    %v6447 = vunpack.c.h.b16 %v5021
    %v6448 = vunpack.c.l.b16 %v5022
    %v6449 = vunpack.c.h.b16 %v5022
    %v6450 = vunpack.c.l.b16 %v5023
    %v6451 = vunpack.c.h.b16 %v5023
    %v6452 = vunpack.c.l.b16 %v5024
    %v6453 = vunpack.c.h.b16 %v5024
    %v6454 = vunpack.c.l.b16 %v5025
    %v6455 = vunpack.c.h.b16 %v5025
    %v6456 = vunpack.c.l.b16 %v5026
    %v6457 = vunpack.c.h.b16 %v5026
    %v6458 = vunpack.c.l.b16 %v5027
    %v6459 = vunpack.c.h.b16 %v5027
    %v6460 = vunpack.c.l.b16 %v5028
    %v6461 = vunpack.c.h.b16 %v5028
    %v6462 = vunpack.c.l.b16 %v5029
    %v6463 = vunpack.c.h.b16 %v5029
    %v6464 = vunpack.c.l.b16 %v5030
    %v6465 = vunpack.c.h.b16 %v5030
    %v6466 = vunpack.c.l.b16 %v5031
    %v6467 = vunpack.c.h.b16 %v5031
    %v6468 = vunpack.c.l.b16 %v5032
    %v6469 = vunpack.c.h.b16 %v5032
    %v6470 = vunpack.c.l.b16 %v5033
    %v6471 = vunpack.c.h.b16 %v5033
    %v6472 = vunpack.c.l.b16 %v5034
    %v6473 = vunpack.c.h.b16 %v5034
    %v6474 = vunpack.c.l.b16 %v5035
    %v6475 = vunpack.c.h.b16 %v5035
    %v6476 = vunpack.c.l.b16 %v5036
    %v6477 = vunpack.c.h.b16 %v5036
    %v6478 = vunpack.c.l.b16 %v5037
    %v6479 = vunpack.c.h.b16 %v5037
    %v6480 = vunpack.c.l.b16 %v5038
    %v6481 = vunpack.c.h.b16 %v5038
    %v6482 = vunpack.c.l.b16 %v5039
    %v6483 = vunpack.c.h.b16 %v5039
    %v6484 = vunpack.c.l.b16 %v5040
    %v6485 = vunpack.c.h.b16 %v5040
    %v6486 = vunpack.c.l.b16 %v5041
    %v6487 = vunpack.c.h.b16 %v5041
    %v6488 = vunpack.c.l.b16 %v5042
    %v6489 = vunpack.c.h.b16 %v5042
    %v6490 = vunpack.c.l.b16 %v5043
    %v6491 = vunpack.c.h.b16 %v5043
    %v6492 = vunpack.c.l.b16 %v5044
    %v6493 = vunpack.c.h.b16 %v5044
    %v6494 = vunpack.c.l.b16 %v5045
    %v6495 = vunpack.c.h.b16 %v5045
    %v6496 = vunpack.c.l.b16 %v5046
    %v6497 = vunpack.c.h.b16 %v5046
    %v6498 = vunpack.c.l.b16 %v5047
    %v6499 = vunpack.c.h.b16 %v5047
    %v6500 = vunpack.c.l.b16 %v5048
    %v6501 = vunpack.c.h.b16 %v5048
    %v6502 = vunpack.c.l.b16 %v5049
    %v6503 = vunpack.c.h.b16 %v5049
    %v6504 = vunpack.c.l.b16 %v5050
    %v6505 = vunpack.c.h.b16 %v5050
    %v6506 = vunpack.c.l.b16 %v5051
    %v6507 = vunpack.c.h.b16 %v5051
    %v6508 = vunpack.c.l.b16 %v5052
    %v6509 = vunpack.c.h.b16 %v5052
    %v6510 = vunpack.c.l.b16 %v5053
    %v6511 = vunpack.c.h.b16 %v5053
    %v6512 = vunpack.c.l.b16 %v5054
    %v6513 = vunpack.c.h.b16 %v5054
    %v6514 = vunpack.c.l.b16 %v5055
    %v6515 = vunpack.c.h.b16 %v5055
    %v6516 = vunpack.c.l.b16 %v5056
    %v6517 = vunpack.c.h.b16 %v5056
    %v6518 = vunpack.c.l.b16 %v5057
    %v6519 = vunpack.c.h.b16 %v5057
    %v6520 = vunpack.c.l.b16 %v5058
    %v6521 = vunpack.c.h.b16 %v5058
    %v6522 = vunpack.c.l.b16 %v5059
    %v6523 = vunpack.c.h.b16 %v5059
    %v6524 = vunpack.c.l.b16 %v5060
    %v6525 = vunpack.c.h.b16 %v5060
    %v6526 = vunpack.c.l.b16 %v5061
    %v6527 = vunpack.c.h.b16 %v5061
    %v6528 = vunpack.c.l.b16 %v5062
    %v6529 = vunpack.c.h.b16 %v5062
    %v6530 = vunpack.c.l.b16 %v5063
    %v6531 = vunpack.c.h.b16 %v5063
    %v6532 = vunpack.c.l.b16 %v5064
    %v6533 = vunpack.c.h.b16 %v5064
    %v6534 = vunpack.c.l.b16 %v5065
    %v6535 = vunpack.c.h.b16 %v5065
    %v6536 = vunpack.c.l.b16 %v5066
    %v6537 = vunpack.c.h.b16 %v5066
    %v6538 = vunpack.c.l.b16 %v5067
    %v6539 = vunpack.c.h.b16 %v5067
    %v6540 = vunpack.c.l.b16 %v5068
    %v6541 = vunpack.c.h.b16 %v5068
    %v6542 = vunpack.c.l.b16 %v5069
    %v6543 = vunpack.c.h.b16 %v5069
    %v6544 = vunpack.c.l.b16 %v5070
    %v6545 = vunpack.c.h.b16 %v5070
    %v6546 = vunpack.c.l.b16 %v5071
    %v6547 = vunpack.c.h.b16 %v5071
    %v6548 = vunpack.c.l.b16 %v5072
    %v6549 = vunpack.c.h.b16 %v5072
    %v6550 = vunpack.c.l.b16 %v5073
    %v6551 = vunpack.c.h.b16 %v5073
    %v6552 = vunpack.c.l.b16 %v5074
    %v6553 = vunpack.c.h.b16 %v5074
    %v6554 = vunpack.c.l.b16 %v5075
    %v6555 = vunpack.c.h.b16 %v5075
    %v6556 = vunpack.c.l.b16 %v5076
    %v6557 = vunpack.c.h.b16 %v5076
    %v6558 = vunpack.c.l.b16 %v5077
    %v6559 = vunpack.c.h.b16 %v5077
    %v6560 = vunpack.c.l.b16 %v5078
    %v6561 = vunpack.c.h.b16 %v5078
    %v6562 = vunpack.c.l.b16 %v5079
    %v6563 = vunpack.c.h.b16 %v5079
    %v6564 = vunpack.c.l.b16 %v5080
    %v6565 = vunpack.c.h.b16 %v5080
    %v6566 = vunpack.c.l.b16 %v5081
    %v6567 = vunpack.c.h.b16 %v5081
    %v6568 = vunpack.c.l.b16 %v5082
    %v6569 = vunpack.c.h.b16 %v5082
    %v6570 = vunpack.c.l.b16 %v5083
    %v6571 = vunpack.c.h.b16 %v5083
    %v6572 = vunpack.c.l.b16 %v5084
    %v6573 = vunpack.c.h.b16 %v5084
    %v6574 = vunpack.c.l.b16 %v5085
    %v6575 = vunpack.c.h.b16 %v5085
    %v6576 = vunpack.c.l.b16 %v5086
    %v6577 = vunpack.c.h.b16 %v5086
    %v6578 = vunpack.c.l.b16 %v5087
    %v6579 = vunpack.c.h.b16 %v5087
    %v6580 = vunpack.c.l.b16 %v5088
    %v6581 = vunpack.c.h.b16 %v5088
    %v6582 = vunpack.c.l.b16 %v5089
    %v6583 = vunpack.c.h.b16 %v5089
    %v6584 = vunpack.c.l.b16 %v5090
    %v6585 = vunpack.c.h.b16 %v5090
    %v6586 = vunpack.c.l.b16 %v5091
    %v6587 = vunpack.c.h.b16 %v5091
    %v6588 = vunpack.c.l.b16 %v5092
    %v6589 = vunpack.c.h.b16 %v5092
    %v6590 = vunpack.c.l.b16 %v5093
    %v6591 = vunpack.c.h.b16 %v5093
    %v6592 = vunpack.c.l.b16 %v5094
    %v6593 = vunpack.c.h.b16 %v5094
    %v6594 = vunpack.c.l.b16 %v5095
    %v6595 = vunpack.c.h.b16 %v5095
    %v6596 = vunpack.c.l.b16 %v5096
    %v6597 = vunpack.c.h.b16 %v5096
    %v6598 = vunpack.c.l.b16 %v5097
    %v6599 = vunpack.c.h.b16 %v5097
    %v6600 = vunpack.c.l.b16 %v5098
    %v6601 = vunpack.c.h.b16 %v5098
    %v6602 = vunpack.c.l.b16 %v5099
    %v6603 = vunpack.c.h.b16 %v5099
    %v6604 = vunpack.c.l.b16 %v5100
    %v6605 = vunpack.c.h.b16 %v5100
    %v6606 = vunpack.c.l.b16 %v5101
    %v6607 = vunpack.c.h.b16 %v5101
    %v6608 = vunpack.c.l.b16 %v5102
    %v6609 = vunpack.c.h.b16 %v5102
    %v6610 = vunpack.c.l.b16 %v5103
    %v6611 = vunpack.c.h.b16 %v5103
    %v6612 = vunpack.c.l.b16 %v5104
    %v6613 = vunpack.c.h.b16 %v5104
    %v6614 = vunpack.c.l.b16 %v5105
    %v6615 = vunpack.c.h.b16 %v5105
    %v6616 = vunpack.c.l.b16 %v5106
    %v6617 = vunpack.c.h.b16 %v5106
    %v6618 = vunpack.c.l.b16 %v5107
    %v6619 = vunpack.c.h.b16 %v5107
    %v6620 = vunpack.c.l.b16 %v5108
    %v6621 = vunpack.c.h.b16 %v5108
    %v6622 = vunpack.c.l.b16 %v5109
    %v6623 = vunpack.c.h.b16 %v5109
    %v6624 = vunpack.c.l.b16 %v5110
    %v6625 = vunpack.c.h.b16 %v5110
    %v6626 = vunpack.c.l.b16 %v5111
    %v6627 = vunpack.c.h.b16 %v5111
    %v6628 = vunpack.c.l.b16 %v5112
    %v6629 = vunpack.c.h.b16 %v5112
    %v6630 = vunpack.c.l.b16 %v5113
    %v6631 = vunpack.c.h.b16 %v5113
    %v6632 = vunpack.c.l.b16 %v5114
    %v6633 = vunpack.c.h.b16 %v5114
    %v6634 = vunpack.c.l.b16 %v5115
    %v6635 = vunpack.c.h.b16 %v5115
    %v6636 = vunpack.c.l.b16 %v5116
    %v6637 = vunpack.c.h.b16 %v5116
    %v6638 = vunpack.c.l.b16 %v5117
    %v6639 = vunpack.c.h.b16 %v5117
    %v6640 = vunpack.c.l.b16 %v5118
    %v6641 = vunpack.c.h.b16 %v5118
    %v6642 = vunpack.c.l.b16 %v5119
    %v6643 = vunpack.c.h.b16 %v5119
    %v6644 = vunpack.c.l.b16 %v5120
    %v6645 = vunpack.c.h.b16 %v5120
    %v6646 = vunpack.c.l.b16 %v5121
    %v6647 = vunpack.c.h.b16 %v5121
    %v6648 = vunpack.c.l.b16 %v5122
    %v6649 = vunpack.c.h.b16 %v5122
    %v6650 = vunpack.c.l.b16 %v5123
    %v6651 = vunpack.c.h.b16 %v5123
    %v6652 = vunpack.c.l.b16 %v5124
    %v6653 = vunpack.c.h.b16 %v5124
    %v6654 = vunpack.c.l.b16 %v5125
    %v6655 = vunpack.c.h.b16 %v5125
    %v6656 = vunpack.c.l.b16 %v5126
    %v6657 = vunpack.c.h.b16 %v5126
    %v6658 = vunpack.c.l.b16 %v5127
    %v6659 = vunpack.c.h.b16 %v5127
    %v6660 = vunpack.c.l.b16 %v5128
    %v6661 = vunpack.c.h.b16 %v5128
    %v6662 = vunpack.c.l.b16 %v5129
    %v6663 = vunpack.c.h.b16 %v5129
    %v6664 = vunpack.c.l.b16 %v5130
    %v6665 = vunpack.c.h.b16 %v5130
    %v6666 = vunpack.c.l.b16 %v5131
    %v6667 = vunpack.c.h.b16 %v5131
    %v6668 = vunpack.c.l.b16 %v5132
    %v6669 = vunpack.c.h.b16 %v5132
    %v6670 = vunpack.c.l.b16 %v5133
    %v6671 = vunpack.c.h.b16 %v5133
    %v6672 = vunpack.c.l.b16 %v5134
    %v6673 = vunpack.c.h.b16 %v5134
    %v6674 = vunpack.c.l.b16 %v5135
    %v6675 = vunpack.c.h.b16 %v5135
    %v6676 = vunpack.c.l.b16 %v5136
    %v6677 = vunpack.c.h.b16 %v5136
    %v6678 = vunpack.c.l.b16 %v5137
    %v6679 = vunpack.c.h.b16 %v5137
    %v6680 = vunpack.c.l.b16 %v5138
    %v6681 = vunpack.c.h.b16 %v5138
    %v6682 = vunpack.c.l.b16 %v5139
    %v6683 = vunpack.c.h.b16 %v5139
    %v6684 = vunpack.c.l.b16 %v5140
    %v6685 = vunpack.c.h.b16 %v5140
    %v6686 = vunpack.c.l.b16 %v5141
    %v6687 = vunpack.c.h.b16 %v5141
    %v6688 = vunpack.c.l.b16 %v5142
    %v6689 = vunpack.c.h.b16 %v5142
    %v6690 = vunpack.c.l.b16 %v5143
    %v6691 = vunpack.c.h.b16 %v5143
    %v6692 = vunpack.c.l.b16 %v5144
    %v6693 = vunpack.c.h.b16 %v5144
    %v6694 = vunpack.c.l.b16 %v5145
    %v6695 = vunpack.c.h.b16 %v5145
    %v6696 = vunpack.c.l.b16 %v5146
    %v6697 = vunpack.c.h.b16 %v5146
    %v6698 = vunpack.c.l.b16 %v5147
    %v6699 = vunpack.c.h.b16 %v5147
    %v6700 = vunpack.c.l.b16 %v5148
    %v6701 = vunpack.c.h.b16 %v5148
    %v6702 = vunpack.c.l.b16 %v5149
    %v6703 = vunpack.c.h.b16 %v5149
    %v6704 = vunpack.c.l.b16 %v5150
    %v6705 = vunpack.c.h.b16 %v5150
    %v6706 = vunpack.c.l.b16 %v5151
    %v6707 = vunpack.c.h.b16 %v5151
    %v6708 = vunpack.c.l.b16 %v5152
    %v6709 = vunpack.c.h.b16 %v5152
    %v6710 = vunpack.c.l.b16 %v5153
    %v6711 = vunpack.c.h.b16 %v5153
    %v6712 = vunpack.c.l.b16 %v5154
    %v6713 = vunpack.c.h.b16 %v5154
    %v6714 = vunpack.c.l.b16 %v5155
    %v6715 = vunpack.c.h.b16 %v5155
    %v6716 = vunpack.c.l.b16 %v5156
    %v6717 = vunpack.c.h.b16 %v5156
    %v6718 = vunpack.c.l.b16 %v5157
    %v6719 = vunpack.c.h.b16 %v5157
    %v6720 = vunpack.c.l.b16 %v5158
    %v6721 = vunpack.c.h.b16 %v5158
    %v6722 = vunpack.c.l.b16 %v5159
    %v6723 = vunpack.c.h.b16 %v5159
    %v6724 = vunpack.c.l.b16 %v5160
    %v6725 = vunpack.c.h.b16 %v5160
    %v6726 = vunpack.c.l.b16 %v5161
    %v6727 = vunpack.c.h.b16 %v5161
    %v6728 = vunpack.c.l.b16 %v5162
    %v6729 = vunpack.c.h.b16 %v5162
    %v6730 = vunpack.c.l.b16 %v5163
    %v6731 = vunpack.c.h.b16 %v5163
    %v6732 = vunpack.c.l.b16 %v5164
    %v6733 = vunpack.c.h.b16 %v5164
    %v6734 = vunpack.c.l.b16 %v5165
    %v6735 = vunpack.c.h.b16 %v5165
    %v6736 = vunpack.c.l.b16 %v5166
    %v6737 = vunpack.c.h.b16 %v5166
    %v6738 = vunpack.c.l.b16 %v5167
    %v6739 = vunpack.c.h.b16 %v5167
    %v6740 = vunpack.c.l.b16 %v5168
    %v6741 = vunpack.c.h.b16 %v5168
    %v6742 = vunpack.c.l.b16 %v5169
    %v6743 = vunpack.c.h.b16 %v5169
    %v6744 = vunpack.c.l.b16 %v5170
    %v6745 = vunpack.c.h.b16 %v5170
    %v6746 = vunpack.c.l.b16 %v5171
    %v6747 = vunpack.c.h.b16 %v5171
    %v6748 = vunpack.c.l.b16 %v5172
    %v6749 = vunpack.c.h.b16 %v5172
    %v6750 = vunpack.c.l.b16 %v5173
    %v6751 = vunpack.c.h.b16 %v5173
    %v6752 = vunpack.c.l.b16 %v5174
    %v6753 = vunpack.c.h.b16 %v5174
    %v6754 = vunpack.c.l.b16 %v5175
    %v6755 = vunpack.c.h.b16 %v5175
    %v6756 = vunpack.c.l.b16 %v5176
    %v6757 = vunpack.c.h.b16 %v5176
    %v6758 = vunpack.c.l.b16 %v5177
    %v6759 = vunpack.c.h.b16 %v5177
    %v6760 = vunpack.c.l.b16 %v5178
    %v6761 = vunpack.c.h.b16 %v5178
    %v6762 = vunpack.c.l.b16 %v5179
    %v6763 = vunpack.c.h.b16 %v5179
    %v6764 = vunpack.c.l.b16 %v5180
    %v6765 = vunpack.c.h.b16 %v5180
    %v6766 = vunpack.c.l.b16 %v5181
    %v6767 = vunpack.c.h.b16 %v5181
    %v6768 = vunpack.c.l.b16 %v5182
    %v6769 = vunpack.c.h.b16 %v5182
    %v6770 = vunpack.c.l.b16 %v5183
    %v6771 = vunpack.c.h.b16 %v5183
    %v6772 = vunpack.c.l.b16 %v5184
    %v6773 = vunpack.c.h.b16 %v5184
    %v6774 = vunpack.c.l.b16 %v5185
    %v6775 = vunpack.c.h.b16 %v5185
    %v6776 = vunpack.c.l.b16 %v5186
    %v6777 = vunpack.c.h.b16 %v5186
    %v6778 = vunpack.c.l.b16 %v5187
    %v6779 = vunpack.c.h.b16 %v5187
    %v6780 = vunpack.c.l.b16 %v5188
    %v6781 = vunpack.c.h.b16 %v5188
    %v6782 = vunpack.c.l.b16 %v5189
    %v6783 = vunpack.c.h.b16 %v5189
    %v6784 = vunpack.c.l.b16 %v5190
    %v6785 = vunpack.c.h.b16 %v5190
    %v6786 = vunpack.c.l.b16 %v5191
    %v6787 = vunpack.c.h.b16 %v5191
    %v6788 = vunpack.c.l.b16 %v5192
    %v6789 = vunpack.c.h.b16 %v5192
    %v6790 = vunpack.c.l.b16 %v5193
    %v6791 = vunpack.c.h.b16 %v5193
    %v6792 = vunpack.c.l.b16 %v5194
    %v6793 = vunpack.c.h.b16 %v5194
    %v6794 = vunpack.c.l.b16 %v5195
    %v6795 = vunpack.c.h.b16 %v5195
    %v6796 = vunpack.c.l.b16 %v5196
    %v6797 = vunpack.c.h.b16 %v5196
    %v6798 = vunpack.c.l.b16 %v5197
    %v6799 = vunpack.c.h.b16 %v5197
    %v6800 = vunpack.c.l.b16 %v5198
    %v6801 = vunpack.c.h.b16 %v5198
    %v6802 = vunpack.c.l.b16 %v5199
    %v6803 = vunpack.c.h.b16 %v5199
    %v6804 = vunpack.c.l.b16 %v5200
    %v6805 = vunpack.c.h.b16 %v5200
    %v6806 = vunpack.c.l.b16 %v5201
    %v6807 = vunpack.c.h.b16 %v5201
    %v6808 = vunpack.c.l.b16 %v5202
    %v6809 = vunpack.c.h.b16 %v5202
    %v6810 = vunpack.c.l.b16 %v5203
    %v6811 = vunpack.c.h.b16 %v5203
    %v6812 = vunpack.c.l.b16 %v5204
    %v6813 = vunpack.c.h.b16 %v5204
    %v6814 = vunpack.c.l.b16 %v5205
    %v6815 = vunpack.c.h.b16 %v5205
    %v6816 = vunpack.c.l.b16 %v5206
    %v6817 = vunpack.c.h.b16 %v5206
    %v6818 = vunpack.c.l.b16 %v5207
    %v6819 = vunpack.c.h.b16 %v5207
    %v6820 = vunpack.c.l.b16 %v5208
    %v6821 = vunpack.c.h.b16 %v5208
    %v6822 = vunpack.c.l.b16 %v5209
    %v6823 = vunpack.c.h.b16 %v5209
    %v6824 = vunpack.c.l.b16 %v5210
    %v6825 = vunpack.c.h.b16 %v5210
    %v6826 = vunpack.c.l.b16 %v5211
    %v6827 = vunpack.c.h.b16 %v5211
    %v6828 = vunpack.c.l.b16 %v5212
    %v6829 = vunpack.c.h.b16 %v5212
    %v6830 = vunpack.c.l.b16 %v5213
    %v6831 = vunpack.c.h.b16 %v5213
    %v6832 = vunpack.c.l.b16 %v5214
    %v6833 = vunpack.c.h.b16 %v5214
    %v6834 = vunpack.c.l.b16 %v5215
    %v6835 = vunpack.c.h.b16 %v5215
    %v6836 = vunpack.c.l.b16 %v5216
    %v6837 = vunpack.c.h.b16 %v5216
    %v6838 = vunpack.c.l.b16 %v5217
    %v6839 = vunpack.c.h.b16 %v5217
    %v6840 = vunpack.c.l.b16 %v5218
    %v6841 = vunpack.c.h.b16 %v5218
    %v6842 = vunpack.c.l.b16 %v5219
    %v6843 = vunpack.c.h.b16 %v5219
    %v6844 = vunpack.c.l.b16 %v5220
    %v6845 = vunpack.c.h.b16 %v5220
    %v6846 = vunpack.c.l.b16 %v5221
    %v6847 = vunpack.c.h.b16 %v5221
    %v6848 = vunpack.c.l.b16 %v5222
    %v6849 = vunpack.c.h.b16 %v5222
    %v6850 = vunpack.c.l.b16 %v5223
    %v6851 = vunpack.c.h.b16 %v5223
    %v6852 = vunpack.c.l.b16 %v5224
    %v6853 = vunpack.c.h.b16 %v5224
    %v6854 = vunpack.c.l.b16 %v5225
    %v6855 = vunpack.c.h.b16 %v5225
    %v6856 = vunpack.c.l.b16 %v5226
    %v6857 = vunpack.c.h.b16 %v5226
    %v6858 = vunpack.c.l.b16 %v5227
    %v6859 = vunpack.c.h.b16 %v5227
    %v6860 = vunpack.c.l.b16 %v5228
    %v6861 = vunpack.c.h.b16 %v5228
    %v6862 = vunpack.c.l.b16 %v5229
    %v6863 = vunpack.c.h.b16 %v5229
    %v6864 = vunpack.c.l.b16 %v5230
    %v6865 = vunpack.c.h.b16 %v5230
    %v6866 = vunpack.c.l.b16 %v5231
    %v6867 = vunpack.c.h.b16 %v5231
    %v6868 = vunpack.c.l.b16 %v5232
    %v6869 = vunpack.c.h.b16 %v5232
    %v6870 = vunpack.c.l.b16 %v5233
    %v6871 = vunpack.c.h.b16 %v5233
    %v6872 = vunpack.c.l.b16 %v5234
    %v6873 = vunpack.c.h.b16 %v5234
    %v6874 = vunpack.c.l.b16 %v5235
    %v6875 = vunpack.c.h.b16 %v5235
    %v6876 = vunpack.c.l.b16 %v5236
    %v6877 = vunpack.c.h.b16 %v5236
    %v6878 = vunpack.c.l.b16 %v5237
    %v6879 = vunpack.c.h.b16 %v5237
    %v6880 = vunpack.c.l.b16 %v5238
    %v6881 = vunpack.c.h.b16 %v5238
    %v6882 = vunpack.c.l.b16 %v5239
    %v6883 = vunpack.c.h.b16 %v5239
    %v6884 = vunpack.c.l.b16 %v5240
    %v6885 = vunpack.c.h.b16 %v5240
    %v6886 = vunpack.c.l.b16 %v5241
    %v6887 = vunpack.c.h.b16 %v5241
    %v6888 = vunpack.c.l.b16 %v5242
    %v6889 = vunpack.c.h.b16 %v5242
    %v6890 = vunpack.c.l.b16 %v5243
    %v6891 = vunpack.c.h.b16 %v5243
    %v6892 = vunpack.c.l.b16 %v5244
    %v6893 = vunpack.c.h.b16 %v5244
    %v6894 = vunpack.c.l.b16 %v5245
    %v6895 = vunpack.c.h.b16 %v5245
    %v6896 = vunpack.c.l.b16 %v5246
    %v6897 = vunpack.c.h.b16 %v5246
    %v6898 = vunpack.c.l.b16 %v5247
    %v6899 = vunpack.c.h.b16 %v5247
    %v6900 = vunpack.c.l.b16 %v5248
    %v6901 = vunpack.c.h.b16 %v5248
    %v6902 = vunpack.c.l.b16 %v5249
    %v6903 = vunpack.c.h.b16 %v5249
    %v6904 = vunpack.c.l.b16 %v5250
    %v6905 = vunpack.c.h.b16 %v5250
    %v6906 = vunpack.c.l.b16 %v5251
    %v6907 = vunpack.c.h.b16 %v5251
    %v6908 = vunpack.c.l.b16 %v5252
    %v6909 = vunpack.c.h.b16 %v5252
    %v6910 = vunpack.c.l.b16 %v5253
    %v6911 = vunpack.c.h.b16 %v5253
    %v6912 = vunpack.c.l.b16 %v5254
    %v6913 = vunpack.c.h.b16 %v5254
    %v6914 = vunpack.c.l.b16 %v5255
    %v6915 = vunpack.c.h.b16 %v5255
    %v6916 = vunpack.c.l.b16 %v5256
    %v6917 = vunpack.c.h.b16 %v5256
    %v6918 = vunpack.c.l.b16 %v5257
    %v6919 = vunpack.c.h.b16 %v5257
    %v6920 = vunpack.c.l.b16 %v5258
    %v6921 = vunpack.c.h.b16 %v5258
    %v6922 = vunpack.c.l.b16 %v5259
    %v6923 = vunpack.c.h.b16 %v5259
    %v6924 = vunpack.c.l.b16 %v5260
    %v6925 = vunpack.c.h.b16 %v5260
    %v6926 = vunpack.c.l.b16 %v5261
    %v6927 = vunpack.c.h.b16 %v5261
    %v6928 = vunpack.c.l.b16 %v5262
    %v6929 = vunpack.c.h.b16 %v5262
    %v6930 = vunpack.c.l.b16 %v5263
    %v6931 = vunpack.c.h.b16 %v5263
    %v6932 = vunpack.c.l.b16 %v5264
    %v6933 = vunpack.c.h.b16 %v5264
    %v6934 = vunpack.c.l.b16 %v5265
    %v6935 = vunpack.c.h.b16 %v5265
    %v6936 = vunpack.c.l.b16 %v5266
    %v6937 = vunpack.c.h.b16 %v5266
    %v6938 = vunpack.c.l.b16 %v5267
    %v6939 = vunpack.c.h.b16 %v5267
    %v6940 = vunpack.c.l.b16 %v5268
    %v6941 = vunpack.c.h.b16 %v5268
    %v6942 = vunpack.c.l.b16 %v5269
    %v6943 = vunpack.c.h.b16 %v5269
    %v6944 = vunpack.c.l.b16 %v5270
    %v6945 = vunpack.c.h.b16 %v5270
    %v6946 = vunpack.c.l.b16 %v5271
    %v6947 = vunpack.c.h.b16 %v5271
    %v6948 = vunpack.c.l.b16 %v5272
    %v6949 = vunpack.c.h.b16 %v5272
    %v6950 = vunpack.c.l.b16 %v5273
    %v6951 = vunpack.c.h.b16 %v5273
    %v6952 = vunpack.c.l.b16 %v5274
    %v6953 = vunpack.c.h.b16 %v5274
    %v6954 = vunpack.c.l.b16 %v5275
    %v6955 = vunpack.c.h.b16 %v5275
    %v6956 = vunpack.c.l.b16 %v5276
    %v6957 = vunpack.c.h.b16 %v5276
    %v6958 = vunpack.c.l.b16 %v5277
    %v6959 = vunpack.c.h.b16 %v5277
    %v6960 = vunpack.c.l.b16 %v5278
    %v6961 = vunpack.c.h.b16 %v5278
    %v6962 = vunpack.c.l.b16 %v5279
    %v6963 = vunpack.c.h.b16 %v5279
    %v6964 = vunpack.c.l.b16 %v5280
    %v6965 = vunpack.c.h.b16 %v5280
    %v6966 = vunpack.c.l.b16 %v5281
    %v6967 = vunpack.c.h.b16 %v5281
    %v6968 = vunpack.c.l.b16 %v5282
    %v6969 = vunpack.c.h.b16 %v5282
    %v6970 = vunpack.c.l.b16 %v5283
    %v6971 = vunpack.c.h.b16 %v5283
    %v6972 = vunpack.c.l.b16 %v5284
    %v6973 = vunpack.c.h.b16 %v5284
    %v6974 = vunpack.c.l.b16 %v5285
    %v6975 = vunpack.c.h.b16 %v5285
    %v6976 = vunpack.c.l.b16 %v5286
    %v6977 = vunpack.c.h.b16 %v5286
    %v6978 = vunpack.c.l.b16 %v5287
    %v6979 = vunpack.c.h.b16 %v5287
    %v6980 = vunpack.c.l.b16 %v5288
    %v6981 = vunpack.c.h.b16 %v5288
    %v6982 = vunpack.c.l.b16 %v5289
    %v6983 = vunpack.c.h.b16 %v5289
    %v6984 = vunpack.c.l.b16 %v5290
    %v6985 = vunpack.c.h.b16 %v5290
    %v6986 = vunpack.c.l.b16 %v5291
    %v6987 = vunpack.c.h.b16 %v5291
    %v6988 = vunpack.c.l.b16 %v5292
    %v6989 = vunpack.c.h.b16 %v5292
    %v6990 = vunpack.c.l.b16 %v5293
    %v6991 = vunpack.c.h.b16 %v5293
    %v6992 = vunpack.c.l.b16 %v5294
    %v6993 = vunpack.c.h.b16 %v5294
    %v6994 = vunpack.c.l.b16 %v5295
    %v6995 = vunpack.c.h.b16 %v5295
    %v6996 = vunpack.c.l.b16 %v5296
    %v6997 = vunpack.c.h.b16 %v5296
    %v6998 = vunpack.c.l.b16 %v5297
    %v6999 = vunpack.c.h.b16 %v5297
    %v7000 = vunpack.c.l.b16 %v5298
    %v7001 = vunpack.c.h.b16 %v5298
    %v7002 = vunpack.c.l.b16 %v5299
    %v7003 = vunpack.c.h.b16 %v5299
    %v7004 = vunpack.c.l.b16 %v5300
    %v7005 = vunpack.c.h.b16 %v5300
    %v7006 = vunpack.c.l.b16 %v5301
    %v7007 = vunpack.c.h.b16 %v5301
    %v7008 = vunpack.c.l.b16 %v5302
    %v7009 = vunpack.c.h.b16 %v5302
    %v7010 = vunpack.c.l.b16 %v5303
    %v7011 = vunpack.c.h.b16 %v5303
    %v7012 = vunpack.c.l.b16 %v5304
    %v7013 = vunpack.c.h.b16 %v5304
    %v7014 = vunpack.c.l.b16 %v5305
    %v7015 = vunpack.c.h.b16 %v5305
    %v7016 = vunpack.c.l.b16 %v5306
    %v7017 = vunpack.c.h.b16 %v5306
    %v7018 = vunpack.c.l.b16 %v5307
    %v7019 = vunpack.c.h.b16 %v5307
    %v7020 = vunpack.c.l.b16 %v5308
    %v7021 = vunpack.c.h.b16 %v5308
    %v7022 = vunpack.c.l.b16 %v5309
    %v7023 = vunpack.c.h.b16 %v5309
    %v7024 = vunpack.c.l.b16 %v5310
    %v7025 = vunpack.c.h.b16 %v5310
    %v7026 = vunpack.c.l.b16 %v5311
    %v7027 = vunpack.c.h.b16 %v5311
    %v7028 = vunpack.c.l.b16 %v5312
    %v7029 = vunpack.c.h.b16 %v5312
    %v7030 = vunpack.c.l.b16 %v5313
    %v7031 = vunpack.c.h.b16 %v5313
    %v7032 = vunpack.c.l.b16 %v5314
    %v7033 = vunpack.c.h.b16 %v5314
    %v7034 = vunpack.c.l.b16 %v5315
    %v7035 = vunpack.c.h.b16 %v5315
    %v7036 = vunpack.c.l.b16 %v5316
    %v7037 = vunpack.c.h.b16 %v5316
    %v7038 = vunpack.c.l.b16 %v5317
    %v7039 = vunpack.c.h.b16 %v5317
    %v7040 = vunpack.c.l.b16 %v5318
    %v7041 = vunpack.c.h.b16 %v5318
    %v7042 = vunpack.c.l.b16 %v5319
    %v7043 = vunpack.c.h.b16 %v5319
    %v7044 = vunpack.c.l.b16 %v5320
    %v7045 = vunpack.c.h.b16 %v5320
    %v7046 = vunpack.c.l.b16 %v5321
    %v7047 = vunpack.c.h.b16 %v5321
    %v7048 = vunpack.c.l.b16 %v5322
    %v7049 = vunpack.c.h.b16 %v5322
    %v7050 = vunpack.c.l.b16 %v5323
    %v7051 = vunpack.c.h.b16 %v5323
    %v7052 = vunpack.c.l.b16 %v5324
    %v7053 = vunpack.c.h.b16 %v5324
    %v7054 = vunpack.c.l.b16 %v5325
    %v7055 = vunpack.c.h.b16 %v5325
    %v7056 = vunpack.c.l.b16 %v5326
    %v7057 = vunpack.c.h.b16 %v5326
    %v7058 = vunpack.c.l.b16 %v5327
    %v7059 = vunpack.c.h.b16 %v5327
    %v7060 = vunpack.c.l.b16 %v5328
    %v7061 = vunpack.c.h.b16 %v5328
    %v7062 = vunpack.c.l.b16 %v5329
    %v7063 = vunpack.c.h.b16 %v5329
    %v7064 = vunpack.c.l.b16 %v5330
    %v7065 = vunpack.c.h.b16 %v5330
    %v7066 = vunpack.c.l.b16 %v5331
    %v7067 = vunpack.c.h.b16 %v5331
    %v7068 = vunpack.c.l.b16 %v5332
    %v7069 = vunpack.c.h.b16 %v5332
    %v7070 = vunpack.c.l.b16 %v5333
    %v7071 = vunpack.c.h.b16 %v5333
    %v7072 = vunpack.c.l.b16 %v5334
    %v7073 = vunpack.c.h.b16 %v5334
    %v7074 = vunpack.c.l.b16 %v5335
    %v7075 = vunpack.c.h.b16 %v5335
    %v7076 = vunpack.c.l.b16 %v5336
    %v7077 = vunpack.c.h.b16 %v5336
    %v7078 = vunpack.c.l.b16 %v5337
    %v7079 = vunpack.c.h.b16 %v5337
    %v7080 = vunpack.c.l.b16 %v5338
    %v7081 = vunpack.c.h.b16 %v5338
    %v7082 = vunpack.c.l.b16 %v5339
    %v7083 = vunpack.c.h.b16 %v5339
    %v7084 = vunpack.c.l.b16 %v5340
    %v7085 = vunpack.c.h.b16 %v5340
    %v7086 = vunpack.c.l.b16 %v5341
    %v7087 = vunpack.c.h.b16 %v5341
    %v7088 = vunpack.c.l.b16 %v5342
    %v7089 = vunpack.c.h.b16 %v5342
    %v7090 = vunpack.c.l.b16 %v5343
    %v7091 = vunpack.c.h.b16 %v5343
    %v7092 = vunpack.c.l.b16 %v5344
    %v7093 = vunpack.c.h.b16 %v5344
    %v7094 = vunpack.c.l.b16 %v5345
    %v7095 = vunpack.c.h.b16 %v5345
    %v7096 = vunpack.c.l.b16 %v5346
    %v7097 = vunpack.c.h.b16 %v5346
    %v7098 = vunpack.c.l.b16 %v5347
    %v7099 = vunpack.c.h.b16 %v5347
    %v7100 = vunpack.c.l.b16 %v5348
    %v7101 = vunpack.c.h.b16 %v5348
    %v7102 = vunpack.c.l.b16 %v5349
    %v7103 = vunpack.c.h.b16 %v5349
    %v7104 = vunpack.c.l.b16 %v5350
    %v7105 = vunpack.c.h.b16 %v5350
    %v7106 = vunpack.c.l.b16 %v5351
    %v7107 = vunpack.c.h.b16 %v5351
    %v7108 = vunpack.c.l.b16 %v5352
    %v7109 = vunpack.c.h.b16 %v5352
    %v7110 = vunpack.c.l.b16 %v5353
    %v7111 = vunpack.c.h.b16 %v5353
    %v7112 = vunpack.c.l.b16 %v5354
    %v7113 = vunpack.c.h.b16 %v5354
    %v7114 = vunpack.c.l.b16 %v5355
    %v7115 = vunpack.c.h.b16 %v5355
    %v7116 = vunpack.c.l.b16 %v5356
    %v7117 = vunpack.c.h.b16 %v5356
    %v7118 = vunpack.c.l.b16 %v5357
    %v7119 = vunpack.c.h.b16 %v5357
    %v7120 = vunpack.c.l.b16 %v5358
    %v7121 = vunpack.c.h.b16 %v5358
    %v7122 = vunpack.c.l.b16 %v5359
    %v7123 = vunpack.c.h.b16 %v5359
    %v7124 = vunpack.c.l.b16 %v5360
    %v7125 = vunpack.c.h.b16 %v5360
    %v7126 = vunpack.c.l.b16 %v5361
    %v7127 = vunpack.c.h.b16 %v5361
    %v7128 = vpack.c.b16 %v6112, %v6104
    %v7129 = vpack.c.b16 %v6113, %v6105
    %v7130 = vpack.c.b16 %v6114, %v6106
    %v7131 = vpack.c.b16 %v6115, %v6107
    %v7132 = vpack.c.b16 %v6116, %v6108
    %v7133 = vpack.c.b16 %v6117, %v6109
    %v7134 = vpack.c.b16 %v6118, %v6110
    %v7135 = vpack.c.b16 %v6119, %v6111
    %v7136 = vpack.c.b16 %v6128, %v6120
    %v7137 = vpack.c.b16 %v6129, %v6121
    %v7138 = vpack.c.b16 %v6130, %v6122
    %v7139 = vpack.c.b16 %v6131, %v6123
    %v7140 = vpack.c.b16 %v6132, %v6124
    %v7141 = vpack.c.b16 %v6133, %v6125
    %v7142 = vpack.c.b16 %v6134, %v6126
    %v7143 = vpack.c.b16 %v6135, %v6127
    %v7144 = vpack.c.b16 %v6144, %v6136
    %v7145 = vpack.c.b16 %v6145, %v6137
    %v7146 = vpack.c.b16 %v6146, %v6138
    %v7147 = vpack.c.b16 %v6147, %v6139
    %v7148 = vpack.c.b16 %v6148, %v6140
    %v7149 = vpack.c.b16 %v6149, %v6141
    %v7150 = vpack.c.b16 %v6150, %v6142
    %v7151 = vpack.c.b16 %v6151, %v6143
    %v7152 = vpack.c.b16 %v6160, %v6152
    %v7153 = vpack.c.b16 %v6161, %v6153
    %v7154 = vpack.c.b16 %v6162, %v6154
    %v7155 = vpack.c.b16 %v6163, %v6155
    %v7156 = vpack.c.b16 %v6164, %v6156
    %v7157 = vpack.c.b16 %v6165, %v6157
    %v7158 = vpack.c.b16 %v6166, %v6158
    %v7159 = vpack.c.b16 %v6167, %v6159
    %v7160 = vpack.c.b16 %v6176, %v6168
    %v7161 = vpack.c.b16 %v6177, %v6169
    %v7162 = vpack.c.b16 %v6178, %v6170
    %v7163 = vpack.c.b16 %v6179, %v6171
    %v7164 = vpack.c.b16 %v6180, %v6172
    %v7165 = vpack.c.b16 %v6181, %v6173
    %v7166 = vpack.c.b16 %v6182, %v6174
    %v7167 = vpack.c.b16 %v6183, %v6175
    %v7168 = vpack.c.b16 %v6192, %v6184
    %v7169 = vpack.c.b16 %v6193, %v6185
    %v7170 = vpack.c.b16 %v6194, %v6186
    %v7171 = vpack.c.b16 %v6195, %v6187
    %v7172 = vpack.c.b16 %v6196, %v6188
    %v7173 = vpack.c.b16 %v6197, %v6189
    %v7174 = vpack.c.b16 %v6198, %v6190
    %v7175 = vpack.c.b16 %v6199, %v6191
    %v7176 = vpack.c.b16 %v6208, %v6200
    %v7177 = vpack.c.b16 %v6209, %v6201
    %v7178 = vpack.c.b16 %v6210, %v6202
    %v7179 = vpack.c.b16 %v6211, %v6203
    %v7180 = vpack.c.b16 %v6212, %v6204
    %v7181 = vpack.c.b16 %v6213, %v6205
    %v7182 = vpack.c.b16 %v6214, %v6206
    %v7183 = vpack.c.b16 %v6215, %v6207
    %v7184 = vpack.c.b16 %v6224, %v6216
    %v7185 = vpack.c.b16 %v6225, %v6217
    %v7186 = vpack.c.b16 %v6226, %v6218
    %v7187 = vpack.c.b16 %v6227, %v6219
    %v7188 = vpack.c.b16 %v6228, %v6220
    %v7189 = vpack.c.b16 %v6229, %v6221
    %v7190 = vpack.c.b16 %v6230, %v6222
    %v7191 = vpack.c.b16 %v6231, %v6223
    %v7192 = vpack.c.b16 %v6240, %v6232
    %v7193 = vpack.c.b16 %v6241, %v6233
    %v7194 = vpack.c.b16 %v6242, %v6234
    %v7195 = vpack.c.b16 %v6243, %v6235
    %v7196 = vpack.c.b16 %v6244, %v6236
    %v7197 = vpack.c.b16 %v6245, %v6237
    %v7198 = vpack.c.b16 %v6246, %v6238
    %v7199 = vpack.c.b16 %v6247, %v6239
    %v7200 = vpack.c.b16 %v6256, %v6248
    %v7201 = vpack.c.b16 %v6257, %v6249
    %v7202 = vpack.c.b16 %v6258, %v6250
    %v7203 = vpack.c.b16 %v6259, %v6251
    %v7204 = vpack.c.b16 %v6260, %v6252
    %v7205 = vpack.c.b16 %v6261, %v6253
    %v7206 = vpack.c.b16 %v6262, %v6254
    %v7207 = vpack.c.b16 %v6263, %v6255
    %v7208 = vpack.c.b16 %v6272, %v6264
    %v7209 = vpack.c.b16 %v6273, %v6265
    %v7210 = vpack.c.b16 %v6274, %v6266
    %v7211 = vpack.c.b16 %v6275, %v6267
    %v7212 = vpack.c.b16 %v6276, %v6268
    %v7213 = vpack.c.b16 %v6277, %v6269
    %v7214 = vpack.c.b16 %v6278, %v6270
    %v7215 = vpack.c.b16 %v6279, %v6271
    %v7216 = vpack.c.b16 %v6288, %v6280
    %v7217 = vpack.c.b16 %v6289, %v6281
    %v7218 = vpack.c.b16 %v6290, %v6282
    %v7219 = vpack.c.b16 %v6291, %v6283
    %v7220 = vpack.c.b16 %v6292, %v6284
    %v7221 = vpack.c.b16 %v6293, %v6285
    %v7222 = vpack.c.b16 %v6294, %v6286
    %v7223 = vpack.c.b16 %v6295, %v6287
    %v7224 = vpack.c.b16 %v6304, %v6296
    %v7225 = vpack.c.b16 %v6305, %v6297
    %v7226 = vpack.c.b16 %v6306, %v6298
    %v7227 = vpack.c.b16 %v6307, %v6299
    %v7228 = vpack.c.b16 %v6308, %v6300
    %v7229 = vpack.c.b16 %v6309, %v6301
    %v7230 = vpack.c.b16 %v6310, %v6302
    %v7231 = vpack.c.b16 %v6311, %v6303
    %v7232 = vpack.c.b16 %v6320, %v6312
    %v7233 = vpack.c.b16 %v6321, %v6313
    %v7234 = vpack.c.b16 %v6322, %v6314
    %v7235 = vpack.c.b16 %v6323, %v6315
    %v7236 = vpack.c.b16 %v6324, %v6316
    %v7237 = vpack.c.b16 %v6325, %v6317
    %v7238 = vpack.c.b16 %v6326, %v6318
    %v7239 = vpack.c.b16 %v6327, %v6319
    %v7240 = vpack.c.b16 %v6336, %v6328
    %v7241 = vpack.c.b16 %v6337, %v6329
    %v7242 = vpack.c.b16 %v6338, %v6330
    %v7243 = vpack.c.b16 %v6339, %v6331
    %v7244 = vpack.c.b16 %v6340, %v6332
    %v7245 = vpack.c.b16 %v6341, %v6333
    %v7246 = vpack.c.b16 %v6342, %v6334
    %v7247 = vpack.c.b16 %v6343, %v6335
    %v7248 = vpack.c.b16 %v6352, %v6344
    %v7249 = vpack.c.b16 %v6353, %v6345
    %v7250 = vpack.c.b16 %v6354, %v6346
    %v7251 = vpack.c.b16 %v6355, %v6347
    %v7252 = vpack.c.b16 %v6356, %v6348
    %v7253 = vpack.c.b16 %v6357, %v6349
    %v7254 = vpack.c.b16 %v6358, %v6350
    %v7255 = vpack.c.b16 %v6359, %v6351
    %v7256 = vpack.c.b16 %v6368, %v6360
    %v7257 = vpack.c.b16 %v6369, %v6361
    %v7258 = vpack.c.b16 %v6370, %v6362
    %v7259 = vpack.c.b16 %v6371, %v6363
    %v7260 = vpack.c.b16 %v6372, %v6364
    %v7261 = vpack.c.b16 %v6373, %v6365
    %v7262 = vpack.c.b16 %v6374, %v6366
    %v7263 = vpack.c.b16 %v6375, %v6367
    %v7264 = vpack.c.b16 %v6384, %v6376
    %v7265 = vpack.c.b16 %v6385, %v6377
    %v7266 = vpack.c.b16 %v6386, %v6378
    %v7267 = vpack.c.b16 %v6387, %v6379
    %v7268 = vpack.c.b16 %v6388, %v6380
    %v7269 = vpack.c.b16 %v6389, %v6381
    %v7270 = vpack.c.b16 %v6390, %v6382
    %v7271 = vpack.c.b16 %v6391, %v6383
    %v7272 = vpack.c.b16 %v6400, %v6392
    %v7273 = vpack.c.b16 %v6401, %v6393
    %v7274 = vpack.c.b16 %v6402, %v6394
    %v7275 = vpack.c.b16 %v6403, %v6395
    %v7276 = vpack.c.b16 %v6404, %v6396
    %v7277 = vpack.c.b16 %v6405, %v6397
    %v7278 = vpack.c.b16 %v6406, %v6398
    %v7279 = vpack.c.b16 %v6407, %v6399
    %v7280 = vpack.c.b16 %v6416, %v6408
    %v7281 = vpack.c.b16 %v6417, %v6409
    %v7282 = vpack.c.b16 %v6418, %v6410
    %v7283 = vpack.c.b16 %v6419, %v6411
    %v7284 = vpack.c.b16 %v6420, %v6412
    %v7285 = vpack.c.b16 %v6421, %v6413
    %v7286 = vpack.c.b16 %v6422, %v6414
    %v7287 = vpack.c.b16 %v6423, %v6415
    %v7288 = vpack.c.b16 %v6432, %v6424
    %v7289 = vpack.c.b16 %v6433, %v6425
    %v7290 = vpack.c.b16 %v6434, %v6426
    %v7291 = vpack.c.b16 %v6435, %v6427
    %v7292 = vpack.c.b16 %v6436, %v6428
    %v7293 = vpack.c.b16 %v6437, %v6429
    %v7294 = vpack.c.b16 %v6438, %v6430
    %v7295 = vpack.c.b16 %v6439, %v6431
    %v7296 = vpack.c.b16 %v6448, %v6440
    %v7297 = vpack.c.b16 %v6449, %v6441
    %v7298 = vpack.c.b16 %v6450, %v6442
    %v7299 = vpack.c.b16 %v6451, %v6443
    %v7300 = vpack.c.b16 %v6452, %v6444
    %v7301 = vpack.c.b16 %v6453, %v6445
    %v7302 = vpack.c.b16 %v6454, %v6446
    %v7303 = vpack.c.b16 %v6455, %v6447
    %v7304 = vpack.c.b16 %v6464, %v6456
    %v7305 = vpack.c.b16 %v6465, %v6457
    %v7306 = vpack.c.b16 %v6466, %v6458
    %v7307 = vpack.c.b16 %v6467, %v6459
    %v7308 = vpack.c.b16 %v6468, %v6460
    %v7309 = vpack.c.b16 %v6469, %v6461
    %v7310 = vpack.c.b16 %v6470, %v6462
    %v7311 = vpack.c.b16 %v6471, %v6463
    %v7312 = vpack.c.b16 %v6480, %v6472
    %v7313 = vpack.c.b16 %v6481, %v6473
    %v7314 = vpack.c.b16 %v6482, %v6474
    %v7315 = vpack.c.b16 %v6483, %v6475
    %v7316 = vpack.c.b16 %v6484, %v6476
    %v7317 = vpack.c.b16 %v6485, %v6477
    %v7318 = vpack.c.b16 %v6486, %v6478
    %v7319 = vpack.c.b16 %v6487, %v6479
    %v7320 = vpack.c.b16 %v6496, %v6488
    %v7321 = vpack.c.b16 %v6497, %v6489
    %v7322 = vpack.c.b16 %v6498, %v6490
    %v7323 = vpack.c.b16 %v6499, %v6491
    %v7324 = vpack.c.b16 %v6500, %v6492
    %v7325 = vpack.c.b16 %v6501, %v6493
    %v7326 = vpack.c.b16 %v6502, %v6494
    %v7327 = vpack.c.b16 %v6503, %v6495
    %v7328 = vpack.c.b16 %v6512, %v6504
    %v7329 = vpack.c.b16 %v6513, %v6505
    %v7330 = vpack.c.b16 %v6514, %v6506
    %v7331 = vpack.c.b16 %v6515, %v6507
    %v7332 = vpack.c.b16 %v6516, %v6508
    %v7333 = vpack.c.b16 %v6517, %v6509
    %v7334 = vpack.c.b16 %v6518, %v6510
    %v7335 = vpack.c.b16 %v6519, %v6511
    %v7336 = vpack.c.b16 %v6528, %v6520
    %v7337 = vpack.c.b16 %v6529, %v6521
    %v7338 = vpack.c.b16 %v6530, %v6522
    %v7339 = vpack.c.b16 %v6531, %v6523
    %v7340 = vpack.c.b16 %v6532, %v6524
    %v7341 = vpack.c.b16 %v6533, %v6525
    %v7342 = vpack.c.b16 %v6534, %v6526
    %v7343 = vpack.c.b16 %v6535, %v6527
    %v7344 = vpack.c.b16 %v6544, %v6536
    %v7345 = vpack.c.b16 %v6545, %v6537
    %v7346 = vpack.c.b16 %v6546, %v6538
    %v7347 = vpack.c.b16 %v6547, %v6539
    %v7348 = vpack.c.b16 %v6548, %v6540
    %v7349 = vpack.c.b16 %v6549, %v6541
    %v7350 = vpack.c.b16 %v6550, %v6542
    %v7351 = vpack.c.b16 %v6551, %v6543
    %v7352 = vpack.c.b16 %v6560, %v6552
    %v7353 = vpack.c.b16 %v6561, %v6553
    %v7354 = vpack.c.b16 %v6562, %v6554
    %v7355 = vpack.c.b16 %v6563, %v6555
    %v7356 = vpack.c.b16 %v6564, %v6556
    %v7357 = vpack.c.b16 %v6565, %v6557
    %v7358 = vpack.c.b16 %v6566, %v6558
    %v7359 = vpack.c.b16 %v6567, %v6559
    %v7360 = vpack.c.b16 %v6576, %v6568
    %v7361 = vpack.c.b16 %v6577, %v6569
    %v7362 = vpack.c.b16 %v6578, %v6570
    %v7363 = vpack.c.b16 %v6579, %v6571
    %v7364 = vpack.c.b16 %v6580, %v6572
    %v7365 = vpack.c.b16 %v6581, %v6573
    %v7366 = vpack.c.b16 %v6582, %v6574
    %v7367 = vpack.c.b16 %v6583, %v6575
    %v7368 = vpack.c.b16 %v6592, %v6584
    %v7369 = vpack.c.b16 %v6593, %v6585
    %v7370 = vpack.c.b16 %v6594, %v6586
    %v7371 = vpack.c.b16 %v6595, %v6587
    %v7372 = vpack.c.b16 %v6596, %v6588
    %v7373 = vpack.c.b16 %v6597, %v6589
    %v7374 = vpack.c.b16 %v6598, %v6590
    %v7375 = vpack.c.b16 %v6599, %v6591
    %v7376 = vpack.c.b16 %v6608, %v6600
    %v7377 = vpack.c.b16 %v6609, %v6601
    %v7378 = vpack.c.b16 %v6610, %v6602
    %v7379 = vpack.c.b16 %v6611, %v6603
    %v7380 = vpack.c.b16 %v6612, %v6604
    %v7381 = vpack.c.b16 %v6613, %v6605
    %v7382 = vpack.c.b16 %v6614, %v6606
    %v7383 = vpack.c.b16 %v6615, %v6607
    %v7384 = vpack.c.b16 %v6624, %v6616
    %v7385 = vpack.c.b16 %v6625, %v6617
    %v7386 = vpack.c.b16 %v6626, %v6618
    %v7387 = vpack.c.b16 %v6627, %v6619
    %v7388 = vpack.c.b16 %v6628, %v6620
    %v7389 = vpack.c.b16 %v6629, %v6621
    %v7390 = vpack.c.b16 %v6630, %v6622
    %v7391 = vpack.c.b16 %v6631, %v6623
    %v7392 = vpack.c.b16 %v6640, %v6632
    %v7393 = vpack.c.b16 %v6641, %v6633
    %v7394 = vpack.c.b16 %v6642, %v6634
    %v7395 = vpack.c.b16 %v6643, %v6635
    %v7396 = vpack.c.b16 %v6644, %v6636
    %v7397 = vpack.c.b16 %v6645, %v6637
    %v7398 = vpack.c.b16 %v6646, %v6638
    %v7399 = vpack.c.b16 %v6647, %v6639
    %v7400 = vpack.c.b16 %v6656, %v6648
    %v7401 = vpack.c.b16 %v6657, %v6649
    %v7402 = vpack.c.b16 %v6658, %v6650
    %v7403 = vpack.c.b16 %v6659, %v6651
    %v7404 = vpack.c.b16 %v6660, %v6652
    %v7405 = vpack.c.b16 %v6661, %v6653
    %v7406 = vpack.c.b16 %v6662, %v6654
    %v7407 = vpack.c.b16 %v6663, %v6655
    %v7408 = vpack.c.b16 %v6672, %v6664
    %v7409 = vpack.c.b16 %v6673, %v6665
    %v7410 = vpack.c.b16 %v6674, %v6666
    %v7411 = vpack.c.b16 %v6675, %v6667
    %v7412 = vpack.c.b16 %v6676, %v6668
    %v7413 = vpack.c.b16 %v6677, %v6669
    %v7414 = vpack.c.b16 %v6678, %v6670
    %v7415 = vpack.c.b16 %v6679, %v6671
    %v7416 = vpack.c.b16 %v6688, %v6680
    %v7417 = vpack.c.b16 %v6689, %v6681
    %v7418 = vpack.c.b16 %v6690, %v6682
    %v7419 = vpack.c.b16 %v6691, %v6683
    %v7420 = vpack.c.b16 %v6692, %v6684
    %v7421 = vpack.c.b16 %v6693, %v6685
    %v7422 = vpack.c.b16 %v6694, %v6686
    %v7423 = vpack.c.b16 %v6695, %v6687
    %v7424 = vpack.c.b16 %v6704, %v6696
    %v7425 = vpack.c.b16 %v6705, %v6697
    %v7426 = vpack.c.b16 %v6706, %v6698
    %v7427 = vpack.c.b16 %v6707, %v6699
    %v7428 = vpack.c.b16 %v6708, %v6700
    %v7429 = vpack.c.b16 %v6709, %v6701
    %v7430 = vpack.c.b16 %v6710, %v6702
    %v7431 = vpack.c.b16 %v6711, %v6703
    %v7432 = vpack.c.b16 %v6720, %v6712
    %v7433 = vpack.c.b16 %v6721, %v6713
    %v7434 = vpack.c.b16 %v6722, %v6714
    %v7435 = vpack.c.b16 %v6723, %v6715
    %v7436 = vpack.c.b16 %v6724, %v6716
    %v7437 = vpack.c.b16 %v6725, %v6717
    %v7438 = vpack.c.b16 %v6726, %v6718
    %v7439 = vpack.c.b16 %v6727, %v6719
    %v7440 = vpack.c.b16 %v6736, %v6728
    %v7441 = vpack.c.b16 %v6737, %v6729
    %v7442 = vpack.c.b16 %v6738, %v6730
    %v7443 = vpack.c.b16 %v6739, %v6731
    %v7444 = vpack.c.b16 %v6740, %v6732
    %v7445 = vpack.c.b16 %v6741, %v6733
    %v7446 = vpack.c.b16 %v6742, %v6734
    %v7447 = vpack.c.b16 %v6743, %v6735
    %v7448 = vpack.c.b16 %v6752, %v6744
    %v7449 = vpack.c.b16 %v6753, %v6745
    %v7450 = vpack.c.b16 %v6754, %v6746
    %v7451 = vpack.c.b16 %v6755, %v6747
    %v7452 = vpack.c.b16 %v6756, %v6748
    %v7453 = vpack.c.b16 %v6757, %v6749
    %v7454 = vpack.c.b16 %v6758, %v6750
    %v7455 = vpack.c.b16 %v6759, %v6751
    %v7456 = vpack.c.b16 %v6768, %v6760
    %v7457 = vpack.c.b16 %v6769, %v6761
    %v7458 = vpack.c.b16 %v6770, %v6762
    %v7459 = vpack.c.b16 %v6771, %v6763
    %v7460 = vpack.c.b16 %v6772, %v6764
    %v7461 = vpack.c.b16 %v6773, %v6765
    %v7462 = vpack.c.b16 %v6774, %v6766
    %v7463 = vpack.c.b16 %v6775, %v6767
    %v7464 = vpack.c.b16 %v6784, %v6776
    %v7465 = vpack.c.b16 %v6785, %v6777
    %v7466 = vpack.c.b16 %v6786, %v6778
    %v7467 = vpack.c.b16 %v6787, %v6779
    %v7468 = vpack.c.b16 %v6788, %v6780
    %v7469 = vpack.c.b16 %v6789, %v6781
    %v7470 = vpack.c.b16 %v6790, %v6782
    %v7471 = vpack.c.b16 %v6791, %v6783
    %v7472 = vpack.c.b16 %v6800, %v6792
    %v7473 = vpack.c.b16 %v6801, %v6793
    %v7474 = vpack.c.b16 %v6802, %v6794
    %v7475 = vpack.c.b16 %v6803, %v6795
    %v7476 = vpack.c.b16 %v6804, %v6796
    %v7477 = vpack.c.b16 %v6805, %v6797
    %v7478 = vpack.c.b16 %v6806, %v6798
    %v7479 = vpack.c.b16 %v6807, %v6799
    %v7480 = vpack.c.b16 %v6816, %v6808
    %v7481 = vpack.c.b16 %v6817, %v6809
    %v7482 = vpack.c.b16 %v6818, %v6810
    %v7483 = vpack.c.b16 %v6819, %v6811
    %v7484 = vpack.c.b16 %v6820, %v6812
    %v7485 = vpack.c.b16 %v6821, %v6813
    %v7486 = vpack.c.b16 %v6822, %v6814
    %v7487 = vpack.c.b16 %v6823, %v6815
    %v7488 = vpack.c.b16 %v6832, %v6824
    %v7489 = vpack.c.b16 %v6833, %v6825
    %v7490 = vpack.c.b16 %v6834, %v6826
    %v7491 = vpack.c.b16 %v6835, %v6827
    %v7492 = vpack.c.b16 %v6836, %v6828
    %v7493 = vpack.c.b16 %v6837, %v6829
    %v7494 = vpack.c.b16 %v6838, %v6830
    %v7495 = vpack.c.b16 %v6839, %v6831
    %v7496 = vpack.c.b16 %v6848, %v6840
    %v7497 = vpack.c.b16 %v6849, %v6841
    %v7498 = vpack.c.b16 %v6850, %v6842
    %v7499 = vpack.c.b16 %v6851, %v6843
    %v7500 = vpack.c.b16 %v6852, %v6844
    %v7501 = vpack.c.b16 %v6853, %v6845
    %v7502 = vpack.c.b16 %v6854, %v6846
    %v7503 = vpack.c.b16 %v6855, %v6847
    %v7504 = vpack.c.b16 %v6864, %v6856
    %v7505 = vpack.c.b16 %v6865, %v6857
    %v7506 = vpack.c.b16 %v6866, %v6858
    %v7507 = vpack.c.b16 %v6867, %v6859
    %v7508 = vpack.c.b16 %v6868, %v6860
    %v7509 = vpack.c.b16 %v6869, %v6861
    %v7510 = vpack.c.b16 %v6870, %v6862
    %v7511 = vpack.c.b16 %v6871, %v6863
    %v7512 = vpack.c.b16 %v6880, %v6872
    %v7513 = vpack.c.b16 %v6881, %v6873
    %v7514 = vpack.c.b16 %v6882, %v6874
    %v7515 = vpack.c.b16 %v6883, %v6875
    %v7516 = vpack.c.b16 %v6884, %v6876
    %v7517 = vpack.c.b16 %v6885, %v6877
    %v7518 = vpack.c.b16 %v6886, %v6878
    %v7519 = vpack.c.b16 %v6887, %v6879
    %v7520 = vpack.c.b16 %v6896, %v6888
    %v7521 = vpack.c.b16 %v6897, %v6889
    %v7522 = vpack.c.b16 %v6898, %v6890
    %v7523 = vpack.c.b16 %v6899, %v6891
    %v7524 = vpack.c.b16 %v6900, %v6892
    %v7525 = vpack.c.b16 %v6901, %v6893
    %v7526 = vpack.c.b16 %v6902, %v6894
    %v7527 = vpack.c.b16 %v6903, %v6895
    %v7528 = vpack.c.b16 %v6912, %v6904
    %v7529 = vpack.c.b16 %v6913, %v6905
    %v7530 = vpack.c.b16 %v6914, %v6906
    %v7531 = vpack.c.b16 %v6915, %v6907
    %v7532 = vpack.c.b16 %v6916, %v6908
    %v7533 = vpack.c.b16 %v6917, %v6909
    %v7534 = vpack.c.b16 %v6918, %v6910
    %v7535 = vpack.c.b16 %v6919, %v6911
    %v7536 = vpack.c.b16 %v6928, %v6920
    %v7537 = vpack.c.b16 %v6929, %v6921
    %v7538 = vpack.c.b16 %v6930, %v6922
    %v7539 = vpack.c.b16 %v6931, %v6923
    %v7540 = vpack.c.b16 %v6932, %v6924
    %v7541 = vpack.c.b16 %v6933, %v6925
    %v7542 = vpack.c.b16 %v6934, %v6926
    %v7543 = vpack.c.b16 %v6935, %v6927
    %v7544 = vpack.c.b16 %v6944, %v6936
    %v7545 = vpack.c.b16 %v6945, %v6937
    %v7546 = vpack.c.b16 %v6946, %v6938
    %v7547 = vpack.c.b16 %v6947, %v6939
    %v7548 = vpack.c.b16 %v6948, %v6940
    %v7549 = vpack.c.b16 %v6949, %v6941
    %v7550 = vpack.c.b16 %v6950, %v6942
    %v7551 = vpack.c.b16 %v6951, %v6943
    %v7552 = vpack.c.b16 %v6960, %v6952
    %v7553 = vpack.c.b16 %v6961, %v6953
    %v7554 = vpack.c.b16 %v6962, %v6954
    %v7555 = vpack.c.b16 %v6963, %v6955
    %v7556 = vpack.c.b16 %v6964, %v6956
    %v7557 = vpack.c.b16 %v6965, %v6957
    %v7558 = vpack.c.b16 %v6966, %v6958
    %v7559 = vpack.c.b16 %v6967, %v6959
    %v7560 = vpack.c.b16 %v6976, %v6968
    %v7561 = vpack.c.b16 %v6977, %v6969
    %v7562 = vpack.c.b16 %v6978, %v6970
    %v7563 = vpack.c.b16 %v6979, %v6971
    %v7564 = vpack.c.b16 %v6980, %v6972
    %v7565 = vpack.c.b16 %v6981, %v6973
    %v7566 = vpack.c.b16 %v6982, %v6974
    %v7567 = vpack.c.b16 %v6983, %v6975
    %v7568 = vpack.c.b16 %v6992, %v6984
    %v7569 = vpack.c.b16 %v6993, %v6985
    %v7570 = vpack.c.b16 %v6994, %v6986
    %v7571 = vpack.c.b16 %v6995, %v6987
    %v7572 = vpack.c.b16 %v6996, %v6988
    %v7573 = vpack.c.b16 %v6997, %v6989
    %v7574 = vpack.c.b16 %v6998, %v6990
    %v7575 = vpack.c.b16 %v6999, %v6991
    %v7576 = vpack.c.b16 %v7008, %v7000
    %v7577 = vpack.c.b16 %v7009, %v7001
    %v7578 = vpack.c.b16 %v7010, %v7002
    %v7579 = vpack.c.b16 %v7011, %v7003
    %v7580 = vpack.c.b16 %v7012, %v7004
    %v7581 = vpack.c.b16 %v7013, %v7005
    %v7582 = vpack.c.b16 %v7014, %v7006
    %v7583 = vpack.c.b16 %v7015, %v7007
    %v7584 = vpack.c.b16 %v7024, %v7016
    %v7585 = vpack.c.b16 %v7025, %v7017
    %v7586 = vpack.c.b16 %v7026, %v7018
    %v7587 = vpack.c.b16 %v7027, %v7019
    %v7588 = vpack.c.b16 %v7028, %v7020
    %v7589 = vpack.c.b16 %v7029, %v7021
    %v7590 = vpack.c.b16 %v7030, %v7022
    %v7591 = vpack.c.b16 %v7031, %v7023
    %v7592 = vpack.c.b16 %v7040, %v7032
    %v7593 = vpack.c.b16 %v7041, %v7033
    %v7594 = vpack.c.b16 %v7042, %v7034
    %v7595 = vpack.c.b16 %v7043, %v7035
    %v7596 = vpack.c.b16 %v7044, %v7036
    %v7597 = vpack.c.b16 %v7045, %v7037
    %v7598 = vpack.c.b16 %v7046, %v7038
    %v7599 = vpack.c.b16 %v7047, %v7039
    %v7600 = vpack.c.b16 %v7056, %v7048
    %v7601 = vpack.c.b16 %v7057, %v7049
    %v7602 = vpack.c.b16 %v7058, %v7050
    %v7603 = vpack.c.b16 %v7059, %v7051
    %v7604 = vpack.c.b16 %v7060, %v7052
    %v7605 = vpack.c.b16 %v7061, %v7053
    %v7606 = vpack.c.b16 %v7062, %v7054
    %v7607 = vpack.c.b16 %v7063, %v7055
    %v7608 = vpack.c.b16 %v7072, %v7064
    %v7609 = vpack.c.b16 %v7073, %v7065
    %v7610 = vpack.c.b16 %v7074, %v7066
    %v7611 = vpack.c.b16 %v7075, %v7067
    %v7612 = vpack.c.b16 %v7076, %v7068
    %v7613 = vpack.c.b16 %v7077, %v7069
    %v7614 = vpack.c.b16 %v7078, %v7070
    %v7615 = vpack.c.b16 %v7079, %v7071
    %v7616 = vpack.c.b16 %v7088, %v7080
    %v7617 = vpack.c.b16 %v7089, %v7081
    %v7618 = vpack.c.b16 %v7090, %v7082
    %v7619 = vpack.c.b16 %v7091, %v7083
    %v7620 = vpack.c.b16 %v7092, %v7084
    %v7621 = vpack.c.b16 %v7093, %v7085
    %v7622 = vpack.c.b16 %v7094, %v7086
    %v7623 = vpack.c.b16 %v7095, %v7087
    %v7624 = vpack.c.b16 %v7104, %v7096
    %v7625 = vpack.c.b16 %v7105, %v7097
    %v7626 = vpack.c.b16 %v7106, %v7098
    %v7627 = vpack.c.b16 %v7107, %v7099
    %v7628 = vpack.c.b16 %v7108, %v7100
    %v7629 = vpack.c.b16 %v7109, %v7101
    %v7630 = vpack.c.b16 %v7110, %v7102
    %v7631 = vpack.c.b16 %v7111, %v7103
    %v7632 = vpack.c.b16 %v7120, %v7112
    %v7633 = vpack.c.b16 %v7121, %v7113
    %v7634 = vpack.c.b16 %v7122, %v7114
    %v7635 = vpack.c.b16 %v7123, %v7115
    %v7636 = vpack.c.b16 %v7124, %v7116
    %v7637 = vpack.c.b16 %v7125, %v7117
    %v7638 = vpack.c.b16 %v7126, %v7118
    %v7639 = vpack.c.b16 %v7127, %v7119
    %8152 = vmatprep.subr.bf16.mxu0 %v7185
    %8153 = vmatpush1.bf16.msra.mxu0 %v7184
    %8154 = vmatprep.subr.bf16.mxu0 %v7177
    %8155 = vmatpush1.bf16.msra.mxu0 %v7176
    %8156 = vmatprep.subr.bf16.mxu0 %v7169
    %8157 = vmatpush1.bf16.msra.mxu0 %v7168
    %8158 = vmatprep.subr.bf16.mxu0 %v7161
    %8159 = vmatpush1.bf16.msra.mxu0 %v7160
    %8160 = vmatprep.subr.bf16.mxu0 %v7153
    %8161 = vmatpush1.bf16.msra.mxu0 %v7152
    %8162 = vmatprep.subr.bf16.mxu0 %v7145
    %8163 = vmatpush1.bf16.msra.mxu0 %v7144
    %8164 = vmatprep.subr.bf16.mxu0 %v7137
    %8165 = vmatpush1.bf16.msra.mxu0 %v7136
    %8166 = vmatprep.subr.bf16.mxu0 %v7129
    %8167 = vmatpush1.bf16.msra.mxu0 %v7128
    %8168 = vmatprep.subr.bf16.mxu0 %v7249
    %8169 = vmatpush2.bf16.msra.mxu0 %v7248
    %8170 = vmatprep.subr.bf16.mxu0 %v7241
    %8171 = vmatpush2.bf16.msra.mxu0 %v7240
    %8172 = vmatprep.subr.bf16.mxu0 %v7233
    %8173 = vmatpush2.bf16.msra.mxu0 %v7232
    %8174 = vmatprep.subr.bf16.mxu0 %v7225
    %8175 = vmatpush2.bf16.msra.mxu0 %v7224
    %8176 = vmatprep.subr.bf16.mxu0 %v7217
    %8177 = vmatpush2.bf16.msra.mxu0 %v7216
    %8178 = vmatprep.subr.bf16.mxu0 %v7209
    %8179 = vmatpush2.bf16.msra.mxu0 %v7208
    %8180 = vmatprep.subr.bf16.mxu0 %v7201
    %8181 = vmatpush2.bf16.msra.mxu0 %v7200
    %8182 = vmatprep.subr.bf16.mxu0 %v7193
    %8183 = vmatpush2.bf16.msra.mxu0 %v7192
    %8184 = vmatprep.mubr.bf16.mxu0 %v5544
    %8185 = vmatmul.mubr.bf16.gmra.mxu0 %v5543
    %v8186 = vpop.f32.mrf.mxu0
    %v8187 = vadd.f32 %v5555, %v8186
    %v8188 = vpop.f32.mrf.mxu0
    %v8189 = vadd.f32 %v5559, %v8188
    %v8190 = vpop.f32.mrf.mxu0
    %v8191 = vadd.f32 %v5555, %v8190
    %v8192 = vpop.f32.mrf.mxu0
    %v8193 = vadd.f32 %v5559, %v8192
    %8194 = vdwg.mxu0
    %8195 = vmatprep.subr.bf16.mxu0 %v7313
    %8196 = vmatpush1.bf16.msra.mxu0 %v7312
    %8197 = vmatprep.subr.bf16.mxu0 %v7305
    %8198 = vmatpush1.bf16.msra.mxu0 %v7304
    %8199 = vmatprep.subr.bf16.mxu0 %v7297
    %8200 = vmatpush1.bf16.msra.mxu0 %v7296
    %8201 = vmatprep.subr.bf16.mxu0 %v7289
    %8202 = vmatpush1.bf16.msra.mxu0 %v7288
    %8203 = vmatprep.subr.bf16.mxu0 %v7281
    %8204 = vmatpush1.bf16.msra.mxu0 %v7280
    %8205 = vmatprep.subr.bf16.mxu0 %v7273
    %8206 = vmatpush1.bf16.msra.mxu0 %v7272
    %8207 = vmatprep.subr.bf16.mxu0 %v7265
    %8208 = vmatpush1.bf16.msra.mxu0 %v7264
    %8209 = vmatprep.subr.bf16.mxu0 %v7257
    %8210 = vmatpush1.bf16.msra.mxu0 %v7256
    %8211 = vmatprep.subr.bf16.mxu0 %v7377
    %8212 = vmatpush2.bf16.msra.mxu0 %v7376
    %8213 = vmatprep.subr.bf16.mxu0 %v7369
    %8214 = vmatpush2.bf16.msra.mxu0 %v7368
    %8215 = vmatprep.subr.bf16.mxu0 %v7361
    %8216 = vmatpush2.bf16.msra.mxu0 %v7360
    %8217 = vmatprep.subr.bf16.mxu0 %v7353
    %8218 = vmatpush2.bf16.msra.mxu0 %v7352
    %8219 = vmatprep.subr.bf16.mxu0 %v7345
    %8220 = vmatpush2.bf16.msra.mxu0 %v7344
    %8221 = vmatprep.subr.bf16.mxu0 %v7337
    %8222 = vmatpush2.bf16.msra.mxu0 %v7336
    %8223 = vmatprep.subr.bf16.mxu0 %v7329
    %8224 = vmatpush2.bf16.msra.mxu0 %v7328
    %8225 = vmatprep.subr.bf16.mxu0 %v7321
    %8226 = vmatpush2.bf16.msra.mxu0 %v7320
    %8227 = vmatprep.mubr.bf16.mxu0 %v5546
    %8228 = vmatmul.mubr.bf16.gmra.mxu0 %v5545
    %v8229 = vpop.f32.mrf.mxu0
    %v8230 = vadd.f32 %v8187, %v8229
    %v8231 = vpop.f32.mrf.mxu0
    %v8232 = vadd.f32 %v8189, %v8231
    %v8233 = vpop.f32.mrf.mxu0
    %v8234 = vadd.f32 %v8191, %v8233
    %v8235 = vpop.f32.mrf.mxu0
    %v8236 = vadd.f32 %v8193, %v8235
    %8237 = vdwg.mxu0
    %8238 = vmatprep.subr.bf16.mxu0 %v7441
    %8239 = vmatpush1.bf16.msra.mxu0 %v7440
    %8240 = vmatprep.subr.bf16.mxu0 %v7433
    %8241 = vmatpush1.bf16.msra.mxu0 %v7432
    %8242 = vmatprep.subr.bf16.mxu0 %v7425
    %8243 = vmatpush1.bf16.msra.mxu0 %v7424
    %8244 = vmatprep.subr.bf16.mxu0 %v7417
    %8245 = vmatpush1.bf16.msra.mxu0 %v7416
    %8246 = vmatprep.subr.bf16.mxu0 %v7409
    %8247 = vmatpush1.bf16.msra.mxu0 %v7408
    %8248 = vmatprep.subr.bf16.mxu0 %v7401
    %8249 = vmatpush1.bf16.msra.mxu0 %v7400
    %8250 = vmatprep.subr.bf16.mxu0 %v7393
    %8251 = vmatpush1.bf16.msra.mxu0 %v7392
    %8252 = vmatprep.subr.bf16.mxu0 %v7385
    %8253 = vmatpush1.bf16.msra.mxu0 %v7384
    %8254 = vmatprep.subr.bf16.mxu0 %v7505
    %8255 = vmatpush2.bf16.msra.mxu0 %v7504
    %8256 = vmatprep.subr.bf16.mxu0 %v7497
    %8257 = vmatpush2.bf16.msra.mxu0 %v7496
    %8258 = vmatprep.subr.bf16.mxu0 %v7489
    %8259 = vmatpush2.bf16.msra.mxu0 %v7488
    %8260 = vmatprep.subr.bf16.mxu0 %v7481
    %8261 = vmatpush2.bf16.msra.mxu0 %v7480
    %8262 = vmatprep.subr.bf16.mxu0 %v7473
    %8263 = vmatpush2.bf16.msra.mxu0 %v7472
    %8264 = vmatprep.subr.bf16.mxu0 %v7465
    %8265 = vmatpush2.bf16.msra.mxu0 %v7464
    %8266 = vmatprep.subr.bf16.mxu0 %v7457
    %8267 = vmatpush2.bf16.msra.mxu0 %v7456
    %8268 = vmatprep.subr.bf16.mxu0 %v7449
    %8269 = vmatpush2.bf16.msra.mxu0 %v7448
    %8270 = vmatprep.mubr.bf16.mxu0 %v5548
    %8271 = vmatmul.mubr.bf16.gmra.mxu0 %v5547
    %v8272 = vpop.f32.mrf.mxu0
    %v8273 = vadd.f32 %v8230, %v8272
    %v8274 = vpop.f32.mrf.mxu0
    %v8275 = vadd.f32 %v8232, %v8274
    %v8276 = vpop.f32.mrf.mxu0
    %v8277 = vadd.f32 %v8234, %v8276
    %v8278 = vpop.f32.mrf.mxu0
    %v8279 = vadd.f32 %v8236, %v8278
    %8280 = vdwg.mxu0
    %8281 = vmatprep.subr.bf16.mxu0 %v7569
    %8282 = vmatpush1.bf16.msra.mxu0 %v7568
    %8283 = vmatprep.subr.bf16.mxu0 %v7561
    %8284 = vmatpush1.bf16.msra.mxu0 %v7560
    %8285 = vmatprep.subr.bf16.mxu0 %v7553
    %8286 = vmatpush1.bf16.msra.mxu0 %v7552
    %8287 = vmatprep.subr.bf16.mxu0 %v7545
    %8288 = vmatpush1.bf16.msra.mxu0 %v7544
    %8289 = vmatprep.subr.bf16.mxu0 %v7537
    %8290 = vmatpush1.bf16.msra.mxu0 %v7536
    %8291 = vmatprep.subr.bf16.mxu0 %v7529
    %8292 = vmatpush1.bf16.msra.mxu0 %v7528
    %8293 = vmatprep.subr.bf16.mxu0 %v7521
    %8294 = vmatpush1.bf16.msra.mxu0 %v7520
    %8295 = vmatprep.subr.bf16.mxu0 %v7513
    %8296 = vmatpush1.bf16.msra.mxu0 %v7512
    %8297 = vmatprep.subr.bf16.mxu0 %v7633
    %8298 = vmatpush2.bf16.msra.mxu0 %v7632
    %8299 = vmatprep.subr.bf16.mxu0 %v7625
    %8300 = vmatpush2.bf16.msra.mxu0 %v7624
    %8301 = vmatprep.subr.bf16.mxu0 %v7617
    %8302 = vmatpush2.bf16.msra.mxu0 %v7616
    %8303 = vmatprep.subr.bf16.mxu0 %v7609
    %8304 = vmatpush2.bf16.msra.mxu0 %v7608
    %8305 = vmatprep.subr.bf16.mxu0 %v7601
    %8306 = vmatpush2.bf16.msra.mxu0 %v7600
    %8307 = vmatprep.subr.bf16.mxu0 %v7593
    %8308 = vmatpush2.bf16.msra.mxu0 %v7592
    %8309 = vmatprep.subr.bf16.mxu0 %v7585
    %8310 = vmatpush2.bf16.msra.mxu0 %v7584
    %8311 = vmatprep.subr.bf16.mxu0 %v7577
    %8312 = vmatpush2.bf16.msra.mxu0 %v7576
    %8313 = vmatprep.mubr.bf16.mxu0 %v5550
    %8314 = vmatmul.mubr.bf16.gmra.mxu0 %v5549
    %v8315 = vpop.f32.mrf.mxu0
    %v8316 = vadd.f32 %v8273, %v8315
    %v8317 = vpop.f32.mrf.mxu0
    %v8318 = vadd.f32 %v8275, %v8317
    %v8319 = vpop.f32.mrf.mxu0
    %v8320 = vadd.f32 %v8277, %v8319
    %v8321 = vpop.f32.mrf.mxu0
    %v8322 = vadd.f32 %v8279, %v8321
    %8323 = vdwg.mxu0
    %8324 = vmatprep.subr.bf16.mxu0 %v7187
    %8325 = vmatpush1.bf16.msra.mxu0 %v7186
    %8326 = vmatprep.subr.bf16.mxu0 %v7179
    %8327 = vmatpush1.bf16.msra.mxu0 %v7178
    %8328 = vmatprep.subr.bf16.mxu0 %v7171
    %8329 = vmatpush1.bf16.msra.mxu0 %v7170
    %8330 = vmatprep.subr.bf16.mxu0 %v7163
    %8331 = vmatpush1.bf16.msra.mxu0 %v7162
    %8332 = vmatprep.subr.bf16.mxu0 %v7155
    %8333 = vmatpush1.bf16.msra.mxu0 %v7154
    %8334 = vmatprep.subr.bf16.mxu0 %v7147
    %8335 = vmatpush1.bf16.msra.mxu0 %v7146
    %8336 = vmatprep.subr.bf16.mxu0 %v7139
    %8337 = vmatpush1.bf16.msra.mxu0 %v7138
    %8338 = vmatprep.subr.bf16.mxu0 %v7131
    %8339 = vmatpush1.bf16.msra.mxu0 %v7130
    %8340 = vmatprep.subr.bf16.mxu0 %v7251
    %8341 = vmatpush2.bf16.msra.mxu0 %v7250
    %8342 = vmatprep.subr.bf16.mxu0 %v7243
    %8343 = vmatpush2.bf16.msra.mxu0 %v7242
    %8344 = vmatprep.subr.bf16.mxu0 %v7235
    %8345 = vmatpush2.bf16.msra.mxu0 %v7234
    %8346 = vmatprep.subr.bf16.mxu0 %v7227
    %8347 = vmatpush2.bf16.msra.mxu0 %v7226
    %8348 = vmatprep.subr.bf16.mxu0 %v7219
    %8349 = vmatpush2.bf16.msra.mxu0 %v7218
    %8350 = vmatprep.subr.bf16.mxu0 %v7211
    %8351 = vmatpush2.bf16.msra.mxu0 %v7210
    %8352 = vmatprep.subr.bf16.mxu0 %v7203
    %8353 = vmatpush2.bf16.msra.mxu0 %v7202
    %8354 = vmatprep.subr.bf16.mxu0 %v7195
    %8355 = vmatpush2.bf16.msra.mxu0 %v7194
    %8356 = vmatprep.mubr.bf16.mxu0 %v5544
    %8357 = vmatmul.mubr.bf16.gmra.mxu0 %v5543
    %v8358 = vpop.f32.mrf.mxu0
    %v8359 = vadd.f32 %v5563, %v8358
    %v8360 = vpop.f32.mrf.mxu0
    %v8361 = vadd.f32 %v5567, %v8360
    %v8362 = vpop.f32.mrf.mxu0
    %v8363 = vadd.f32 %v5563, %v8362
    %v8364 = vpop.f32.mrf.mxu0
    %v8365 = vadd.f32 %v5567, %v8364
    %8366 = vdwg.mxu0
    %8367 = vmatprep.subr.bf16.mxu0 %v7315
    %8368 = vmatpush1.bf16.msra.mxu0 %v7314
    %8369 = vmatprep.subr.bf16.mxu0 %v7307
    %8370 = vmatpush1.bf16.msra.mxu0 %v7306
    %8371 = vmatprep.subr.bf16.mxu0 %v7299
    %8372 = vmatpush1.bf16.msra.mxu0 %v7298
    %8373 = vmatprep.subr.bf16.mxu0 %v7291
    %8374 = vmatpush1.bf16.msra.mxu0 %v7290
    %8375 = vmatprep.subr.bf16.mxu0 %v7283
    %8376 = vmatpush1.bf16.msra.mxu0 %v7282
    %8377 = vmatprep.subr.bf16.mxu0 %v7275
    %8378 = vmatpush1.bf16.msra.mxu0 %v7274
    %8379 = vmatprep.subr.bf16.mxu0 %v7267
    %8380 = vmatpush1.bf16.msra.mxu0 %v7266
    %8381 = vmatprep.subr.bf16.mxu0 %v7259
    %8382 = vmatpush1.bf16.msra.mxu0 %v7258
    %8383 = vmatprep.subr.bf16.mxu0 %v7379
    %8384 = vmatpush2.bf16.msra.mxu0 %v7378
    %8385 = vmatprep.subr.bf16.mxu0 %v7371
    %8386 = vmatpush2.bf16.msra.mxu0 %v7370
    %8387 = vmatprep.subr.bf16.mxu0 %v7363
    %8388 = vmatpush2.bf16.msra.mxu0 %v7362
    %8389 = vmatprep.subr.bf16.mxu0 %v7355
    %8390 = vmatpush2.bf16.msra.mxu0 %v7354
    %8391 = vmatprep.subr.bf16.mxu0 %v7347
    %8392 = vmatpush2.bf16.msra.mxu0 %v7346
    %8393 = vmatprep.subr.bf16.mxu0 %v7339
    %8394 = vmatpush2.bf16.msra.mxu0 %v7338
    %8395 = vmatprep.subr.bf16.mxu0 %v7331
    %8396 = vmatpush2.bf16.msra.mxu0 %v7330
    %8397 = vmatprep.subr.bf16.mxu0 %v7323
    %8398 = vmatpush2.bf16.msra.mxu0 %v7322
    %8399 = vmatprep.mubr.bf16.mxu0 %v5546
    %8400 = vmatmul.mubr.bf16.gmra.mxu0 %v5545
    %v8401 = vpop.f32.mrf.mxu0
    %v8402 = vadd.f32 %v8359, %v8401
    %v8403 = vpop.f32.mrf.mxu0
    %v8404 = vadd.f32 %v8361, %v8403
    %v8405 = vpop.f32.mrf.mxu0
    %v8406 = vadd.f32 %v8363, %v8405
    %v8407 = vpop.f32.mrf.mxu0
    %v8408 = vadd.f32 %v8365, %v8407
    %8409 = vdwg.mxu0
    %8410 = vmatprep.subr.bf16.mxu0 %v7443
    %8411 = vmatpush1.bf16.msra.mxu0 %v7442
    %8412 = vmatprep.subr.bf16.mxu0 %v7435
    %8413 = vmatpush1.bf16.msra.mxu0 %v7434
    %8414 = vmatprep.subr.bf16.mxu0 %v7427
    %8415 = vmatpush1.bf16.msra.mxu0 %v7426
    %8416 = vmatprep.subr.bf16.mxu0 %v7419
    %8417 = vmatpush1.bf16.msra.mxu0 %v7418
    %8418 = vmatprep.subr.bf16.mxu0 %v7411
    %8419 = vmatpush1.bf16.msra.mxu0 %v7410
    %8420 = vmatprep.subr.bf16.mxu0 %v7403
    %8421 = vmatpush1.bf16.msra.mxu0 %v7402
    %8422 = vmatprep.subr.bf16.mxu0 %v7395
    %8423 = vmatpush1.bf16.msra.mxu0 %v7394
    %8424 = vmatprep.subr.bf16.mxu0 %v7387
    %8425 = vmatpush1.bf16.msra.mxu0 %v7386
    %8426 = vmatprep.subr.bf16.mxu0 %v7507
    %8427 = vmatpush2.bf16.msra.mxu0 %v7506
    %8428 = vmatprep.subr.bf16.mxu0 %v7499
    %8429 = vmatpush2.bf16.msra.mxu0 %v7498
    %8430 = vmatprep.subr.bf16.mxu0 %v7491
    %8431 = vmatpush2.bf16.msra.mxu0 %v7490
    %8432 = vmatprep.subr.bf16.mxu0 %v7483
    %8433 = vmatpush2.bf16.msra.mxu0 %v7482
    %8434 = vmatprep.subr.bf16.mxu0 %v7475
    %8435 = vmatpush2.bf16.msra.mxu0 %v7474
    %8436 = vmatprep.subr.bf16.mxu0 %v7467
    %8437 = vmatpush2.bf16.msra.mxu0 %v7466
    %8438 = vmatprep.subr.bf16.mxu0 %v7459
    %8439 = vmatpush2.bf16.msra.mxu0 %v7458
    %8440 = vmatprep.subr.bf16.mxu0 %v7451
    %8441 = vmatpush2.bf16.msra.mxu0 %v7450
    %8442 = vmatprep.mubr.bf16.mxu0 %v5548
    %8443 = vmatmul.mubr.bf16.gmra.mxu0 %v5547
    %v8444 = vpop.f32.mrf.mxu0
    %v8445 = vadd.f32 %v8402, %v8444
    %v8446 = vpop.f32.mrf.mxu0
    %v8447 = vadd.f32 %v8404, %v8446
    %v8448 = vpop.f32.mrf.mxu0
    %v8449 = vadd.f32 %v8406, %v8448
    %v8450 = vpop.f32.mrf.mxu0
    %v8451 = vadd.f32 %v8408, %v8450
    %8452 = vdwg.mxu0
    %8453 = vmatprep.subr.bf16.mxu0 %v7571
    %8454 = vmatpush1.bf16.msra.mxu0 %v7570
    %8455 = vmatprep.subr.bf16.mxu0 %v7563
    %8456 = vmatpush1.bf16.msra.mxu0 %v7562
    %8457 = vmatprep.subr.bf16.mxu0 %v7555
    %8458 = vmatpush1.bf16.msra.mxu0 %v7554
    %8459 = vmatprep.subr.bf16.mxu0 %v7547
    %8460 = vmatpush1.bf16.msra.mxu0 %v7546
    %8461 = vmatprep.subr.bf16.mxu0 %v7539
    %8462 = vmatpush1.bf16.msra.mxu0 %v7538
    %8463 = vmatprep.subr.bf16.mxu0 %v7531
    %8464 = vmatpush1.bf16.msra.mxu0 %v7530
    %8465 = vmatprep.subr.bf16.mxu0 %v7523
    %8466 = vmatpush1.bf16.msra.mxu0 %v7522
    %8467 = vmatprep.subr.bf16.mxu0 %v7515
    %8468 = vmatpush1.bf16.msra.mxu0 %v7514
    %8469 = vmatprep.subr.bf16.mxu0 %v7635
    %8470 = vmatpush2.bf16.msra.mxu0 %v7634
    %8471 = vmatprep.subr.bf16.mxu0 %v7627
    %8472 = vmatpush2.bf16.msra.mxu0 %v7626
    %8473 = vmatprep.subr.bf16.mxu0 %v7619
    %8474 = vmatpush2.bf16.msra.mxu0 %v7618
    %8475 = vmatprep.subr.bf16.mxu0 %v7611
    %8476 = vmatpush2.bf16.msra.mxu0 %v7610
    %8477 = vmatprep.subr.bf16.mxu0 %v7603
    %8478 = vmatpush2.bf16.msra.mxu0 %v7602
    %8479 = vmatprep.subr.bf16.mxu0 %v7595
    %8480 = vmatpush2.bf16.msra.mxu0 %v7594
    %8481 = vmatprep.subr.bf16.mxu0 %v7587
    %8482 = vmatpush2.bf16.msra.mxu0 %v7586
    %8483 = vmatprep.subr.bf16.mxu0 %v7579
    %8484 = vmatpush2.bf16.msra.mxu0 %v7578
    %8485 = vmatprep.mubr.bf16.mxu0 %v5550
    %8486 = vmatmul.mubr.bf16.gmra.mxu0 %v5549
    %v8487 = vpop.f32.mrf.mxu0
    %v8488 = vadd.f32 %v8445, %v8487
    %v8489 = vpop.f32.mrf.mxu0
    %v8490 = vadd.f32 %v8447, %v8489
    %v8491 = vpop.f32.mrf.mxu0
    %v8492 = vadd.f32 %v8449, %v8491
    %v8493 = vpop.f32.mrf.mxu0
    %v8494 = vadd.f32 %v8451, %v8493
    %8495 = vdwg.mxu0
    %8496 = vmatprep.subr.bf16.mxu0 %v7189
    %8497 = vmatpush1.bf16.msra.mxu0 %v7188
    %8498 = vmatprep.subr.bf16.mxu0 %v7181
    %8499 = vmatpush1.bf16.msra.mxu0 %v7180
    %8500 = vmatprep.subr.bf16.mxu0 %v7173
    %8501 = vmatpush1.bf16.msra.mxu0 %v7172
    %8502 = vmatprep.subr.bf16.mxu0 %v7165
    %8503 = vmatpush1.bf16.msra.mxu0 %v7164
    %8504 = vmatprep.subr.bf16.mxu0 %v7157
    %8505 = vmatpush1.bf16.msra.mxu0 %v7156
    %8506 = vmatprep.subr.bf16.mxu0 %v7149
    %8507 = vmatpush1.bf16.msra.mxu0 %v7148
    %8508 = vmatprep.subr.bf16.mxu0 %v7141
    %8509 = vmatpush1.bf16.msra.mxu0 %v7140
    %8510 = vmatprep.subr.bf16.mxu0 %v7133
    %8511 = vmatpush1.bf16.msra.mxu0 %v7132
    %8512 = vmatprep.subr.bf16.mxu0 %v7253
    %8513 = vmatpush2.bf16.msra.mxu0 %v7252
    %8514 = vmatprep.subr.bf16.mxu0 %v7245
    %8515 = vmatpush2.bf16.msra.mxu0 %v7244
    %8516 = vmatprep.subr.bf16.mxu0 %v7237
    %8517 = vmatpush2.bf16.msra.mxu0 %v7236
    %8518 = vmatprep.subr.bf16.mxu0 %v7229
    %8519 = vmatpush2.bf16.msra.mxu0 %v7228
    %8520 = vmatprep.subr.bf16.mxu0 %v7221
    %8521 = vmatpush2.bf16.msra.mxu0 %v7220
    %8522 = vmatprep.subr.bf16.mxu0 %v7213
    %8523 = vmatpush2.bf16.msra.mxu0 %v7212
    %8524 = vmatprep.subr.bf16.mxu0 %v7205
    %8525 = vmatpush2.bf16.msra.mxu0 %v7204
    %8526 = vmatprep.subr.bf16.mxu0 %v7197
    %8527 = vmatpush2.bf16.msra.mxu0 %v7196
    %8528 = vmatprep.mubr.bf16.mxu0 %v5544
    %8529 = vmatmul.mubr.bf16.gmra.mxu0 %v5543
    %v8530 = vpop.f32.mrf.mxu0
    %v8531 = vadd.f32 %v5571, %v8530
    %v8532 = vpop.f32.mrf.mxu0
    %v8533 = vadd.f32 %v5575, %v8532
    %v8534 = vpop.f32.mrf.mxu0
    %v8535 = vadd.f32 %v5571, %v8534
    %v8536 = vpop.f32.mrf.mxu0
    %v8537 = vadd.f32 %v5575, %v8536
    %8538 = vdwg.mxu0
    %8539 = vmatprep.subr.bf16.mxu0 %v7317
    %8540 = vmatpush1.bf16.msra.mxu0 %v7316
    %8541 = vmatprep.subr.bf16.mxu0 %v7309
    %8542 = vmatpush1.bf16.msra.mxu0 %v7308
    %8543 = vmatprep.subr.bf16.mxu0 %v7301
    %8544 = vmatpush1.bf16.msra.mxu0 %v7300
    %8545 = vmatprep.subr.bf16.mxu0 %v7293
    %8546 = vmatpush1.bf16.msra.mxu0 %v7292
    %8547 = vmatprep.subr.bf16.mxu0 %v7285
    %8548 = vmatpush1.bf16.msra.mxu0 %v7284
    %8549 = vmatprep.subr.bf16.mxu0 %v7277
    %8550 = vmatpush1.bf16.msra.mxu0 %v7276
    %8551 = vmatprep.subr.bf16.mxu0 %v7269
    %8552 = vmatpush1.bf16.msra.mxu0 %v7268
    %8553 = vmatprep.subr.bf16.mxu0 %v7261
    %8554 = vmatpush1.bf16.msra.mxu0 %v7260
    %8555 = vmatprep.subr.bf16.mxu0 %v7381
    %8556 = vmatpush2.bf16.msra.mxu0 %v7380
    %8557 = vmatprep.subr.bf16.mxu0 %v7373
    %8558 = vmatpush2.bf16.msra.mxu0 %v7372
    %8559 = vmatprep.subr.bf16.mxu0 %v7365
    %8560 = vmatpush2.bf16.msra.mxu0 %v7364
    %8561 = vmatprep.subr.bf16.mxu0 %v7357
    %8562 = vmatpush2.bf16.msra.mxu0 %v7356
    %8563 = vmatprep.subr.bf16.mxu0 %v7349
    %8564 = vmatpush2.bf16.msra.mxu0 %v7348
    %8565 = vmatprep.subr.bf16.mxu0 %v7341
    %8566 = vmatpush2.bf16.msra.mxu0 %v7340
    %8567 = vmatprep.subr.bf16.mxu0 %v7333
    %8568 = vmatpush2.bf16.msra.mxu0 %v7332
    %8569 = vmatprep.subr.bf16.mxu0 %v7325
    %8570 = vmatpush2.bf16.msra.mxu0 %v7324
    %8571 = vmatprep.mubr.bf16.mxu0 %v5546
    %8572 = vmatmul.mubr.bf16.gmra.mxu0 %v5545
    %v8573 = vpop.f32.mrf.mxu0
    %v8574 = vadd.f32 %v8531, %v8573
    %v8575 = vpop.f32.mrf.mxu0
    %v8576 = vadd.f32 %v8533, %v8575
    %v8577 = vpop.f32.mrf.mxu0
    %v8578 = vadd.f32 %v8535, %v8577
    %v8579 = vpop.f32.mrf.mxu0
    %v8580 = vadd.f32 %v8537, %v8579
    %8581 = vdwg.mxu0
    %8582 = vmatprep.subr.bf16.mxu0 %v7445
    %8583 = vmatpush1.bf16.msra.mxu0 %v7444
    %8584 = vmatprep.subr.bf16.mxu0 %v7437
    %8585 = vmatpush1.bf16.msra.mxu0 %v7436
    %8586 = vmatprep.subr.bf16.mxu0 %v7429
    %8587 = vmatpush1.bf16.msra.mxu0 %v7428
    %8588 = vmatprep.subr.bf16.mxu0 %v7421
    %8589 = vmatpush1.bf16.msra.mxu0 %v7420
    %8590 = vmatprep.subr.bf16.mxu0 %v7413
    %8591 = vmatpush1.bf16.msra.mxu0 %v7412
    %8592 = vmatprep.subr.bf16.mxu0 %v7405
    %8593 = vmatpush1.bf16.msra.mxu0 %v7404
    %8594 = vmatprep.subr.bf16.mxu0 %v7397
    %8595 = vmatpush1.bf16.msra.mxu0 %v7396
    %8596 = vmatprep.subr.bf16.mxu0 %v7389
    %8597 = vmatpush1.bf16.msra.mxu0 %v7388
    %8598 = vmatprep.subr.bf16.mxu0 %v7509
    %8599 = vmatpush2.bf16.msra.mxu0 %v7508
    %8600 = vmatprep.subr.bf16.mxu0 %v7501
    %8601 = vmatpush2.bf16.msra.mxu0 %v7500
    %8602 = vmatprep.subr.bf16.mxu0 %v7493
    %8603 = vmatpush2.bf16.msra.mxu0 %v7492
    %8604 = vmatprep.subr.bf16.mxu0 %v7485
    %8605 = vmatpush2.bf16.msra.mxu0 %v7484
    %8606 = vmatprep.subr.bf16.mxu0 %v7477
    %8607 = vmatpush2.bf16.msra.mxu0 %v7476
    %8608 = vmatprep.subr.bf16.mxu0 %v7469
    %8609 = vmatpush2.bf16.msra.mxu0 %v7468
    %8610 = vmatprep.subr.bf16.mxu0 %v7461
    %8611 = vmatpush2.bf16.msra.mxu0 %v7460
    %8612 = vmatprep.subr.bf16.mxu0 %v7453
    %8613 = vmatpush2.bf16.msra.mxu0 %v7452
    %8614 = vmatprep.mubr.bf16.mxu0 %v5548
    %8615 = vmatmul.mubr.bf16.gmra.mxu0 %v5547
    %v8616 = vpop.f32.mrf.mxu0
    %v8617 = vadd.f32 %v8574, %v8616
    %v8618 = vpop.f32.mrf.mxu0
    %v8619 = vadd.f32 %v8576, %v8618
    %v8620 = vpop.f32.mrf.mxu0
    %v8621 = vadd.f32 %v8578, %v8620
    %v8622 = vpop.f32.mrf.mxu0
    %v8623 = vadd.f32 %v8580, %v8622
    %8624 = vdwg.mxu0
    %8625 = vmatprep.subr.bf16.mxu0 %v7573
    %8626 = vmatpush1.bf16.msra.mxu0 %v7572
    %8627 = vmatprep.subr.bf16.mxu0 %v7565
    %8628 = vmatpush1.bf16.msra.mxu0 %v7564
    %8629 = vmatprep.subr.bf16.mxu0 %v7557
    %8630 = vmatpush1.bf16.msra.mxu0 %v7556
    %8631 = vmatprep.subr.bf16.mxu0 %v7549
    %8632 = vmatpush1.bf16.msra.mxu0 %v7548
    %8633 = vmatprep.subr.bf16.mxu0 %v7541
    %8634 = vmatpush1.bf16.msra.mxu0 %v7540
    %8635 = vmatprep.subr.bf16.mxu0 %v7533
    %8636 = vmatpush1.bf16.msra.mxu0 %v7532
    %8637 = vmatprep.subr.bf16.mxu0 %v7525
    %8638 = vmatpush1.bf16.msra.mxu0 %v7524
    %8639 = vmatprep.subr.bf16.mxu0 %v7517
    %8640 = vmatpush1.bf16.msra.mxu0 %v7516
    %8641 = vmatprep.subr.bf16.mxu0 %v7637
    %8642 = vmatpush2.bf16.msra.mxu0 %v7636
    %8643 = vmatprep.subr.bf16.mxu0 %v7629
    %8644 = vmatpush2.bf16.msra.mxu0 %v7628
    %8645 = vmatprep.subr.bf16.mxu0 %v7621
    %8646 = vmatpush2.bf16.msra.mxu0 %v7620
    %8647 = vmatprep.subr.bf16.mxu0 %v7613
    %8648 = vmatpush2.bf16.msra.mxu0 %v7612
    %8649 = vmatprep.subr.bf16.mxu0 %v7605
    %8650 = vmatpush2.bf16.msra.mxu0 %v7604
    %8651 = vmatprep.subr.bf16.mxu0 %v7597
    %8652 = vmatpush2.bf16.msra.mxu0 %v7596
    %8653 = vmatprep.subr.bf16.mxu0 %v7589
    %8654 = vmatpush2.bf16.msra.mxu0 %v7588
    %8655 = vmatprep.subr.bf16.mxu0 %v7581
    %8656 = vmatpush2.bf16.msra.mxu0 %v7580
    %8657 = vmatprep.mubr.bf16.mxu0 %v5550
    %8658 = vmatmul.mubr.bf16.gmra.mxu0 %v5549
    %v8659 = vpop.f32.mrf.mxu0
    %v8660 = vadd.f32 %v8617, %v8659
    %v8661 = vpop.f32.mrf.mxu0
    %v8662 = vadd.f32 %v8619, %v8661
    %v8663 = vpop.f32.mrf.mxu0
    %v8664 = vadd.f32 %v8621, %v8663
    %v8665 = vpop.f32.mrf.mxu0
    %v8666 = vadd.f32 %v8623, %v8665
    %8667 = vdwg.mxu0
    %8668 = vmatprep.subr.bf16.mxu0 %v7191
    %8669 = vmatpush1.bf16.msra.mxu0 %v7190
    %8670 = vmatprep.subr.bf16.mxu0 %v7183
    %8671 = vmatpush1.bf16.msra.mxu0 %v7182
    %8672 = vmatprep.subr.bf16.mxu0 %v7175
    %8673 = vmatpush1.bf16.msra.mxu0 %v7174
    %8674 = vmatprep.subr.bf16.mxu0 %v7167
    %8675 = vmatpush1.bf16.msra.mxu0 %v7166
    %8676 = vmatprep.subr.bf16.mxu0 %v7159
    %8677 = vmatpush1.bf16.msra.mxu0 %v7158
    %8678 = vmatprep.subr.bf16.mxu0 %v7151
    %8679 = vmatpush1.bf16.msra.mxu0 %v7150
    %8680 = vmatprep.subr.bf16.mxu0 %v7143
    %8681 = vmatpush1.bf16.msra.mxu0 %v7142
    %8682 = vmatprep.subr.bf16.mxu0 %v7135
    %8683 = vmatpush1.bf16.msra.mxu0 %v7134
    %8684 = vmatprep.subr.bf16.mxu0 %v7255
    %8685 = vmatpush2.bf16.msra.mxu0 %v7254
    %8686 = vmatprep.subr.bf16.mxu0 %v7247
    %8687 = vmatpush2.bf16.msra.mxu0 %v7246
    %8688 = vmatprep.subr.bf16.mxu0 %v7239
    %8689 = vmatpush2.bf16.msra.mxu0 %v7238
    %8690 = vmatprep.subr.bf16.mxu0 %v7231
    %8691 = vmatpush2.bf16.msra.mxu0 %v7230
    %8692 = vmatprep.subr.bf16.mxu0 %v7223
    %8693 = vmatpush2.bf16.msra.mxu0 %v7222
    %8694 = vmatprep.subr.bf16.mxu0 %v7215
    %8695 = vmatpush2.bf16.msra.mxu0 %v7214
    %8696 = vmatprep.subr.bf16.mxu0 %v7207
    %8697 = vmatpush2.bf16.msra.mxu0 %v7206
    %8698 = vmatprep.subr.bf16.mxu0 %v7199
    %8699 = vmatpush2.bf16.msra.mxu0 %v7198
    %8700 = vmatprep.mubr.bf16.mxu0 %v5544
    %8701 = vmatmul.mubr.bf16.gmra.mxu0 %v5543
    %v8702 = vpop.f32.mrf.mxu0
    %v8703 = vadd.f32 %v5579, %v8702
    %v8704 = vpop.f32.mrf.mxu0
    %v8705 = vadd.f32 %v5583, %v8704
    %v8706 = vpop.f32.mrf.mxu0
    %v8707 = vadd.f32 %v5579, %v8706
    %v8708 = vpop.f32.mrf.mxu0
    %v8709 = vadd.f32 %v5583, %v8708
    %8710 = vdwg.mxu0
    %8711 = vmatprep.subr.bf16.mxu0 %v7319
    %8712 = vmatpush1.bf16.msra.mxu0 %v7318
    %8713 = vmatprep.subr.bf16.mxu0 %v7311
    %8714 = vmatpush1.bf16.msra.mxu0 %v7310
    %8715 = vmatprep.subr.bf16.mxu0 %v7303
    %8716 = vmatpush1.bf16.msra.mxu0 %v7302
    %8717 = vmatprep.subr.bf16.mxu0 %v7295
    %8718 = vmatpush1.bf16.msra.mxu0 %v7294
    %8719 = vmatprep.subr.bf16.mxu0 %v7287
    %8720 = vmatpush1.bf16.msra.mxu0 %v7286
    %8721 = vmatprep.subr.bf16.mxu0 %v7279
    %8722 = vmatpush1.bf16.msra.mxu0 %v7278
    %8723 = vmatprep.subr.bf16.mxu0 %v7271
    %8724 = vmatpush1.bf16.msra.mxu0 %v7270
    %8725 = vmatprep.subr.bf16.mxu0 %v7263
    %8726 = vmatpush1.bf16.msra.mxu0 %v7262
    %8727 = vmatprep.subr.bf16.mxu0 %v7383
    %8728 = vmatpush2.bf16.msra.mxu0 %v7382
    %8729 = vmatprep.subr.bf16.mxu0 %v7375
    %8730 = vmatpush2.bf16.msra.mxu0 %v7374
    %8731 = vmatprep.subr.bf16.mxu0 %v7367
    %8732 = vmatpush2.bf16.msra.mxu0 %v7366
    %8733 = vmatprep.subr.bf16.mxu0 %v7359
    %8734 = vmatpush2.bf16.msra.mxu0 %v7358
    %8735 = vmatprep.subr.bf16.mxu0 %v7351
    %8736 = vmatpush2.bf16.msra.mxu0 %v7350
    %8737 = vmatprep.subr.bf16.mxu0 %v7343
    %8738 = vmatpush2.bf16.msra.mxu0 %v7342
    %8739 = vmatprep.subr.bf16.mxu0 %v7335
    %8740 = vmatpush2.bf16.msra.mxu0 %v7334
    %8741 = vmatprep.subr.bf16.mxu0 %v7327
    %8742 = vmatpush2.bf16.msra.mxu0 %v7326
    %8743 = vmatprep.mubr.bf16.mxu0 %v5546
    %8744 = vmatmul.mubr.bf16.gmra.mxu0 %v5545
    %v8745 = vpop.f32.mrf.mxu0
    %v8746 = vadd.f32 %v8703, %v8745
    %v8747 = vpop.f32.mrf.mxu0
    %v8748 = vadd.f32 %v8705, %v8747
    %v8749 = vpop.f32.mrf.mxu0
    %v8750 = vadd.f32 %v8707, %v8749
    %v8751 = vpop.f32.mrf.mxu0
    %v8752 = vadd.f32 %v8709, %v8751
    %8753 = vdwg.mxu0
    %8754 = vmatprep.subr.bf16.mxu0 %v7447
    %8755 = vmatpush1.bf16.msra.mxu0 %v7446
    %8756 = vmatprep.subr.bf16.mxu0 %v7439
    %8757 = vmatpush1.bf16.msra.mxu0 %v7438
    %8758 = vmatprep.subr.bf16.mxu0 %v7431
    %8759 = vmatpush1.bf16.msra.mxu0 %v7430
    %8760 = vmatprep.subr.bf16.mxu0 %v7423
    %8761 = vmatpush1.bf16.msra.mxu0 %v7422
    %8762 = vmatprep.subr.bf16.mxu0 %v7415
    %8763 = vmatpush1.bf16.msra.mxu0 %v7414
    %8764 = vmatprep.subr.bf16.mxu0 %v7407
    %8765 = vmatpush1.bf16.msra.mxu0 %v7406
    %8766 = vmatprep.subr.bf16.mxu0 %v7399
    %8767 = vmatpush1.bf16.msra.mxu0 %v7398
    %8768 = vmatprep.subr.bf16.mxu0 %v7391
    %8769 = vmatpush1.bf16.msra.mxu0 %v7390
    %8770 = vmatprep.subr.bf16.mxu0 %v7511
    %8771 = vmatpush2.bf16.msra.mxu0 %v7510
    %8772 = vmatprep.subr.bf16.mxu0 %v7503
    %8773 = vmatpush2.bf16.msra.mxu0 %v7502
    %8774 = vmatprep.subr.bf16.mxu0 %v7495
    %8775 = vmatpush2.bf16.msra.mxu0 %v7494
    %8776 = vmatprep.subr.bf16.mxu0 %v7487
    %8777 = vmatpush2.bf16.msra.mxu0 %v7486
    %8778 = vmatprep.subr.bf16.mxu0 %v7479
    %8779 = vmatpush2.bf16.msra.mxu0 %v7478
    %8780 = vmatprep.subr.bf16.mxu0 %v7471
    %8781 = vmatpush2.bf16.msra.mxu0 %v7470
    %8782 = vmatprep.subr.bf16.mxu0 %v7463
    %8783 = vmatpush2.bf16.msra.mxu0 %v7462
    %8784 = vmatprep.subr.bf16.mxu0 %v7455
    %8785 = vmatpush2.bf16.msra.mxu0 %v7454
    %8786 = vmatprep.mubr.bf16.mxu0 %v5548
    %8787 = vmatmul.mubr.bf16.gmra.mxu0 %v5547
    %v8788 = vpop.f32.mrf.mxu0
    %v8789 = vadd.f32 %v8746, %v8788
    %v8790 = vpop.f32.mrf.mxu0
    %v8791 = vadd.f32 %v8748, %v8790
    %v8792 = vpop.f32.mrf.mxu0
    %v8793 = vadd.f32 %v8750, %v8792
    %v8794 = vpop.f32.mrf.mxu0
    %v8795 = vadd.f32 %v8752, %v8794
    %8796 = vdwg.mxu0
    %8797 = vmatprep.subr.bf16.mxu0 %v7575
    %8798 = vmatpush1.bf16.msra.mxu0 %v7574
    %8799 = vmatprep.subr.bf16.mxu0 %v7567
    %8800 = vmatpush1.bf16.msra.mxu0 %v7566
    %8801 = vmatprep.subr.bf16.mxu0 %v7559
    %8802 = vmatpush1.bf16.msra.mxu0 %v7558
    %8803 = vmatprep.subr.bf16.mxu0 %v7551
    %8804 = vmatpush1.bf16.msra.mxu0 %v7550
    %8805 = vmatprep.subr.bf16.mxu0 %v7543
    %8806 = vmatpush1.bf16.msra.mxu0 %v7542
    %8807 = vmatprep.subr.bf16.mxu0 %v7535
    %8808 = vmatpush1.bf16.msra.mxu0 %v7534
    %8809 = vmatprep.subr.bf16.mxu0 %v7527
    %8810 = vmatpush1.bf16.msra.mxu0 %v7526
    %8811 = vmatprep.subr.bf16.mxu0 %v7519
    %8812 = vmatpush1.bf16.msra.mxu0 %v7518
    %8813 = vmatprep.subr.bf16.mxu0 %v7639
    %8814 = vmatpush2.bf16.msra.mxu0 %v7638
    %8815 = vmatprep.subr.bf16.mxu0 %v7631
    %8816 = vmatpush2.bf16.msra.mxu0 %v7630
    %8817 = vmatprep.subr.bf16.mxu0 %v7623
    %8818 = vmatpush2.bf16.msra.mxu0 %v7622
    %8819 = vmatprep.subr.bf16.mxu0 %v7615
    %8820 = vmatpush2.bf16.msra.mxu0 %v7614
    %8821 = vmatprep.subr.bf16.mxu0 %v7607
    %8822 = vmatpush2.bf16.msra.mxu0 %v7606
    %8823 = vmatprep.subr.bf16.mxu0 %v7599
    %8824 = vmatpush2.bf16.msra.mxu0 %v7598
    %8825 = vmatprep.subr.bf16.mxu0 %v7591
    %8826 = vmatpush2.bf16.msra.mxu0 %v7590
    %8827 = vmatprep.subr.bf16.mxu0 %v7583
    %8828 = vmatpush2.bf16.msra.mxu0 %v7582
    %8829 = vmatprep.mubr.bf16.mxu0 %v5550
    %8830 = vmatmul.mubr.bf16.gmra.mxu0 %v5549
    %v8831 = vpop.f32.mrf.mxu0
    %v8832 = vadd.f32 %v8789, %v8831
    %v8833 = vpop.f32.mrf.mxu0
    %v8834 = vadd.f32 %v8791, %v8833
    %v8835 = vpop.f32.mrf.mxu0
    %v8836 = vadd.f32 %v8793, %v8835
    %v8837 = vpop.f32.mrf.mxu0
    %v8838 = vadd.f32 %v8795, %v8837
    %8839 = vdwg.mxu0
    %v8840 = vmax.f32 %v8316, 0.0
    %v8841 = vmax.f32 %v8318, 0.0
    %v8842 = vmax.f32 %v8488, 0.0
    %v8843 = vmax.f32 %v8490, 0.0
    %v8844 = vmax.f32 %v8660, 0.0
    %v8845 = vmax.f32 %v8662, 0.0
    %v8846 = vmax.f32 %v8832, 0.0
    %v8847 = vmax.f32 %v8834, 0.0
    %v8848 = vmax.f32 %v8320, 0.0
    %v8849 = vmax.f32 %v8322, 0.0
    %v8850 = vmax.f32 %v8492, 0.0
    %v8851 = vmax.f32 %v8494, 0.0
    %v8852 = vmax.f32 %v8664, 0.0
    %v8853 = vmax.f32 %v8666, 0.0
    %v8854 = vmax.f32 %v8836, 0.0
    %v8855 = vmax.f32 %v8838, 0.0
    %v8856 = vld [vmem:[#allocation10] sm:$0xf]
    %v8857 = vld [vmem:[#allocation10 + $0x4] sm:$0xf]
    %v8858 = vld [vmem:[#allocation10 + $0x8] sm:$0xf]
    %v8859 = vld [vmem:[#allocation10 + $0xc] sm:$0xf]
    %v8860 = vld [vmem:[#allocation10 + $0x10] sm:$0xf]
    %v8861 = vld [vmem:[#allocation10 + $0x14] sm:$0xf]
    %v8862 = vld [vmem:[#allocation10 + $0x18] sm:$0xf]
    %v8863 = vld [vmem:[#allocation10 + $0x1c] sm:$0xf]
    %v8864 = vld [vmem:[#allocation10 + $0x20] sm:$0xf]
    %v8865 = vld [vmem:[#allocation10 + $0x24] sm:$0xf]
    %v8866 = vld [vmem:[#allocation10 + $0x28] sm:$0xf]
    %v8867 = vld [vmem:[#allocation10 + $0x2c] sm:$0xf]
    %v8868 = vld [vmem:[#allocation10 + $0x30] sm:$0xf]
    %v8869 = vld [vmem:[#allocation10 + $0x34] sm:$0xf]
    %v8870 = vld [vmem:[#allocation10 + $0x38] sm:$0xf]
    %v8871 = vld [vmem:[#allocation10 + $0x3c] sm:$0xf]
    %v8872 = vld [vmem:[#allocation10 + $0x40] sm:$0xf]
    %v8873 = vld [vmem:[#allocation10 + $0x44] sm:$0xf]
    %v8874 = vld [vmem:[#allocation10 + $0x48] sm:$0xf]
    %v8875 = vld [vmem:[#allocation10 + $0x4c] sm:$0xf]
    %v8876 = vld [vmem:[#allocation10 + $0x50] sm:$0xf]
    %v8877 = vld [vmem:[#allocation10 + $0x54] sm:$0xf]
    %v8878 = vld [vmem:[#allocation10 + $0x58] sm:$0xf]
    %v8879 = vld [vmem:[#allocation10 + $0x5c] sm:$0xf]
    %v8880 = vld [vmem:[#allocation10 + $0x60] sm:$0xf]
    %v8881 = vld [vmem:[#allocation10 + $0x64] sm:$0xf]
    %v8882 = vld [vmem:[#allocation10 + $0x68] sm:$0xf]
    %v8883 = vld [vmem:[#allocation10 + $0x6c] sm:$0xf]
    %v8884 = vld [vmem:[#allocation10 + $0x70] sm:$0xf]
    %v8885 = vld [vmem:[#allocation10 + $0x74] sm:$0xf]
    %v8886 = vld [vmem:[#allocation10 + $0x78] sm:$0xf]
    %v8887 = vld [vmem:[#allocation10 + $0x7c] sm:$0xf]
    %v8888 = vld [vmem:[#allocation10 + $0x80] sm:$0xf]
    %v8889 = vld [vmem:[#allocation10 + $0x84] sm:$0xf]
    %v8890 = vld [vmem:[#allocation10 + $0x88] sm:$0xf]
    %v8891 = vld [vmem:[#allocation10 + $0x8c] sm:$0xf]
    %v8892 = vld [vmem:[#allocation10 + $0x90] sm:$0xf]
    %v8893 = vld [vmem:[#allocation10 + $0x94] sm:$0xf]
    %v8894 = vld [vmem:[#allocation10 + $0x98] sm:$0xf]
    %v8895 = vld [vmem:[#allocation10 + $0x9c] sm:$0xf]
    %v8896 = vld [vmem:[#allocation10 + $0xa0] sm:$0xf]
    %v8897 = vld [vmem:[#allocation10 + $0xa4] sm:$0xf]
    %v8898 = vld [vmem:[#allocation10 + $0xa8] sm:$0xf]
    %v8899 = vld [vmem:[#allocation10 + $0xac] sm:$0xf]
    %v8900 = vld [vmem:[#allocation10 + $0xb0] sm:$0xf]
    %v8901 = vld [vmem:[#allocation10 + $0xb4] sm:$0xf]
    %v8902 = vld [vmem:[#allocation10 + $0xb8] sm:$0xf]
    %v8903 = vld [vmem:[#allocation10 + $0xbc] sm:$0xf]
    %v8904 = vld [vmem:[#allocation10 + $0xc0] sm:$0xf]
    %v8905 = vld [vmem:[#allocation10 + $0xc4] sm:$0xf]
    %v8906 = vld [vmem:[#allocation10 + $0xc8] sm:$0xf]
    %v8907 = vld [vmem:[#allocation10 + $0xcc] sm:$0xf]
    %v8908 = vld [vmem:[#allocation10 + $0xd0] sm:$0xf]
    %v8909 = vld [vmem:[#allocation10 + $0xd4] sm:$0xf]
    %v8910 = vld [vmem:[#allocation10 + $0xd8] sm:$0xf]
    %v8911 = vld [vmem:[#allocation10 + $0xdc] sm:$0xf]
    %v8912 = vld [vmem:[#allocation10 + $0xe0] sm:$0xf]
    %v8913 = vld [vmem:[#allocation10 + $0xe4] sm:$0xf]
    %v8914 = vld [vmem:[#allocation10 + $0xe8] sm:$0xf]
    %v8915 = vld [vmem:[#allocation10 + $0xec] sm:$0xf]
    %v8916 = vld [vmem:[#allocation10 + $0xf0] sm:$0xf]
    %v8917 = vld [vmem:[#allocation10 + $0xf4] sm:$0xf]
    %v8918 = vld [vmem:[#allocation10 + $0xf8] sm:$0xf]
    %v8919 = vld [vmem:[#allocation10 + $0xfc] sm:$0xf]
    %v8920 = vld [vmem:[#allocation10 + $0x100] sm:$0xf]
    %v8921 = vld [vmem:[#allocation10 + $0x104] sm:$0xf]
    %v8922 = vld [vmem:[#allocation10 + $0x108] sm:$0xf]
    %v8923 = vld [vmem:[#allocation10 + $0x10c] sm:$0xf]
    %v8924 = vld [vmem:[#allocation10 + $0x110] sm:$0xf]
    %v8925 = vld [vmem:[#allocation10 + $0x114] sm:$0xf]
    %v8926 = vld [vmem:[#allocation10 + $0x118] sm:$0xf]
    %v8927 = vld [vmem:[#allocation10 + $0x11c] sm:$0xf]
    %v8928 = vld [vmem:[#allocation10 + $0x120] sm:$0xf]
    %v8929 = vld [vmem:[#allocation10 + $0x124] sm:$0xf]
    %v8930 = vld [vmem:[#allocation10 + $0x128] sm:$0xf]
    %v8931 = vld [vmem:[#allocation10 + $0x12c] sm:$0xf]
    %v8932 = vld [vmem:[#allocation10 + $0x130] sm:$0xf]
    %v8933 = vld [vmem:[#allocation10 + $0x134] sm:$0xf]
    %v8934 = vld [vmem:[#allocation10 + $0x138] sm:$0xf]
    %v8935 = vld [vmem:[#allocation10 + $0x13c] sm:$0xf]
    %v8936 = vld [vmem:[#allocation10 + $0x140] sm:$0xf]
    %v8937 = vld [vmem:[#allocation10 + $0x144] sm:$0xf]
    %v8938 = vld [vmem:[#allocation10 + $0x148] sm:$0xf]
    %v8939 = vld [vmem:[#allocation10 + $0x14c] sm:$0xf]
    %v8940 = vld [vmem:[#allocation10 + $0x150] sm:$0xf]
    %v8941 = vld [vmem:[#allocation10 + $0x154] sm:$0xf]
    %v8942 = vld [vmem:[#allocation10 + $0x158] sm:$0xf]
    %v8943 = vld [vmem:[#allocation10 + $0x15c] sm:$0xf]
    %v8944 = vld [vmem:[#allocation10 + $0x160] sm:$0xf]
    %v8945 = vld [vmem:[#allocation10 + $0x164] sm:$0xf]
    %v8946 = vld [vmem:[#allocation10 + $0x168] sm:$0xf]
    %v8947 = vld [vmem:[#allocation10 + $0x16c] sm:$0xf]
    %v8948 = vld [vmem:[#allocation10 + $0x170] sm:$0xf]
    %v8949 = vld [vmem:[#allocation10 + $0x174] sm:$0xf]
    %v8950 = vld [vmem:[#allocation10 + $0x178] sm:$0xf]
    %v8951 = vld [vmem:[#allocation10 + $0x17c] sm:$0xf]
    %v8952 = vld [vmem:[#allocation10 + $0x180] sm:$0xf]
    %v8953 = vld [vmem:[#allocation10 + $0x184] sm:$0xf]
    %v8954 = vld [vmem:[#allocation10 + $0x188] sm:$0xf]
    %v8955 = vld [vmem:[#allocation10 + $0x18c] sm:$0xf]
    %v8956 = vld [vmem:[#allocation10 + $0x190] sm:$0xf]
    %v8957 = vld [vmem:[#allocation10 + $0x194] sm:$0xf]
    %v8958 = vld [vmem:[#allocation10 + $0x198] sm:$0xf]
    %v8959 = vld [vmem:[#allocation10 + $0x19c] sm:$0xf]
    %v8960 = vld [vmem:[#allocation10 + $0x1a0] sm:$0xf]
    %v8961 = vld [vmem:[#allocation10 + $0x1a4] sm:$0xf]
    %v8962 = vld [vmem:[#allocation10 + $0x1a8] sm:$0xf]
    %v8963 = vld [vmem:[#allocation10 + $0x1ac] sm:$0xf]
    %v8964 = vld [vmem:[#allocation10 + $0x1b0] sm:$0xf]
    %v8965 = vld [vmem:[#allocation10 + $0x1b4] sm:$0xf]
    %v8966 = vld [vmem:[#allocation10 + $0x1b8] sm:$0xf]
    %v8967 = vld [vmem:[#allocation10 + $0x1bc] sm:$0xf]
    %v8968 = vld [vmem:[#allocation10 + $0x1c0] sm:$0xf]
    %v8969 = vld [vmem:[#allocation10 + $0x1c4] sm:$0xf]
    %v8970 = vld [vmem:[#allocation10 + $0x1c8] sm:$0xf]
    %v8971 = vld [vmem:[#allocation10 + $0x1cc] sm:$0xf]
    %v8972 = vld [vmem:[#allocation10 + $0x1d0] sm:$0xf]
    %v8973 = vld [vmem:[#allocation10 + $0x1d4] sm:$0xf]
    %v8974 = vld [vmem:[#allocation10 + $0x1d8] sm:$0xf]
    %v8975 = vld [vmem:[#allocation10 + $0x1dc] sm:$0xf]
    %v8976 = vld [vmem:[#allocation10 + $0x1e0] sm:$0xf]
    %v8977 = vld [vmem:[#allocation10 + $0x1e4] sm:$0xf]
    %v8978 = vld [vmem:[#allocation10 + $0x1e8] sm:$0xf]
    %v8979 = vld [vmem:[#allocation10 + $0x1ec] sm:$0xf]
    %v8980 = vld [vmem:[#allocation10 + $0x1f0] sm:$0xf]
    %v8981 = vld [vmem:[#allocation10 + $0x1f4] sm:$0xf]
    %v8982 = vld [vmem:[#allocation10 + $0x1f8] sm:$0xf]
    %v8983 = vld [vmem:[#allocation10 + $0x1fc] sm:$0xf]
    %v8984 = vld [vmem:[#allocation16] sm:$0x1]
    %v8985 = vpack.c.bf16 %v8848, %v8840
    %v8986 = vpack.c.bf16 %v8849, %v8841
    %v8987 = vpack.c.bf16 %v8850, %v8842
    %v8988 = vpack.c.bf16 %v8851, %v8843
    %v8989 = vpack.c.bf16 %v8852, %v8844
    %v8990 = vpack.c.bf16 %v8853, %v8845
    %v8991 = vpack.c.bf16 %v8854, %v8846
    %v8992 = vpack.c.bf16 %v8855, %v8847
    %v9121 = vunpack.c.l.b16 %v8856
    %v9122 = vunpack.c.l.b16 %v8857
    %v9123 = vunpack.c.l.b16 %v8858
    %v9124 = vunpack.c.l.b16 %v8859
    %v9125 = vunpack.c.l.b16 %v8860
    %v9126 = vunpack.c.l.b16 %v8861
    %v9127 = vunpack.c.l.b16 %v8862
    %v9128 = vunpack.c.l.b16 %v8863
    %v9129 = vunpack.c.l.b16 %v8864
    %v9130 = vunpack.c.l.b16 %v8865
    %v9131 = vunpack.c.l.b16 %v8866
    %v9132 = vunpack.c.l.b16 %v8867
    %v9133 = vunpack.c.l.b16 %v8868
    %v9134 = vunpack.c.l.b16 %v8869
    %v9135 = vunpack.c.l.b16 %v8870
    %v9136 = vunpack.c.l.b16 %v8871
    %v9137 = vunpack.c.l.b16 %v8872
    %v9138 = vunpack.c.l.b16 %v8873
    %v9139 = vunpack.c.l.b16 %v8874
    %v9140 = vunpack.c.l.b16 %v8875
    %v9141 = vunpack.c.l.b16 %v8876
    %v9142 = vunpack.c.l.b16 %v8877
    %v9143 = vunpack.c.l.b16 %v8878
    %v9144 = vunpack.c.l.b16 %v8879
    %v9145 = vunpack.c.l.b16 %v8880
    %v9146 = vunpack.c.l.b16 %v8881
    %v9147 = vunpack.c.l.b16 %v8882
    %v9148 = vunpack.c.l.b16 %v8883
    %v9149 = vunpack.c.l.b16 %v8884
    %v9150 = vunpack.c.l.b16 %v8885
    %v9151 = vunpack.c.l.b16 %v8886
    %v9152 = vunpack.c.l.b16 %v8887
    %v9153 = vunpack.c.l.b16 %v8888
    %v9154 = vunpack.c.l.b16 %v8889
    %v9155 = vunpack.c.l.b16 %v8890
    %v9156 = vunpack.c.l.b16 %v8891
    %v9157 = vunpack.c.l.b16 %v8892
    %v9158 = vunpack.c.l.b16 %v8893
    %v9159 = vunpack.c.l.b16 %v8894
    %v9160 = vunpack.c.l.b16 %v8895
    %v9161 = vunpack.c.l.b16 %v8896
    %v9162 = vunpack.c.l.b16 %v8897
    %v9163 = vunpack.c.l.b16 %v8898
    %v9164 = vunpack.c.l.b16 %v8899
    %v9165 = vunpack.c.l.b16 %v8900
    %v9166 = vunpack.c.l.b16 %v8901
    %v9167 = vunpack.c.l.b16 %v8902
    %v9168 = vunpack.c.l.b16 %v8903
    %v9169 = vunpack.c.l.b16 %v8904
    %v9170 = vunpack.c.l.b16 %v8905
    %v9171 = vunpack.c.l.b16 %v8906
    %v9172 = vunpack.c.l.b16 %v8907
    %v9173 = vunpack.c.l.b16 %v8908
    %v9174 = vunpack.c.l.b16 %v8909
    %v9175 = vunpack.c.l.b16 %v8910
    %v9176 = vunpack.c.l.b16 %v8911
    %v9177 = vunpack.c.l.b16 %v8912
    %v9178 = vunpack.c.l.b16 %v8913
    %v9179 = vunpack.c.l.b16 %v8914
    %v9180 = vunpack.c.l.b16 %v8915
    %v9181 = vunpack.c.l.b16 %v8916
    %v9182 = vunpack.c.l.b16 %v8917
    %v9183 = vunpack.c.l.b16 %v8918
    %v9184 = vunpack.c.l.b16 %v8919
    %v9185 = vunpack.c.l.b16 %v8920
    %v9186 = vunpack.c.l.b16 %v8921
    %v9187 = vunpack.c.l.b16 %v8922
    %v9188 = vunpack.c.l.b16 %v8923
    %v9189 = vunpack.c.l.b16 %v8924
    %v9190 = vunpack.c.l.b16 %v8925
    %v9191 = vunpack.c.l.b16 %v8926
    %v9192 = vunpack.c.l.b16 %v8927
    %v9193 = vunpack.c.l.b16 %v8928
    %v9194 = vunpack.c.l.b16 %v8929
    %v9195 = vunpack.c.l.b16 %v8930
    %v9196 = vunpack.c.l.b16 %v8931
    %v9197 = vunpack.c.l.b16 %v8932
    %v9198 = vunpack.c.l.b16 %v8933
    %v9199 = vunpack.c.l.b16 %v8934
    %v9200 = vunpack.c.l.b16 %v8935
    %v9201 = vunpack.c.l.b16 %v8936
    %v9202 = vunpack.c.l.b16 %v8937
    %v9203 = vunpack.c.l.b16 %v8938
    %v9204 = vunpack.c.l.b16 %v8939
    %v9205 = vunpack.c.l.b16 %v8940
    %v9206 = vunpack.c.l.b16 %v8941
    %v9207 = vunpack.c.l.b16 %v8942
    %v9208 = vunpack.c.l.b16 %v8943
    %v9209 = vunpack.c.l.b16 %v8944
    %v9210 = vunpack.c.l.b16 %v8945
    %v9211 = vunpack.c.l.b16 %v8946
    %v9212 = vunpack.c.l.b16 %v8947
    %v9213 = vunpack.c.l.b16 %v8948
    %v9214 = vunpack.c.l.b16 %v8949
    %v9215 = vunpack.c.l.b16 %v8950
    %v9216 = vunpack.c.l.b16 %v8951
    %v9217 = vunpack.c.l.b16 %v8952
    %v9218 = vunpack.c.l.b16 %v8953
    %v9219 = vunpack.c.l.b16 %v8954
    %v9220 = vunpack.c.l.b16 %v8955
    %v9221 = vunpack.c.l.b16 %v8956
    %v9222 = vunpack.c.l.b16 %v8957
    %v9223 = vunpack.c.l.b16 %v8958
    %v9224 = vunpack.c.l.b16 %v8959
    %v9225 = vunpack.c.l.b16 %v8960
    %v9226 = vunpack.c.l.b16 %v8961
    %v9227 = vunpack.c.l.b16 %v8962
    %v9228 = vunpack.c.l.b16 %v8963
    %v9229 = vunpack.c.l.b16 %v8964
    %v9230 = vunpack.c.l.b16 %v8965
    %v9231 = vunpack.c.l.b16 %v8966
    %v9232 = vunpack.c.l.b16 %v8967
    %v9233 = vunpack.c.l.b16 %v8968
    %v9234 = vunpack.c.l.b16 %v8969
    %v9235 = vunpack.c.l.b16 %v8970
    %v9236 = vunpack.c.l.b16 %v8971
    %v9237 = vunpack.c.l.b16 %v8972
    %v9238 = vunpack.c.l.b16 %v8973
    %v9239 = vunpack.c.l.b16 %v8974
    %v9240 = vunpack.c.l.b16 %v8975
    %v9241 = vunpack.c.l.b16 %v8976
    %v9242 = vunpack.c.l.b16 %v8977
    %v9243 = vunpack.c.l.b16 %v8978
    %v9244 = vunpack.c.l.b16 %v8979
    %v9245 = vunpack.c.l.b16 %v8980
    %v9246 = vunpack.c.l.b16 %v8981
    %v9247 = vunpack.c.l.b16 %v8982
    %v9248 = vunpack.c.l.b16 %v8983
    %v9249 = vpack.c.b16 %v9122, %v9121
    %v9250 = vpack.c.b16 %v9124, %v9123
    %v9251 = vpack.c.b16 %v9126, %v9125
    %v9252 = vpack.c.b16 %v9128, %v9127
    %v9253 = vpack.c.b16 %v9130, %v9129
    %v9254 = vpack.c.b16 %v9132, %v9131
    %v9255 = vpack.c.b16 %v9134, %v9133
    %v9256 = vpack.c.b16 %v9136, %v9135
    %v9257 = vpack.c.b16 %v9138, %v9137
    %v9258 = vpack.c.b16 %v9140, %v9139
    %v9259 = vpack.c.b16 %v9142, %v9141
    %v9260 = vpack.c.b16 %v9144, %v9143
    %v9261 = vpack.c.b16 %v9146, %v9145
    %v9262 = vpack.c.b16 %v9148, %v9147
    %v9263 = vpack.c.b16 %v9150, %v9149
    %v9264 = vpack.c.b16 %v9152, %v9151
    %v9265 = vpack.c.b16 %v9154, %v9153
    %v9266 = vpack.c.b16 %v9156, %v9155
    %v9267 = vpack.c.b16 %v9158, %v9157
    %v9268 = vpack.c.b16 %v9160, %v9159
    %v9269 = vpack.c.b16 %v9162, %v9161
    %v9270 = vpack.c.b16 %v9164, %v9163
    %v9271 = vpack.c.b16 %v9166, %v9165
    %v9272 = vpack.c.b16 %v9168, %v9167
    %v9273 = vpack.c.b16 %v9170, %v9169
    %v9274 = vpack.c.b16 %v9172, %v9171
    %v9275 = vpack.c.b16 %v9174, %v9173
    %v9276 = vpack.c.b16 %v9176, %v9175
    %v9277 = vpack.c.b16 %v9178, %v9177
    %v9278 = vpack.c.b16 %v9180, %v9179
    %v9279 = vpack.c.b16 %v9182, %v9181
    %v9280 = vpack.c.b16 %v9184, %v9183
    %v9281 = vpack.c.b16 %v9186, %v9185
    %v9282 = vpack.c.b16 %v9188, %v9187
    %v9283 = vpack.c.b16 %v9190, %v9189
    %v9284 = vpack.c.b16 %v9192, %v9191
    %v9285 = vpack.c.b16 %v9194, %v9193
    %v9286 = vpack.c.b16 %v9196, %v9195
    %v9287 = vpack.c.b16 %v9198, %v9197
    %v9288 = vpack.c.b16 %v9200, %v9199
    %v9289 = vpack.c.b16 %v9202, %v9201
    %v9290 = vpack.c.b16 %v9204, %v9203
    %v9291 = vpack.c.b16 %v9206, %v9205
    %v9292 = vpack.c.b16 %v9208, %v9207
    %v9293 = vpack.c.b16 %v9210, %v9209
    %v9294 = vpack.c.b16 %v9212, %v9211
    %v9295 = vpack.c.b16 %v9214, %v9213
    %v9296 = vpack.c.b16 %v9216, %v9215
    %v9297 = vpack.c.b16 %v9218, %v9217
    %v9298 = vpack.c.b16 %v9220, %v9219
    %v9299 = vpack.c.b16 %v9222, %v9221
    %v9300 = vpack.c.b16 %v9224, %v9223
    %v9301 = vpack.c.b16 %v9226, %v9225
    %v9302 = vpack.c.b16 %v9228, %v9227
    %v9303 = vpack.c.b16 %v9230, %v9229
    %v9304 = vpack.c.b16 %v9232, %v9231
    %v9305 = vpack.c.b16 %v9234, %v9233
    %v9306 = vpack.c.b16 %v9236, %v9235
    %v9307 = vpack.c.b16 %v9238, %v9237
    %v9308 = vpack.c.b16 %v9240, %v9239
    %v9309 = vpack.c.b16 %v9242, %v9241
    %v9310 = vpack.c.b16 %v9244, %v9243
    %v9311 = vpack.c.b16 %v9246, %v9245
    %v9312 = vpack.c.b16 %v9248, %v9247
    %9377 = vmatprep.subr.bf16.mxu0 0
    %9378 = vmatpush1.bf16.msra.mxu0 %v9256
    %9379 = vmatprep.subr.bf16.mxu0 0
    %9380 = vmatpush1.bf16.msra.mxu0 %v9255
    %9381 = vmatprep.subr.bf16.mxu0 0
    %9382 = vmatpush1.bf16.msra.mxu0 %v9254
    %9383 = vmatprep.subr.bf16.mxu0 0
    %9384 = vmatpush1.bf16.msra.mxu0 %v9253
    %9385 = vmatprep.subr.bf16.mxu0 0
    %9386 = vmatpush1.bf16.msra.mxu0 %v9252
    %9387 = vmatprep.subr.bf16.mxu0 0
    %9388 = vmatpush1.bf16.msra.mxu0 %v9251
    %9389 = vmatprep.subr.bf16.mxu0 0
    %9390 = vmatpush1.bf16.msra.mxu0 %v9250
    %9391 = vmatprep.subr.bf16.mxu0 0
    %9392 = vmatpush1.bf16.msra.mxu0 %v9249
    %9393 = vmatprep.subr.bf16.mxu0 0
    %9394 = vmatpush2.bf16.msra.mxu0 %v9264
    %9395 = vmatprep.subr.bf16.mxu0 0
    %9396 = vmatpush2.bf16.msra.mxu0 %v9263
    %9397 = vmatprep.subr.bf16.mxu0 0
    %9398 = vmatpush2.bf16.msra.mxu0 %v9262
    %9399 = vmatprep.subr.bf16.mxu0 0
    %9400 = vmatpush2.bf16.msra.mxu0 %v9261
    %9401 = vmatprep.subr.bf16.mxu0 0
    %9402 = vmatpush2.bf16.msra.mxu0 %v9260
    %9403 = vmatprep.subr.bf16.mxu0 0
    %9404 = vmatpush2.bf16.msra.mxu0 %v9259
    %9405 = vmatprep.subr.bf16.mxu0 0
    %9406 = vmatpush2.bf16.msra.mxu0 %v9258
    %9407 = vmatprep.subr.bf16.mxu0 0
    %9408 = vmatpush2.bf16.msra.mxu0 %v9257
    %9409 = vmatprep.mubr.bf16.mxu0 %v8986
    %9410 = vmatmul.mubr.bf16.gmra.mxu0 %v8985
    %v9411 = vpop.f32.mrf.mxu0
    %v9412 = vadd.f32 0.0, %v9411
    %v9413 = vpop.f32.mrf.mxu0
    %v9414 = vpop.f32.mrf.mxu0
    %v9415 = vadd.f32 0.0, %v9414
    %v9416 = vpop.f32.mrf.mxu0
    %9417 = vdwg.mxu0
    %9418 = vmatprep.subr.bf16.mxu0 0
    %9419 = vmatpush1.bf16.msra.mxu0 %v9272
    %9420 = vmatprep.subr.bf16.mxu0 0
    %9421 = vmatpush1.bf16.msra.mxu0 %v9271
    %9422 = vmatprep.subr.bf16.mxu0 0
    %9423 = vmatpush1.bf16.msra.mxu0 %v9270
    %9424 = vmatprep.subr.bf16.mxu0 0
    %9425 = vmatpush1.bf16.msra.mxu0 %v9269
    %9426 = vmatprep.subr.bf16.mxu0 0
    %9427 = vmatpush1.bf16.msra.mxu0 %v9268
    %9428 = vmatprep.subr.bf16.mxu0 0
    %9429 = vmatpush1.bf16.msra.mxu0 %v9267
    %9430 = vmatprep.subr.bf16.mxu0 0
    %9431 = vmatpush1.bf16.msra.mxu0 %v9266
    %9432 = vmatprep.subr.bf16.mxu0 0
    %9433 = vmatpush1.bf16.msra.mxu0 %v9265
    %9434 = vmatprep.subr.bf16.mxu0 0
    %9435 = vmatpush2.bf16.msra.mxu0 %v9280
    %9436 = vmatprep.subr.bf16.mxu0 0
    %9437 = vmatpush2.bf16.msra.mxu0 %v9279
    %9438 = vmatprep.subr.bf16.mxu0 0
    %9439 = vmatpush2.bf16.msra.mxu0 %v9278
    %9440 = vmatprep.subr.bf16.mxu0 0
    %9441 = vmatpush2.bf16.msra.mxu0 %v9277
    %9442 = vmatprep.subr.bf16.mxu0 0
    %9443 = vmatpush2.bf16.msra.mxu0 %v9276
    %9444 = vmatprep.subr.bf16.mxu0 0
    %9445 = vmatpush2.bf16.msra.mxu0 %v9275
    %9446 = vmatprep.subr.bf16.mxu0 0
    %9447 = vmatpush2.bf16.msra.mxu0 %v9274
    %9448 = vmatprep.subr.bf16.mxu0 0
    %9449 = vmatpush2.bf16.msra.mxu0 %v9273
    %9450 = vmatprep.mubr.bf16.mxu0 %v8988
    %9451 = vmatmul.mubr.bf16.gmra.mxu0 %v8987
    %v9452 = vpop.f32.mrf.mxu0
    %v9453 = vadd.f32 %v9412, %v9452
    %v9454 = vpop.f32.mrf.mxu0
    %v9455 = vpop.f32.mrf.mxu0
    %v9456 = vadd.f32 %v9415, %v9455
    %v9457 = vpop.f32.mrf.mxu0
    %9458 = vdwg.mxu0
    %9459 = vmatprep.subr.bf16.mxu0 0
    %9460 = vmatpush1.bf16.msra.mxu0 %v9288
    %9461 = vmatprep.subr.bf16.mxu0 0
    %9462 = vmatpush1.bf16.msra.mxu0 %v9287
    %9463 = vmatprep.subr.bf16.mxu0 0
    %9464 = vmatpush1.bf16.msra.mxu0 %v9286
    %9465 = vmatprep.subr.bf16.mxu0 0
    %9466 = vmatpush1.bf16.msra.mxu0 %v9285
    %9467 = vmatprep.subr.bf16.mxu0 0
    %9468 = vmatpush1.bf16.msra.mxu0 %v9284
    %9469 = vmatprep.subr.bf16.mxu0 0
    %9470 = vmatpush1.bf16.msra.mxu0 %v9283
    %9471 = vmatprep.subr.bf16.mxu0 0
    %9472 = vmatpush1.bf16.msra.mxu0 %v9282
    %9473 = vmatprep.subr.bf16.mxu0 0
    %9474 = vmatpush1.bf16.msra.mxu0 %v9281
    %9475 = vmatprep.subr.bf16.mxu0 0
    %9476 = vmatpush2.bf16.msra.mxu0 %v9296
    %9477 = vmatprep.subr.bf16.mxu0 0
    %9478 = vmatpush2.bf16.msra.mxu0 %v9295
    %9479 = vmatprep.subr.bf16.mxu0 0
    %9480 = vmatpush2.bf16.msra.mxu0 %v9294
    %9481 = vmatprep.subr.bf16.mxu0 0
    %9482 = vmatpush2.bf16.msra.mxu0 %v9293
    %9483 = vmatprep.subr.bf16.mxu0 0
    %9484 = vmatpush2.bf16.msra.mxu0 %v9292
    %9485 = vmatprep.subr.bf16.mxu0 0
    %9486 = vmatpush2.bf16.msra.mxu0 %v9291
    %9487 = vmatprep.subr.bf16.mxu0 0
    %9488 = vmatpush2.bf16.msra.mxu0 %v9290
    %9489 = vmatprep.subr.bf16.mxu0 0
    %9490 = vmatpush2.bf16.msra.mxu0 %v9289
    %9491 = vmatprep.mubr.bf16.mxu0 %v8990
    %9492 = vmatmul.mubr.bf16.gmra.mxu0 %v8989
    %v9493 = vpop.f32.mrf.mxu0
    %v9494 = vadd.f32 %v9453, %v9493
    %v9495 = vpop.f32.mrf.mxu0
    %v9496 = vpop.f32.mrf.mxu0
    %v9497 = vadd.f32 %v9456, %v9496
    %v9498 = vpop.f32.mrf.mxu0
    %9499 = vdwg.mxu0
    %9500 = vmatprep.subr.bf16.mxu0 0
    %9501 = vmatpush1.bf16.msra.mxu0 %v9304
    %9502 = vmatprep.subr.bf16.mxu0 0
    %9503 = vmatpush1.bf16.msra.mxu0 %v9303
    %9504 = vmatprep.subr.bf16.mxu0 0
    %9505 = vmatpush1.bf16.msra.mxu0 %v9302
    %9506 = vmatprep.subr.bf16.mxu0 0
    %9507 = vmatpush1.bf16.msra.mxu0 %v9301
    %9508 = vmatprep.subr.bf16.mxu0 0
    %9509 = vmatpush1.bf16.msra.mxu0 %v9300
    %9510 = vmatprep.subr.bf16.mxu0 0
    %9511 = vmatpush1.bf16.msra.mxu0 %v9299
    %9512 = vmatprep.subr.bf16.mxu0 0
    %9513 = vmatpush1.bf16.msra.mxu0 %v9298
    %9514 = vmatprep.subr.bf16.mxu0 0
    %9515 = vmatpush1.bf16.msra.mxu0 %v9297
    %9516 = vmatprep.subr.bf16.mxu0 0
    %9517 = vmatpush2.bf16.msra.mxu0 %v9312
    %9518 = vmatprep.subr.bf16.mxu0 0
    %9519 = vmatpush2.bf16.msra.mxu0 %v9311
    %9520 = vmatprep.subr.bf16.mxu0 0
    %9521 = vmatpush2.bf16.msra.mxu0 %v9310
    %9522 = vmatprep.subr.bf16.mxu0 0
    %9523 = vmatpush2.bf16.msra.mxu0 %v9309
    %9524 = vmatprep.subr.bf16.mxu0 0
    %9525 = vmatpush2.bf16.msra.mxu0 %v9308
    %9526 = vmatprep.subr.bf16.mxu0 0
    %9527 = vmatpush2.bf16.msra.mxu0 %v9307
    %9528 = vmatprep.subr.bf16.mxu0 0
    %9529 = vmatpush2.bf16.msra.mxu0 %v9306
    %9530 = vmatprep.subr.bf16.mxu0 0
    %9531 = vmatpush2.bf16.msra.mxu0 %v9305
    %9532 = vmatprep.mubr.bf16.mxu0 %v8992
    %9533 = vmatmul.mubr.bf16.gmra.mxu0 %v8991
    %v9534 = vpop.f32.mrf.mxu0
    %v9535 = vadd.f32 %v9494, %v9534
    %v9536 = vpop.f32.mrf.mxu0
    %v9537 = vpop.f32.mrf.mxu0
    %v9538 = vadd.f32 %v9497, %v9537
    %v9539 = vpop.f32.mrf.mxu0
    %9540 = vdwg.mxu0
    %v9541 = vpack.c.bf16 %v9538, %v9535
    %v9543 = vlaneseq
    %v9544 = vshrl.u32 %v9543, 7
    %v9545 = vsub.s32 0, %v9544
    %v9546 = vrot.slane %v8984, %v9545
    %v9550 = vunpack.c.l.b16 %v169
    %v9551 = vunpack.c.l.b16 %v170
    %v9552 = vpack.c.b16 %v9551, %v9550
    %v9554 = vsel %vm249, %v9552, 0
    %9556 = vmatprep.subr.bf16.mxu0 0
    %9557 = vmatpush1.bf16.msra.mxu0 0
    %9558 = vmatprep.subr.bf16.mxu0 0
    %9559 = vmatpush1.bf16.msra.mxu0 0
    %9560 = vmatprep.subr.bf16.mxu0 0
    %9561 = vmatpush1.bf16.msra.mxu0 0
    %9562 = vmatprep.subr.bf16.mxu0 0
    %9563 = vmatpush1.bf16.msra.mxu0 0
    %9564 = vmatprep.subr.bf16.mxu0 0
    %9565 = vmatpush1.bf16.msra.mxu0 0
    %9566 = vmatprep.subr.bf16.mxu0 0
    %9567 = vmatpush1.bf16.msra.mxu0 0
    %9568 = vmatprep.subr.bf16.mxu0 0
    %9569 = vmatpush1.bf16.msra.mxu0 0
    %9570 = vmatprep.subr.bf16.mxu0 0
    %9571 = vmatpush1.bf16.msra.mxu0 %v9541
    %9572 = vmatprep.subr.bf16.mxu0 0
    %9573 = vmatpush2.bf16.msra.mxu0 0
    %9574 = vmatprep.subr.bf16.mxu0 0
    %9575 = vmatpush2.bf16.msra.mxu0 0
    %9576 = vmatprep.subr.bf16.mxu0 0
    %9577 = vmatpush2.bf16.msra.mxu0 0
    %9578 = vmatprep.subr.bf16.mxu0 0
    %9579 = vmatpush2.bf16.msra.mxu0 0
    %9580 = vmatprep.subr.bf16.mxu0 0
    %9581 = vmatpush2.bf16.msra.mxu0 0
    %9582 = vmatprep.subr.bf16.mxu0 0
    %9583 = vmatpush2.bf16.msra.mxu0 0
    %9584 = vmatprep.subr.bf16.mxu0 0
    %9585 = vmatpush2.bf16.msra.mxu0 0
    %9586 = vmatprep.subr.bf16.mxu0 0
    %9587 = vmatpush2.bf16.msra.mxu0 0
    %9588 = vmatprep.mubr.bf16.mxu0 0
    %9589 = vmatmul.mubr.bf16.gmra.mxu0 %v9554
    %v9590 = vpop.f32.mrf.mxu0
    %v9591 = vadd.f32 %v9546, %v9590
    %v9592 = vpop.f32.mrf.mxu0
    %v9593 = vpop.f32.mrf.mxu0
    %v9594 = vadd.f32 %v9546, %v9593
    %v9595 = vpop.f32.mrf.mxu0
    %9596 = vdwg.mxu0
    %9597 = vst [vmem:[%s11] sm:$0xff] %v9591
    %9598 = vst [vmem:[%s11 + $0x8] sm:$0xff] %v9594
    // Predicated region
    $region86: #{_forward.1} parent=1 // pred_check
      _
    $region87: #{_forward.1} parent=1 // pred_check_branch
      %9600 = sbr.rel (0) target = $region89
    $region88: #{_forward.1} parent=1 // pred_region
      _
    $region89: #{_forward.1} parent=1 // pred_fallthru
      _
    // Predicated region
    $region90: #{_forward.1} parent=1 // pred_check
      _
    $region91: #{_forward.1} parent=1 // pred_check_branch
      %9602 = sbr.rel (0) target = $region93
    $region92: #{_forward.1} parent=1 // pred_region
      _
    $region93: #{_forward.1} parent=1 // pred_fallthru
      _
    %9603 = vsyncpa [#allocation3], 1
    %9604 = vsyncpa [#allocation5], 1
    %9605 = vsyncpa [#allocation8], 1
    %9606 = vsyncpa [#allocation11], 1
    %9607 = vsyncpa [#allocation14], 1
    %9608 = vsyncpa [#allocation17], 1

</llo_original>
